<compile_context>
chip_gen: v7x
topology: tpu7x:2x2x1
jax: 0.10.0
libtpu: 0.0.40
codegen_flags: <defaults>
</compile_context>

<pallas_src>
import functools

import jax
import jax.numpy as jnp
from jax.experimental import pallas as pl
from jax.experimental.pallas import tpu as pltpu

_LANE = 128  # TPU vreg lane width; channels are padded to a multiple of this.


def _round_up(n, m):
    return (n + m - 1) // m * m


def _zero_border(pad_ref):
    """Zero only the 1-element spatial border of a (Hp, Wp, C) pad scratch.

    Invariant relied upon: the interior stores below never touch row/col 0 or
    row Hp-1 / col Wp-1, and the interior is fully overwritten every grid step,
    so only the border needs (re)initialisation.  It is re-zeroed each step
    (cheap: 4 thin memsets) rather than once under pl.when(program_id==0),
    because with a "parallel" batch axis a TensorCore may never execute
    program_id 0 yet still owns its own scratch.
    """
    hp, wp, c = pad_ref.shape
    zrow = jnp.zeros((1, wp, c), pad_ref.dtype)
    pad_ref[pl.ds(0, 1)] = zrow
    pad_ref[pl.ds(hp - 1, 1)] = zrow
    zcol = jnp.zeros((hp, 1, c), pad_ref.dtype)
    pad_ref[:, pl.ds(0, 1), :] = zcol
    pad_ref[:, pl.ds(wp - 1, 1), :] = zcol


def _im2col_3x3(pad_ref, col_ref, ho, wo, stride):
    """Scatter the 9 3x3 tap windows of a padded (Hp, Wp, C) ref into col_ref.

    col_ref: (ho*wo, 9*C) bf16; lane block tap*C:(tap+1)*C holds tap (dy, dx).
    Tap windows are read directly from the ref (no materialized padded value);
    every store is lane-aligned since C % 128 == 0.
    """
    c = pad_ref.shape[-1]
    for tap in range(9):
        dy, dx = tap // 3, tap % 3
        if stride == 1:
            patch = pad_ref[pl.ds(dy, ho), pl.ds(dx, wo), :]
        else:
            # TODO(synk): for stride=2, subsample once per (dy%2, dx%2) parity
            # (4 strided extracts) instead of 9 strided windows.
            win = pad_ref[pl.ds(dy, stride * (ho - 1) + 1),
                          pl.ds(dx, stride * (wo - 1) + 1), :]
            patch = win[::stride, ::stride, :]
        col_ref[:, tap * c:(tap + 1) * c] = patch.reshape(ho * wo, c)


def _fused_block_kernel(x_ref, wa_ref, sa_ref, ba_ref, wb_ref, sb_ref, bb_ref,
                        o_ref, xpad_ref, cola_ref, ypad_ref, colb_ref, *,
                        stride):
    """One batch element of: conv3x3(stride)+BN+ReLU -> conv3x3(1)+BN.

    x_ref:   (1, H, W, Cin_p)        bf16 unpadded input tile
    wa_ref:  (9*Cin_p, Cout_p)       bf16 conv-a weights (tap-major, im2col K)
    sa_ref, ba_ref: (1, Cout_p)      f32 folded BN (layer a)
    wb_ref:  (9*Cout_p, Cout_p)      bf16 conv-b weights
    sb_ref, bb_ref: (1, Cout_p)      f32 folded BN (layer b, final_bn -> no ReLU)
    o_ref:   (1, Ho, Wo, Cout_p)     output tile
    xpad_ref: VMEM (H+2, W+2, Cin_p)    bf16 padded input scratch
    cola_ref: VMEM (Ho*Wo, 9*Cin_p)     bf16 im2col scratch (layer a)
    ypad_ref: VMEM (Ho+2, Wo+2, Cout_p) bf16 padded intermediate scratch
    colb_ref: VMEM (Ho*Wo, 9*Cout_p)    bf16 im2col scratch (layer b)
    """
    _, h, w, _ = x_ref.shape
    _, ho, wo, cout = o_ref.shape

    # Only the 1-wide border needs zeroing; interiors are fully overwritten.
    _zero_border(xpad_ref)
    _zero_border(ypad_ref)

    # ---- layer a: conv3x3(stride) -> BN -> ReLU (f32 epilogue) ----
    xpad_ref[pl.ds(1, h), pl.ds(1, w), :] = x_ref[0]
    _im2col_3x3(xpad_ref, cola_ref, ho, wo, stride)
    acc_a = jnp.dot(cola_ref[...], wa_ref[...],
                    preferred_element_type=jnp.float32)      # (ho*wo, Cout_p)
    y = jnp.maximum(acc_a * sa_ref[0] + ba_ref[0], 0.0)

    # Intermediate stays in VMEM (bf16), zero-padded for the second conv.
    ypad_ref[pl.ds(1, ho), pl.ds(1, wo), :] = (
        y.reshape(ho, wo, cout).astype(jnp.bfloat16))

    # ---- layer b: conv3x3(1) -> BN (final_bn, no ReLU) ----
    _im2col_3x3(ypad_ref, colb_ref, ho, wo, 1)
    acc_b = jnp.dot(colb_ref[...], wb_ref[...],
                    preferred_element_type=jnp.float32)      # (ho*wo, Cout_p)
    out = acc_b * sb_ref[0] + bb_ref[0]
    o_ref[0] = out.reshape(ho, wo, cout).astype(o_ref.dtype)


def _fused_channel_basic(x_nhwc, a_w, a_scale, a_bias, b_w, b_scale, b_bias,
                         *, stride, out_dtype):
    """x_nhwc: (B, H, W, Cin); a_w: (Cout, Cin, 3, 3); b_w: (Cout, Cout, 3, 3).

    Returns (B, Ho, Wo, Cout_p) with Cout_p = round_up(Cout, 128); caller slices
    the real channels back out.
    """
    B, H, W, Cin = x_nhwc.shape
    Cout = a_w.shape[0]
    Ho = (H + 2 - 3) // stride + 1
    Wo = (W + 2 - 3) // stride + 1

    # Lane-dense channels: pad Cin/Cout to multiples of 128 so every im2col
    # store, VPU epilogue op and output store is unmasked (padded channels have
    # zero weights/bias -> identical results).
    Cin_p = _round_up(Cin, _LANE)
    Cout_p = _round_up(Cout, _LANE)

    # bf16 operands for the MXU; the folded BN affine stays f32.
    x_bf = jnp.pad(x_nhwc.astype(jnp.bfloat16),
                   ((0, 0), (0, 0), (0, 0), (0, Cin_p - Cin)))

    # TODO(synk): in a full network, pre-pack weights / folded-BN once at load
    # time instead of per call.
    def pack_w(w, cin, cin_p, cout, cout_p):
        w = jnp.transpose(w, (2, 3, 1, 0))                       # (3,3,cin,cout)
        w = jnp.pad(w, ((0, 0), (0, 0), (0, cin_p - cin), (0, cout_p - cout)))
        return w.reshape(9 * cin_p, cout_p).astype(jnp.bfloat16)  # tap-major K

    wa = pack_w(a_w, Cin, Cin_p, Cout, Cout_p)
    wb = pack_w(b_w, Cout, Cout_p, Cout, Cout_p)

    def pad_vec(v):
        return jnp.pad(v.astype(jnp.float32), (0, Cout_p - Cout)).reshape(1, Cout_p)

    sa, ba = pad_vec(a_scale), pad_vec(a_bias)
    sb, bb = pad_vec(b_scale), pad_vec(b_bias)

    kernel = functools.partial(_fused_block_kernel, stride=stride)

    def const_spec(shape):
        # Constant across the batch grid -> fetched once; single-buffer it so
        # the weight slabs are not duplicated in VMEM.
        return pl.BlockSpec(shape, lambda b: (0,) * len(shape),
                            pipeline_mode=pl.Buffered(1))

    # Leave headroom for double buffers / compiler scratch: ~48 MiB on v7x
    # (64 MiB physical), ~96 MiB on v5e/v6e (128 MiB physical).
    try:
        vmem_cap = pltpu.get_tpu_info().vmem_capacity_bytes
    except Exception:
        vmem_cap = 64 * 1024 * 1024
    vmem_limit = int(min(vmem_cap * 3 // 4, 100 * 1024 * 1024))

    # TODO(synk): for realistic H/W/C (e.g. 64-128 channels, 112-224 spatial),
    # add an H-tile grid axis with a 2-row input halo (and optionally a Cout
    # tile axis) so the per-step working set fits v7x's 64 MiB VMEM and both
    # TensorCores stay busy at small batch.
    return pl.pallas_call(
        kernel,
        out_shape=jax.ShapeDtypeStruct((B, Ho, Wo, Cout_p), out_dtype),
        grid_spec=pltpu.PrefetchScalarGridSpec(
            num_scalar_prefetch=0,
            grid=(B,),
            in_specs=[
                pl.BlockSpec((1, H, W, Cin_p), lambda b: (b, 0, 0, 0)),
                const_spec((9 * Cin_p, Cout_p)),
                const_spec((1, Cout_p)),
                const_spec((1, Cout_p)),
                const_spec((9 * Cout_p, Cout_p)),
                const_spec((1, Cout_p)),
                const_spec((1, Cout_p)),
            ],
            out_specs=pl.BlockSpec((1, Ho, Wo, Cout_p), lambda b: (b, 0, 0, 0)),
            scratch_shapes=[
                pltpu.VMEM((H + 2, W + 2, Cin_p), jnp.bfloat16),      # xpad
                pltpu.VMEM((Ho * Wo, 9 * Cin_p), jnp.bfloat16),       # im2col a
                pltpu.VMEM((Ho + 2, Wo + 2, Cout_p), jnp.bfloat16),   # ypad
                pltpu.VMEM((Ho * Wo, 9 * Cout_p), jnp.bfloat16),      # im2col b
            ],
        ),
        compiler_params=pltpu.CompilerParams(
            dimension_semantics=("parallel",),
            vmem_limit_bytes=vmem_limit,
        ),
    )(x_bf, wa, sa, ba, wb, sb, bb)


def channel_basic_transform_nhwc(x_nhwc, params, *, stride, out_dtype=None):
    """NHWC -> NHWC forward. In a full network prefer out_dtype=jnp.bfloat16
    and keep activations NHWC end-to-end (no per-block transposes)."""
    eps = 1e-5  # cfg.BN.EPS default
    # Fold BN (eval mode, running stats) into per-channel affine.
    a_scale = params["a_bn_gamma"] * jax.lax.rsqrt(params["a_bn_var"] + eps)
    a_bias = params["a_bn_beta"] - params["a_bn_mean"] * a_scale
    b_scale = params["b_bn_gamma"] * jax.lax.rsqrt(params["b_bn_var"] + eps)
    b_bias = params["b_bn_beta"] - params["b_bn_mean"] * b_scale

    out_dtype = x_nhwc.dtype if out_dtype is None else out_dtype
    Cout = params["a_w"].shape[0]
    y = _fused_channel_basic(x_nhwc, params["a_w"], a_scale, a_bias,
                             params["b_w"], b_scale, b_bias,
                             stride=stride, out_dtype=out_dtype)
    return y[..., :Cout]   # drop the lane-padding channels


def channel_basic_transform(x_nchw, params, *, stride, out_dtype=None):
    """PyTorch-parity wrapper: (B, Cin, H, W) -> (B, Cout, Ho, Wo).

    TODO(synk): in a full network keep activations bf16 NHWC (channel-padded)
    end-to-end and drop these boundary transposes from the hot path.
    """
    x = jnp.transpose(x_nchw, (0, 2, 3, 1))          # NCHW -> NHWC
    y = channel_basic_transform_nhwc(x, params, stride=stride,
                                     out_dtype=out_dtype)
    return jnp.transpose(y, (0, 3, 1, 2))            # NHWC -> NCHW


def init_params(key, dim_in, dim_out):
    k_a, k_b = jax.random.split(key)
    fan_a = dim_in * 9
    fan_b = dim_out * 9
    return {
        # conv weights, PyTorch OIHW layout
        "a_w": jax.random.normal(k_a, (dim_out, dim_in, 3, 3), jnp.float32)
        * (2.0 / fan_a) ** 0.5,
        "b_w": jax.random.normal(k_b, (dim_out, dim_out, 3, 3), jnp.float32)
        * (2.0 / fan_b) ** 0.5,
        # BatchNorm params at PyTorch defaults
        "a_bn_gamma": jnp.ones((dim_out,), jnp.float32),
        "a_bn_beta": jnp.zeros((dim_out,), jnp.float32),
        "a_bn_mean": jnp.zeros((dim_out,), jnp.float32),
        "a_bn_var": jnp.ones((dim_out,), jnp.float32),
        "b_bn_gamma": jnp.ones((dim_out,), jnp.float32),
        "b_bn_beta": jnp.zeros((dim_out,), jnp.float32),
        "b_bn_mean": jnp.zeros((dim_out,), jnp.float32),
        "b_bn_var": jnp.ones((dim_out,), jnp.float32),
    }


if __name__ == "__main__":
    key = jax.random.PRNGKey(0)
    k_x, k_p = jax.random.split(key)

    B, dim_in, dim_out, H, W, stride = 2, 4, 8, 16, 16, 1
    x = jax.random.normal(k_x, (B, dim_in, H, W), jnp.float32)  # NCHW, like PyTorch
    params = init_params(k_p, dim_in, dim_out)

    out = channel_basic_transform(x, params, stride=stride)
    out = jax.block_until_ready(out)
    assert out.shape == (B, dim_out, H // stride, W // stride), out.shape
    print("KERNEL_OK")
</pallas_src>

<mosaic_0001>
module attributes {stable_mosaic.version = 11 : i64} {
  func.func @_fused_block_kernel(%arg0: i32, %arg1: memref<1x16x16x128xbf16, #tpu.memory_space<vmem>>, %arg2: memref<1152x128xbf16, #tpu.memory_space<vmem>>, %arg3: memref<1x128xf32, #tpu.memory_space<vmem>>, %arg4: memref<1x128xf32, #tpu.memory_space<vmem>>, %arg5: memref<1152x128xbf16, #tpu.memory_space<vmem>>, %arg6: memref<1x128xf32, #tpu.memory_space<vmem>>, %arg7: memref<1x128xf32, #tpu.memory_space<vmem>>, %arg8: memref<1x16x16x128xf32, #tpu.memory_space<vmem>>, %arg9: memref<18x18x128xbf16, #tpu.memory_space<vmem>>, %arg10: memref<256x1152xbf16, #tpu.memory_space<vmem>>, %arg11: memref<18x18x128xbf16, #tpu.memory_space<vmem>>, %arg12: memref<256x1152xbf16, #tpu.memory_space<vmem>>) attributes {dimension_semantics = [#tpu.dimension_semantics<parallel>], iteration_bounds = array<i64: 2>, scalar_prefetch = 0 : i64, scratch_operands = 4 : i64, tpu.core_type = #tpu.core_type<tc>, window_params = [{transform_indices = @transform_0, window_bounds = array<i64: 1, 16, 16, 128>}, {pipeline_mode = #tpu.pipeline_mode<synchronous>, transform_indices = @transform_1, window_bounds = array<i64: 1152, 128>}, {pipeline_mode = #tpu.pipeline_mode<synchronous>, transform_indices = @transform_2, window_bounds = array<i64: 1, 128>}, {pipeline_mode = #tpu.pipeline_mode<synchronous>, transform_indices = @transform_3, window_bounds = array<i64: 1, 128>}, {pipeline_mode = #tpu.pipeline_mode<synchronous>, transform_indices = @transform_4, window_bounds = array<i64: 1152, 128>}, {pipeline_mode = #tpu.pipeline_mode<synchronous>, transform_indices = @transform_5, window_bounds = array<i64: 1, 128>}, {pipeline_mode = #tpu.pipeline_mode<synchronous>, transform_indices = @transform_6, window_bounds = array<i64: 1, 128>}, {transform_indices = @transform_7, window_bounds = array<i64: 1, 16, 16, 128>}]} {
    %cst = arith.constant 0.000000e+00 : bf16
    %0 = vector.broadcast %cst : bf16 to vector<1x18x128xbf16>
    %c0 = arith.constant 0 : index
    %c0_0 = arith.constant 0 : index
    %c0_1 = arith.constant 0 : index
    %1 = vector.load %arg9[%c0, %c0_0, %c0_1] : memref<18x18x128xbf16, #tpu.memory_space<vmem>>, vector<1x18x128xbf16>
    tpu.vector_store %arg9[%c0, %c0_0, %c0_1], %0 {strides = array<i32>} : memref<18x18x128xbf16, #tpu.memory_space<vmem>>, vector<1x18x128xbf16>,
    %c17 = arith.constant 17 : index
    %c0_2 = arith.constant 0 : index
    %c0_3 = arith.constant 0 : index
    %2 = vector.load %arg9[%c17, %c0_2, %c0_3] : memref<18x18x128xbf16, #tpu.memory_space<vmem>>, vector<1x18x128xbf16>
    tpu.vector_store %arg9[%c17, %c0_2, %c0_3], %0 {strides = array<i32>} : memref<18x18x128xbf16, #tpu.memory_space<vmem>>, vector<1x18x128xbf16>,
    %cst_4 = arith.constant 0.000000e+00 : bf16
    %3 = vector.broadcast %cst_4 : bf16 to vector<18x1x128xbf16>
    %c0_5 = arith.constant 0 : index
    %c0_6 = arith.constant 0 : index
    %c0_7 = arith.constant 0 : index
    %4 = vector.load %arg9[%c0_5, %c0_6, %c0_7] : memref<18x18x128xbf16, #tpu.memory_space<vmem>>, vector<18x1x128xbf16>
    tpu.vector_store %arg9[%c0_5, %c0_6, %c0_7], %3 {strides = array<i32>} : memref<18x18x128xbf16, #tpu.memory_space<vmem>>, vector<18x1x128xbf16>,
    %c0_8 = arith.constant 0 : index
    %c17_9 = arith.constant 17 : index
    %c0_10 = arith.constant 0 : index
    %5 = vector.load %arg9[%c0_8, %c17_9, %c0_10] : memref<18x18x128xbf16, #tpu.memory_space<vmem>>, vector<18x1x128xbf16>
    tpu.vector_store %arg9[%c0_8, %c17_9, %c0_10], %3 {strides = array<i32>} : memref<18x18x128xbf16, #tpu.memory_space<vmem>>, vector<18x1x128xbf16>,
    %cst_11 = arith.constant 0.000000e+00 : bf16
    %6 = vector.broadcast %cst_11 : bf16 to vector<1x18x128xbf16>
    %c0_12 = arith.constant 0 : index
    %c0_13 = arith.constant 0 : index
    %c0_14 = arith.constant 0 : index
    %7 = vector.load %arg11[%c0_12, %c0_13, %c0_14] : memref<18x18x128xbf16, #tpu.memory_space<vmem>>, vector<1x18x128xbf16>
    tpu.vector_store %arg11[%c0_12, %c0_13, %c0_14], %6 {strides = array<i32>} : memref<18x18x128xbf16, #tpu.memory_space<vmem>>, vector<1x18x128xbf16>,
    %c17_15 = arith.constant 17 : index
    %c0_16 = arith.constant 0 : index
    %c0_17 = arith.constant 0 : index
    %8 = vector.load %arg11[%c17_15, %c0_16, %c0_17] : memref<18x18x128xbf16, #tpu.memory_space<vmem>>, vector<1x18x128xbf16>
    tpu.vector_store %arg11[%c17_15, %c0_16, %c0_17], %6 {strides = array<i32>} : memref<18x18x128xbf16, #tpu.memory_space<vmem>>, vector<1x18x128xbf16>,
    %cst_18 = arith.constant 0.000000e+00 : bf16
    %9 = vector.broadcast %cst_18 : bf16 to vector<18x1x128xbf16>
    %c0_19 = arith.constant 0 : index
    %c0_20 = arith.constant 0 : index
    %c0_21 = arith.constant 0 : index
    %10 = vector.load %arg11[%c0_19, %c0_20, %c0_21] : memref<18x18x128xbf16, #tpu.memory_space<vmem>>, vector<18x1x128xbf16>
    tpu.vector_store %arg11[%c0_19, %c0_20, %c0_21], %9 {strides = array<i32>} : memref<18x18x128xbf16, #tpu.memory_space<vmem>>, vector<18x1x128xbf16>,
    %c0_22 = arith.constant 0 : index
    %c17_23 = arith.constant 17 : index
    %c0_24 = arith.constant 0 : index
    %11 = vector.load %arg11[%c0_22, %c17_23, %c0_24] : memref<18x18x128xbf16, #tpu.memory_space<vmem>>, vector<18x1x128xbf16>
    tpu.vector_store %arg11[%c0_22, %c17_23, %c0_24], %9 {strides = array<i32>} : memref<18x18x128xbf16, #tpu.memory_space<vmem>>, vector<18x1x128xbf16>,
    %c0_25 = arith.constant 0 : index
    %c0_26 = arith.constant 0 : index
    %c0_27 = arith.constant 0 : index
    %c0_28 = arith.constant 0 : index
    %12 = vector.load %arg1[%c0_25, %c0_26, %c0_27, %c0_28] : memref<1x16x16x128xbf16, #tpu.memory_space<vmem>>, vector<1x16x16x128xbf16>
    %13 = vector.shape_cast %12 : vector<1x16x16x128xbf16> to vector<16x16x128xbf16>
    %c1 = arith.constant 1 : index
    %c1_29 = arith.constant 1 : index
    %c0_30 = arith.constant 0 : index
    %14 = vector.load %arg9[%c1, %c1_29, %c0_30] : memref<18x18x128xbf16, #tpu.memory_space<vmem>>, vector<16x16x128xbf16>
    tpu.vector_store %arg9[%c1, %c1_29, %c0_30], %13 {strides = array<i32>} : memref<18x18x128xbf16, #tpu.memory_space<vmem>>, vector<16x16x128xbf16>,
    %c0_31 = arith.constant 0 : index
    %c0_32 = arith.constant 0 : index
    %c0_33 = arith.constant 0 : index
    %15 = vector.load %arg9[%c0_31, %c0_32, %c0_33] : memref<18x18x128xbf16, #tpu.memory_space<vmem>>, vector<16x16x128xbf16>
    %16 = vector.shape_cast %15 : vector<16x16x128xbf16> to vector<256x128xbf16>
    %c0_34 = arith.constant 0 : index
    %c0_35 = arith.constant 0 : index
    %17 = vector.load %arg10[%c0_34, %c0_35] : memref<256x1152xbf16, #tpu.memory_space<vmem>>, vector<256x128xbf16>
    tpu.vector_store %arg10[%c0_34, %c0_35], %16 {strides = array<i32>} : memref<256x1152xbf16, #tpu.memory_space<vmem>>, vector<256x128xbf16>,
    %c0_36 = arith.constant 0 : index
    %c1_37 = arith.constant 1 : index
    %c0_38 = arith.constant 0 : index
    %18 = vector.load %arg9[%c0_36, %c1_37, %c0_38] : memref<18x18x128xbf16, #tpu.memory_space<vmem>>, vector<16x16x128xbf16>
    %19 = vector.shape_cast %18 : vector<16x16x128xbf16> to vector<256x128xbf16>
    %c0_39 = arith.constant 0 : index
    %c128 = arith.constant 128 : index
    %20 = vector.load %arg10[%c0_39, %c128] : memref<256x1152xbf16, #tpu.memory_space<vmem>>, vector<256x128xbf16>
    tpu.vector_store %arg10[%c0_39, %c128], %19 {strides = array<i32>} : memref<256x1152xbf16, #tpu.memory_space<vmem>>, vector<256x128xbf16>,
    %c0_40 = arith.constant 0 : index
    %c2 = arith.constant 2 : index
    %c0_41 = arith.constant 0 : index
    %21 = vector.load %arg9[%c0_40, %c2, %c0_41] : memref<18x18x128xbf16, #tpu.memory_space<vmem>>, vector<16x16x128xbf16>
    %22 = vector.shape_cast %21 : vector<16x16x128xbf16> to vector<256x128xbf16>
    %c0_42 = arith.constant 0 : index
    %c256 = arith.constant 256 : index
    %23 = vector.load %arg10[%c0_42, %c256] : memref<256x1152xbf16, #tpu.memory_space<vmem>>, vector<256x128xbf16>
    tpu.vector_store %arg10[%c0_42, %c256], %22 {strides = array<i32>} : memref<256x1152xbf16, #tpu.memory_space<vmem>>, vector<256x128xbf16>,
    %c1_43 = arith.constant 1 : index
    %c0_44 = arith.constant 0 : index
    %c0_45 = arith.constant 0 : index
    %24 = vector.load %arg9[%c1_43, %c0_44, %c0_45] : memref<18x18x128xbf16, #tpu.memory_space<vmem>>, vector<16x16x128xbf16>
    %25 = vector.shape_cast %24 : vector<16x16x128xbf16> to vector<256x128xbf16>
    %c0_46 = arith.constant 0 : index
    %c384 = arith.constant 384 : index
    %26 = vector.load %arg10[%c0_46, %c384] : memref<256x1152xbf16, #tpu.memory_space<vmem>>, vector<256x128xbf16>
    tpu.vector_store %arg10[%c0_46, %c384], %25 {strides = array<i32>} : memref<256x1152xbf16, #tpu.memory_space<vmem>>, vector<256x128xbf16>,
    %c1_47 = arith.constant 1 : index
    %c1_48 = arith.constant 1 : index
    %c0_49 = arith.constant 0 : index
    %27 = vector.load %arg9[%c1_47, %c1_48, %c0_49] : memref<18x18x128xbf16, #tpu.memory_space<vmem>>, vector<16x16x128xbf16>
    %28 = vector.shape_cast %27 : vector<16x16x128xbf16> to vector<256x128xbf16>
    %c0_50 = arith.constant 0 : index
    %c512 = arith.constant 512 : index
    %29 = vector.load %arg10[%c0_50, %c512] : memref<256x1152xbf16, #tpu.memory_space<vmem>>, vector<256x128xbf16>
    tpu.vector_store %arg10[%c0_50, %c512], %28 {strides = array<i32>} : memref<256x1152xbf16, #tpu.memory_space<vmem>>, vector<256x128xbf16>,
    %c1_51 = arith.constant 1 : index
    %c2_52 = arith.constant 2 : index
    %c0_53 = arith.constant 0 : index
    %30 = vector.load %arg9[%c1_51, %c2_52, %c0_53] : memref<18x18x128xbf16, #tpu.memory_space<vmem>>, vector<16x16x128xbf16>
    %31 = vector.shape_cast %30 : vector<16x16x128xbf16> to vector<256x128xbf16>
    %c0_54 = arith.constant 0 : index
    %c640 = arith.constant 640 : index
    %32 = vector.load %arg10[%c0_54, %c640] : memref<256x1152xbf16, #tpu.memory_space<vmem>>, vector<256x128xbf16>
    tpu.vector_store %arg10[%c0_54, %c640], %31 {strides = array<i32>} : memref<256x1152xbf16, #tpu.memory_space<vmem>>, vector<256x128xbf16>,
    %c2_55 = arith.constant 2 : index
    %c0_56 = arith.constant 0 : index
    %c0_57 = arith.constant 0 : index
    %33 = vector.load %arg9[%c2_55, %c0_56, %c0_57] : memref<18x18x128xbf16, #tpu.memory_space<vmem>>, vector<16x16x128xbf16>
    %34 = vector.shape_cast %33 : vector<16x16x128xbf16> to vector<256x128xbf16>
    %c0_58 = arith.constant 0 : index
    %c768 = arith.constant 768 : index
    %35 = vector.load %arg10[%c0_58, %c768] : memref<256x1152xbf16, #tpu.memory_space<vmem>>, vector<256x128xbf16>
    tpu.vector_store %arg10[%c0_58, %c768], %34 {strides = array<i32>} : memref<256x1152xbf16, #tpu.memory_space<vmem>>, vector<256x128xbf16>,
    %c2_59 = arith.constant 2 : index
    %c1_60 = arith.constant 1 : index
    %c0_61 = arith.constant 0 : index
    %36 = vector.load %arg9[%c2_59, %c1_60, %c0_61] : memref<18x18x128xbf16, #tpu.memory_space<vmem>>, vector<16x16x128xbf16>
    %37 = vector.shape_cast %36 : vector<16x16x128xbf16> to vector<256x128xbf16>
    %c0_62 = arith.constant 0 : index
    %c896 = arith.constant 896 : index
    %38 = vector.load %arg10[%c0_62, %c896] : memref<256x1152xbf16, #tpu.memory_space<vmem>>, vector<256x128xbf16>
    tpu.vector_store %arg10[%c0_62, %c896], %37 {strides = array<i32>} : memref<256x1152xbf16, #tpu.memory_space<vmem>>, vector<256x128xbf16>,
    %c2_63 = arith.constant 2 : index
    %c2_64 = arith.constant 2 : index
    %c0_65 = arith.constant 0 : index
    %39 = vector.load %arg9[%c2_63, %c2_64, %c0_65] : memref<18x18x128xbf16, #tpu.memory_space<vmem>>, vector<16x16x128xbf16>
    %40 = vector.shape_cast %39 : vector<16x16x128xbf16> to vector<256x128xbf16>
    %c0_66 = arith.constant 0 : index
    %c1024 = arith.constant 1024 : index
    %41 = vector.load %arg10[%c0_66, %c1024] : memref<256x1152xbf16, #tpu.memory_space<vmem>>, vector<256x128xbf16>
    tpu.vector_store %arg10[%c0_66, %c1024], %40 {strides = array<i32>} : memref<256x1152xbf16, #tpu.memory_space<vmem>>, vector<256x128xbf16>,
    %c0_67 = arith.constant 0 : index
    %c0_68 = arith.constant 0 : index
    %42 = vector.load %arg10[%c0_67, %c0_68] : memref<256x1152xbf16, #tpu.memory_space<vmem>>, vector<256x1152xbf16>
    %c0_69 = arith.constant 0 : index
    %c0_70 = arith.constant 0 : index
    %43 = vector.load %arg2[%c0_69, %c0_70] : memref<1152x128xbf16, #tpu.memory_space<vmem>>, vector<1152x128xbf16>
    %cst_71 = arith.constant dense<0.000000e+00> : vector<256x128xf32>
    %44 = tpu.matmul %42, %43, %cst_71 {dimension_numbers = #tpu.dot_dimension_numbers<[1], [0], [0], [1], [0, 0, 1, 1], [], []>} : vector<256x1152xbf16>, vector<1152x128xbf16>, vector<256x128xf32> -> vector<256x128xf32>
    %c0_72 = arith.constant 0 : index
    %c0_73 = arith.constant 0 : index
    %45 = vector.load %arg3[%c0_72, %c0_73] : memref<1x128xf32, #tpu.memory_space<vmem>>, vector<1x128xf32>
    %46 = vector.shape_cast %45 : vector<1x128xf32> to vector<128xf32>
    %47 = vector.shape_cast %46 : vector<128xf32> to vector<1x128xf32>
    %48 = vector.broadcast %47 : vector<1x128xf32> to vector<256x128xf32>
    %49 = arith.mulf %44, %48 : vector<256x128xf32>
    %c0_74 = arith.constant 0 : index
    %c0_75 = arith.constant 0 : index
    %50 = vector.load %arg4[%c0_74, %c0_75] : memref<1x128xf32, #tpu.memory_space<vmem>>, vector<1x128xf32>
    %51 = vector.shape_cast %50 : vector<1x128xf32> to vector<128xf32>
    %52 = vector.shape_cast %51 : vector<128xf32> to vector<1x128xf32>
    %53 = vector.broadcast %52 : vector<1x128xf32> to vector<256x128xf32>
    %54 = arith.addf %49, %53 : vector<256x128xf32>
    %cst_76 = arith.constant 0.000000e+00 : f32
    %55 = vector.broadcast %cst_76 : f32 to vector<256x128xf32>
    %56 = arith.maximumf %54, %55 : vector<256x128xf32>
    %57 = vector.shape_cast %56 : vector<256x128xf32> to vector<16x16x128xf32>
    %58 = arith.truncf %57 : vector<16x16x128xf32> to vector<16x16x128xbf16>
    %c1_77 = arith.constant 1 : index
    %c1_78 = arith.constant 1 : index
    %c0_79 = arith.constant 0 : index
    %59 = vector.load %arg11[%c1_77, %c1_78, %c0_79] : memref<18x18x128xbf16, #tpu.memory_space<vmem>>, vector<16x16x128xbf16>
    tpu.vector_store %arg11[%c1_77, %c1_78, %c0_79], %58 {strides = array<i32>} : memref<18x18x128xbf16, #tpu.memory_space<vmem>>, vector<16x16x128xbf16>,
    %c0_80 = arith.constant 0 : index
    %c0_81 = arith.constant 0 : index
    %c0_82 = arith.constant 0 : index
    %60 = vector.load %arg11[%c0_80, %c0_81, %c0_82] : memref<18x18x128xbf16, #tpu.memory_space<vmem>>, vector<16x16x128xbf16>
    %61 = vector.shape_cast %60 : vector<16x16x128xbf16> to vector<256x128xbf16>
    %c0_83 = arith.constant 0 : index
    %c0_84 = arith.constant 0 : index
    %62 = vector.load %arg12[%c0_83, %c0_84] : memref<256x1152xbf16, #tpu.memory_space<vmem>>, vector<256x128xbf16>
    tpu.vector_store %arg12[%c0_83, %c0_84], %61 {strides = array<i32>} : memref<256x1152xbf16, #tpu.memory_space<vmem>>, vector<256x128xbf16>,
    %c0_85 = arith.constant 0 : index
    %c1_86 = arith.constant 1 : index
    %c0_87 = arith.constant 0 : index
    %63 = vector.load %arg11[%c0_85, %c1_86, %c0_87] : memref<18x18x128xbf16, #tpu.memory_space<vmem>>, vector<16x16x128xbf16>
    %64 = vector.shape_cast %63 : vector<16x16x128xbf16> to vector<256x128xbf16>
    %c0_88 = arith.constant 0 : index
    %c128_89 = arith.constant 128 : index
    %65 = vector.load %arg12[%c0_88, %c128_89] : memref<256x1152xbf16, #tpu.memory_space<vmem>>, vector<256x128xbf16>
    tpu.vector_store %arg12[%c0_88, %c128_89], %64 {strides = array<i32>} : memref<256x1152xbf16, #tpu.memory_space<vmem>>, vector<256x128xbf16>,
    %c0_90 = arith.constant 0 : index
    %c2_91 = arith.constant 2 : index
    %c0_92 = arith.constant 0 : index
    %66 = vector.load %arg11[%c0_90, %c2_91, %c0_92] : memref<18x18x128xbf16, #tpu.memory_space<vmem>>, vector<16x16x128xbf16>
    %67 = vector.shape_cast %66 : vector<16x16x128xbf16> to vector<256x128xbf16>
    %c0_93 = arith.constant 0 : index
    %c256_94 = arith.constant 256 : index
    %68 = vector.load %arg12[%c0_93, %c256_94] : memref<256x1152xbf16, #tpu.memory_space<vmem>>, vector<256x128xbf16>
    tpu.vector_store %arg12[%c0_93, %c256_94], %67 {strides = array<i32>} : memref<256x1152xbf16, #tpu.memory_space<vmem>>, vector<256x128xbf16>,
    %c1_95 = arith.constant 1 : index
    %c0_96 = arith.constant 0 : index
    %c0_97 = arith.constant 0 : index
    %69 = vector.load %arg11[%c1_95, %c0_96, %c0_97] : memref<18x18x128xbf16, #tpu.memory_space<vmem>>, vector<16x16x128xbf16>
    %70 = vector.shape_cast %69 : vector<16x16x128xbf16> to vector<256x128xbf16>
    %c0_98 = arith.constant 0 : index
    %c384_99 = arith.constant 384 : index
    %71 = vector.load %arg12[%c0_98, %c384_99] : memref<256x1152xbf16, #tpu.memory_space<vmem>>, vector<256x128xbf16>
    tpu.vector_store %arg12[%c0_98, %c384_99], %70 {strides = array<i32>} : memref<256x1152xbf16, #tpu.memory_space<vmem>>, vector<256x128xbf16>,
    %c1_100 = arith.constant 1 : index
    %c1_101 = arith.constant 1 : index
    %c0_102 = arith.constant 0 : index
    %72 = vector.load %arg11[%c1_100, %c1_101, %c0_102] : memref<18x18x128xbf16, #tpu.memory_space<vmem>>, vector<16x16x128xbf16>
    %73 = vector.shape_cast %72 : vector<16x16x128xbf16> to vector<256x128xbf16>
    %c0_103 = arith.constant 0 : index
    %c512_104 = arith.constant 512 : index
    %74 = vector.load %arg12[%c0_103, %c512_104] : memref<256x1152xbf16, #tpu.memory_space<vmem>>, vector<256x128xbf16>
    tpu.vector_store %arg12[%c0_103, %c512_104], %73 {strides = array<i32>} : memref<256x1152xbf16, #tpu.memory_space<vmem>>, vector<256x128xbf16>,
    %c1_105 = arith.constant 1 : index
    %c2_106 = arith.constant 2 : index
    %c0_107 = arith.constant 0 : index
    %75 = vector.load %arg11[%c1_105, %c2_106, %c0_107] : memref<18x18x128xbf16, #tpu.memory_space<vmem>>, vector<16x16x128xbf16>
    %76 = vector.shape_cast %75 : vector<16x16x128xbf16> to vector<256x128xbf16>
    %c0_108 = arith.constant 0 : index
    %c640_109 = arith.constant 640 : index
    %77 = vector.load %arg12[%c0_108, %c640_109] : memref<256x1152xbf16, #tpu.memory_space<vmem>>, vector<256x128xbf16>
    tpu.vector_store %arg12[%c0_108, %c640_109], %76 {strides = array<i32>} : memref<256x1152xbf16, #tpu.memory_space<vmem>>, vector<256x128xbf16>,
    %c2_110 = arith.constant 2 : index
    %c0_111 = arith.constant 0 : index
    %c0_112 = arith.constant 0 : index
    %78 = vector.load %arg11[%c2_110, %c0_111, %c0_112] : memref<18x18x128xbf16, #tpu.memory_space<vmem>>, vector<16x16x128xbf16>
    %79 = vector.shape_cast %78 : vector<16x16x128xbf16> to vector<256x128xbf16>
    %c0_113 = arith.constant 0 : index
    %c768_114 = arith.constant 768 : index
    %80 = vector.load %arg12[%c0_113, %c768_114] : memref<256x1152xbf16, #tpu.memory_space<vmem>>, vector<256x128xbf16>
    tpu.vector_store %arg12[%c0_113, %c768_114], %79 {strides = array<i32>} : memref<256x1152xbf16, #tpu.memory_space<vmem>>, vector<256x128xbf16>,
    %c2_115 = arith.constant 2 : index
    %c1_116 = arith.constant 1 : index
    %c0_117 = arith.constant 0 : index
    %81 = vector.load %arg11[%c2_115, %c1_116, %c0_117] : memref<18x18x128xbf16, #tpu.memory_space<vmem>>, vector<16x16x128xbf16>
    %82 = vector.shape_cast %81 : vector<16x16x128xbf16> to vector<256x128xbf16>
    %c0_118 = arith.constant 0 : index
    %c896_119 = arith.constant 896 : index
    %83 = vector.load %arg12[%c0_118, %c896_119] : memref<256x1152xbf16, #tpu.memory_space<vmem>>, vector<256x128xbf16>
    tpu.vector_store %arg12[%c0_118, %c896_119], %82 {strides = array<i32>} : memref<256x1152xbf16, #tpu.memory_space<vmem>>, vector<256x128xbf16>,
    %c2_120 = arith.constant 2 : index
    %c2_121 = arith.constant 2 : index
    %c0_122 = arith.constant 0 : index
    %84 = vector.load %arg11[%c2_120, %c2_121, %c0_122] : memref<18x18x128xbf16, #tpu.memory_space<vmem>>, vector<16x16x128xbf16>
    %85 = vector.shape_cast %84 : vector<16x16x128xbf16> to vector<256x128xbf16>
    %c0_123 = arith.constant 0 : index
    %c1024_124 = arith.constant 1024 : index
    %86 = vector.load %arg12[%c0_123, %c1024_124] : memref<256x1152xbf16, #tpu.memory_space<vmem>>, vector<256x128xbf16>
    tpu.vector_store %arg12[%c0_123, %c1024_124], %85 {strides = array<i32>} : memref<256x1152xbf16, #tpu.memory_space<vmem>>, vector<256x128xbf16>,
    %c0_125 = arith.constant 0 : index
    %c0_126 = arith.constant 0 : index
    %87 = vector.load %arg12[%c0_125, %c0_126] : memref<256x1152xbf16, #tpu.memory_space<vmem>>, vector<256x1152xbf16>
    %c0_127 = arith.constant 0 : index
    %c0_128 = arith.constant 0 : index
    %88 = vector.load %arg5[%c0_127, %c0_128] : memref<1152x128xbf16, #tpu.memory_space<vmem>>, vector<1152x128xbf16>
    %cst_129 = arith.constant dense<0.000000e+00> : vector<256x128xf32>
    %89 = tpu.matmul %87, %88, %cst_129 {dimension_numbers = #tpu.dot_dimension_numbers<[1], [0], [0], [1], [0, 0, 1, 1], [], []>} : vector<256x1152xbf16>, vector<1152x128xbf16>, vector<256x128xf32> -> vector<256x128xf32>
    %c0_130 = arith.constant 0 : index
    %c0_131 = arith.constant 0 : index
    %90 = vector.load %arg6[%c0_130, %c0_131] : memref<1x128xf32, #tpu.memory_space<vmem>>, vector<1x128xf32>
    %91 = vector.shape_cast %90 : vector<1x128xf32> to vector<128xf32>
    %92 = vector.shape_cast %91 : vector<128xf32> to vector<1x128xf32>
    %93 = vector.broadcast %92 : vector<1x128xf32> to vector<256x128xf32>
    %94 = arith.mulf %89, %93 : vector<256x128xf32>
    %c0_132 = arith.constant 0 : index
    %c0_133 = arith.constant 0 : index
    %95 = vector.load %arg7[%c0_132, %c0_133] : memref<1x128xf32, #tpu.memory_space<vmem>>, vector<1x128xf32>
    %96 = vector.shape_cast %95 : vector<1x128xf32> to vector<128xf32>
    %97 = vector.shape_cast %96 : vector<128xf32> to vector<1x128xf32>
    %98 = vector.broadcast %97 : vector<1x128xf32> to vector<256x128xf32>
    %99 = arith.addf %94, %98 : vector<256x128xf32>
    %100 = vector.shape_cast %99 : vector<256x128xf32> to vector<16x16x128xf32>
    %c0_134 = arith.constant 0 : index
    %c0_135 = arith.constant 0 : index
    %c0_136 = arith.constant 0 : index
    %c0_137 = arith.constant 0 : index
    %101 = vector.load %arg8[%c0_134, %c0_135, %c0_136, %c0_137] : memref<1x16x16x128xf32, #tpu.memory_space<vmem>>, vector<1x16x16x128xf32>
    %102 = vector.shape_cast %101 : vector<1x16x16x128xf32> to vector<16x16x128xf32>
    %103 = vector.shape_cast %100 : vector<16x16x128xf32> to vector<1x16x16x128xf32>
    tpu.vector_store %arg8[%c0_134, %c0_135, %c0_136, %c0_137], %103 {strides = array<i32>} : memref<1x16x16x128xf32, #tpu.memory_space<vmem>>, vector<1x16x16x128xf32>,
    return
  }
  func.func @transform_0(%arg0: i32) -> (i32, i32, i32, i32) {
    %c0_i32 = arith.constant 0 : i32
    %c0_i32_0 = arith.constant 0 : i32
    %c0_i32_1 = arith.constant 0 : i32
    %c0_i32_2 = arith.constant 0 : i32
    return %arg0, %c0_i32, %c0_i32_0, %c0_i32_1 : i32, i32, i32, i32
  }
  func.func @transform_1(%arg0: i32) -> (i32, i32) {
    %c0_i32 = arith.constant 0 : i32
    %c0_i32_0 = arith.constant 0 : i32
    %c0_i32_1 = arith.constant 0 : i32
    return %c0_i32, %c0_i32_0 : i32, i32
  }
  func.func @transform_2(%arg0: i32) -> (i32, i32) {
    %c0_i32 = arith.constant 0 : i32
    %c0_i32_0 = arith.constant 0 : i32
    %c0_i32_1 = arith.constant 0 : i32
    return %c0_i32, %c0_i32_0 : i32, i32
  }
  func.func @transform_3(%arg0: i32) -> (i32, i32) {
    %c0_i32 = arith.constant 0 : i32
    %c0_i32_0 = arith.constant 0 : i32
    %c0_i32_1 = arith.constant 0 : i32
    return %c0_i32, %c0_i32_0 : i32, i32
  }
  func.func @transform_4(%arg0: i32) -> (i32, i32) {
    %c0_i32 = arith.constant 0 : i32
    %c0_i32_0 = arith.constant 0 : i32
    %c0_i32_1 = arith.constant 0 : i32
    return %c0_i32, %c0_i32_0 : i32, i32
  }
  func.func @transform_5(%arg0: i32) -> (i32, i32) {
    %c0_i32 = arith.constant 0 : i32
    %c0_i32_0 = arith.constant 0 : i32
    %c0_i32_1 = arith.constant 0 : i32
    return %c0_i32, %c0_i32_0 : i32, i32
  }
  func.func @transform_6(%arg0: i32) -> (i32, i32) {
    %c0_i32 = arith.constant 0 : i32
    %c0_i32_0 = arith.constant 0 : i32
    %c0_i32_1 = arith.constant 0 : i32
    return %c0_i32, %c0_i32_0 : i32, i32
  }
  func.func @transform_7(%arg0: i32) -> (i32, i32, i32, i32) {
    %c0_i32 = arith.constant 0 : i32
    %c0_i32_0 = arith.constant 0 : i32
    %c0_i32_1 = arith.constant 0 : i32
    %c0_i32_2 = arith.constant 0 : i32
    return %arg0, %c0_i32, %c0_i32_0, %c0_i32_1 : i32, i32, i32, i32
  }
}

</mosaic_0001>

<llo_original>
// kernel: tpu_custom_call.1
$region0: #{tpu_custom_call.1}
  #allocation0 [shape = 'u32[]', space=smem, size = 0x4, offset = 0x4, fixed_abs, tag = 'smem constant byte address 0x4 - core index']
  #allocation1 [shape = 'u32[144,128]{1,0:T(1,128)}', space=vmem, size = 0x12000, scoped, tag = 'internal scratch']
  #allocation2 [shape = 'bf16[18,18,128]{2,1,0:T(8,128)(2,1)}', space=vmem, size = 0x1b000, scoped, tag = 'scratch operand']
  #allocation3 [shape = 'bf16[256,1152]{1,0:T(16,128)(2,1)}', space=vmem, size = 0x90000, scoped, tag = 'scratch operand']
  #allocation4 [shape = 'bf16[18,18,128]{2,1,0:T(8,128)(2,1)}', space=vmem, size = 0x1b000, scoped, tag = 'scratch operand']
  #allocation5 [shape = 'bf16[256,1152]{1,0:T(16,128)(2,1)}', space=vmem, size = 0x90000, scoped, tag = 'scratch operand']
  %s0 = inlined_call_operand.hbm [shape: bf16[2,16,16,128], index: 0, kind: input, shape index: {}]
  %s1 = inlined_call_operand.hbm [shape: bf16[1152,128], index: 1, kind: input, shape index: {}]
  %s2 = inlined_call_operand.vmem [shape: f32[1,128], index: 2, kind: input, shape index: {}]
  %s3 = inlined_call_operand.vmem [shape: f32[1,128], index: 3, kind: input, shape index: {}]
  %s4 = inlined_call_operand.hbm [shape: bf16[1152,128], index: 4, kind: input, shape index: {}]
  %s5 = inlined_call_operand.vmem [shape: f32[1,128], index: 5, kind: input, shape index: {}]
  %s6 = inlined_call_operand.vmem [shape: f32[1,128], index: 6, kind: input, shape index: {}]
  %s7 = inlined_call_operand.hbm [shape: f32[2,16,16,128], index: 7, kind: output, shape index: {}]
  %s8 = sld [smem:[#allocation0]]
  $region73: #{tpu_custom_call.1} parent=0
    _
  %s10 = ssub.s32 1, %s8
  %s11 = scalar_select 0, %s10, %s8
  $region1: #{tpu_custom_call.1} parent=0
    #allocation6 [shape = 'u8[131072]{0}', space=vmem, size = 0x20000, scoped, tag = 'input window, operand 0']
    #allocation7 [shape = 's32[2]{0}', space=sflag, size = 0x8, scoped, tag = 'scoped memory for tpu_custom_call.1']
    #allocation8 [shape = 's32[2]{0}', space=sflag, size = 0x8, scoped, tag = 'scoped memory for tpu_custom_call.1']
    #allocation9 [shape = 'u8[294912]{0}', space=vmem, size = 0x48000, scoped, tag = 'input window, operand 1, single buffered']
    #allocation10 [shape = 's32[1]{0}', space=sflag, size = 0x4, scoped, tag = 'scoped memory for tpu_custom_call.1']
    #allocation11 [shape = 'u8[294912]{0}', space=vmem, size = 0x48000, scoped, tag = 'input window, operand 4, single buffered']
    #allocation12 [shape = 'u8[262144]{0}', space=vmem, size = 0x40000, scoped, tag = 'output window, operand 0']
    %12 = vsyncpa [#allocation7], 0
    %s13 = scalar_lea.sflag [#allocation7], 1
    %14 = vsyncpa %s13, 0
    %15 = vsyncpa [#allocation10], 0
    %16 = vsyncpa [#allocation8], 0
    %s17 = scalar_lea.sflag [#allocation8], 1
    %18 = vsyncpa %s17, 0
    loop: start=0, step=1, limit=4
    $region2: #{tpu_custom_call.1} parent=1 // loop_pre_header
      _
    $region3: #{tpu_custom_call.1} parent=1 // loop_header
      %s20 = sphi 0, %s24
      %p21 = scmp.ge.s32.totalorder %s20, 4
      %s30 = sphi 0, %s32
      %s33 = sphi 0, %s30
      %s34 = sphi 0, %s33
      %s50 = sphi 0, %s34
      %s54 = sphi 0, %s54
      %s56 = sphi 0, %s54
      %s57 = sphi 0, %s56
      %s71 = sphi 0, %s57
      %s75 = sphi 0, %s75
      %s77 = sphi 0, %s75
      %s78 = sphi 0, %s77
      %s92 = sphi 0, %s78
      %s96 = sphi 0, %s96
      %s98 = sphi 0, %s96
      %s99 = sphi 0, %s98
      %s113 = sphi 0, %s99
      %s117 = sphi 0, %s117
      %s119 = sphi 0, %s117
      %s120 = sphi 0, %s119
      %s134 = sphi 0, %s120
      %s138 = sphi 0, %s138
      %s140 = sphi 0, %s138
      %s141 = sphi 0, %s140
      %s155 = sphi 0, %s141
      %s159 = sphi 0, %s159
      %s161 = sphi 0, %s159
      %s162 = sphi 0, %s161
      %s176 = sphi 0, %s162
      %s182 = sphi 0, %s184
      %s185 = sphi 0, %s182
      %s186 = sphi 0, %s185
      %s202 = sphi 0, %s186
    $region4: #{tpu_custom_call.1} parent=1 // loop_header_branch
      %23 = sbr.rel (%p21) target = $region8
    $region5: #{tpu_custom_call.1} parent=1 // loop_body
      %s25 = ssub.s32 %s20, 1
      %s26 = ssub.s32 %s20, 2
      %s27 = sadd.s32 %s20, 1
      %s28 = ssub.s32 %s20, %s27
      %p29 = scmp.eq.s32.totalorder %s28, 0
      %s31 = sadd.s32 %s30, 1
      %s32 = scalar_select %p29, %s30, %s31
      %p35 = pneg %p29
      %p36 = scmp.eq.s32.totalorder %s20, 1
      %p37 = por %p35, %p36
      %p38 = scmp.ne.s32.totalorder %s30, %s33
      %p39 = scmp.eq.s32.totalorder %s20, 0
      %p40 = por %p38, %p39
      %p41 = scmp.ne.s32.totalorder %s30, %s33
      %p42 = scmp.eq.s32.totalorder %s25, 1
      %p43 = por %p41, %p42
      %p44 = scmp.ne.s32.totalorder %s33, %s34
      %p45 = scmp.eq.s32.totalorder %s25, 0
      %p46 = por %p44, %p45
      %p47 = scmp.ne.s32.totalorder %s33, %s34
      %p48 = scmp.eq.s32.totalorder %s26, 1
      %p49 = por %p47, %p48
      %p51 = scmp.ne.s32.totalorder %s34, %s50
      %p52 = scmp.eq.s32.totalorder %s26, 0
      %p53 = por %p51, %p52
      %s55 = sadd.s32 %s54, 1
      %p58 = scmp.eq.s32.totalorder %s20, 1
      %p59 = scmp.ne.s32.totalorder %s54, %s56
      %p60 = scmp.eq.s32.totalorder %s20, 0
      %p61 = por %p59, %p60
      %p62 = scmp.ne.s32.totalorder %s54, %s56
      %p63 = scmp.eq.s32.totalorder %s25, 1
      %p64 = por %p62, %p63
      %p65 = scmp.ne.s32.totalorder %s56, %s57
      %p66 = scmp.eq.s32.totalorder %s25, 0
      %p67 = por %p65, %p66
      %p68 = scmp.ne.s32.totalorder %s56, %s57
      %p69 = scmp.eq.s32.totalorder %s26, 1
      %p70 = por %p68, %p69
      %p72 = scmp.ne.s32.totalorder %s57, %s71
      %p73 = scmp.eq.s32.totalorder %s26, 0
      %p74 = por %p72, %p73
      %s76 = sadd.s32 %s75, 1
      %p79 = scmp.eq.s32.totalorder %s20, 1
      %p80 = scmp.ne.s32.totalorder %s75, %s77
      %p81 = scmp.eq.s32.totalorder %s20, 0
      %p82 = por %p80, %p81
      %p83 = scmp.ne.s32.totalorder %s75, %s77
      %p84 = scmp.eq.s32.totalorder %s25, 1
      %p85 = por %p83, %p84
      %p86 = scmp.ne.s32.totalorder %s77, %s78
      %p87 = scmp.eq.s32.totalorder %s25, 0
      %p88 = por %p86, %p87
      %p89 = scmp.ne.s32.totalorder %s77, %s78
      %p90 = scmp.eq.s32.totalorder %s26, 1
      %p91 = por %p89, %p90
      %p93 = scmp.ne.s32.totalorder %s78, %s92
      %p94 = scmp.eq.s32.totalorder %s26, 0
      %p95 = por %p93, %p94
      %s97 = sadd.s32 %s96, 1
      %p100 = scmp.eq.s32.totalorder %s20, 1
      %p101 = scmp.ne.s32.totalorder %s96, %s98
      %p102 = scmp.eq.s32.totalorder %s20, 0
      %p103 = por %p101, %p102
      %p104 = scmp.ne.s32.totalorder %s96, %s98
      %p105 = scmp.eq.s32.totalorder %s25, 1
      %p106 = por %p104, %p105
      %p107 = scmp.ne.s32.totalorder %s98, %s99
      %p108 = scmp.eq.s32.totalorder %s25, 0
      %p109 = por %p107, %p108
      %p110 = scmp.ne.s32.totalorder %s98, %s99
      %p111 = scmp.eq.s32.totalorder %s26, 1
      %p112 = por %p110, %p111
      %p114 = scmp.ne.s32.totalorder %s99, %s113
      %p115 = scmp.eq.s32.totalorder %s26, 0
      %p116 = por %p114, %p115
      %s118 = sadd.s32 %s117, 1
      %p121 = scmp.eq.s32.totalorder %s20, 1
      %p122 = scmp.ne.s32.totalorder %s117, %s119
      %p123 = scmp.eq.s32.totalorder %s20, 0
      %p124 = por %p122, %p123
      %p125 = scmp.ne.s32.totalorder %s117, %s119
      %p126 = scmp.eq.s32.totalorder %s25, 1
      %p127 = por %p125, %p126
      %p128 = scmp.ne.s32.totalorder %s119, %s120
      %p129 = scmp.eq.s32.totalorder %s25, 0
      %p130 = por %p128, %p129
      %p131 = scmp.ne.s32.totalorder %s119, %s120
      %p132 = scmp.eq.s32.totalorder %s26, 1
      %p133 = por %p131, %p132
      %p135 = scmp.ne.s32.totalorder %s120, %s134
      %p136 = scmp.eq.s32.totalorder %s26, 0
      %p137 = por %p135, %p136
      %s139 = sadd.s32 %s138, 1
      %p142 = scmp.eq.s32.totalorder %s20, 1
      %p143 = scmp.ne.s32.totalorder %s138, %s140
      %p144 = scmp.eq.s32.totalorder %s20, 0
      %p145 = por %p143, %p144
      %p146 = scmp.ne.s32.totalorder %s138, %s140
      %p147 = scmp.eq.s32.totalorder %s25, 1
      %p148 = por %p146, %p147
      %p149 = scmp.ne.s32.totalorder %s140, %s141
      %p150 = scmp.eq.s32.totalorder %s25, 0
      %p151 = por %p149, %p150
      %p152 = scmp.ne.s32.totalorder %s140, %s141
      %p153 = scmp.eq.s32.totalorder %s26, 1
      %p154 = por %p152, %p153
      %p156 = scmp.ne.s32.totalorder %s141, %s155
      %p157 = scmp.eq.s32.totalorder %s26, 0
      %p158 = por %p156, %p157
      %s160 = sadd.s32 %s159, 1
      %p163 = scmp.eq.s32.totalorder %s20, 1
      %p164 = scmp.ne.s32.totalorder %s159, %s161
      %p165 = scmp.eq.s32.totalorder %s20, 0
      %p166 = por %p164, %p165
      %p167 = scmp.ne.s32.totalorder %s159, %s161
      %p168 = scmp.eq.s32.totalorder %s25, 1
      %p169 = por %p167, %p168
      %p170 = scmp.ne.s32.totalorder %s161, %s162
      %p171 = scmp.eq.s32.totalorder %s25, 0
      %p172 = por %p170, %p171
      %p173 = scmp.ne.s32.totalorder %s161, %s162
      %p174 = scmp.eq.s32.totalorder %s26, 1
      %p175 = por %p173, %p174
      %p177 = scmp.ne.s32.totalorder %s162, %s176
      %p178 = scmp.eq.s32.totalorder %s26, 0
      %p179 = por %p177, %p178
      %s180 = ssub.s32 %s20, %s27
      %p181 = scmp.eq.s32.totalorder %s180, 0
      %s183 = sadd.s32 %s182, 1
      %s184 = scalar_select %p181, %s182, %s183
      %p187 = pneg %p181
      %p188 = scmp.eq.s32.totalorder %s20, 1
      %p189 = por %p187, %p188
      %p190 = scmp.ne.s32.totalorder %s182, %s185
      %p191 = scmp.eq.s32.totalorder %s20, 0
      %p192 = por %p190, %p191
      %p193 = scmp.ne.s32.totalorder %s182, %s185
      %p194 = scmp.eq.s32.totalorder %s25, 1
      %p195 = por %p193, %p194
      %p196 = scmp.ne.s32.totalorder %s185, %s186
      %p197 = scmp.eq.s32.totalorder %s25, 0
      %p198 = por %p196, %p197
      %p199 = scmp.ne.s32.totalorder %s185, %s186
      %p200 = scmp.eq.s32.totalorder %s26, 1
      %p201 = por %p199, %p200
      %p203 = scmp.ne.s32.totalorder %s186, %s202
      %p204 = scmp.eq.s32.totalorder %s26, 0
      %p205 = por %p203, %p204
      %p206 = scmp.le.s32.totalorder 1, %s20
      %p207 = scmp.lt.s32.totalorder %s20, 3
      %p208 = pnand %p206, %p207
      %p209 = pneg %p208
      // Predicated region
      $region9: #{tpu_custom_call.1} parent=5 // pred_check
        _
      $region10: #{tpu_custom_call.1} parent=5 // pred_check_branch
        %211 = sbr.rel (%p208) target = $region12
      $region11: #{tpu_custom_call.1} parent=5 // pred_region
        %s212 = ssub.s32 %s20, 1
        // Predicated region
        $region13: #{tpu_custom_call.1} parent=11 // pred_check
          %p213 = pneg %p67
        $region14: #{tpu_custom_call.1} parent=11 // pred_check_branch
          %215 = sbr.rel (%p213) target = $region16
        $region15: #{tpu_custom_call.1} parent=11 // pred_region
          %s217 = ssub.s32 9216, 9216
          %218 = vsyncadd [#allocation10], %s217
          %s219 = sshll.u32 [#allocation9], 4
          %s220 = int_to_ptr.vmem [resolvable:$true] %s219
          %225 = dma.hbm_to_vmem [thread:$0]  %s1, 9216, %s220, [#allocation10], 64, 64, 4
        $region16: #{tpu_custom_call.1} parent=11 // pred_fallthru
          _
        // Predicated region
        $region17: #{tpu_custom_call.1} parent=11 // pred_check
          %p226 = pneg %p88
        $region18: #{tpu_custom_call.1} parent=11 // pred_check_branch
          %228 = sbr.rel (%p226) target = $region20
        $region19: #{tpu_custom_call.1} parent=11 // pred_region
          _
        $region20: #{tpu_custom_call.1} parent=11 // pred_fallthru
          _
        // Predicated region
        $region21: #{tpu_custom_call.1} parent=11 // pred_check
          %p229 = pneg %p109
        $region22: #{tpu_custom_call.1} parent=11 // pred_check_branch
          %231 = sbr.rel (%p229) target = $region24
        $region23: #{tpu_custom_call.1} parent=11 // pred_region
          _
        $region24: #{tpu_custom_call.1} parent=11 // pred_fallthru
          _
        // Predicated region
        $region25: #{tpu_custom_call.1} parent=11 // pred_check
          %p232 = pneg %p130
        $region26: #{tpu_custom_call.1} parent=11 // pred_check_branch
          %234 = sbr.rel (%p232) target = $region28
        $region27: #{tpu_custom_call.1} parent=11 // pred_region
          %s236 = ssub.s32 9216, 9216
          %237 = vsyncadd [#allocation10], %s236
          %s238 = sshll.u32 [#allocation11], 4
          %s239 = int_to_ptr.vmem [resolvable:$true] %s238
          %244 = dma.hbm_to_vmem [thread:$0]  %s4, 9216, %s239, [#allocation10], 64, 64, 4
        $region28: #{tpu_custom_call.1} parent=11 // pred_fallthru
          _
        // Predicated region
        $region29: #{tpu_custom_call.1} parent=11 // pred_check
          %p245 = pneg %p151
        $region30: #{tpu_custom_call.1} parent=11 // pred_check_branch
          %247 = sbr.rel (%p245) target = $region32
        $region31: #{tpu_custom_call.1} parent=11 // pred_region
          _
        $region32: #{tpu_custom_call.1} parent=11 // pred_fallthru
          _
        // Predicated region
        $region33: #{tpu_custom_call.1} parent=11 // pred_check
          %p248 = pneg %p172
        $region34: #{tpu_custom_call.1} parent=11 // pred_check_branch
          %250 = sbr.rel (%p248) target = $region36
        $region35: #{tpu_custom_call.1} parent=11 // pred_region
          _
        $region36: #{tpu_custom_call.1} parent=11 // pred_fallthru
          _
      $region12: #{tpu_custom_call.1} parent=5 // pred_fallthru
        _
      %p251 = scmp.lt.s32.totalorder %s20, 2
      // Predicated region
      $region37: #{tpu_custom_call.1} parent=5 // pred_check
        %p252 = pneg %p251
      $region38: #{tpu_custom_call.1} parent=5 // pred_check_branch
        %254 = sbr.rel (%p252) target = $region40
      $region39: #{tpu_custom_call.1} parent=5 // pred_region
        // Predicated region
        $region41: #{tpu_custom_call.1} parent=39 // pred_check
          %p255 = pneg %p40
        $region42: #{tpu_custom_call.1} parent=39 // pred_check_branch
          %257 = sbr.rel (%p255) target = $region44
        $region43: #{tpu_custom_call.1} parent=39 // pred_region
          %s258 = sand.u32 %s30, 1
          %s259 = scalar_lea.sflag [#allocation7], %s258
          %s260 = sand.u32 %s30, 1
          %s261 = smul.addr %s260, 128
          %s262 = scalar_lea.vmem [#allocation6], %s261
          %s264 = ssub.s32 2048, 2048
          %265 = vsyncadd %s259, %s264
          %s266 = smul.addr %s20, 32
          %s267 = smul.addr %s266, 64
          %s268 = scalar_lea.hbm %s0, %s267
          %s269 = sshll.u32 %s262, 4
          %s270 = int_to_ptr.vmem [resolvable:$true] %s269
          %275 = dma.hbm_to_vmem [thread:$0]  %s268, 2048, %s270, %s259, 64, 64, 4
        $region44: #{tpu_custom_call.1} parent=39 // pred_fallthru
          _
      $region40: #{tpu_custom_call.1} parent=5 // pred_fallthru
        _
      %p276 = scmp.le.s32.totalorder 1, %s20
      %p277 = scmp.lt.s32.totalorder %s20, 3
      %p278 = pnand %p276, %p277
      %p279 = pneg %p278
      // Predicated region
      $region45: #{tpu_custom_call.1} parent=5 // pred_check
        _
      $region46: #{tpu_custom_call.1} parent=5 // pred_check_branch
        %281 = sbr.rel (%p278) target = $region48
      $region47: #{tpu_custom_call.1} parent=5 // pred_region
        %s282 = ssub.s32 %s20, 1
        %s283 = sand.u32 %s33, 1
        %s284 = scalar_lea.sflag [#allocation7], %s283
        %s285 = sand.u32 %s33, 1
        %s286 = smul.addr %s285, 128
        %s287 = scalar_lea.vmem [#allocation6], %s286
        // Predicated region
        $region49: #{tpu_custom_call.1} parent=47 // pred_check
          %p288 = pneg %p46
        $region50: #{tpu_custom_call.1} parent=47 // pred_check_branch
          %290 = sbr.rel (%p288) target = $region52
        $region51: #{tpu_custom_call.1} parent=47 // pred_region
          %291 = dma.done %s284, 2048
        $region52: #{tpu_custom_call.1} parent=47 // pred_fallthru
          _
        // Predicated region
        $region53: #{tpu_custom_call.1} parent=47 // pred_check
          %p292 = pneg %p67
        $region54: #{tpu_custom_call.1} parent=47 // pred_check_branch
          %294 = sbr.rel (%p292) target = $region56
        $region55: #{tpu_custom_call.1} parent=47 // pred_region
          %295 = dma.done [#allocation10], 9216
        $region56: #{tpu_custom_call.1} parent=47 // pred_fallthru
          _
        // Predicated region
        $region57: #{tpu_custom_call.1} parent=47 // pred_check
          %p296 = pneg %p130
        $region58: #{tpu_custom_call.1} parent=47 // pred_check_branch
          %298 = sbr.rel (%p296) target = $region60
        $region59: #{tpu_custom_call.1} parent=47 // pred_region
          %299 = dma.done [#allocation10], 9216
        $region60: #{tpu_custom_call.1} parent=47 // pred_fallthru
          _
        %s300 = sand.u32 %s33, 1
        %s301 = scalar_lea.sflag [#allocation7], %s300
        %s302 = sand.u32 %s33, 1
        %s303 = smul.addr %s302, 128
        %s304 = scalar_lea.vmem [#allocation6], %s303
        %p305 = pneg %p46
        %p306 = pneg %p43
        %p307 = pneg %p67
        %p308 = pneg %p64
        %p309 = pneg %p88
        %p310 = pneg %p85
        %p311 = pneg %p109
        %p312 = pneg %p106
        %p313 = pneg %p130
        %p314 = pneg %p127
        %p315 = pneg %p151
        %p316 = pneg %p148
        %p317 = pneg %p172
        %p318 = pneg %p169
        %p319 = pneg %p198
        %p320 = pneg %p195
        %s321 = sand.u32 %s185, 1
        %s322 = scalar_lea.sflag [#allocation8], %s321
        %s323 = sand.u32 %s185, 1
        %s324 = smul.addr %s323, 256
        %s325 = scalar_lea.vmem [#allocation12], %s324
        %327 = vst [vmem:[#allocation2] sm:$0xf] 0
        %328 = vst [vmem:[#allocation2 + $0x4] sm:$0xf] 0
        %329 = vst [vmem:[#allocation2 + $0x8] sm:$0x1] 0
        %s330 = scalar_lea.vmem [#allocation2], 204
        %331 = vst [vmem:[%s330] sm:$0xf] 0
        %332 = vst [vmem:[%s330 + $0x4] sm:$0xf] 0
        %333 = vst [vmem:[%s330 + $0x8] sm:$0x1] 0
        %vm334 = vcmask 1040384
        %vm335 = vsmask.f32 256
        %vm336 = vmand %vm334, %vm335
        %v337 = vld [vmem:[#allocation2] sm:$0x1]
        %v338 = vsel %vm336, 0, %v337
        %339 = vst [vmem:[#allocation2] sm:$0x1] %v338
        %v340 = vld [vmem:[#allocation2 + $0xc] sm:$0x1]
        %v341 = vsel %vm336, 0, %v340
        %342 = vst [vmem:[#allocation2 + $0xc] sm:$0x1] %v341
        %v343 = vld [vmem:[#allocation2 + $0x18] sm:$0x1]
        %v344 = vsel %vm336, 0, %v343
        %345 = vst [vmem:[#allocation2 + $0x18] sm:$0x1] %v344
        %v346 = vld [vmem:[#allocation2 + $0x24] sm:$0x1]
        %v347 = vsel %vm336, 0, %v346
        %348 = vst [vmem:[#allocation2 + $0x24] sm:$0x1] %v347
        %v349 = vld [vmem:[#allocation2 + $0x30] sm:$0x1]
        %v350 = vsel %vm336, 0, %v349
        %351 = vst [vmem:[#allocation2 + $0x30] sm:$0x1] %v350
        %v352 = vld [vmem:[#allocation2 + $0x3c] sm:$0x1]
        %v353 = vsel %vm336, 0, %v352
        %354 = vst [vmem:[#allocation2 + $0x3c] sm:$0x1] %v353
        %v355 = vld [vmem:[#allocation2 + $0x48] sm:$0x1]
        %v356 = vsel %vm336, 0, %v355
        %357 = vst [vmem:[#allocation2 + $0x48] sm:$0x1] %v356
        %v358 = vld [vmem:[#allocation2 + $0x54] sm:$0x1]
        %v359 = vsel %vm336, 0, %v358
        %360 = vst [vmem:[#allocation2 + $0x54] sm:$0x1] %v359
        %v361 = vld [vmem:[#allocation2 + $0x60] sm:$0x1]
        %v362 = vsel %vm336, 0, %v361
        %363 = vst [vmem:[#allocation2 + $0x60] sm:$0x1] %v362
        %v364 = vld [vmem:[#allocation2 + $0x6c] sm:$0x1]
        %v365 = vsel %vm336, 0, %v364
        %366 = vst [vmem:[#allocation2 + $0x6c] sm:$0x1] %v365
        %v367 = vld [vmem:[#allocation2 + $0x78] sm:$0x1]
        %v368 = vsel %vm336, 0, %v367
        %369 = vst [vmem:[#allocation2 + $0x78] sm:$0x1] %v368
        %v370 = vld [vmem:[#allocation2 + $0x84] sm:$0x1]
        %v371 = vsel %vm336, 0, %v370
        %372 = vst [vmem:[#allocation2 + $0x84] sm:$0x1] %v371
        %v373 = vld [vmem:[#allocation2 + $0x90] sm:$0x1]
        %v374 = vsel %vm336, 0, %v373
        %375 = vst [vmem:[#allocation2 + $0x90] sm:$0x1] %v374
        %v376 = vld [vmem:[#allocation2 + $0x9c] sm:$0x1]
        %v377 = vsel %vm336, 0, %v376
        %378 = vst [vmem:[#allocation2 + $0x9c] sm:$0x1] %v377
        %v379 = vld [vmem:[#allocation2 + $0xa8] sm:$0x1]
        %v380 = vsel %vm336, 0, %v379
        %381 = vst [vmem:[#allocation2 + $0xa8] sm:$0x1] %v380
        %v382 = vld [vmem:[#allocation2 + $0xb4] sm:$0x1]
        %v383 = vsel %vm336, 0, %v382
        %384 = vst [vmem:[#allocation2 + $0xb4] sm:$0x1] %v383
        %v385 = vld [vmem:[#allocation2 + $0xc0] sm:$0x1]
        %v386 = vsel %vm336, 0, %v385
        %387 = vst [vmem:[#allocation2 + $0xc0] sm:$0x1] %v386
        %v388 = vld [vmem:[#allocation2 + $0xcc] sm:$0x1]
        %v389 = vsel %vm336, 0, %v388
        %390 = vst [vmem:[#allocation2 + $0xcc] sm:$0x1] %v389
        %vm391 = vsmask.f32 7938
        %vm392 = vmand %vm334, %vm391
        %v393 = vld [vmem:[#allocation2 + $0x8] sm:$0x1]
        %v394 = vsel %vm392, 0, %v393
        %395 = vst [vmem:[#allocation2 + $0x8] sm:$0x1] %v394
        %v396 = vld [vmem:[#allocation2 + $0x14] sm:$0x1]
        %v397 = vsel %vm392, 0, %v396
        %398 = vst [vmem:[#allocation2 + $0x14] sm:$0x1] %v397
        %v399 = vld [vmem:[#allocation2 + $0x20] sm:$0x1]
        %v400 = vsel %vm392, 0, %v399
        %401 = vst [vmem:[#allocation2 + $0x20] sm:$0x1] %v400
        %v402 = vld [vmem:[#allocation2 + $0x2c] sm:$0x1]
        %v403 = vsel %vm392, 0, %v402
        %404 = vst [vmem:[#allocation2 + $0x2c] sm:$0x1] %v403
        %v405 = vld [vmem:[#allocation2 + $0x38] sm:$0x1]
        %v406 = vsel %vm392, 0, %v405
        %407 = vst [vmem:[#allocation2 + $0x38] sm:$0x1] %v406
        %v408 = vld [vmem:[#allocation2 + $0x44] sm:$0x1]
        %v409 = vsel %vm392, 0, %v408
        %410 = vst [vmem:[#allocation2 + $0x44] sm:$0x1] %v409
        %v411 = vld [vmem:[#allocation2 + $0x50] sm:$0x1]
        %v412 = vsel %vm392, 0, %v411
        %413 = vst [vmem:[#allocation2 + $0x50] sm:$0x1] %v412
        %v414 = vld [vmem:[#allocation2 + $0x5c] sm:$0x1]
        %v415 = vsel %vm392, 0, %v414
        %416 = vst [vmem:[#allocation2 + $0x5c] sm:$0x1] %v415
        %v417 = vld [vmem:[#allocation2 + $0x68] sm:$0x1]
        %v418 = vsel %vm392, 0, %v417
        %419 = vst [vmem:[#allocation2 + $0x68] sm:$0x1] %v418
        %v420 = vld [vmem:[#allocation2 + $0x74] sm:$0x1]
        %v421 = vsel %vm392, 0, %v420
        %422 = vst [vmem:[#allocation2 + $0x74] sm:$0x1] %v421
        %v423 = vld [vmem:[#allocation2 + $0x80] sm:$0x1]
        %v424 = vsel %vm392, 0, %v423
        %425 = vst [vmem:[#allocation2 + $0x80] sm:$0x1] %v424
        %v426 = vld [vmem:[#allocation2 + $0x8c] sm:$0x1]
        %v427 = vsel %vm392, 0, %v426
        %428 = vst [vmem:[#allocation2 + $0x8c] sm:$0x1] %v427
        %v429 = vld [vmem:[#allocation2 + $0x98] sm:$0x1]
        %v430 = vsel %vm392, 0, %v429
        %431 = vst [vmem:[#allocation2 + $0x98] sm:$0x1] %v430
        %v432 = vld [vmem:[#allocation2 + $0xa4] sm:$0x1]
        %v433 = vsel %vm392, 0, %v432
        %434 = vst [vmem:[#allocation2 + $0xa4] sm:$0x1] %v433
        %v435 = vld [vmem:[#allocation2 + $0xb0] sm:$0x1]
        %v436 = vsel %vm392, 0, %v435
        %437 = vst [vmem:[#allocation2 + $0xb0] sm:$0x1] %v436
        %v438 = vld [vmem:[#allocation2 + $0xbc] sm:$0x1]
        %v439 = vsel %vm392, 0, %v438
        %440 = vst [vmem:[#allocation2 + $0xbc] sm:$0x1] %v439
        %v441 = vld [vmem:[#allocation2 + $0xc8] sm:$0x1]
        %v442 = vsel %vm392, 0, %v441
        %443 = vst [vmem:[#allocation2 + $0xc8] sm:$0x1] %v442
        %v444 = vld [vmem:[#allocation2 + $0xd4] sm:$0x1]
        %v445 = vsel %vm392, 0, %v444
        %446 = vst [vmem:[#allocation2 + $0xd4] sm:$0x1] %v445
        %447 = vst [vmem:[#allocation4] sm:$0xf] 0
        %448 = vst [vmem:[#allocation4 + $0x4] sm:$0xf] 0
        %449 = vst [vmem:[#allocation4 + $0x8] sm:$0x1] 0
        %s450 = scalar_lea.vmem [#allocation4], 204
        %451 = vst [vmem:[%s450] sm:$0xf] 0
        %452 = vst [vmem:[%s450 + $0x4] sm:$0xf] 0
        %453 = vst [vmem:[%s450 + $0x8] sm:$0x1] 0
        %v454 = vld [vmem:[#allocation4] sm:$0x1]
        %v455 = vsel %vm336, 0, %v454
        %456 = vst [vmem:[#allocation4] sm:$0x1] %v455
        %v457 = vld [vmem:[#allocation4 + $0xc] sm:$0x1]
        %v458 = vsel %vm336, 0, %v457
        %459 = vst [vmem:[#allocation4 + $0xc] sm:$0x1] %v458
        %v460 = vld [vmem:[#allocation4 + $0x18] sm:$0x1]
        %v461 = vsel %vm336, 0, %v460
        %462 = vst [vmem:[#allocation4 + $0x18] sm:$0x1] %v461
        %v463 = vld [vmem:[#allocation4 + $0x24] sm:$0x1]
        %v464 = vsel %vm336, 0, %v463
        %465 = vst [vmem:[#allocation4 + $0x24] sm:$0x1] %v464
        %v466 = vld [vmem:[#allocation4 + $0x30] sm:$0x1]
        %v467 = vsel %vm336, 0, %v466
        %468 = vst [vmem:[#allocation4 + $0x30] sm:$0x1] %v467
        %v469 = vld [vmem:[#allocation4 + $0x3c] sm:$0x1]
        %v470 = vsel %vm336, 0, %v469
        %471 = vst [vmem:[#allocation4 + $0x3c] sm:$0x1] %v470
        %v472 = vld [vmem:[#allocation4 + $0x48] sm:$0x1]
        %v473 = vsel %vm336, 0, %v472
        %474 = vst [vmem:[#allocation4 + $0x48] sm:$0x1] %v473
        %v475 = vld [vmem:[#allocation4 + $0x54] sm:$0x1]
        %v476 = vsel %vm336, 0, %v475
        %477 = vst [vmem:[#allocation4 + $0x54] sm:$0x1] %v476
        %v478 = vld [vmem:[#allocation4 + $0x60] sm:$0x1]
        %v479 = vsel %vm336, 0, %v478
        %480 = vst [vmem:[#allocation4 + $0x60] sm:$0x1] %v479
        %v481 = vld [vmem:[#allocation4 + $0x6c] sm:$0x1]
        %v482 = vsel %vm336, 0, %v481
        %483 = vst [vmem:[#allocation4 + $0x6c] sm:$0x1] %v482
        %v484 = vld [vmem:[#allocation4 + $0x78] sm:$0x1]
        %v485 = vsel %vm336, 0, %v484
        %486 = vst [vmem:[#allocation4 + $0x78] sm:$0x1] %v485
        %v487 = vld [vmem:[#allocation4 + $0x84] sm:$0x1]
        %v488 = vsel %vm336, 0, %v487
        %489 = vst [vmem:[#allocation4 + $0x84] sm:$0x1] %v488
        %v490 = vld [vmem:[#allocation4 + $0x90] sm:$0x1]
        %v491 = vsel %vm336, 0, %v490
        %492 = vst [vmem:[#allocation4 + $0x90] sm:$0x1] %v491
        %v493 = vld [vmem:[#allocation4 + $0x9c] sm:$0x1]
        %v494 = vsel %vm336, 0, %v493
        %495 = vst [vmem:[#allocation4 + $0x9c] sm:$0x1] %v494
        %v496 = vld [vmem:[#allocation4 + $0xa8] sm:$0x1]
        %v497 = vsel %vm336, 0, %v496
        %498 = vst [vmem:[#allocation4 + $0xa8] sm:$0x1] %v497
        %v499 = vld [vmem:[#allocation4 + $0xb4] sm:$0x1]
        %v500 = vsel %vm336, 0, %v499
        %501 = vst [vmem:[#allocation4 + $0xb4] sm:$0x1] %v500
        %v502 = vld [vmem:[#allocation4 + $0xc0] sm:$0x1]
        %v503 = vsel %vm336, 0, %v502
        %504 = vst [vmem:[#allocation4 + $0xc0] sm:$0x1] %v503
        %v505 = vld [vmem:[#allocation4 + $0xcc] sm:$0x1]
        %v506 = vsel %vm336, 0, %v505
        %507 = vst [vmem:[#allocation4 + $0xcc] sm:$0x1] %v506
        %v508 = vld [vmem:[#allocation4 + $0x8] sm:$0x1]
        %v509 = vsel %vm392, 0, %v508
        %510 = vst [vmem:[#allocation4 + $0x8] sm:$0x1] %v509
        %v511 = vld [vmem:[#allocation4 + $0x14] sm:$0x1]
        %v512 = vsel %vm392, 0, %v511
        %513 = vst [vmem:[#allocation4 + $0x14] sm:$0x1] %v512
        %v514 = vld [vmem:[#allocation4 + $0x20] sm:$0x1]
        %v515 = vsel %vm392, 0, %v514
        %516 = vst [vmem:[#allocation4 + $0x20] sm:$0x1] %v515
        %v517 = vld [vmem:[#allocation4 + $0x2c] sm:$0x1]
        %v518 = vsel %vm392, 0, %v517
        %519 = vst [vmem:[#allocation4 + $0x2c] sm:$0x1] %v518
        %v520 = vld [vmem:[#allocation4 + $0x38] sm:$0x1]
        %v521 = vsel %vm392, 0, %v520
        %522 = vst [vmem:[#allocation4 + $0x38] sm:$0x1] %v521
        %v523 = vld [vmem:[#allocation4 + $0x44] sm:$0x1]
        %v524 = vsel %vm392, 0, %v523
        %525 = vst [vmem:[#allocation4 + $0x44] sm:$0x1] %v524
        %v526 = vld [vmem:[#allocation4 + $0x50] sm:$0x1]
        %v527 = vsel %vm392, 0, %v526
        %528 = vst [vmem:[#allocation4 + $0x50] sm:$0x1] %v527
        %v529 = vld [vmem:[#allocation4 + $0x5c] sm:$0x1]
        %v530 = vsel %vm392, 0, %v529
        %531 = vst [vmem:[#allocation4 + $0x5c] sm:$0x1] %v530
        %v532 = vld [vmem:[#allocation4 + $0x68] sm:$0x1]
        %v533 = vsel %vm392, 0, %v532
        %534 = vst [vmem:[#allocation4 + $0x68] sm:$0x1] %v533
        %v535 = vld [vmem:[#allocation4 + $0x74] sm:$0x1]
        %v536 = vsel %vm392, 0, %v535
        %537 = vst [vmem:[#allocation4 + $0x74] sm:$0x1] %v536
        %v538 = vld [vmem:[#allocation4 + $0x80] sm:$0x1]
        %v539 = vsel %vm392, 0, %v538
        %540 = vst [vmem:[#allocation4 + $0x80] sm:$0x1] %v539
        %v541 = vld [vmem:[#allocation4 + $0x8c] sm:$0x1]
        %v542 = vsel %vm392, 0, %v541
        %543 = vst [vmem:[#allocation4 + $0x8c] sm:$0x1] %v542
        %v544 = vld [vmem:[#allocation4 + $0x98] sm:$0x1]
        %v545 = vsel %vm392, 0, %v544
        %546 = vst [vmem:[#allocation4 + $0x98] sm:$0x1] %v545
        %v547 = vld [vmem:[#allocation4 + $0xa4] sm:$0x1]
        %v548 = vsel %vm392, 0, %v547
        %549 = vst [vmem:[#allocation4 + $0xa4] sm:$0x1] %v548
        %v550 = vld [vmem:[#allocation4 + $0xb0] sm:$0x1]
        %v551 = vsel %vm392, 0, %v550
        %552 = vst [vmem:[#allocation4 + $0xb0] sm:$0x1] %v551
        %v553 = vld [vmem:[#allocation4 + $0xbc] sm:$0x1]
        %v554 = vsel %vm392, 0, %v553
        %555 = vst [vmem:[#allocation4 + $0xbc] sm:$0x1] %v554
        %v556 = vld [vmem:[#allocation4 + $0xc8] sm:$0x1]
        %v557 = vsel %vm392, 0, %v556
        %558 = vst [vmem:[#allocation4 + $0xc8] sm:$0x1] %v557
        %v559 = vld [vmem:[#allocation4 + $0xd4] sm:$0x1]
        %v560 = vsel %vm392, 0, %v559
        %561 = vst [vmem:[#allocation4 + $0xd4] sm:$0x1] %v560
        %v562 = vld [vmem:[%s287] sm:$0xf]
        %v563 = vld [vmem:[%s287 + $0x4] sm:$0xf]
        %v564 = vld [vmem:[%s287 + $0x8] sm:$0xf]
        %v565 = vld [vmem:[%s287 + $0xc] sm:$0xf]
        %v566 = vld [vmem:[%s287 + $0x10] sm:$0xf]
        %v567 = vld [vmem:[%s287 + $0x14] sm:$0xf]
        %v568 = vld [vmem:[%s287 + $0x18] sm:$0xf]
        %v569 = vld [vmem:[%s287 + $0x1c] sm:$0xf]
        %v570 = vld [vmem:[%s287 + $0x20] sm:$0xf]
        %v571 = vld [vmem:[%s287 + $0x24] sm:$0xf]
        %v572 = vld [vmem:[%s287 + $0x28] sm:$0xf]
        %v573 = vld [vmem:[%s287 + $0x2c] sm:$0xf]
        %v574 = vld [vmem:[%s287 + $0x30] sm:$0xf]
        %v575 = vld [vmem:[%s287 + $0x34] sm:$0xf]
        %v576 = vld [vmem:[%s287 + $0x38] sm:$0xf]
        %v577 = vld [vmem:[%s287 + $0x3c] sm:$0xf]
        %v578 = vld [vmem:[%s287 + $0x40] sm:$0xf]
        %v579 = vld [vmem:[%s287 + $0x44] sm:$0xf]
        %v580 = vld [vmem:[%s287 + $0x48] sm:$0xf]
        %v581 = vld [vmem:[%s287 + $0x4c] sm:$0xf]
        %v582 = vld [vmem:[%s287 + $0x50] sm:$0xf]
        %v583 = vld [vmem:[%s287 + $0x54] sm:$0xf]
        %v584 = vld [vmem:[%s287 + $0x58] sm:$0xf]
        %v585 = vld [vmem:[%s287 + $0x5c] sm:$0xf]
        %v586 = vld [vmem:[%s287 + $0x60] sm:$0xf]
        %v587 = vld [vmem:[%s287 + $0x64] sm:$0xf]
        %v588 = vld [vmem:[%s287 + $0x68] sm:$0xf]
        %v589 = vld [vmem:[%s287 + $0x6c] sm:$0xf]
        %v590 = vld [vmem:[%s287 + $0x70] sm:$0xf]
        %v591 = vld [vmem:[%s287 + $0x74] sm:$0xf]
        %v592 = vld [vmem:[%s287 + $0x78] sm:$0xf]
        %v593 = vld [vmem:[%s287 + $0x7c] sm:$0xf]
        %vm594 = vsmask.f32 4368
        %vm595 = vmor %vm335, %vm594
        %v597 = vshrl.u32 %v562, 16
        %v599 = vrot.slane %v597, 7
        %v600 = vshll.u32 %v562, 16
        %v602 = vor.u32 %v599, %v600
        %v603 = vrot.slane %v599, 4
        %v605 = vshrl.u32 %v563, 16
        %v607 = vrot.slane %v605, 7
        %v608 = vshll.u32 %v563, 16
        %v610 = vor.u32 %v607, %v608
        %v611 = vsel %vm595, %v603, %v610
        %v612 = vrot.slane %v607, 4
        %v614 = vshrl.u32 %v564, 16
        %v616 = vrot.slane %v614, 7
        %v617 = vshll.u32 %v564, 16
        %v619 = vor.u32 %v616, %v617
        %v620 = vrot.slane %v616, 4
        %v622 = vshrl.u32 %v565, 16
        %v624 = vrot.slane %v622, 7
        %v625 = vshll.u32 %v565, 16
        %v627 = vor.u32 %v624, %v625
        %v628 = vsel %vm595, %v620, %v627
        %v629 = vrot.slane %v624, 4
        %v631 = vshrl.u32 %v566, 16
        %v633 = vrot.slane %v631, 7
        %v634 = vshll.u32 %v566, 16
        %v636 = vor.u32 %v633, %v634
        %v637 = vrot.slane %v633, 4
        %v639 = vshrl.u32 %v567, 16
        %v641 = vrot.slane %v639, 7
        %v642 = vshll.u32 %v567, 16
        %v644 = vor.u32 %v641, %v642
        %v645 = vsel %vm595, %v637, %v644
        %v646 = vrot.slane %v641, 4
        %v648 = vshrl.u32 %v568, 16
        %v650 = vrot.slane %v648, 7
        %v651 = vshll.u32 %v568, 16
        %v653 = vor.u32 %v650, %v651
        %v654 = vrot.slane %v650, 4
        %v656 = vshrl.u32 %v569, 16
        %v658 = vrot.slane %v656, 7
        %v659 = vshll.u32 %v569, 16
        %v661 = vor.u32 %v658, %v659
        %v662 = vsel %vm595, %v654, %v661
        %v663 = vrot.slane %v658, 4
        %v665 = vshrl.u32 %v570, 16
        %v667 = vrot.slane %v665, 7
        %v668 = vshll.u32 %v570, 16
        %v670 = vor.u32 %v667, %v668
        %v671 = vrot.slane %v667, 4
        %v673 = vshrl.u32 %v571, 16
        %v675 = vrot.slane %v673, 7
        %v676 = vshll.u32 %v571, 16
        %v678 = vor.u32 %v675, %v676
        %v679 = vsel %vm595, %v671, %v678
        %v680 = vrot.slane %v675, 4
        %v682 = vshrl.u32 %v572, 16
        %v684 = vrot.slane %v682, 7
        %v685 = vshll.u32 %v572, 16
        %v687 = vor.u32 %v684, %v685
        %v688 = vrot.slane %v684, 4
        %v690 = vshrl.u32 %v573, 16
        %v692 = vrot.slane %v690, 7
        %v693 = vshll.u32 %v573, 16
        %v695 = vor.u32 %v692, %v693
        %v696 = vsel %vm595, %v688, %v695
        %v697 = vrot.slane %v692, 4
        %v699 = vshrl.u32 %v574, 16
        %v701 = vrot.slane %v699, 7
        %v702 = vshll.u32 %v574, 16
        %v704 = vor.u32 %v701, %v702
        %v705 = vrot.slane %v701, 4
        %v707 = vshrl.u32 %v575, 16
        %v709 = vrot.slane %v707, 7
        %v710 = vshll.u32 %v575, 16
        %v712 = vor.u32 %v709, %v710
        %v713 = vsel %vm595, %v705, %v712
        %v714 = vrot.slane %v709, 4
        %v716 = vshrl.u32 %v576, 16
        %v718 = vrot.slane %v716, 7
        %v719 = vshll.u32 %v576, 16
        %v721 = vor.u32 %v718, %v719
        %v722 = vrot.slane %v718, 4
        %v724 = vshrl.u32 %v577, 16
        %v726 = vrot.slane %v724, 7
        %v727 = vshll.u32 %v577, 16
        %v729 = vor.u32 %v726, %v727
        %v730 = vsel %vm595, %v722, %v729
        %v731 = vrot.slane %v726, 4
        %v733 = vshrl.u32 %v578, 16
        %v735 = vrot.slane %v733, 7
        %v736 = vshll.u32 %v578, 16
        %v738 = vor.u32 %v735, %v736
        %v739 = vrot.slane %v735, 4
        %v741 = vshrl.u32 %v579, 16
        %v743 = vrot.slane %v741, 7
        %v744 = vshll.u32 %v579, 16
        %v746 = vor.u32 %v743, %v744
        %v747 = vsel %vm595, %v739, %v746
        %v748 = vrot.slane %v743, 4
        %v750 = vshrl.u32 %v580, 16
        %v752 = vrot.slane %v750, 7
        %v753 = vshll.u32 %v580, 16
        %v755 = vor.u32 %v752, %v753
        %v756 = vrot.slane %v752, 4
        %v758 = vshrl.u32 %v581, 16
        %v760 = vrot.slane %v758, 7
        %v761 = vshll.u32 %v581, 16
        %v763 = vor.u32 %v760, %v761
        %v764 = vsel %vm595, %v756, %v763
        %v765 = vrot.slane %v760, 4
        %v767 = vshrl.u32 %v582, 16
        %v769 = vrot.slane %v767, 7
        %v770 = vshll.u32 %v582, 16
        %v772 = vor.u32 %v769, %v770
        %v773 = vrot.slane %v769, 4
        %v775 = vshrl.u32 %v583, 16
        %v777 = vrot.slane %v775, 7
        %v778 = vshll.u32 %v583, 16
        %v780 = vor.u32 %v777, %v778
        %v781 = vsel %vm595, %v773, %v780
        %v782 = vrot.slane %v777, 4
        %v784 = vshrl.u32 %v584, 16
        %v786 = vrot.slane %v784, 7
        %v787 = vshll.u32 %v584, 16
        %v789 = vor.u32 %v786, %v787
        %v790 = vrot.slane %v786, 4
        %v792 = vshrl.u32 %v585, 16
        %v794 = vrot.slane %v792, 7
        %v795 = vshll.u32 %v585, 16
        %v797 = vor.u32 %v794, %v795
        %v798 = vsel %vm595, %v790, %v797
        %v799 = vrot.slane %v794, 4
        %v801 = vshrl.u32 %v586, 16
        %v803 = vrot.slane %v801, 7
        %v804 = vshll.u32 %v586, 16
        %v806 = vor.u32 %v803, %v804
        %v807 = vrot.slane %v803, 4
        %v809 = vshrl.u32 %v587, 16
        %v811 = vrot.slane %v809, 7
        %v812 = vshll.u32 %v587, 16
        %v814 = vor.u32 %v811, %v812
        %v815 = vsel %vm595, %v807, %v814
        %v816 = vrot.slane %v811, 4
        %v818 = vshrl.u32 %v588, 16
        %v820 = vrot.slane %v818, 7
        %v821 = vshll.u32 %v588, 16
        %v823 = vor.u32 %v820, %v821
        %v824 = vrot.slane %v820, 4
        %v826 = vshrl.u32 %v589, 16
        %v828 = vrot.slane %v826, 7
        %v829 = vshll.u32 %v589, 16
        %v831 = vor.u32 %v828, %v829
        %v832 = vsel %vm595, %v824, %v831
        %v833 = vrot.slane %v828, 4
        %v835 = vshrl.u32 %v590, 16
        %v837 = vrot.slane %v835, 7
        %v838 = vshll.u32 %v590, 16
        %v840 = vor.u32 %v837, %v838
        %v841 = vrot.slane %v837, 4
        %v843 = vshrl.u32 %v591, 16
        %v845 = vrot.slane %v843, 7
        %v846 = vshll.u32 %v591, 16
        %v848 = vor.u32 %v845, %v846
        %v849 = vsel %vm595, %v841, %v848
        %v850 = vrot.slane %v845, 4
        %v852 = vshrl.u32 %v592, 16
        %v854 = vrot.slane %v852, 7
        %v855 = vshll.u32 %v592, 16
        %v857 = vor.u32 %v854, %v855
        %v858 = vrot.slane %v854, 4
        %v860 = vshrl.u32 %v593, 16
        %v862 = vrot.slane %v860, 7
        %v863 = vshll.u32 %v593, 16
        %v865 = vor.u32 %v862, %v863
        %v866 = vsel %vm595, %v858, %v865
        %v867 = vrot.slane %v862, 4
        %s916 = scalar_lea.vmem [#allocation2], 12
        %vm917 = vcmask 1043456
        %vm918 = vmand %vm917, %vm391
        %v919 = vld [vmem:[%s916] sm:$0xf]
        %v920 = vsel %vm918, %v602, %v919
        %921 = vst [vmem:[%s916] sm:$0xf] %v920
        %922 = vst [vmem:[%s916 + $0x4] sm:$0xf] %v611
        %v923 = vld [vmem:[%s916 + $0x8] sm:$0x1]
        %v924 = vsel %vm336, %v612, %v923
        %925 = vst [vmem:[%s916 + $0x8] sm:$0x1] %v924
        %v926 = vld [vmem:[%s916 + $0xc] sm:$0xf]
        %v927 = vsel %vm918, %v619, %v926
        %928 = vst [vmem:[%s916 + $0xc] sm:$0xf] %v927
        %929 = vst [vmem:[%s916 + $0x10] sm:$0xf] %v628
        %v930 = vld [vmem:[%s916 + $0x14] sm:$0x1]
        %v931 = vsel %vm336, %v629, %v930
        %932 = vst [vmem:[%s916 + $0x14] sm:$0x1] %v931
        %v933 = vld [vmem:[%s916 + $0x18] sm:$0xf]
        %v934 = vsel %vm918, %v636, %v933
        %935 = vst [vmem:[%s916 + $0x18] sm:$0xf] %v934
        %936 = vst [vmem:[%s916 + $0x1c] sm:$0xf] %v645
        %v937 = vld [vmem:[%s916 + $0x20] sm:$0x1]
        %v938 = vsel %vm336, %v646, %v937
        %939 = vst [vmem:[%s916 + $0x20] sm:$0x1] %v938
        %v940 = vld [vmem:[%s916 + $0x24] sm:$0xf]
        %v941 = vsel %vm918, %v653, %v940
        %942 = vst [vmem:[%s916 + $0x24] sm:$0xf] %v941
        %943 = vst [vmem:[%s916 + $0x28] sm:$0xf] %v662
        %v944 = vld [vmem:[%s916 + $0x2c] sm:$0x1]
        %v945 = vsel %vm336, %v663, %v944
        %946 = vst [vmem:[%s916 + $0x2c] sm:$0x1] %v945
        %v947 = vld [vmem:[%s916 + $0x30] sm:$0xf]
        %v948 = vsel %vm918, %v670, %v947
        %949 = vst [vmem:[%s916 + $0x30] sm:$0xf] %v948
        %950 = vst [vmem:[%s916 + $0x34] sm:$0xf] %v679
        %v951 = vld [vmem:[%s916 + $0x38] sm:$0x1]
        %v952 = vsel %vm336, %v680, %v951
        %953 = vst [vmem:[%s916 + $0x38] sm:$0x1] %v952
        %v954 = vld [vmem:[%s916 + $0x3c] sm:$0xf]
        %v955 = vsel %vm918, %v687, %v954
        %956 = vst [vmem:[%s916 + $0x3c] sm:$0xf] %v955
        %957 = vst [vmem:[%s916 + $0x40] sm:$0xf] %v696
        %v958 = vld [vmem:[%s916 + $0x44] sm:$0x1]
        %v959 = vsel %vm336, %v697, %v958
        %960 = vst [vmem:[%s916 + $0x44] sm:$0x1] %v959
        %v961 = vld [vmem:[%s916 + $0x48] sm:$0xf]
        %v962 = vsel %vm918, %v704, %v961
        %963 = vst [vmem:[%s916 + $0x48] sm:$0xf] %v962
        %964 = vst [vmem:[%s916 + $0x4c] sm:$0xf] %v713
        %v965 = vld [vmem:[%s916 + $0x50] sm:$0x1]
        %v966 = vsel %vm336, %v714, %v965
        %967 = vst [vmem:[%s916 + $0x50] sm:$0x1] %v966
        %v968 = vld [vmem:[%s916 + $0x54] sm:$0xf]
        %v969 = vsel %vm918, %v721, %v968
        %970 = vst [vmem:[%s916 + $0x54] sm:$0xf] %v969
        %971 = vst [vmem:[%s916 + $0x58] sm:$0xf] %v730
        %v972 = vld [vmem:[%s916 + $0x5c] sm:$0x1]
        %v973 = vsel %vm336, %v731, %v972
        %974 = vst [vmem:[%s916 + $0x5c] sm:$0x1] %v973
        %v975 = vld [vmem:[%s916 + $0x60] sm:$0xf]
        %v976 = vsel %vm918, %v738, %v975
        %977 = vst [vmem:[%s916 + $0x60] sm:$0xf] %v976
        %978 = vst [vmem:[%s916 + $0x64] sm:$0xf] %v747
        %v979 = vld [vmem:[%s916 + $0x68] sm:$0x1]
        %v980 = vsel %vm336, %v748, %v979
        %981 = vst [vmem:[%s916 + $0x68] sm:$0x1] %v980
        %v982 = vld [vmem:[%s916 + $0x6c] sm:$0xf]
        %v983 = vsel %vm918, %v755, %v982
        %984 = vst [vmem:[%s916 + $0x6c] sm:$0xf] %v983
        %985 = vst [vmem:[%s916 + $0x70] sm:$0xf] %v764
        %v986 = vld [vmem:[%s916 + $0x74] sm:$0x1]
        %v987 = vsel %vm336, %v765, %v986
        %988 = vst [vmem:[%s916 + $0x74] sm:$0x1] %v987
        %v989 = vld [vmem:[%s916 + $0x78] sm:$0xf]
        %v990 = vsel %vm918, %v772, %v989
        %991 = vst [vmem:[%s916 + $0x78] sm:$0xf] %v990
        %992 = vst [vmem:[%s916 + $0x7c] sm:$0xf] %v781
        %v993 = vld [vmem:[%s916 + $0x80] sm:$0x1]
        %v994 = vsel %vm336, %v782, %v993
        %995 = vst [vmem:[%s916 + $0x80] sm:$0x1] %v994
        %v996 = vld [vmem:[%s916 + $0x84] sm:$0xf]
        %v997 = vsel %vm918, %v789, %v996
        %998 = vst [vmem:[%s916 + $0x84] sm:$0xf] %v997
        %999 = vst [vmem:[%s916 + $0x88] sm:$0xf] %v798
        %v1000 = vld [vmem:[%s916 + $0x8c] sm:$0x1]
        %v1001 = vsel %vm336, %v799, %v1000
        %1002 = vst [vmem:[%s916 + $0x8c] sm:$0x1] %v1001
        %v1003 = vld [vmem:[%s916 + $0x90] sm:$0xf]
        %v1004 = vsel %vm918, %v806, %v1003
        %1005 = vst [vmem:[%s916 + $0x90] sm:$0xf] %v1004
        %1006 = vst [vmem:[%s916 + $0x94] sm:$0xf] %v815
        %v1007 = vld [vmem:[%s916 + $0x98] sm:$0x1]
        %v1008 = vsel %vm336, %v816, %v1007
        %1009 = vst [vmem:[%s916 + $0x98] sm:$0x1] %v1008
        %v1010 = vld [vmem:[%s916 + $0x9c] sm:$0xf]
        %v1011 = vsel %vm918, %v823, %v1010
        %1012 = vst [vmem:[%s916 + $0x9c] sm:$0xf] %v1011
        %1013 = vst [vmem:[%s916 + $0xa0] sm:$0xf] %v832
        %v1014 = vld [vmem:[%s916 + $0xa4] sm:$0x1]
        %v1015 = vsel %vm336, %v833, %v1014
        %1016 = vst [vmem:[%s916 + $0xa4] sm:$0x1] %v1015
        %v1017 = vld [vmem:[%s916 + $0xa8] sm:$0xf]
        %v1018 = vsel %vm918, %v840, %v1017
        %1019 = vst [vmem:[%s916 + $0xa8] sm:$0xf] %v1018
        %1020 = vst [vmem:[%s916 + $0xac] sm:$0xf] %v849
        %v1021 = vld [vmem:[%s916 + $0xb0] sm:$0x1]
        %v1022 = vsel %vm336, %v850, %v1021
        %1023 = vst [vmem:[%s916 + $0xb0] sm:$0x1] %v1022
        %v1024 = vld [vmem:[%s916 + $0xb4] sm:$0xf]
        %v1025 = vsel %vm918, %v857, %v1024
        %1026 = vst [vmem:[%s916 + $0xb4] sm:$0xf] %v1025
        %1027 = vst [vmem:[%s916 + $0xb8] sm:$0xf] %v866
        %v1028 = vld [vmem:[%s916 + $0xbc] sm:$0x1]
        %v1029 = vsel %vm336, %v867, %v1028
        %1030 = vst [vmem:[%s916 + $0xbc] sm:$0x1] %v1029
        %v1031 = vld [vmem:[#allocation2] sm:$0xf]
        %v1032 = vld [vmem:[#allocation2 + $0x4] sm:$0xf]
        %v1033 = vld [vmem:[#allocation2 + $0xc] sm:$0xf]
        %v1034 = vld [vmem:[#allocation2 + $0x10] sm:$0xf]
        %v1035 = vld [vmem:[#allocation2 + $0x18] sm:$0xf]
        %v1036 = vld [vmem:[#allocation2 + $0x1c] sm:$0xf]
        %v1037 = vld [vmem:[#allocation2 + $0x24] sm:$0xf]
        %v1038 = vld [vmem:[#allocation2 + $0x28] sm:$0xf]
        %v1039 = vld [vmem:[#allocation2 + $0x30] sm:$0xf]
        %v1040 = vld [vmem:[#allocation2 + $0x34] sm:$0xf]
        %v1041 = vld [vmem:[#allocation2 + $0x3c] sm:$0xf]
        %v1042 = vld [vmem:[#allocation2 + $0x40] sm:$0xf]
        %v1043 = vld [vmem:[#allocation2 + $0x48] sm:$0xf]
        %v1044 = vld [vmem:[#allocation2 + $0x4c] sm:$0xf]
        %v1045 = vld [vmem:[#allocation2 + $0x54] sm:$0xf]
        %v1046 = vld [vmem:[#allocation2 + $0x58] sm:$0xf]
        %v1047 = vld [vmem:[#allocation2 + $0x60] sm:$0xf]
        %v1048 = vld [vmem:[#allocation2 + $0x64] sm:$0xf]
        %v1049 = vld [vmem:[#allocation2 + $0x6c] sm:$0xf]
        %v1050 = vld [vmem:[#allocation2 + $0x70] sm:$0xf]
        %v1051 = vld [vmem:[#allocation2 + $0x78] sm:$0xf]
        %v1052 = vld [vmem:[#allocation2 + $0x7c] sm:$0xf]
        %v1053 = vld [vmem:[#allocation2 + $0x84] sm:$0xf]
        %v1054 = vld [vmem:[#allocation2 + $0x88] sm:$0xf]
        %v1055 = vld [vmem:[#allocation2 + $0x90] sm:$0xf]
        %v1056 = vld [vmem:[#allocation2 + $0x94] sm:$0xf]
        %v1057 = vld [vmem:[#allocation2 + $0x9c] sm:$0xf]
        %v1058 = vld [vmem:[#allocation2 + $0xa0] sm:$0xf]
        %v1059 = vld [vmem:[#allocation2 + $0xa8] sm:$0xf]
        %v1060 = vld [vmem:[#allocation2 + $0xac] sm:$0xf]
        %v1061 = vld [vmem:[#allocation2 + $0xb4] sm:$0xf]
        %v1062 = vld [vmem:[#allocation2 + $0xb8] sm:$0xf]
        %v1095 = vunpack.c.l.b16 %v1031
        %v1096 = vunpack.c.l.b16 %v1032
        %v1097 = vunpack.c.l.b16 %v1033
        %v1098 = vunpack.c.l.b16 %v1034
        %v1099 = vunpack.c.l.b16 %v1035
        %v1100 = vunpack.c.l.b16 %v1036
        %v1101 = vunpack.c.l.b16 %v1037
        %v1102 = vunpack.c.l.b16 %v1038
        %v1103 = vunpack.c.l.b16 %v1039
        %v1104 = vunpack.c.l.b16 %v1040
        %v1105 = vunpack.c.l.b16 %v1041
        %v1106 = vunpack.c.l.b16 %v1042
        %v1107 = vunpack.c.l.b16 %v1043
        %v1108 = vunpack.c.l.b16 %v1044
        %v1109 = vunpack.c.l.b16 %v1045
        %v1110 = vunpack.c.l.b16 %v1046
        %v1111 = vunpack.c.l.b16 %v1047
        %v1112 = vunpack.c.l.b16 %v1048
        %v1113 = vunpack.c.l.b16 %v1049
        %v1114 = vunpack.c.l.b16 %v1050
        %v1115 = vunpack.c.l.b16 %v1051
        %v1116 = vunpack.c.l.b16 %v1052
        %v1117 = vunpack.c.l.b16 %v1053
        %v1118 = vunpack.c.l.b16 %v1054
        %v1119 = vunpack.c.l.b16 %v1055
        %v1120 = vunpack.c.l.b16 %v1056
        %v1121 = vunpack.c.l.b16 %v1057
        %v1122 = vunpack.c.l.b16 %v1058
        %v1123 = vunpack.c.l.b16 %v1059
        %v1124 = vunpack.c.l.b16 %v1060
        %v1125 = vunpack.c.l.b16 %v1061
        %v1126 = vunpack.c.l.b16 %v1062
        %v1127 = vpack.c.b16 %v1096, %v1095
        %v1128 = vpack.c.b16 %v1098, %v1097
        %v1129 = vpack.c.b16 %v1100, %v1099
        %v1130 = vpack.c.b16 %v1102, %v1101
        %v1131 = vpack.c.b16 %v1104, %v1103
        %v1132 = vpack.c.b16 %v1106, %v1105
        %v1133 = vpack.c.b16 %v1108, %v1107
        %v1134 = vpack.c.b16 %v1110, %v1109
        %v1135 = vpack.c.b16 %v1112, %v1111
        %v1136 = vpack.c.b16 %v1114, %v1113
        %v1137 = vpack.c.b16 %v1116, %v1115
        %v1138 = vpack.c.b16 %v1118, %v1117
        %v1139 = vpack.c.b16 %v1120, %v1119
        %v1140 = vpack.c.b16 %v1122, %v1121
        %v1141 = vpack.c.b16 %v1124, %v1123
        %v1142 = vpack.c.b16 %v1126, %v1125
        %1159 = vst [vmem:[#allocation3] sm:$0xff] %v1127
        %1160 = vst [vmem:[#allocation3 + $0x48] sm:$0xff] %v1128
        %1161 = vst [vmem:[#allocation3 + $0x90] sm:$0xff] %v1129
        %1162 = vst [vmem:[#allocation3 + $0xd8] sm:$0xff] %v1130
        %1163 = vst [vmem:[#allocation3 + $0x120] sm:$0xff] %v1131
        %1164 = vst [vmem:[#allocation3 + $0x168] sm:$0xff] %v1132
        %1165 = vst [vmem:[#allocation3 + $0x1b0] sm:$0xff] %v1133
        %1166 = vst [vmem:[#allocation3 + $0x1f8] sm:$0xff] %v1134
        %1167 = vst [vmem:[#allocation3 + $0x240] sm:$0xff] %v1135
        %1168 = vst [vmem:[#allocation3 + $0x288] sm:$0xff] %v1136
        %1169 = vst [vmem:[#allocation3 + $0x2d0] sm:$0xff] %v1137
        %1170 = vst [vmem:[#allocation3 + $0x318] sm:$0xff] %v1138
        %1171 = vst [vmem:[#allocation3 + $0x360] sm:$0xff] %v1139
        %1172 = vst [vmem:[#allocation3 + $0x3a8] sm:$0xff] %v1140
        %1173 = vst [vmem:[#allocation3 + $0x3f0] sm:$0xff] %v1141
        %1174 = vst [vmem:[#allocation3 + $0x438] sm:$0xff] %v1142
        %v1175 = vld [vmem:[#allocation2] sm:$0xf]
        %v1176 = vld [vmem:[#allocation2 + $0x4] sm:$0xf]
        %v1177 = vld [vmem:[#allocation2 + $0x8] sm:$0x1]
        %v1178 = vld [vmem:[#allocation2 + $0xc] sm:$0xf]
        %v1179 = vld [vmem:[#allocation2 + $0x10] sm:$0xf]
        %v1180 = vld [vmem:[#allocation2 + $0x14] sm:$0x1]
        %v1181 = vld [vmem:[#allocation2 + $0x18] sm:$0xf]
        %v1182 = vld [vmem:[#allocation2 + $0x1c] sm:$0xf]
        %v1183 = vld [vmem:[#allocation2 + $0x20] sm:$0x1]
        %v1184 = vld [vmem:[#allocation2 + $0x24] sm:$0xf]
        %v1185 = vld [vmem:[#allocation2 + $0x28] sm:$0xf]
        %v1186 = vld [vmem:[#allocation2 + $0x2c] sm:$0x1]
        %v1187 = vld [vmem:[#allocation2 + $0x30] sm:$0xf]
        %v1188 = vld [vmem:[#allocation2 + $0x34] sm:$0xf]
        %v1189 = vld [vmem:[#allocation2 + $0x38] sm:$0x1]
        %v1190 = vld [vmem:[#allocation2 + $0x3c] sm:$0xf]
        %v1191 = vld [vmem:[#allocation2 + $0x40] sm:$0xf]
        %v1192 = vld [vmem:[#allocation2 + $0x44] sm:$0x1]
        %v1193 = vld [vmem:[#allocation2 + $0x48] sm:$0xf]
        %v1194 = vld [vmem:[#allocation2 + $0x4c] sm:$0xf]
        %v1195 = vld [vmem:[#allocation2 + $0x50] sm:$0x1]
        %v1196 = vld [vmem:[#allocation2 + $0x54] sm:$0xf]
        %v1197 = vld [vmem:[#allocation2 + $0x58] sm:$0xf]
        %v1198 = vld [vmem:[#allocation2 + $0x5c] sm:$0x1]
        %v1199 = vld [vmem:[#allocation2 + $0x60] sm:$0xf]
        %v1200 = vld [vmem:[#allocation2 + $0x64] sm:$0xf]
        %v1201 = vld [vmem:[#allocation2 + $0x68] sm:$0x1]
        %v1202 = vld [vmem:[#allocation2 + $0x6c] sm:$0xf]
        %v1203 = vld [vmem:[#allocation2 + $0x70] sm:$0xf]
        %v1204 = vld [vmem:[#allocation2 + $0x74] sm:$0x1]
        %v1205 = vld [vmem:[#allocation2 + $0x78] sm:$0xf]
        %v1206 = vld [vmem:[#allocation2 + $0x7c] sm:$0xf]
        %v1207 = vld [vmem:[#allocation2 + $0x80] sm:$0x1]
        %v1208 = vld [vmem:[#allocation2 + $0x84] sm:$0xf]
        %v1209 = vld [vmem:[#allocation2 + $0x88] sm:$0xf]
        %v1210 = vld [vmem:[#allocation2 + $0x8c] sm:$0x1]
        %v1211 = vld [vmem:[#allocation2 + $0x90] sm:$0xf]
        %v1212 = vld [vmem:[#allocation2 + $0x94] sm:$0xf]
        %v1213 = vld [vmem:[#allocation2 + $0x98] sm:$0x1]
        %v1214 = vld [vmem:[#allocation2 + $0x9c] sm:$0xf]
        %v1215 = vld [vmem:[#allocation2 + $0xa0] sm:$0xf]
        %v1216 = vld [vmem:[#allocation2 + $0xa4] sm:$0x1]
        %v1217 = vld [vmem:[#allocation2 + $0xa8] sm:$0xf]
        %v1218 = vld [vmem:[#allocation2 + $0xac] sm:$0xf]
        %v1219 = vld [vmem:[#allocation2 + $0xb0] sm:$0x1]
        %v1220 = vld [vmem:[#allocation2 + $0xb4] sm:$0xf]
        %v1221 = vld [vmem:[#allocation2 + $0xb8] sm:$0xf]
        %v1222 = vld [vmem:[#allocation2 + $0xbc] sm:$0x1]
        %vm1223 = vsmask.f32 3328
        %vm1224 = vsmask.f32 7440
        %vm1225 = vmor %vm1223, %vm1224
        %v1227 = vshrl.u32 %v1175, 16
        %v1229 = vrot.slane %v1227, 4
        %v1230 = vshll.u32 %v1175, 16
        %v1232 = vrot.slane %v1230, 5
        %v1233 = vor.u32 %v1229, %v1232
        %v1234 = vrot.slane %v1233, 4
        %v1236 = vshll.u32 %v1176, 16
        %v1238 = vrot.slane %v1236, 5
        %v1239 = vsel %vm1225, %v1234, %v1238
        %v1240 = vshrl.u32 %v1176, 16
        %v1242 = vrot.slane %v1240, 4
        %v1243 = vor.u32 %v1242, %v1238
        %v1244 = vrot.slane %v1243, 4
        %v1246 = vshll.u32 %v1177, 16
        %v1248 = vrot.slane %v1246, 5
        %v1249 = vsel %vm1225, %v1244, %v1248
        %v1251 = vshrl.u32 %v1178, 16
        %v1253 = vrot.slane %v1251, 4
        %v1254 = vshll.u32 %v1178, 16
        %v1256 = vrot.slane %v1254, 5
        %v1257 = vor.u32 %v1253, %v1256
        %v1258 = vrot.slane %v1257, 4
        %v1260 = vshll.u32 %v1179, 16
        %v1262 = vrot.slane %v1260, 5
        %v1263 = vsel %vm1225, %v1258, %v1262
        %v1264 = vshrl.u32 %v1179, 16
        %v1266 = vrot.slane %v1264, 4
        %v1267 = vor.u32 %v1266, %v1262
        %v1268 = vrot.slane %v1267, 4
        %v1270 = vshll.u32 %v1180, 16
        %v1272 = vrot.slane %v1270, 5
        %v1273 = vsel %vm1225, %v1268, %v1272
        %v1275 = vshrl.u32 %v1181, 16
        %v1277 = vrot.slane %v1275, 4
        %v1278 = vshll.u32 %v1181, 16
        %v1280 = vrot.slane %v1278, 5
        %v1281 = vor.u32 %v1277, %v1280
        %v1282 = vrot.slane %v1281, 4
        %v1284 = vshll.u32 %v1182, 16
        %v1286 = vrot.slane %v1284, 5
        %v1287 = vsel %vm1225, %v1282, %v1286
        %v1288 = vshrl.u32 %v1182, 16
        %v1290 = vrot.slane %v1288, 4
        %v1291 = vor.u32 %v1290, %v1286
        %v1292 = vrot.slane %v1291, 4
        %v1294 = vshll.u32 %v1183, 16
        %v1296 = vrot.slane %v1294, 5
        %v1297 = vsel %vm1225, %v1292, %v1296
        %v1299 = vshrl.u32 %v1184, 16
        %v1301 = vrot.slane %v1299, 4
        %v1302 = vshll.u32 %v1184, 16
        %v1304 = vrot.slane %v1302, 5
        %v1305 = vor.u32 %v1301, %v1304
        %v1306 = vrot.slane %v1305, 4
        %v1308 = vshll.u32 %v1185, 16
        %v1310 = vrot.slane %v1308, 5
        %v1311 = vsel %vm1225, %v1306, %v1310
        %v1312 = vshrl.u32 %v1185, 16
        %v1314 = vrot.slane %v1312, 4
        %v1315 = vor.u32 %v1314, %v1310
        %v1316 = vrot.slane %v1315, 4
        %v1318 = vshll.u32 %v1186, 16
        %v1320 = vrot.slane %v1318, 5
        %v1321 = vsel %vm1225, %v1316, %v1320
        %v1323 = vshrl.u32 %v1187, 16
        %v1325 = vrot.slane %v1323, 4
        %v1326 = vshll.u32 %v1187, 16
        %v1328 = vrot.slane %v1326, 5
        %v1329 = vor.u32 %v1325, %v1328
        %v1330 = vrot.slane %v1329, 4
        %v1332 = vshll.u32 %v1188, 16
        %v1334 = vrot.slane %v1332, 5
        %v1335 = vsel %vm1225, %v1330, %v1334
        %v1336 = vshrl.u32 %v1188, 16
        %v1338 = vrot.slane %v1336, 4
        %v1339 = vor.u32 %v1338, %v1334
        %v1340 = vrot.slane %v1339, 4
        %v1342 = vshll.u32 %v1189, 16
        %v1344 = vrot.slane %v1342, 5
        %v1345 = vsel %vm1225, %v1340, %v1344
        %v1347 = vshrl.u32 %v1190, 16
        %v1349 = vrot.slane %v1347, 4
        %v1350 = vshll.u32 %v1190, 16
        %v1352 = vrot.slane %v1350, 5
        %v1353 = vor.u32 %v1349, %v1352
        %v1354 = vrot.slane %v1353, 4
        %v1356 = vshll.u32 %v1191, 16
        %v1358 = vrot.slane %v1356, 5
        %v1359 = vsel %vm1225, %v1354, %v1358
        %v1360 = vshrl.u32 %v1191, 16
        %v1362 = vrot.slane %v1360, 4
        %v1363 = vor.u32 %v1362, %v1358
        %v1364 = vrot.slane %v1363, 4
        %v1366 = vshll.u32 %v1192, 16
        %v1368 = vrot.slane %v1366, 5
        %v1369 = vsel %vm1225, %v1364, %v1368
        %v1371 = vshrl.u32 %v1193, 16
        %v1373 = vrot.slane %v1371, 4
        %v1374 = vshll.u32 %v1193, 16
        %v1376 = vrot.slane %v1374, 5
        %v1377 = vor.u32 %v1373, %v1376
        %v1378 = vrot.slane %v1377, 4
        %v1380 = vshll.u32 %v1194, 16
        %v1382 = vrot.slane %v1380, 5
        %v1383 = vsel %vm1225, %v1378, %v1382
        %v1384 = vshrl.u32 %v1194, 16
        %v1386 = vrot.slane %v1384, 4
        %v1387 = vor.u32 %v1386, %v1382
        %v1388 = vrot.slane %v1387, 4
        %v1390 = vshll.u32 %v1195, 16
        %v1392 = vrot.slane %v1390, 5
        %v1393 = vsel %vm1225, %v1388, %v1392
        %v1395 = vshrl.u32 %v1196, 16
        %v1397 = vrot.slane %v1395, 4
        %v1398 = vshll.u32 %v1196, 16
        %v1400 = vrot.slane %v1398, 5
        %v1401 = vor.u32 %v1397, %v1400
        %v1402 = vrot.slane %v1401, 4
        %v1404 = vshll.u32 %v1197, 16
        %v1406 = vrot.slane %v1404, 5
        %v1407 = vsel %vm1225, %v1402, %v1406
        %v1408 = vshrl.u32 %v1197, 16
        %v1410 = vrot.slane %v1408, 4
        %v1411 = vor.u32 %v1410, %v1406
        %v1412 = vrot.slane %v1411, 4
        %v1414 = vshll.u32 %v1198, 16
        %v1416 = vrot.slane %v1414, 5
        %v1417 = vsel %vm1225, %v1412, %v1416
        %v1419 = vshrl.u32 %v1199, 16
        %v1421 = vrot.slane %v1419, 4
        %v1422 = vshll.u32 %v1199, 16
        %v1424 = vrot.slane %v1422, 5
        %v1425 = vor.u32 %v1421, %v1424
        %v1426 = vrot.slane %v1425, 4
        %v1428 = vshll.u32 %v1200, 16
        %v1430 = vrot.slane %v1428, 5
        %v1431 = vsel %vm1225, %v1426, %v1430
        %v1432 = vshrl.u32 %v1200, 16
        %v1434 = vrot.slane %v1432, 4
        %v1435 = vor.u32 %v1434, %v1430
        %v1436 = vrot.slane %v1435, 4
        %v1438 = vshll.u32 %v1201, 16
        %v1440 = vrot.slane %v1438, 5
        %v1441 = vsel %vm1225, %v1436, %v1440
        %v1443 = vshrl.u32 %v1202, 16
        %v1445 = vrot.slane %v1443, 4
        %v1446 = vshll.u32 %v1202, 16
        %v1448 = vrot.slane %v1446, 5
        %v1449 = vor.u32 %v1445, %v1448
        %v1450 = vrot.slane %v1449, 4
        %v1452 = vshll.u32 %v1203, 16
        %v1454 = vrot.slane %v1452, 5
        %v1455 = vsel %vm1225, %v1450, %v1454
        %v1456 = vshrl.u32 %v1203, 16
        %v1458 = vrot.slane %v1456, 4
        %v1459 = vor.u32 %v1458, %v1454
        %v1460 = vrot.slane %v1459, 4
        %v1462 = vshll.u32 %v1204, 16
        %v1464 = vrot.slane %v1462, 5
        %v1465 = vsel %vm1225, %v1460, %v1464
        %v1467 = vshrl.u32 %v1205, 16
        %v1469 = vrot.slane %v1467, 4
        %v1470 = vshll.u32 %v1205, 16
        %v1472 = vrot.slane %v1470, 5
        %v1473 = vor.u32 %v1469, %v1472
        %v1474 = vrot.slane %v1473, 4
        %v1476 = vshll.u32 %v1206, 16
        %v1478 = vrot.slane %v1476, 5
        %v1479 = vsel %vm1225, %v1474, %v1478
        %v1480 = vshrl.u32 %v1206, 16
        %v1482 = vrot.slane %v1480, 4
        %v1483 = vor.u32 %v1482, %v1478
        %v1484 = vrot.slane %v1483, 4
        %v1486 = vshll.u32 %v1207, 16
        %v1488 = vrot.slane %v1486, 5
        %v1489 = vsel %vm1225, %v1484, %v1488
        %v1491 = vshrl.u32 %v1208, 16
        %v1493 = vrot.slane %v1491, 4
        %v1494 = vshll.u32 %v1208, 16
        %v1496 = vrot.slane %v1494, 5
        %v1497 = vor.u32 %v1493, %v1496
        %v1498 = vrot.slane %v1497, 4
        %v1500 = vshll.u32 %v1209, 16
        %v1502 = vrot.slane %v1500, 5
        %v1503 = vsel %vm1225, %v1498, %v1502
        %v1504 = vshrl.u32 %v1209, 16
        %v1506 = vrot.slane %v1504, 4
        %v1507 = vor.u32 %v1506, %v1502
        %v1508 = vrot.slane %v1507, 4
        %v1510 = vshll.u32 %v1210, 16
        %v1512 = vrot.slane %v1510, 5
        %v1513 = vsel %vm1225, %v1508, %v1512
        %v1515 = vshrl.u32 %v1211, 16
        %v1517 = vrot.slane %v1515, 4
        %v1518 = vshll.u32 %v1211, 16
        %v1520 = vrot.slane %v1518, 5
        %v1521 = vor.u32 %v1517, %v1520
        %v1522 = vrot.slane %v1521, 4
        %v1524 = vshll.u32 %v1212, 16
        %v1526 = vrot.slane %v1524, 5
        %v1527 = vsel %vm1225, %v1522, %v1526
        %v1528 = vshrl.u32 %v1212, 16
        %v1530 = vrot.slane %v1528, 4
        %v1531 = vor.u32 %v1530, %v1526
        %v1532 = vrot.slane %v1531, 4
        %v1534 = vshll.u32 %v1213, 16
        %v1536 = vrot.slane %v1534, 5
        %v1537 = vsel %vm1225, %v1532, %v1536
        %v1539 = vshrl.u32 %v1214, 16
        %v1541 = vrot.slane %v1539, 4
        %v1542 = vshll.u32 %v1214, 16
        %v1544 = vrot.slane %v1542, 5
        %v1545 = vor.u32 %v1541, %v1544
        %v1546 = vrot.slane %v1545, 4
        %v1548 = vshll.u32 %v1215, 16
        %v1550 = vrot.slane %v1548, 5
        %v1551 = vsel %vm1225, %v1546, %v1550
        %v1552 = vshrl.u32 %v1215, 16
        %v1554 = vrot.slane %v1552, 4
        %v1555 = vor.u32 %v1554, %v1550
        %v1556 = vrot.slane %v1555, 4
        %v1558 = vshll.u32 %v1216, 16
        %v1560 = vrot.slane %v1558, 5
        %v1561 = vsel %vm1225, %v1556, %v1560
        %v1563 = vshrl.u32 %v1217, 16
        %v1565 = vrot.slane %v1563, 4
        %v1566 = vshll.u32 %v1217, 16
        %v1568 = vrot.slane %v1566, 5
        %v1569 = vor.u32 %v1565, %v1568
        %v1570 = vrot.slane %v1569, 4
        %v1572 = vshll.u32 %v1218, 16
        %v1574 = vrot.slane %v1572, 5
        %v1575 = vsel %vm1225, %v1570, %v1574
        %v1576 = vshrl.u32 %v1218, 16
        %v1578 = vrot.slane %v1576, 4
        %v1579 = vor.u32 %v1578, %v1574
        %v1580 = vrot.slane %v1579, 4
        %v1582 = vshll.u32 %v1219, 16
        %v1584 = vrot.slane %v1582, 5
        %v1585 = vsel %vm1225, %v1580, %v1584
        %v1587 = vshrl.u32 %v1220, 16
        %v1589 = vrot.slane %v1587, 4
        %v1590 = vshll.u32 %v1220, 16
        %v1592 = vrot.slane %v1590, 5
        %v1593 = vor.u32 %v1589, %v1592
        %v1594 = vrot.slane %v1593, 4
        %v1596 = vshll.u32 %v1221, 16
        %v1598 = vrot.slane %v1596, 5
        %v1599 = vsel %vm1225, %v1594, %v1598
        %v1600 = vshrl.u32 %v1221, 16
        %v1602 = vrot.slane %v1600, 4
        %v1603 = vor.u32 %v1602, %v1598
        %v1604 = vrot.slane %v1603, 4
        %v1606 = vshll.u32 %v1222, 16
        %v1608 = vrot.slane %v1606, 5
        %v1609 = vsel %vm1225, %v1604, %v1608
        %v1610 = vunpack.c.l.b16 %v1239
        %v1611 = vunpack.c.l.b16 %v1249
        %v1612 = vunpack.c.l.b16 %v1263
        %v1613 = vunpack.c.l.b16 %v1273
        %v1614 = vunpack.c.l.b16 %v1287
        %v1615 = vunpack.c.l.b16 %v1297
        %v1616 = vunpack.c.l.b16 %v1311
        %v1617 = vunpack.c.l.b16 %v1321
        %v1618 = vunpack.c.l.b16 %v1335
        %v1619 = vunpack.c.l.b16 %v1345
        %v1620 = vunpack.c.l.b16 %v1359
        %v1621 = vunpack.c.l.b16 %v1369
        %v1622 = vunpack.c.l.b16 %v1383
        %v1623 = vunpack.c.l.b16 %v1393
        %v1624 = vunpack.c.l.b16 %v1407
        %v1625 = vunpack.c.l.b16 %v1417
        %v1626 = vunpack.c.l.b16 %v1431
        %v1627 = vunpack.c.l.b16 %v1441
        %v1628 = vunpack.c.l.b16 %v1455
        %v1629 = vunpack.c.l.b16 %v1465
        %v1630 = vunpack.c.l.b16 %v1479
        %v1631 = vunpack.c.l.b16 %v1489
        %v1632 = vunpack.c.l.b16 %v1503
        %v1633 = vunpack.c.l.b16 %v1513
        %v1634 = vunpack.c.l.b16 %v1527
        %v1635 = vunpack.c.l.b16 %v1537
        %v1636 = vunpack.c.l.b16 %v1551
        %v1637 = vunpack.c.l.b16 %v1561
        %v1638 = vunpack.c.l.b16 %v1575
        %v1639 = vunpack.c.l.b16 %v1585
        %v1640 = vunpack.c.l.b16 %v1599
        %v1641 = vunpack.c.l.b16 %v1609
        %v1642 = vpack.c.b16 %v1611, %v1610
        %v1643 = vpack.c.b16 %v1613, %v1612
        %v1644 = vpack.c.b16 %v1615, %v1614
        %v1645 = vpack.c.b16 %v1617, %v1616
        %v1646 = vpack.c.b16 %v1619, %v1618
        %v1647 = vpack.c.b16 %v1621, %v1620
        %v1648 = vpack.c.b16 %v1623, %v1622
        %v1649 = vpack.c.b16 %v1625, %v1624
        %v1650 = vpack.c.b16 %v1627, %v1626
        %v1651 = vpack.c.b16 %v1629, %v1628
        %v1652 = vpack.c.b16 %v1631, %v1630
        %v1653 = vpack.c.b16 %v1633, %v1632
        %v1654 = vpack.c.b16 %v1635, %v1634
        %v1655 = vpack.c.b16 %v1637, %v1636
        %v1656 = vpack.c.b16 %v1639, %v1638
        %v1657 = vpack.c.b16 %v1641, %v1640
        %1674 = vst [vmem:[#allocation3 + $0x8] sm:$0xff] %v1642
        %1675 = vst [vmem:[#allocation3 + $0x50] sm:$0xff] %v1643
        %1676 = vst [vmem:[#allocation3 + $0x98] sm:$0xff] %v1644
        %1677 = vst [vmem:[#allocation3 + $0xe0] sm:$0xff] %v1645
        %1678 = vst [vmem:[#allocation3 + $0x128] sm:$0xff] %v1646
        %1679 = vst [vmem:[#allocation3 + $0x170] sm:$0xff] %v1647
        %1680 = vst [vmem:[#allocation3 + $0x1b8] sm:$0xff] %v1648
        %1681 = vst [vmem:[#allocation3 + $0x200] sm:$0xff] %v1649
        %1682 = vst [vmem:[#allocation3 + $0x248] sm:$0xff] %v1650
        %1683 = vst [vmem:[#allocation3 + $0x290] sm:$0xff] %v1651
        %1684 = vst [vmem:[#allocation3 + $0x2d8] sm:$0xff] %v1652
        %1685 = vst [vmem:[#allocation3 + $0x320] sm:$0xff] %v1653
        %1686 = vst [vmem:[#allocation3 + $0x368] sm:$0xff] %v1654
        %1687 = vst [vmem:[#allocation3 + $0x3b0] sm:$0xff] %v1655
        %1688 = vst [vmem:[#allocation3 + $0x3f8] sm:$0xff] %v1656
        %1689 = vst [vmem:[#allocation3 + $0x440] sm:$0xff] %v1657
        %v1690 = vld [vmem:[#allocation2] sm:$0xe]
        %v1691 = vld [vmem:[#allocation2 + $0x4] sm:$0xf]
        %v1692 = vld [vmem:[#allocation2 + $0x8] sm:$0x1]
        %v1693 = vld [vmem:[#allocation2 + $0xc] sm:$0xe]
        %v1694 = vld [vmem:[#allocation2 + $0x10] sm:$0xf]
        %v1695 = vld [vmem:[#allocation2 + $0x14] sm:$0x1]
        %v1696 = vld [vmem:[#allocation2 + $0x18] sm:$0xe]
        %v1697 = vld [vmem:[#allocation2 + $0x1c] sm:$0xf]
        %v1698 = vld [vmem:[#allocation2 + $0x20] sm:$0x1]
        %v1699 = vld [vmem:[#allocation2 + $0x24] sm:$0xe]
        %v1700 = vld [vmem:[#allocation2 + $0x28] sm:$0xf]
        %v1701 = vld [vmem:[#allocation2 + $0x2c] sm:$0x1]
        %v1702 = vld [vmem:[#allocation2 + $0x30] sm:$0xe]
        %v1703 = vld [vmem:[#allocation2 + $0x34] sm:$0xf]
        %v1704 = vld [vmem:[#allocation2 + $0x38] sm:$0x1]
        %v1705 = vld [vmem:[#allocation2 + $0x3c] sm:$0xe]
        %v1706 = vld [vmem:[#allocation2 + $0x40] sm:$0xf]
        %v1707 = vld [vmem:[#allocation2 + $0x44] sm:$0x1]
        %v1708 = vld [vmem:[#allocation2 + $0x48] sm:$0xe]
        %v1709 = vld [vmem:[#allocation2 + $0x4c] sm:$0xf]
        %v1710 = vld [vmem:[#allocation2 + $0x50] sm:$0x1]
        %v1711 = vld [vmem:[#allocation2 + $0x54] sm:$0xe]
        %v1712 = vld [vmem:[#allocation2 + $0x58] sm:$0xf]
        %v1713 = vld [vmem:[#allocation2 + $0x5c] sm:$0x1]
        %v1714 = vld [vmem:[#allocation2 + $0x60] sm:$0xe]
        %v1715 = vld [vmem:[#allocation2 + $0x64] sm:$0xf]
        %v1716 = vld [vmem:[#allocation2 + $0x68] sm:$0x1]
        %v1717 = vld [vmem:[#allocation2 + $0x6c] sm:$0xe]
        %v1718 = vld [vmem:[#allocation2 + $0x70] sm:$0xf]
        %v1719 = vld [vmem:[#allocation2 + $0x74] sm:$0x1]
        %v1720 = vld [vmem:[#allocation2 + $0x78] sm:$0xe]
        %v1721 = vld [vmem:[#allocation2 + $0x7c] sm:$0xf]
        %v1722 = vld [vmem:[#allocation2 + $0x80] sm:$0x1]
        %v1723 = vld [vmem:[#allocation2 + $0x84] sm:$0xe]
        %v1724 = vld [vmem:[#allocation2 + $0x88] sm:$0xf]
        %v1725 = vld [vmem:[#allocation2 + $0x8c] sm:$0x1]
        %v1726 = vld [vmem:[#allocation2 + $0x90] sm:$0xe]
        %v1727 = vld [vmem:[#allocation2 + $0x94] sm:$0xf]
        %v1728 = vld [vmem:[#allocation2 + $0x98] sm:$0x1]
        %v1729 = vld [vmem:[#allocation2 + $0x9c] sm:$0xe]
        %v1730 = vld [vmem:[#allocation2 + $0xa0] sm:$0xf]
        %v1731 = vld [vmem:[#allocation2 + $0xa4] sm:$0x1]
        %v1732 = vld [vmem:[#allocation2 + $0xa8] sm:$0xe]
        %v1733 = vld [vmem:[#allocation2 + $0xac] sm:$0xf]
        %v1734 = vld [vmem:[#allocation2 + $0xb0] sm:$0x1]
        %v1735 = vld [vmem:[#allocation2 + $0xb4] sm:$0xe]
        %v1736 = vld [vmem:[#allocation2 + $0xb8] sm:$0xf]
        %v1737 = vld [vmem:[#allocation2 + $0xbc] sm:$0x1]
        %vm1786 = vcmask 1042432
        %vm1787 = vcmask 1046532
        %vm1788 = vmor %vm1786, %vm1787
        %v1789 = vrot.slane %v1690, 5
        %v1790 = vrot.slane %v1789, 4
        %v1791 = vrot.slane %v1691, 5
        %v1792 = vsel %vm1788, %v1790, %v1791
        %v1793 = vrot.slane %v1791, 4
        %v1794 = vrot.slane %v1692, 5
        %v1795 = vsel %vm1788, %v1793, %v1794
        %v1796 = vrot.slane %v1693, 5
        %v1797 = vrot.slane %v1796, 4
        %v1798 = vrot.slane %v1694, 5
        %v1799 = vsel %vm1788, %v1797, %v1798
        %v1800 = vrot.slane %v1798, 4
        %v1801 = vrot.slane %v1695, 5
        %v1802 = vsel %vm1788, %v1800, %v1801
        %v1803 = vrot.slane %v1696, 5
        %v1804 = vrot.slane %v1803, 4
        %v1805 = vrot.slane %v1697, 5
        %v1806 = vsel %vm1788, %v1804, %v1805
        %v1807 = vrot.slane %v1805, 4
        %v1808 = vrot.slane %v1698, 5
        %v1809 = vsel %vm1788, %v1807, %v1808
        %v1810 = vrot.slane %v1699, 5
        %v1811 = vrot.slane %v1810, 4
        %v1812 = vrot.slane %v1700, 5
        %v1813 = vsel %vm1788, %v1811, %v1812
        %v1814 = vrot.slane %v1812, 4
        %v1815 = vrot.slane %v1701, 5
        %v1816 = vsel %vm1788, %v1814, %v1815
        %v1817 = vrot.slane %v1702, 5
        %v1818 = vrot.slane %v1817, 4
        %v1819 = vrot.slane %v1703, 5
        %v1820 = vsel %vm1788, %v1818, %v1819
        %v1821 = vrot.slane %v1819, 4
        %v1822 = vrot.slane %v1704, 5
        %v1823 = vsel %vm1788, %v1821, %v1822
        %v1824 = vrot.slane %v1705, 5
        %v1825 = vrot.slane %v1824, 4
        %v1826 = vrot.slane %v1706, 5
        %v1827 = vsel %vm1788, %v1825, %v1826
        %v1828 = vrot.slane %v1826, 4
        %v1829 = vrot.slane %v1707, 5
        %v1830 = vsel %vm1788, %v1828, %v1829
        %v1831 = vrot.slane %v1708, 5
        %v1832 = vrot.slane %v1831, 4
        %v1833 = vrot.slane %v1709, 5
        %v1834 = vsel %vm1788, %v1832, %v1833
        %v1835 = vrot.slane %v1833, 4
        %v1836 = vrot.slane %v1710, 5
        %v1837 = vsel %vm1788, %v1835, %v1836
        %v1838 = vrot.slane %v1711, 5
        %v1839 = vrot.slane %v1838, 4
        %v1840 = vrot.slane %v1712, 5
        %v1841 = vsel %vm1788, %v1839, %v1840
        %v1842 = vrot.slane %v1840, 4
        %v1843 = vrot.slane %v1713, 5
        %v1844 = vsel %vm1788, %v1842, %v1843
        %v1845 = vrot.slane %v1714, 5
        %v1846 = vrot.slane %v1845, 4
        %v1847 = vrot.slane %v1715, 5
        %v1848 = vsel %vm1788, %v1846, %v1847
        %v1849 = vrot.slane %v1847, 4
        %v1850 = vrot.slane %v1716, 5
        %v1851 = vsel %vm1788, %v1849, %v1850
        %v1852 = vrot.slane %v1717, 5
        %v1853 = vrot.slane %v1852, 4
        %v1854 = vrot.slane %v1718, 5
        %v1855 = vsel %vm1788, %v1853, %v1854
        %v1856 = vrot.slane %v1854, 4
        %v1857 = vrot.slane %v1719, 5
        %v1858 = vsel %vm1788, %v1856, %v1857
        %v1859 = vrot.slane %v1720, 5
        %v1860 = vrot.slane %v1859, 4
        %v1861 = vrot.slane %v1721, 5
        %v1862 = vsel %vm1788, %v1860, %v1861
        %v1863 = vrot.slane %v1861, 4
        %v1864 = vrot.slane %v1722, 5
        %v1865 = vsel %vm1788, %v1863, %v1864
        %v1866 = vrot.slane %v1723, 5
        %v1867 = vrot.slane %v1866, 4
        %v1868 = vrot.slane %v1724, 5
        %v1869 = vsel %vm1788, %v1867, %v1868
        %v1870 = vrot.slane %v1868, 4
        %v1871 = vrot.slane %v1725, 5
        %v1872 = vsel %vm1788, %v1870, %v1871
        %v1873 = vrot.slane %v1726, 5
        %v1874 = vrot.slane %v1873, 4
        %v1875 = vrot.slane %v1727, 5
        %v1876 = vsel %vm1788, %v1874, %v1875
        %v1877 = vrot.slane %v1875, 4
        %v1878 = vrot.slane %v1728, 5
        %v1879 = vsel %vm1788, %v1877, %v1878
        %v1880 = vrot.slane %v1729, 5
        %v1881 = vrot.slane %v1880, 4
        %v1882 = vrot.slane %v1730, 5
        %v1883 = vsel %vm1788, %v1881, %v1882
        %v1884 = vrot.slane %v1882, 4
        %v1885 = vrot.slane %v1731, 5
        %v1886 = vsel %vm1788, %v1884, %v1885
        %v1887 = vrot.slane %v1732, 5
        %v1888 = vrot.slane %v1887, 4
        %v1889 = vrot.slane %v1733, 5
        %v1890 = vsel %vm1788, %v1888, %v1889
        %v1891 = vrot.slane %v1889, 4
        %v1892 = vrot.slane %v1734, 5
        %v1893 = vsel %vm1788, %v1891, %v1892
        %v1894 = vrot.slane %v1735, 5
        %v1895 = vrot.slane %v1894, 4
        %v1896 = vrot.slane %v1736, 5
        %v1897 = vsel %vm1788, %v1895, %v1896
        %v1898 = vrot.slane %v1896, 4
        %v1899 = vrot.slane %v1737, 5
        %v1900 = vsel %vm1788, %v1898, %v1899
        %v1901 = vunpack.c.l.b16 %v1792
        %v1902 = vunpack.c.l.b16 %v1795
        %v1903 = vunpack.c.l.b16 %v1799
        %v1904 = vunpack.c.l.b16 %v1802
        %v1905 = vunpack.c.l.b16 %v1806
        %v1906 = vunpack.c.l.b16 %v1809
        %v1907 = vunpack.c.l.b16 %v1813
        %v1908 = vunpack.c.l.b16 %v1816
        %v1909 = vunpack.c.l.b16 %v1820
        %v1910 = vunpack.c.l.b16 %v1823
        %v1911 = vunpack.c.l.b16 %v1827
        %v1912 = vunpack.c.l.b16 %v1830
        %v1913 = vunpack.c.l.b16 %v1834
        %v1914 = vunpack.c.l.b16 %v1837
        %v1915 = vunpack.c.l.b16 %v1841
        %v1916 = vunpack.c.l.b16 %v1844
        %v1917 = vunpack.c.l.b16 %v1848
        %v1918 = vunpack.c.l.b16 %v1851
        %v1919 = vunpack.c.l.b16 %v1855
        %v1920 = vunpack.c.l.b16 %v1858
        %v1921 = vunpack.c.l.b16 %v1862
        %v1922 = vunpack.c.l.b16 %v1865
        %v1923 = vunpack.c.l.b16 %v1869
        %v1924 = vunpack.c.l.b16 %v1872
        %v1925 = vunpack.c.l.b16 %v1876
        %v1926 = vunpack.c.l.b16 %v1879
        %v1927 = vunpack.c.l.b16 %v1883
        %v1928 = vunpack.c.l.b16 %v1886
        %v1929 = vunpack.c.l.b16 %v1890
        %v1930 = vunpack.c.l.b16 %v1893
        %v1931 = vunpack.c.l.b16 %v1897
        %v1932 = vunpack.c.l.b16 %v1900
        %v1933 = vpack.c.b16 %v1902, %v1901
        %v1934 = vpack.c.b16 %v1904, %v1903
        %v1935 = vpack.c.b16 %v1906, %v1905
        %v1936 = vpack.c.b16 %v1908, %v1907
        %v1937 = vpack.c.b16 %v1910, %v1909
        %v1938 = vpack.c.b16 %v1912, %v1911
        %v1939 = vpack.c.b16 %v1914, %v1913
        %v1940 = vpack.c.b16 %v1916, %v1915
        %v1941 = vpack.c.b16 %v1918, %v1917
        %v1942 = vpack.c.b16 %v1920, %v1919
        %v1943 = vpack.c.b16 %v1922, %v1921
        %v1944 = vpack.c.b16 %v1924, %v1923
        %v1945 = vpack.c.b16 %v1926, %v1925
        %v1946 = vpack.c.b16 %v1928, %v1927
        %v1947 = vpack.c.b16 %v1930, %v1929
        %v1948 = vpack.c.b16 %v1932, %v1931
        %1965 = vst [vmem:[#allocation3 + $0x10] sm:$0xff] %v1933
        %1966 = vst [vmem:[#allocation3 + $0x58] sm:$0xff] %v1934
        %1967 = vst [vmem:[#allocation3 + $0xa0] sm:$0xff] %v1935
        %1968 = vst [vmem:[#allocation3 + $0xe8] sm:$0xff] %v1936
        %1969 = vst [vmem:[#allocation3 + $0x130] sm:$0xff] %v1937
        %1970 = vst [vmem:[#allocation3 + $0x178] sm:$0xff] %v1938
        %1971 = vst [vmem:[#allocation3 + $0x1c0] sm:$0xff] %v1939
        %1972 = vst [vmem:[#allocation3 + $0x208] sm:$0xff] %v1940
        %1973 = vst [vmem:[#allocation3 + $0x250] sm:$0xff] %v1941
        %1974 = vst [vmem:[#allocation3 + $0x298] sm:$0xff] %v1942
        %1975 = vst [vmem:[#allocation3 + $0x2e0] sm:$0xff] %v1943
        %1976 = vst [vmem:[#allocation3 + $0x328] sm:$0xff] %v1944
        %1977 = vst [vmem:[#allocation3 + $0x370] sm:$0xff] %v1945
        %1978 = vst [vmem:[#allocation3 + $0x3b8] sm:$0xff] %v1946
        %1979 = vst [vmem:[#allocation3 + $0x400] sm:$0xff] %v1947
        %1980 = vst [vmem:[#allocation3 + $0x448] sm:$0xff] %v1948
        %v1981 = vld [vmem:[%s916] sm:$0xf]
        %v1982 = vld [vmem:[%s916 + $0x4] sm:$0xf]
        %v1983 = vld [vmem:[%s916 + $0xc] sm:$0xf]
        %v1984 = vld [vmem:[%s916 + $0x10] sm:$0xf]
        %v1985 = vld [vmem:[%s916 + $0x18] sm:$0xf]
        %v1986 = vld [vmem:[%s916 + $0x1c] sm:$0xf]
        %v1987 = vld [vmem:[%s916 + $0x24] sm:$0xf]
        %v1988 = vld [vmem:[%s916 + $0x28] sm:$0xf]
        %v1989 = vld [vmem:[%s916 + $0x30] sm:$0xf]
        %v1990 = vld [vmem:[%s916 + $0x34] sm:$0xf]
        %v1991 = vld [vmem:[%s916 + $0x3c] sm:$0xf]
        %v1992 = vld [vmem:[%s916 + $0x40] sm:$0xf]
        %v1993 = vld [vmem:[%s916 + $0x48] sm:$0xf]
        %v1994 = vld [vmem:[%s916 + $0x4c] sm:$0xf]
        %v1995 = vld [vmem:[%s916 + $0x54] sm:$0xf]
        %v1996 = vld [vmem:[%s916 + $0x58] sm:$0xf]
        %v1997 = vld [vmem:[%s916 + $0x60] sm:$0xf]
        %v1998 = vld [vmem:[%s916 + $0x64] sm:$0xf]
        %v1999 = vld [vmem:[%s916 + $0x6c] sm:$0xf]
        %v2000 = vld [vmem:[%s916 + $0x70] sm:$0xf]
        %v2001 = vld [vmem:[%s916 + $0x78] sm:$0xf]
        %v2002 = vld [vmem:[%s916 + $0x7c] sm:$0xf]
        %v2003 = vld [vmem:[%s916 + $0x84] sm:$0xf]
        %v2004 = vld [vmem:[%s916 + $0x88] sm:$0xf]
        %v2005 = vld [vmem:[%s916 + $0x90] sm:$0xf]
        %v2006 = vld [vmem:[%s916 + $0x94] sm:$0xf]
        %v2007 = vld [vmem:[%s916 + $0x9c] sm:$0xf]
        %v2008 = vld [vmem:[%s916 + $0xa0] sm:$0xf]
        %v2009 = vld [vmem:[%s916 + $0xa8] sm:$0xf]
        %v2010 = vld [vmem:[%s916 + $0xac] sm:$0xf]
        %v2011 = vld [vmem:[%s916 + $0xb4] sm:$0xf]
        %v2012 = vld [vmem:[%s916 + $0xb8] sm:$0xf]
        %v2045 = vunpack.c.l.b16 %v1981
        %v2046 = vunpack.c.l.b16 %v1982
        %v2047 = vunpack.c.l.b16 %v1983
        %v2048 = vunpack.c.l.b16 %v1984
        %v2049 = vunpack.c.l.b16 %v1985
        %v2050 = vunpack.c.l.b16 %v1986
        %v2051 = vunpack.c.l.b16 %v1987
        %v2052 = vunpack.c.l.b16 %v1988
        %v2053 = vunpack.c.l.b16 %v1989
        %v2054 = vunpack.c.l.b16 %v1990
        %v2055 = vunpack.c.l.b16 %v1991
        %v2056 = vunpack.c.l.b16 %v1992
        %v2057 = vunpack.c.l.b16 %v1993
        %v2058 = vunpack.c.l.b16 %v1994
        %v2059 = vunpack.c.l.b16 %v1995
        %v2060 = vunpack.c.l.b16 %v1996
        %v2061 = vunpack.c.l.b16 %v1997
        %v2062 = vunpack.c.l.b16 %v1998
        %v2063 = vunpack.c.l.b16 %v1999
        %v2064 = vunpack.c.l.b16 %v2000
        %v2065 = vunpack.c.l.b16 %v2001
        %v2066 = vunpack.c.l.b16 %v2002
        %v2067 = vunpack.c.l.b16 %v2003
        %v2068 = vunpack.c.l.b16 %v2004
        %v2069 = vunpack.c.l.b16 %v2005
        %v2070 = vunpack.c.l.b16 %v2006
        %v2071 = vunpack.c.l.b16 %v2007
        %v2072 = vunpack.c.l.b16 %v2008
        %v2073 = vunpack.c.l.b16 %v2009
        %v2074 = vunpack.c.l.b16 %v2010
        %v2075 = vunpack.c.l.b16 %v2011
        %v2076 = vunpack.c.l.b16 %v2012
        %v2077 = vpack.c.b16 %v2046, %v2045
        %v2078 = vpack.c.b16 %v2048, %v2047
        %v2079 = vpack.c.b16 %v2050, %v2049
        %v2080 = vpack.c.b16 %v2052, %v2051
        %v2081 = vpack.c.b16 %v2054, %v2053
        %v2082 = vpack.c.b16 %v2056, %v2055
        %v2083 = vpack.c.b16 %v2058, %v2057
        %v2084 = vpack.c.b16 %v2060, %v2059
        %v2085 = vpack.c.b16 %v2062, %v2061
        %v2086 = vpack.c.b16 %v2064, %v2063
        %v2087 = vpack.c.b16 %v2066, %v2065
        %v2088 = vpack.c.b16 %v2068, %v2067
        %v2089 = vpack.c.b16 %v2070, %v2069
        %v2090 = vpack.c.b16 %v2072, %v2071
        %v2091 = vpack.c.b16 %v2074, %v2073
        %v2092 = vpack.c.b16 %v2076, %v2075
        %2109 = vst [vmem:[#allocation3 + $0x18] sm:$0xff] %v2077
        %2110 = vst [vmem:[#allocation3 + $0x60] sm:$0xff] %v2078
        %2111 = vst [vmem:[#allocation3 + $0xa8] sm:$0xff] %v2079
        %2112 = vst [vmem:[#allocation3 + $0xf0] sm:$0xff] %v2080
        %2113 = vst [vmem:[#allocation3 + $0x138] sm:$0xff] %v2081
        %2114 = vst [vmem:[#allocation3 + $0x180] sm:$0xff] %v2082
        %2115 = vst [vmem:[#allocation3 + $0x1c8] sm:$0xff] %v2083
        %2116 = vst [vmem:[#allocation3 + $0x210] sm:$0xff] %v2084
        %2117 = vst [vmem:[#allocation3 + $0x258] sm:$0xff] %v2085
        %2118 = vst [vmem:[#allocation3 + $0x2a0] sm:$0xff] %v2086
        %2119 = vst [vmem:[#allocation3 + $0x2e8] sm:$0xff] %v2087
        %2120 = vst [vmem:[#allocation3 + $0x330] sm:$0xff] %v2088
        %2121 = vst [vmem:[#allocation3 + $0x378] sm:$0xff] %v2089
        %2122 = vst [vmem:[#allocation3 + $0x3c0] sm:$0xff] %v2090
        %2123 = vst [vmem:[#allocation3 + $0x408] sm:$0xff] %v2091
        %2124 = vst [vmem:[#allocation3 + $0x450] sm:$0xff] %v2092
        %v2125 = vld [vmem:[%s916] sm:$0xf]
        %v2126 = vld [vmem:[%s916 + $0x4] sm:$0xf]
        %v2127 = vld [vmem:[%s916 + $0x8] sm:$0x1]
        %v2128 = vld [vmem:[%s916 + $0xc] sm:$0xf]
        %v2129 = vld [vmem:[%s916 + $0x10] sm:$0xf]
        %v2130 = vld [vmem:[%s916 + $0x14] sm:$0x1]
        %v2131 = vld [vmem:[%s916 + $0x18] sm:$0xf]
        %v2132 = vld [vmem:[%s916 + $0x1c] sm:$0xf]
        %v2133 = vld [vmem:[%s916 + $0x20] sm:$0x1]
        %v2134 = vld [vmem:[%s916 + $0x24] sm:$0xf]
        %v2135 = vld [vmem:[%s916 + $0x28] sm:$0xf]
        %v2136 = vld [vmem:[%s916 + $0x2c] sm:$0x1]
        %v2137 = vld [vmem:[%s916 + $0x30] sm:$0xf]
        %v2138 = vld [vmem:[%s916 + $0x34] sm:$0xf]
        %v2139 = vld [vmem:[%s916 + $0x38] sm:$0x1]
        %v2140 = vld [vmem:[%s916 + $0x3c] sm:$0xf]
        %v2141 = vld [vmem:[%s916 + $0x40] sm:$0xf]
        %v2142 = vld [vmem:[%s916 + $0x44] sm:$0x1]
        %v2143 = vld [vmem:[%s916 + $0x48] sm:$0xf]
        %v2144 = vld [vmem:[%s916 + $0x4c] sm:$0xf]
        %v2145 = vld [vmem:[%s916 + $0x50] sm:$0x1]
        %v2146 = vld [vmem:[%s916 + $0x54] sm:$0xf]
        %v2147 = vld [vmem:[%s916 + $0x58] sm:$0xf]
        %v2148 = vld [vmem:[%s916 + $0x5c] sm:$0x1]
        %v2149 = vld [vmem:[%s916 + $0x60] sm:$0xf]
        %v2150 = vld [vmem:[%s916 + $0x64] sm:$0xf]
        %v2151 = vld [vmem:[%s916 + $0x68] sm:$0x1]
        %v2152 = vld [vmem:[%s916 + $0x6c] sm:$0xf]
        %v2153 = vld [vmem:[%s916 + $0x70] sm:$0xf]
        %v2154 = vld [vmem:[%s916 + $0x74] sm:$0x1]
        %v2155 = vld [vmem:[%s916 + $0x78] sm:$0xf]
        %v2156 = vld [vmem:[%s916 + $0x7c] sm:$0xf]
        %v2157 = vld [vmem:[%s916 + $0x80] sm:$0x1]
        %v2158 = vld [vmem:[%s916 + $0x84] sm:$0xf]
        %v2159 = vld [vmem:[%s916 + $0x88] sm:$0xf]
        %v2160 = vld [vmem:[%s916 + $0x8c] sm:$0x1]
        %v2161 = vld [vmem:[%s916 + $0x90] sm:$0xf]
        %v2162 = vld [vmem:[%s916 + $0x94] sm:$0xf]
        %v2163 = vld [vmem:[%s916 + $0x98] sm:$0x1]
        %v2164 = vld [vmem:[%s916 + $0x9c] sm:$0xf]
        %v2165 = vld [vmem:[%s916 + $0xa0] sm:$0xf]
        %v2166 = vld [vmem:[%s916 + $0xa4] sm:$0x1]
        %v2167 = vld [vmem:[%s916 + $0xa8] sm:$0xf]
        %v2168 = vld [vmem:[%s916 + $0xac] sm:$0xf]
        %v2169 = vld [vmem:[%s916 + $0xb0] sm:$0x1]
        %v2170 = vld [vmem:[%s916 + $0xb4] sm:$0xf]
        %v2171 = vld [vmem:[%s916 + $0xb8] sm:$0xf]
        %v2172 = vld [vmem:[%s916 + $0xbc] sm:$0x1]
        %v2174 = vshrl.u32 %v2125, 16
        %v2176 = vrot.slane %v2174, 4
        %v2177 = vshll.u32 %v2125, 16
        %v2179 = vrot.slane %v2177, 5
        %v2180 = vor.u32 %v2176, %v2179
        %v2181 = vrot.slane %v2180, 4
        %v2183 = vshll.u32 %v2126, 16
        %v2185 = vrot.slane %v2183, 5
        %v2186 = vsel %vm1225, %v2181, %v2185
        %v2187 = vshrl.u32 %v2126, 16
        %v2189 = vrot.slane %v2187, 4
        %v2190 = vor.u32 %v2189, %v2185
        %v2191 = vrot.slane %v2190, 4
        %v2193 = vshll.u32 %v2127, 16
        %v2195 = vrot.slane %v2193, 5
        %v2196 = vsel %vm1225, %v2191, %v2195
        %v2198 = vshrl.u32 %v2128, 16
        %v2200 = vrot.slane %v2198, 4
        %v2201 = vshll.u32 %v2128, 16
        %v2203 = vrot.slane %v2201, 5
        %v2204 = vor.u32 %v2200, %v2203
        %v2205 = vrot.slane %v2204, 4
        %v2207 = vshll.u32 %v2129, 16
        %v2209 = vrot.slane %v2207, 5
        %v2210 = vsel %vm1225, %v2205, %v2209
        %v2211 = vshrl.u32 %v2129, 16
        %v2213 = vrot.slane %v2211, 4
        %v2214 = vor.u32 %v2213, %v2209
        %v2215 = vrot.slane %v2214, 4
        %v2217 = vshll.u32 %v2130, 16
        %v2219 = vrot.slane %v2217, 5
        %v2220 = vsel %vm1225, %v2215, %v2219
        %v2222 = vshrl.u32 %v2131, 16
        %v2224 = vrot.slane %v2222, 4
        %v2225 = vshll.u32 %v2131, 16
        %v2227 = vrot.slane %v2225, 5
        %v2228 = vor.u32 %v2224, %v2227
        %v2229 = vrot.slane %v2228, 4
        %v2231 = vshll.u32 %v2132, 16
        %v2233 = vrot.slane %v2231, 5
        %v2234 = vsel %vm1225, %v2229, %v2233
        %v2235 = vshrl.u32 %v2132, 16
        %v2237 = vrot.slane %v2235, 4
        %v2238 = vor.u32 %v2237, %v2233
        %v2239 = vrot.slane %v2238, 4
        %v2241 = vshll.u32 %v2133, 16
        %v2243 = vrot.slane %v2241, 5
        %v2244 = vsel %vm1225, %v2239, %v2243
        %v2246 = vshrl.u32 %v2134, 16
        %v2248 = vrot.slane %v2246, 4
        %v2249 = vshll.u32 %v2134, 16
        %v2251 = vrot.slane %v2249, 5
        %v2252 = vor.u32 %v2248, %v2251
        %v2253 = vrot.slane %v2252, 4
        %v2255 = vshll.u32 %v2135, 16
        %v2257 = vrot.slane %v2255, 5
        %v2258 = vsel %vm1225, %v2253, %v2257
        %v2259 = vshrl.u32 %v2135, 16
        %v2261 = vrot.slane %v2259, 4
        %v2262 = vor.u32 %v2261, %v2257
        %v2263 = vrot.slane %v2262, 4
        %v2265 = vshll.u32 %v2136, 16
        %v2267 = vrot.slane %v2265, 5
        %v2268 = vsel %vm1225, %v2263, %v2267
        %v2270 = vshrl.u32 %v2137, 16
        %v2272 = vrot.slane %v2270, 4
        %v2273 = vshll.u32 %v2137, 16
        %v2275 = vrot.slane %v2273, 5
        %v2276 = vor.u32 %v2272, %v2275
        %v2277 = vrot.slane %v2276, 4
        %v2279 = vshll.u32 %v2138, 16
        %v2281 = vrot.slane %v2279, 5
        %v2282 = vsel %vm1225, %v2277, %v2281
        %v2283 = vshrl.u32 %v2138, 16
        %v2285 = vrot.slane %v2283, 4
        %v2286 = vor.u32 %v2285, %v2281
        %v2287 = vrot.slane %v2286, 4
        %v2289 = vshll.u32 %v2139, 16
        %v2291 = vrot.slane %v2289, 5
        %v2292 = vsel %vm1225, %v2287, %v2291
        %v2294 = vshrl.u32 %v2140, 16
        %v2296 = vrot.slane %v2294, 4
        %v2297 = vshll.u32 %v2140, 16
        %v2299 = vrot.slane %v2297, 5
        %v2300 = vor.u32 %v2296, %v2299
        %v2301 = vrot.slane %v2300, 4
        %v2303 = vshll.u32 %v2141, 16
        %v2305 = vrot.slane %v2303, 5
        %v2306 = vsel %vm1225, %v2301, %v2305
        %v2307 = vshrl.u32 %v2141, 16
        %v2309 = vrot.slane %v2307, 4
        %v2310 = vor.u32 %v2309, %v2305
        %v2311 = vrot.slane %v2310, 4
        %v2313 = vshll.u32 %v2142, 16
        %v2315 = vrot.slane %v2313, 5
        %v2316 = vsel %vm1225, %v2311, %v2315
        %v2318 = vshrl.u32 %v2143, 16
        %v2320 = vrot.slane %v2318, 4
        %v2321 = vshll.u32 %v2143, 16
        %v2323 = vrot.slane %v2321, 5
        %v2324 = vor.u32 %v2320, %v2323
        %v2325 = vrot.slane %v2324, 4
        %v2327 = vshll.u32 %v2144, 16
        %v2329 = vrot.slane %v2327, 5
        %v2330 = vsel %vm1225, %v2325, %v2329
        %v2331 = vshrl.u32 %v2144, 16
        %v2333 = vrot.slane %v2331, 4
        %v2334 = vor.u32 %v2333, %v2329
        %v2335 = vrot.slane %v2334, 4
        %v2337 = vshll.u32 %v2145, 16
        %v2339 = vrot.slane %v2337, 5
        %v2340 = vsel %vm1225, %v2335, %v2339
        %v2342 = vshrl.u32 %v2146, 16
        %v2344 = vrot.slane %v2342, 4
        %v2345 = vshll.u32 %v2146, 16
        %v2347 = vrot.slane %v2345, 5
        %v2348 = vor.u32 %v2344, %v2347
        %v2349 = vrot.slane %v2348, 4
        %v2351 = vshll.u32 %v2147, 16
        %v2353 = vrot.slane %v2351, 5
        %v2354 = vsel %vm1225, %v2349, %v2353
        %v2355 = vshrl.u32 %v2147, 16
        %v2357 = vrot.slane %v2355, 4
        %v2358 = vor.u32 %v2357, %v2353
        %v2359 = vrot.slane %v2358, 4
        %v2361 = vshll.u32 %v2148, 16
        %v2363 = vrot.slane %v2361, 5
        %v2364 = vsel %vm1225, %v2359, %v2363
        %v2366 = vshrl.u32 %v2149, 16
        %v2368 = vrot.slane %v2366, 4
        %v2369 = vshll.u32 %v2149, 16
        %v2371 = vrot.slane %v2369, 5
        %v2372 = vor.u32 %v2368, %v2371
        %v2373 = vrot.slane %v2372, 4
        %v2375 = vshll.u32 %v2150, 16
        %v2377 = vrot.slane %v2375, 5
        %v2378 = vsel %vm1225, %v2373, %v2377
        %v2379 = vshrl.u32 %v2150, 16
        %v2381 = vrot.slane %v2379, 4
        %v2382 = vor.u32 %v2381, %v2377
        %v2383 = vrot.slane %v2382, 4
        %v2385 = vshll.u32 %v2151, 16
        %v2387 = vrot.slane %v2385, 5
        %v2388 = vsel %vm1225, %v2383, %v2387
        %v2390 = vshrl.u32 %v2152, 16
        %v2392 = vrot.slane %v2390, 4
        %v2393 = vshll.u32 %v2152, 16
        %v2395 = vrot.slane %v2393, 5
        %v2396 = vor.u32 %v2392, %v2395
        %v2397 = vrot.slane %v2396, 4
        %v2399 = vshll.u32 %v2153, 16
        %v2401 = vrot.slane %v2399, 5
        %v2402 = vsel %vm1225, %v2397, %v2401
        %v2403 = vshrl.u32 %v2153, 16
        %v2405 = vrot.slane %v2403, 4
        %v2406 = vor.u32 %v2405, %v2401
        %v2407 = vrot.slane %v2406, 4
        %v2409 = vshll.u32 %v2154, 16
        %v2411 = vrot.slane %v2409, 5
        %v2412 = vsel %vm1225, %v2407, %v2411
        %v2414 = vshrl.u32 %v2155, 16
        %v2416 = vrot.slane %v2414, 4
        %v2417 = vshll.u32 %v2155, 16
        %v2419 = vrot.slane %v2417, 5
        %v2420 = vor.u32 %v2416, %v2419
        %v2421 = vrot.slane %v2420, 4
        %v2423 = vshll.u32 %v2156, 16
        %v2425 = vrot.slane %v2423, 5
        %v2426 = vsel %vm1225, %v2421, %v2425
        %v2427 = vshrl.u32 %v2156, 16
        %v2429 = vrot.slane %v2427, 4
        %v2430 = vor.u32 %v2429, %v2425
        %v2431 = vrot.slane %v2430, 4
        %v2433 = vshll.u32 %v2157, 16
        %v2435 = vrot.slane %v2433, 5
        %v2436 = vsel %vm1225, %v2431, %v2435
        %v2438 = vshrl.u32 %v2158, 16
        %v2440 = vrot.slane %v2438, 4
        %v2441 = vshll.u32 %v2158, 16
        %v2443 = vrot.slane %v2441, 5
        %v2444 = vor.u32 %v2440, %v2443
        %v2445 = vrot.slane %v2444, 4
        %v2447 = vshll.u32 %v2159, 16
        %v2449 = vrot.slane %v2447, 5
        %v2450 = vsel %vm1225, %v2445, %v2449
        %v2451 = vshrl.u32 %v2159, 16
        %v2453 = vrot.slane %v2451, 4
        %v2454 = vor.u32 %v2453, %v2449
        %v2455 = vrot.slane %v2454, 4
        %v2457 = vshll.u32 %v2160, 16
        %v2459 = vrot.slane %v2457, 5
        %v2460 = vsel %vm1225, %v2455, %v2459
        %v2462 = vshrl.u32 %v2161, 16
        %v2464 = vrot.slane %v2462, 4
        %v2465 = vshll.u32 %v2161, 16
        %v2467 = vrot.slane %v2465, 5
        %v2468 = vor.u32 %v2464, %v2467
        %v2469 = vrot.slane %v2468, 4
        %v2471 = vshll.u32 %v2162, 16
        %v2473 = vrot.slane %v2471, 5
        %v2474 = vsel %vm1225, %v2469, %v2473
        %v2475 = vshrl.u32 %v2162, 16
        %v2477 = vrot.slane %v2475, 4
        %v2478 = vor.u32 %v2477, %v2473
        %v2479 = vrot.slane %v2478, 4
        %v2481 = vshll.u32 %v2163, 16
        %v2483 = vrot.slane %v2481, 5
        %v2484 = vsel %vm1225, %v2479, %v2483
        %v2486 = vshrl.u32 %v2164, 16
        %v2488 = vrot.slane %v2486, 4
        %v2489 = vshll.u32 %v2164, 16
        %v2491 = vrot.slane %v2489, 5
        %v2492 = vor.u32 %v2488, %v2491
        %v2493 = vrot.slane %v2492, 4
        %v2495 = vshll.u32 %v2165, 16
        %v2497 = vrot.slane %v2495, 5
        %v2498 = vsel %vm1225, %v2493, %v2497
        %v2499 = vshrl.u32 %v2165, 16
        %v2501 = vrot.slane %v2499, 4
        %v2502 = vor.u32 %v2501, %v2497
        %v2503 = vrot.slane %v2502, 4
        %v2505 = vshll.u32 %v2166, 16
        %v2507 = vrot.slane %v2505, 5
        %v2508 = vsel %vm1225, %v2503, %v2507
        %v2510 = vshrl.u32 %v2167, 16
        %v2512 = vrot.slane %v2510, 4
        %v2513 = vshll.u32 %v2167, 16
        %v2515 = vrot.slane %v2513, 5
        %v2516 = vor.u32 %v2512, %v2515
        %v2517 = vrot.slane %v2516, 4
        %v2519 = vshll.u32 %v2168, 16
        %v2521 = vrot.slane %v2519, 5
        %v2522 = vsel %vm1225, %v2517, %v2521
        %v2523 = vshrl.u32 %v2168, 16
        %v2525 = vrot.slane %v2523, 4
        %v2526 = vor.u32 %v2525, %v2521
        %v2527 = vrot.slane %v2526, 4
        %v2529 = vshll.u32 %v2169, 16
        %v2531 = vrot.slane %v2529, 5
        %v2532 = vsel %vm1225, %v2527, %v2531
        %v2534 = vshrl.u32 %v2170, 16
        %v2536 = vrot.slane %v2534, 4
        %v2537 = vshll.u32 %v2170, 16
        %v2539 = vrot.slane %v2537, 5
        %v2540 = vor.u32 %v2536, %v2539
        %v2541 = vrot.slane %v2540, 4
        %v2543 = vshll.u32 %v2171, 16
        %v2545 = vrot.slane %v2543, 5
        %v2546 = vsel %vm1225, %v2541, %v2545
        %v2547 = vshrl.u32 %v2171, 16
        %v2549 = vrot.slane %v2547, 4
        %v2550 = vor.u32 %v2549, %v2545
        %v2551 = vrot.slane %v2550, 4
        %v2553 = vshll.u32 %v2172, 16
        %v2555 = vrot.slane %v2553, 5
        %v2556 = vsel %vm1225, %v2551, %v2555
        %v2557 = vunpack.c.l.b16 %v2186
        %v2558 = vunpack.c.l.b16 %v2196
        %v2559 = vunpack.c.l.b16 %v2210
        %v2560 = vunpack.c.l.b16 %v2220
        %v2561 = vunpack.c.l.b16 %v2234
        %v2562 = vunpack.c.l.b16 %v2244
        %v2563 = vunpack.c.l.b16 %v2258
        %v2564 = vunpack.c.l.b16 %v2268
        %v2565 = vunpack.c.l.b16 %v2282
        %v2566 = vunpack.c.l.b16 %v2292
        %v2567 = vunpack.c.l.b16 %v2306
        %v2568 = vunpack.c.l.b16 %v2316
        %v2569 = vunpack.c.l.b16 %v2330
        %v2570 = vunpack.c.l.b16 %v2340
        %v2571 = vunpack.c.l.b16 %v2354
        %v2572 = vunpack.c.l.b16 %v2364
        %v2573 = vunpack.c.l.b16 %v2378
        %v2574 = vunpack.c.l.b16 %v2388
        %v2575 = vunpack.c.l.b16 %v2402
        %v2576 = vunpack.c.l.b16 %v2412
        %v2577 = vunpack.c.l.b16 %v2426
        %v2578 = vunpack.c.l.b16 %v2436
        %v2579 = vunpack.c.l.b16 %v2450
        %v2580 = vunpack.c.l.b16 %v2460
        %v2581 = vunpack.c.l.b16 %v2474
        %v2582 = vunpack.c.l.b16 %v2484
        %v2583 = vunpack.c.l.b16 %v2498
        %v2584 = vunpack.c.l.b16 %v2508
        %v2585 = vunpack.c.l.b16 %v2522
        %v2586 = vunpack.c.l.b16 %v2532
        %v2587 = vunpack.c.l.b16 %v2546
        %v2588 = vunpack.c.l.b16 %v2556
        %v2589 = vpack.c.b16 %v2558, %v2557
        %v2590 = vpack.c.b16 %v2560, %v2559
        %v2591 = vpack.c.b16 %v2562, %v2561
        %v2592 = vpack.c.b16 %v2564, %v2563
        %v2593 = vpack.c.b16 %v2566, %v2565
        %v2594 = vpack.c.b16 %v2568, %v2567
        %v2595 = vpack.c.b16 %v2570, %v2569
        %v2596 = vpack.c.b16 %v2572, %v2571
        %v2597 = vpack.c.b16 %v2574, %v2573
        %v2598 = vpack.c.b16 %v2576, %v2575
        %v2599 = vpack.c.b16 %v2578, %v2577
        %v2600 = vpack.c.b16 %v2580, %v2579
        %v2601 = vpack.c.b16 %v2582, %v2581
        %v2602 = vpack.c.b16 %v2584, %v2583
        %v2603 = vpack.c.b16 %v2586, %v2585
        %v2604 = vpack.c.b16 %v2588, %v2587
        %2621 = vst [vmem:[#allocation3 + $0x20] sm:$0xff] %v2589
        %2622 = vst [vmem:[#allocation3 + $0x68] sm:$0xff] %v2590
        %2623 = vst [vmem:[#allocation3 + $0xb0] sm:$0xff] %v2591
        %2624 = vst [vmem:[#allocation3 + $0xf8] sm:$0xff] %v2592
        %2625 = vst [vmem:[#allocation3 + $0x140] sm:$0xff] %v2593
        %2626 = vst [vmem:[#allocation3 + $0x188] sm:$0xff] %v2594
        %2627 = vst [vmem:[#allocation3 + $0x1d0] sm:$0xff] %v2595
        %2628 = vst [vmem:[#allocation3 + $0x218] sm:$0xff] %v2596
        %2629 = vst [vmem:[#allocation3 + $0x260] sm:$0xff] %v2597
        %2630 = vst [vmem:[#allocation3 + $0x2a8] sm:$0xff] %v2598
        %2631 = vst [vmem:[#allocation3 + $0x2f0] sm:$0xff] %v2599
        %2632 = vst [vmem:[#allocation3 + $0x338] sm:$0xff] %v2600
        %2633 = vst [vmem:[#allocation3 + $0x380] sm:$0xff] %v2601
        %2634 = vst [vmem:[#allocation3 + $0x3c8] sm:$0xff] %v2602
        %2635 = vst [vmem:[#allocation3 + $0x410] sm:$0xff] %v2603
        %2636 = vst [vmem:[#allocation3 + $0x458] sm:$0xff] %v2604
        %v2637 = vld [vmem:[%s916] sm:$0xe]
        %v2638 = vld [vmem:[%s916 + $0x4] sm:$0xf]
        %v2639 = vld [vmem:[%s916 + $0x8] sm:$0x1]
        %v2640 = vld [vmem:[%s916 + $0xc] sm:$0xe]
        %v2641 = vld [vmem:[%s916 + $0x10] sm:$0xf]
        %v2642 = vld [vmem:[%s916 + $0x14] sm:$0x1]
        %v2643 = vld [vmem:[%s916 + $0x18] sm:$0xe]
        %v2644 = vld [vmem:[%s916 + $0x1c] sm:$0xf]
        %v2645 = vld [vmem:[%s916 + $0x20] sm:$0x1]
        %v2646 = vld [vmem:[%s916 + $0x24] sm:$0xe]
        %v2647 = vld [vmem:[%s916 + $0x28] sm:$0xf]
        %v2648 = vld [vmem:[%s916 + $0x2c] sm:$0x1]
        %v2649 = vld [vmem:[%s916 + $0x30] sm:$0xe]
        %v2650 = vld [vmem:[%s916 + $0x34] sm:$0xf]
        %v2651 = vld [vmem:[%s916 + $0x38] sm:$0x1]
        %v2652 = vld [vmem:[%s916 + $0x3c] sm:$0xe]
        %v2653 = vld [vmem:[%s916 + $0x40] sm:$0xf]
        %v2654 = vld [vmem:[%s916 + $0x44] sm:$0x1]
        %v2655 = vld [vmem:[%s916 + $0x48] sm:$0xe]
        %v2656 = vld [vmem:[%s916 + $0x4c] sm:$0xf]
        %v2657 = vld [vmem:[%s916 + $0x50] sm:$0x1]
        %v2658 = vld [vmem:[%s916 + $0x54] sm:$0xe]
        %v2659 = vld [vmem:[%s916 + $0x58] sm:$0xf]
        %v2660 = vld [vmem:[%s916 + $0x5c] sm:$0x1]
        %v2661 = vld [vmem:[%s916 + $0x60] sm:$0xe]
        %v2662 = vld [vmem:[%s916 + $0x64] sm:$0xf]
        %v2663 = vld [vmem:[%s916 + $0x68] sm:$0x1]
        %v2664 = vld [vmem:[%s916 + $0x6c] sm:$0xe]
        %v2665 = vld [vmem:[%s916 + $0x70] sm:$0xf]
        %v2666 = vld [vmem:[%s916 + $0x74] sm:$0x1]
        %v2667 = vld [vmem:[%s916 + $0x78] sm:$0xe]
        %v2668 = vld [vmem:[%s916 + $0x7c] sm:$0xf]
        %v2669 = vld [vmem:[%s916 + $0x80] sm:$0x1]
        %v2670 = vld [vmem:[%s916 + $0x84] sm:$0xe]
        %v2671 = vld [vmem:[%s916 + $0x88] sm:$0xf]
        %v2672 = vld [vmem:[%s916 + $0x8c] sm:$0x1]
        %v2673 = vld [vmem:[%s916 + $0x90] sm:$0xe]
        %v2674 = vld [vmem:[%s916 + $0x94] sm:$0xf]
        %v2675 = vld [vmem:[%s916 + $0x98] sm:$0x1]
        %v2676 = vld [vmem:[%s916 + $0x9c] sm:$0xe]
        %v2677 = vld [vmem:[%s916 + $0xa0] sm:$0xf]
        %v2678 = vld [vmem:[%s916 + $0xa4] sm:$0x1]
        %v2679 = vld [vmem:[%s916 + $0xa8] sm:$0xe]
        %v2680 = vld [vmem:[%s916 + $0xac] sm:$0xf]
        %v2681 = vld [vmem:[%s916 + $0xb0] sm:$0x1]
        %v2682 = vld [vmem:[%s916 + $0xb4] sm:$0xe]
        %v2683 = vld [vmem:[%s916 + $0xb8] sm:$0xf]
        %v2684 = vld [vmem:[%s916 + $0xbc] sm:$0x1]
        %v2733 = vrot.slane %v2637, 5
        %v2734 = vrot.slane %v2733, 4
        %v2735 = vrot.slane %v2638, 5
        %v2736 = vsel %vm1788, %v2734, %v2735
        %v2737 = vrot.slane %v2735, 4
        %v2738 = vrot.slane %v2639, 5
        %v2739 = vsel %vm1788, %v2737, %v2738
        %v2740 = vrot.slane %v2640, 5
        %v2741 = vrot.slane %v2740, 4
        %v2742 = vrot.slane %v2641, 5
        %v2743 = vsel %vm1788, %v2741, %v2742
        %v2744 = vrot.slane %v2742, 4
        %v2745 = vrot.slane %v2642, 5
        %v2746 = vsel %vm1788, %v2744, %v2745
        %v2747 = vrot.slane %v2643, 5
        %v2748 = vrot.slane %v2747, 4
        %v2749 = vrot.slane %v2644, 5
        %v2750 = vsel %vm1788, %v2748, %v2749
        %v2751 = vrot.slane %v2749, 4
        %v2752 = vrot.slane %v2645, 5
        %v2753 = vsel %vm1788, %v2751, %v2752
        %v2754 = vrot.slane %v2646, 5
        %v2755 = vrot.slane %v2754, 4
        %v2756 = vrot.slane %v2647, 5
        %v2757 = vsel %vm1788, %v2755, %v2756
        %v2758 = vrot.slane %v2756, 4
        %v2759 = vrot.slane %v2648, 5
        %v2760 = vsel %vm1788, %v2758, %v2759
        %v2761 = vrot.slane %v2649, 5
        %v2762 = vrot.slane %v2761, 4
        %v2763 = vrot.slane %v2650, 5
        %v2764 = vsel %vm1788, %v2762, %v2763
        %v2765 = vrot.slane %v2763, 4
        %v2766 = vrot.slane %v2651, 5
        %v2767 = vsel %vm1788, %v2765, %v2766
        %v2768 = vrot.slane %v2652, 5
        %v2769 = vrot.slane %v2768, 4
        %v2770 = vrot.slane %v2653, 5
        %v2771 = vsel %vm1788, %v2769, %v2770
        %v2772 = vrot.slane %v2770, 4
        %v2773 = vrot.slane %v2654, 5
        %v2774 = vsel %vm1788, %v2772, %v2773
        %v2775 = vrot.slane %v2655, 5
        %v2776 = vrot.slane %v2775, 4
        %v2777 = vrot.slane %v2656, 5
        %v2778 = vsel %vm1788, %v2776, %v2777
        %v2779 = vrot.slane %v2777, 4
        %v2780 = vrot.slane %v2657, 5
        %v2781 = vsel %vm1788, %v2779, %v2780
        %v2782 = vrot.slane %v2658, 5
        %v2783 = vrot.slane %v2782, 4
        %v2784 = vrot.slane %v2659, 5
        %v2785 = vsel %vm1788, %v2783, %v2784
        %v2786 = vrot.slane %v2784, 4
        %v2787 = vrot.slane %v2660, 5
        %v2788 = vsel %vm1788, %v2786, %v2787
        %v2789 = vrot.slane %v2661, 5
        %v2790 = vrot.slane %v2789, 4
        %v2791 = vrot.slane %v2662, 5
        %v2792 = vsel %vm1788, %v2790, %v2791
        %v2793 = vrot.slane %v2791, 4
        %v2794 = vrot.slane %v2663, 5
        %v2795 = vsel %vm1788, %v2793, %v2794
        %v2796 = vrot.slane %v2664, 5
        %v2797 = vrot.slane %v2796, 4
        %v2798 = vrot.slane %v2665, 5
        %v2799 = vsel %vm1788, %v2797, %v2798
        %v2800 = vrot.slane %v2798, 4
        %v2801 = vrot.slane %v2666, 5
        %v2802 = vsel %vm1788, %v2800, %v2801
        %v2803 = vrot.slane %v2667, 5
        %v2804 = vrot.slane %v2803, 4
        %v2805 = vrot.slane %v2668, 5
        %v2806 = vsel %vm1788, %v2804, %v2805
        %v2807 = vrot.slane %v2805, 4
        %v2808 = vrot.slane %v2669, 5
        %v2809 = vsel %vm1788, %v2807, %v2808
        %v2810 = vrot.slane %v2670, 5
        %v2811 = vrot.slane %v2810, 4
        %v2812 = vrot.slane %v2671, 5
        %v2813 = vsel %vm1788, %v2811, %v2812
        %v2814 = vrot.slane %v2812, 4
        %v2815 = vrot.slane %v2672, 5
        %v2816 = vsel %vm1788, %v2814, %v2815
        %v2817 = vrot.slane %v2673, 5
        %v2818 = vrot.slane %v2817, 4
        %v2819 = vrot.slane %v2674, 5
        %v2820 = vsel %vm1788, %v2818, %v2819
        %v2821 = vrot.slane %v2819, 4
        %v2822 = vrot.slane %v2675, 5
        %v2823 = vsel %vm1788, %v2821, %v2822
        %v2824 = vrot.slane %v2676, 5
        %v2825 = vrot.slane %v2824, 4
        %v2826 = vrot.slane %v2677, 5
        %v2827 = vsel %vm1788, %v2825, %v2826
        %v2828 = vrot.slane %v2826, 4
        %v2829 = vrot.slane %v2678, 5
        %v2830 = vsel %vm1788, %v2828, %v2829
        %v2831 = vrot.slane %v2679, 5
        %v2832 = vrot.slane %v2831, 4
        %v2833 = vrot.slane %v2680, 5
        %v2834 = vsel %vm1788, %v2832, %v2833
        %v2835 = vrot.slane %v2833, 4
        %v2836 = vrot.slane %v2681, 5
        %v2837 = vsel %vm1788, %v2835, %v2836
        %v2838 = vrot.slane %v2682, 5
        %v2839 = vrot.slane %v2838, 4
        %v2840 = vrot.slane %v2683, 5
        %v2841 = vsel %vm1788, %v2839, %v2840
        %v2842 = vrot.slane %v2840, 4
        %v2843 = vrot.slane %v2684, 5
        %v2844 = vsel %vm1788, %v2842, %v2843
        %v2845 = vunpack.c.l.b16 %v2736
        %v2846 = vunpack.c.l.b16 %v2739
        %v2847 = vunpack.c.l.b16 %v2743
        %v2848 = vunpack.c.l.b16 %v2746
        %v2849 = vunpack.c.l.b16 %v2750
        %v2850 = vunpack.c.l.b16 %v2753
        %v2851 = vunpack.c.l.b16 %v2757
        %v2852 = vunpack.c.l.b16 %v2760
        %v2853 = vunpack.c.l.b16 %v2764
        %v2854 = vunpack.c.l.b16 %v2767
        %v2855 = vunpack.c.l.b16 %v2771
        %v2856 = vunpack.c.l.b16 %v2774
        %v2857 = vunpack.c.l.b16 %v2778
        %v2858 = vunpack.c.l.b16 %v2781
        %v2859 = vunpack.c.l.b16 %v2785
        %v2860 = vunpack.c.l.b16 %v2788
        %v2861 = vunpack.c.l.b16 %v2792
        %v2862 = vunpack.c.l.b16 %v2795
        %v2863 = vunpack.c.l.b16 %v2799
        %v2864 = vunpack.c.l.b16 %v2802
        %v2865 = vunpack.c.l.b16 %v2806
        %v2866 = vunpack.c.l.b16 %v2809
        %v2867 = vunpack.c.l.b16 %v2813
        %v2868 = vunpack.c.l.b16 %v2816
        %v2869 = vunpack.c.l.b16 %v2820
        %v2870 = vunpack.c.l.b16 %v2823
        %v2871 = vunpack.c.l.b16 %v2827
        %v2872 = vunpack.c.l.b16 %v2830
        %v2873 = vunpack.c.l.b16 %v2834
        %v2874 = vunpack.c.l.b16 %v2837
        %v2875 = vunpack.c.l.b16 %v2841
        %v2876 = vunpack.c.l.b16 %v2844
        %v2877 = vpack.c.b16 %v2846, %v2845
        %v2878 = vpack.c.b16 %v2848, %v2847
        %v2879 = vpack.c.b16 %v2850, %v2849
        %v2880 = vpack.c.b16 %v2852, %v2851
        %v2881 = vpack.c.b16 %v2854, %v2853
        %v2882 = vpack.c.b16 %v2856, %v2855
        %v2883 = vpack.c.b16 %v2858, %v2857
        %v2884 = vpack.c.b16 %v2860, %v2859
        %v2885 = vpack.c.b16 %v2862, %v2861
        %v2886 = vpack.c.b16 %v2864, %v2863
        %v2887 = vpack.c.b16 %v2866, %v2865
        %v2888 = vpack.c.b16 %v2868, %v2867
        %v2889 = vpack.c.b16 %v2870, %v2869
        %v2890 = vpack.c.b16 %v2872, %v2871
        %v2891 = vpack.c.b16 %v2874, %v2873
        %v2892 = vpack.c.b16 %v2876, %v2875
        %2909 = vst [vmem:[#allocation3 + $0x28] sm:$0xff] %v2877
        %2910 = vst [vmem:[#allocation3 + $0x70] sm:$0xff] %v2878
        %2911 = vst [vmem:[#allocation3 + $0xb8] sm:$0xff] %v2879
        %2912 = vst [vmem:[#allocation3 + $0x100] sm:$0xff] %v2880
        %2913 = vst [vmem:[#allocation3 + $0x148] sm:$0xff] %v2881
        %2914 = vst [vmem:[#allocation3 + $0x190] sm:$0xff] %v2882
        %2915 = vst [vmem:[#allocation3 + $0x1d8] sm:$0xff] %v2883
        %2916 = vst [vmem:[#allocation3 + $0x220] sm:$0xff] %v2884
        %2917 = vst [vmem:[#allocation3 + $0x268] sm:$0xff] %v2885
        %2918 = vst [vmem:[#allocation3 + $0x2b0] sm:$0xff] %v2886
        %2919 = vst [vmem:[#allocation3 + $0x2f8] sm:$0xff] %v2887
        %2920 = vst [vmem:[#allocation3 + $0x340] sm:$0xff] %v2888
        %2921 = vst [vmem:[#allocation3 + $0x388] sm:$0xff] %v2889
        %2922 = vst [vmem:[#allocation3 + $0x3d0] sm:$0xff] %v2890
        %2923 = vst [vmem:[#allocation3 + $0x418] sm:$0xff] %v2891
        %2924 = vst [vmem:[#allocation3 + $0x460] sm:$0xff] %v2892
        %s2925 = scalar_lea.vmem [#allocation2], 24
        %v2926 = vld [vmem:[%s2925] sm:$0xf]
        %v2927 = vld [vmem:[%s2925 + $0x4] sm:$0xf]
        %v2928 = vld [vmem:[%s2925 + $0xc] sm:$0xf]
        %v2929 = vld [vmem:[%s2925 + $0x10] sm:$0xf]
        %v2930 = vld [vmem:[%s2925 + $0x18] sm:$0xf]
        %v2931 = vld [vmem:[%s2925 + $0x1c] sm:$0xf]
        %v2932 = vld [vmem:[%s2925 + $0x24] sm:$0xf]
        %v2933 = vld [vmem:[%s2925 + $0x28] sm:$0xf]
        %v2934 = vld [vmem:[%s2925 + $0x30] sm:$0xf]
        %v2935 = vld [vmem:[%s2925 + $0x34] sm:$0xf]
        %v2936 = vld [vmem:[%s2925 + $0x3c] sm:$0xf]
        %v2937 = vld [vmem:[%s2925 + $0x40] sm:$0xf]
        %v2938 = vld [vmem:[%s2925 + $0x48] sm:$0xf]
        %v2939 = vld [vmem:[%s2925 + $0x4c] sm:$0xf]
        %v2940 = vld [vmem:[%s2925 + $0x54] sm:$0xf]
        %v2941 = vld [vmem:[%s2925 + $0x58] sm:$0xf]
        %v2942 = vld [vmem:[%s2925 + $0x60] sm:$0xf]
        %v2943 = vld [vmem:[%s2925 + $0x64] sm:$0xf]
        %v2944 = vld [vmem:[%s2925 + $0x6c] sm:$0xf]
        %v2945 = vld [vmem:[%s2925 + $0x70] sm:$0xf]
        %v2946 = vld [vmem:[%s2925 + $0x78] sm:$0xf]
        %v2947 = vld [vmem:[%s2925 + $0x7c] sm:$0xf]
        %v2948 = vld [vmem:[%s2925 + $0x84] sm:$0xf]
        %v2949 = vld [vmem:[%s2925 + $0x88] sm:$0xf]
        %v2950 = vld [vmem:[%s2925 + $0x90] sm:$0xf]
        %v2951 = vld [vmem:[%s2925 + $0x94] sm:$0xf]
        %v2952 = vld [vmem:[%s2925 + $0x9c] sm:$0xf]
        %v2953 = vld [vmem:[%s2925 + $0xa0] sm:$0xf]
        %v2954 = vld [vmem:[%s2925 + $0xa8] sm:$0xf]
        %v2955 = vld [vmem:[%s2925 + $0xac] sm:$0xf]
        %v2956 = vld [vmem:[%s2925 + $0xb4] sm:$0xf]
        %v2957 = vld [vmem:[%s2925 + $0xb8] sm:$0xf]
        %v2990 = vunpack.c.l.b16 %v2926
        %v2991 = vunpack.c.l.b16 %v2927
        %v2992 = vunpack.c.l.b16 %v2928
        %v2993 = vunpack.c.l.b16 %v2929
        %v2994 = vunpack.c.l.b16 %v2930
        %v2995 = vunpack.c.l.b16 %v2931
        %v2996 = vunpack.c.l.b16 %v2932
        %v2997 = vunpack.c.l.b16 %v2933
        %v2998 = vunpack.c.l.b16 %v2934
        %v2999 = vunpack.c.l.b16 %v2935
        %v3000 = vunpack.c.l.b16 %v2936
        %v3001 = vunpack.c.l.b16 %v2937
        %v3002 = vunpack.c.l.b16 %v2938
        %v3003 = vunpack.c.l.b16 %v2939
        %v3004 = vunpack.c.l.b16 %v2940
        %v3005 = vunpack.c.l.b16 %v2941
        %v3006 = vunpack.c.l.b16 %v2942
        %v3007 = vunpack.c.l.b16 %v2943
        %v3008 = vunpack.c.l.b16 %v2944
        %v3009 = vunpack.c.l.b16 %v2945
        %v3010 = vunpack.c.l.b16 %v2946
        %v3011 = vunpack.c.l.b16 %v2947
        %v3012 = vunpack.c.l.b16 %v2948
        %v3013 = vunpack.c.l.b16 %v2949
        %v3014 = vunpack.c.l.b16 %v2950
        %v3015 = vunpack.c.l.b16 %v2951
        %v3016 = vunpack.c.l.b16 %v2952
        %v3017 = vunpack.c.l.b16 %v2953
        %v3018 = vunpack.c.l.b16 %v2954
        %v3019 = vunpack.c.l.b16 %v2955
        %v3020 = vunpack.c.l.b16 %v2956
        %v3021 = vunpack.c.l.b16 %v2957
        %v3022 = vpack.c.b16 %v2991, %v2990
        %v3023 = vpack.c.b16 %v2993, %v2992
        %v3024 = vpack.c.b16 %v2995, %v2994
        %v3025 = vpack.c.b16 %v2997, %v2996
        %v3026 = vpack.c.b16 %v2999, %v2998
        %v3027 = vpack.c.b16 %v3001, %v3000
        %v3028 = vpack.c.b16 %v3003, %v3002
        %v3029 = vpack.c.b16 %v3005, %v3004
        %v3030 = vpack.c.b16 %v3007, %v3006
        %v3031 = vpack.c.b16 %v3009, %v3008
        %v3032 = vpack.c.b16 %v3011, %v3010
        %v3033 = vpack.c.b16 %v3013, %v3012
        %v3034 = vpack.c.b16 %v3015, %v3014
        %v3035 = vpack.c.b16 %v3017, %v3016
        %v3036 = vpack.c.b16 %v3019, %v3018
        %v3037 = vpack.c.b16 %v3021, %v3020
        %3054 = vst [vmem:[#allocation3 + $0x30] sm:$0xff] %v3022
        %3055 = vst [vmem:[#allocation3 + $0x78] sm:$0xff] %v3023
        %3056 = vst [vmem:[#allocation3 + $0xc0] sm:$0xff] %v3024
        %3057 = vst [vmem:[#allocation3 + $0x108] sm:$0xff] %v3025
        %3058 = vst [vmem:[#allocation3 + $0x150] sm:$0xff] %v3026
        %3059 = vst [vmem:[#allocation3 + $0x198] sm:$0xff] %v3027
        %3060 = vst [vmem:[#allocation3 + $0x1e0] sm:$0xff] %v3028
        %3061 = vst [vmem:[#allocation3 + $0x228] sm:$0xff] %v3029
        %3062 = vst [vmem:[#allocation3 + $0x270] sm:$0xff] %v3030
        %3063 = vst [vmem:[#allocation3 + $0x2b8] sm:$0xff] %v3031
        %3064 = vst [vmem:[#allocation3 + $0x300] sm:$0xff] %v3032
        %3065 = vst [vmem:[#allocation3 + $0x348] sm:$0xff] %v3033
        %3066 = vst [vmem:[#allocation3 + $0x390] sm:$0xff] %v3034
        %3067 = vst [vmem:[#allocation3 + $0x3d8] sm:$0xff] %v3035
        %3068 = vst [vmem:[#allocation3 + $0x420] sm:$0xff] %v3036
        %3069 = vst [vmem:[#allocation3 + $0x468] sm:$0xff] %v3037
        %v3070 = vld [vmem:[%s2925] sm:$0xf]
        %v3071 = vld [vmem:[%s2925 + $0x4] sm:$0xf]
        %v3072 = vld [vmem:[%s2925 + $0x8] sm:$0x1]
        %v3073 = vld [vmem:[%s2925 + $0xc] sm:$0xf]
        %v3074 = vld [vmem:[%s2925 + $0x10] sm:$0xf]
        %v3075 = vld [vmem:[%s2925 + $0x14] sm:$0x1]
        %v3076 = vld [vmem:[%s2925 + $0x18] sm:$0xf]
        %v3077 = vld [vmem:[%s2925 + $0x1c] sm:$0xf]
        %v3078 = vld [vmem:[%s2925 + $0x20] sm:$0x1]
        %v3079 = vld [vmem:[%s2925 + $0x24] sm:$0xf]
        %v3080 = vld [vmem:[%s2925 + $0x28] sm:$0xf]
        %v3081 = vld [vmem:[%s2925 + $0x2c] sm:$0x1]
        %v3082 = vld [vmem:[%s2925 + $0x30] sm:$0xf]
        %v3083 = vld [vmem:[%s2925 + $0x34] sm:$0xf]
        %v3084 = vld [vmem:[%s2925 + $0x38] sm:$0x1]
        %v3085 = vld [vmem:[%s2925 + $0x3c] sm:$0xf]
        %v3086 = vld [vmem:[%s2925 + $0x40] sm:$0xf]
        %v3087 = vld [vmem:[%s2925 + $0x44] sm:$0x1]
        %v3088 = vld [vmem:[%s2925 + $0x48] sm:$0xf]
        %v3089 = vld [vmem:[%s2925 + $0x4c] sm:$0xf]
        %v3090 = vld [vmem:[%s2925 + $0x50] sm:$0x1]
        %v3091 = vld [vmem:[%s2925 + $0x54] sm:$0xf]
        %v3092 = vld [vmem:[%s2925 + $0x58] sm:$0xf]
        %v3093 = vld [vmem:[%s2925 + $0x5c] sm:$0x1]
        %v3094 = vld [vmem:[%s2925 + $0x60] sm:$0xf]
        %v3095 = vld [vmem:[%s2925 + $0x64] sm:$0xf]
        %v3096 = vld [vmem:[%s2925 + $0x68] sm:$0x1]
        %v3097 = vld [vmem:[%s2925 + $0x6c] sm:$0xf]
        %v3098 = vld [vmem:[%s2925 + $0x70] sm:$0xf]
        %v3099 = vld [vmem:[%s2925 + $0x74] sm:$0x1]
        %v3100 = vld [vmem:[%s2925 + $0x78] sm:$0xf]
        %v3101 = vld [vmem:[%s2925 + $0x7c] sm:$0xf]
        %v3102 = vld [vmem:[%s2925 + $0x80] sm:$0x1]
        %v3103 = vld [vmem:[%s2925 + $0x84] sm:$0xf]
        %v3104 = vld [vmem:[%s2925 + $0x88] sm:$0xf]
        %v3105 = vld [vmem:[%s2925 + $0x8c] sm:$0x1]
        %v3106 = vld [vmem:[%s2925 + $0x90] sm:$0xf]
        %v3107 = vld [vmem:[%s2925 + $0x94] sm:$0xf]
        %v3108 = vld [vmem:[%s2925 + $0x98] sm:$0x1]
        %v3109 = vld [vmem:[%s2925 + $0x9c] sm:$0xf]
        %v3110 = vld [vmem:[%s2925 + $0xa0] sm:$0xf]
        %v3111 = vld [vmem:[%s2925 + $0xa4] sm:$0x1]
        %v3112 = vld [vmem:[%s2925 + $0xa8] sm:$0xf]
        %v3113 = vld [vmem:[%s2925 + $0xac] sm:$0xf]
        %v3114 = vld [vmem:[%s2925 + $0xb0] sm:$0x1]
        %v3115 = vld [vmem:[%s2925 + $0xb4] sm:$0xf]
        %v3116 = vld [vmem:[%s2925 + $0xb8] sm:$0xf]
        %v3117 = vld [vmem:[%s2925 + $0xbc] sm:$0x1]
        %v3119 = vshrl.u32 %v3070, 16
        %v3121 = vrot.slane %v3119, 4
        %v3122 = vshll.u32 %v3070, 16
        %v3124 = vrot.slane %v3122, 5
        %v3125 = vor.u32 %v3121, %v3124
        %v3126 = vrot.slane %v3125, 4
        %v3128 = vshll.u32 %v3071, 16
        %v3130 = vrot.slane %v3128, 5
        %v3131 = vsel %vm1225, %v3126, %v3130
        %v3132 = vshrl.u32 %v3071, 16
        %v3134 = vrot.slane %v3132, 4
        %v3135 = vor.u32 %v3134, %v3130
        %v3136 = vrot.slane %v3135, 4
        %v3138 = vshll.u32 %v3072, 16
        %v3140 = vrot.slane %v3138, 5
        %v3141 = vsel %vm1225, %v3136, %v3140
        %v3143 = vshrl.u32 %v3073, 16
        %v3145 = vrot.slane %v3143, 4
        %v3146 = vshll.u32 %v3073, 16
        %v3148 = vrot.slane %v3146, 5
        %v3149 = vor.u32 %v3145, %v3148
        %v3150 = vrot.slane %v3149, 4
        %v3152 = vshll.u32 %v3074, 16
        %v3154 = vrot.slane %v3152, 5
        %v3155 = vsel %vm1225, %v3150, %v3154
        %v3156 = vshrl.u32 %v3074, 16
        %v3158 = vrot.slane %v3156, 4
        %v3159 = vor.u32 %v3158, %v3154
        %v3160 = vrot.slane %v3159, 4
        %v3162 = vshll.u32 %v3075, 16
        %v3164 = vrot.slane %v3162, 5
        %v3165 = vsel %vm1225, %v3160, %v3164
        %v3167 = vshrl.u32 %v3076, 16
        %v3169 = vrot.slane %v3167, 4
        %v3170 = vshll.u32 %v3076, 16
        %v3172 = vrot.slane %v3170, 5
        %v3173 = vor.u32 %v3169, %v3172
        %v3174 = vrot.slane %v3173, 4
        %v3176 = vshll.u32 %v3077, 16
        %v3178 = vrot.slane %v3176, 5
        %v3179 = vsel %vm1225, %v3174, %v3178
        %v3180 = vshrl.u32 %v3077, 16
        %v3182 = vrot.slane %v3180, 4
        %v3183 = vor.u32 %v3182, %v3178
        %v3184 = vrot.slane %v3183, 4
        %v3186 = vshll.u32 %v3078, 16
        %v3188 = vrot.slane %v3186, 5
        %v3189 = vsel %vm1225, %v3184, %v3188
        %v3191 = vshrl.u32 %v3079, 16
        %v3193 = vrot.slane %v3191, 4
        %v3194 = vshll.u32 %v3079, 16
        %v3196 = vrot.slane %v3194, 5
        %v3197 = vor.u32 %v3193, %v3196
        %v3198 = vrot.slane %v3197, 4
        %v3200 = vshll.u32 %v3080, 16
        %v3202 = vrot.slane %v3200, 5
        %v3203 = vsel %vm1225, %v3198, %v3202
        %v3204 = vshrl.u32 %v3080, 16
        %v3206 = vrot.slane %v3204, 4
        %v3207 = vor.u32 %v3206, %v3202
        %v3208 = vrot.slane %v3207, 4
        %v3210 = vshll.u32 %v3081, 16
        %v3212 = vrot.slane %v3210, 5
        %v3213 = vsel %vm1225, %v3208, %v3212
        %v3215 = vshrl.u32 %v3082, 16
        %v3217 = vrot.slane %v3215, 4
        %v3218 = vshll.u32 %v3082, 16
        %v3220 = vrot.slane %v3218, 5
        %v3221 = vor.u32 %v3217, %v3220
        %v3222 = vrot.slane %v3221, 4
        %v3224 = vshll.u32 %v3083, 16
        %v3226 = vrot.slane %v3224, 5
        %v3227 = vsel %vm1225, %v3222, %v3226
        %v3228 = vshrl.u32 %v3083, 16
        %v3230 = vrot.slane %v3228, 4
        %v3231 = vor.u32 %v3230, %v3226
        %v3232 = vrot.slane %v3231, 4
        %v3234 = vshll.u32 %v3084, 16
        %v3236 = vrot.slane %v3234, 5
        %v3237 = vsel %vm1225, %v3232, %v3236
        %v3239 = vshrl.u32 %v3085, 16
        %v3241 = vrot.slane %v3239, 4
        %v3242 = vshll.u32 %v3085, 16
        %v3244 = vrot.slane %v3242, 5
        %v3245 = vor.u32 %v3241, %v3244
        %v3246 = vrot.slane %v3245, 4
        %v3248 = vshll.u32 %v3086, 16
        %v3250 = vrot.slane %v3248, 5
        %v3251 = vsel %vm1225, %v3246, %v3250
        %v3252 = vshrl.u32 %v3086, 16
        %v3254 = vrot.slane %v3252, 4
        %v3255 = vor.u32 %v3254, %v3250
        %v3256 = vrot.slane %v3255, 4
        %v3258 = vshll.u32 %v3087, 16
        %v3260 = vrot.slane %v3258, 5
        %v3261 = vsel %vm1225, %v3256, %v3260
        %v3263 = vshrl.u32 %v3088, 16
        %v3265 = vrot.slane %v3263, 4
        %v3266 = vshll.u32 %v3088, 16
        %v3268 = vrot.slane %v3266, 5
        %v3269 = vor.u32 %v3265, %v3268
        %v3270 = vrot.slane %v3269, 4
        %v3272 = vshll.u32 %v3089, 16
        %v3274 = vrot.slane %v3272, 5
        %v3275 = vsel %vm1225, %v3270, %v3274
        %v3276 = vshrl.u32 %v3089, 16
        %v3278 = vrot.slane %v3276, 4
        %v3279 = vor.u32 %v3278, %v3274
        %v3280 = vrot.slane %v3279, 4
        %v3282 = vshll.u32 %v3090, 16
        %v3284 = vrot.slane %v3282, 5
        %v3285 = vsel %vm1225, %v3280, %v3284
        %v3287 = vshrl.u32 %v3091, 16
        %v3289 = vrot.slane %v3287, 4
        %v3290 = vshll.u32 %v3091, 16
        %v3292 = vrot.slane %v3290, 5
        %v3293 = vor.u32 %v3289, %v3292
        %v3294 = vrot.slane %v3293, 4
        %v3296 = vshll.u32 %v3092, 16
        %v3298 = vrot.slane %v3296, 5
        %v3299 = vsel %vm1225, %v3294, %v3298
        %v3300 = vshrl.u32 %v3092, 16
        %v3302 = vrot.slane %v3300, 4
        %v3303 = vor.u32 %v3302, %v3298
        %v3304 = vrot.slane %v3303, 4
        %v3306 = vshll.u32 %v3093, 16
        %v3308 = vrot.slane %v3306, 5
        %v3309 = vsel %vm1225, %v3304, %v3308
        %v3311 = vshrl.u32 %v3094, 16
        %v3313 = vrot.slane %v3311, 4
        %v3314 = vshll.u32 %v3094, 16
        %v3316 = vrot.slane %v3314, 5
        %v3317 = vor.u32 %v3313, %v3316
        %v3318 = vrot.slane %v3317, 4
        %v3320 = vshll.u32 %v3095, 16
        %v3322 = vrot.slane %v3320, 5
        %v3323 = vsel %vm1225, %v3318, %v3322
        %v3324 = vshrl.u32 %v3095, 16
        %v3326 = vrot.slane %v3324, 4
        %v3327 = vor.u32 %v3326, %v3322
        %v3328 = vrot.slane %v3327, 4
        %v3330 = vshll.u32 %v3096, 16
        %v3332 = vrot.slane %v3330, 5
        %v3333 = vsel %vm1225, %v3328, %v3332
        %v3335 = vshrl.u32 %v3097, 16
        %v3337 = vrot.slane %v3335, 4
        %v3338 = vshll.u32 %v3097, 16
        %v3340 = vrot.slane %v3338, 5
        %v3341 = vor.u32 %v3337, %v3340
        %v3342 = vrot.slane %v3341, 4
        %v3344 = vshll.u32 %v3098, 16
        %v3346 = vrot.slane %v3344, 5
        %v3347 = vsel %vm1225, %v3342, %v3346
        %v3348 = vshrl.u32 %v3098, 16
        %v3350 = vrot.slane %v3348, 4
        %v3351 = vor.u32 %v3350, %v3346
        %v3352 = vrot.slane %v3351, 4
        %v3354 = vshll.u32 %v3099, 16
        %v3356 = vrot.slane %v3354, 5
        %v3357 = vsel %vm1225, %v3352, %v3356
        %v3359 = vshrl.u32 %v3100, 16
        %v3361 = vrot.slane %v3359, 4
        %v3362 = vshll.u32 %v3100, 16
        %v3364 = vrot.slane %v3362, 5
        %v3365 = vor.u32 %v3361, %v3364
        %v3366 = vrot.slane %v3365, 4
        %v3368 = vshll.u32 %v3101, 16
        %v3370 = vrot.slane %v3368, 5
        %v3371 = vsel %vm1225, %v3366, %v3370
        %v3372 = vshrl.u32 %v3101, 16
        %v3374 = vrot.slane %v3372, 4
        %v3375 = vor.u32 %v3374, %v3370
        %v3376 = vrot.slane %v3375, 4
        %v3378 = vshll.u32 %v3102, 16
        %v3380 = vrot.slane %v3378, 5
        %v3381 = vsel %vm1225, %v3376, %v3380
        %v3383 = vshrl.u32 %v3103, 16
        %v3385 = vrot.slane %v3383, 4
        %v3386 = vshll.u32 %v3103, 16
        %v3388 = vrot.slane %v3386, 5
        %v3389 = vor.u32 %v3385, %v3388
        %v3390 = vrot.slane %v3389, 4
        %v3392 = vshll.u32 %v3104, 16
        %v3394 = vrot.slane %v3392, 5
        %v3395 = vsel %vm1225, %v3390, %v3394
        %v3396 = vshrl.u32 %v3104, 16
        %v3398 = vrot.slane %v3396, 4
        %v3399 = vor.u32 %v3398, %v3394
        %v3400 = vrot.slane %v3399, 4
        %v3402 = vshll.u32 %v3105, 16
        %v3404 = vrot.slane %v3402, 5
        %v3405 = vsel %vm1225, %v3400, %v3404
        %v3407 = vshrl.u32 %v3106, 16
        %v3409 = vrot.slane %v3407, 4
        %v3410 = vshll.u32 %v3106, 16
        %v3412 = vrot.slane %v3410, 5
        %v3413 = vor.u32 %v3409, %v3412
        %v3414 = vrot.slane %v3413, 4
        %v3416 = vshll.u32 %v3107, 16
        %v3418 = vrot.slane %v3416, 5
        %v3419 = vsel %vm1225, %v3414, %v3418
        %v3420 = vshrl.u32 %v3107, 16
        %v3422 = vrot.slane %v3420, 4
        %v3423 = vor.u32 %v3422, %v3418
        %v3424 = vrot.slane %v3423, 4
        %v3426 = vshll.u32 %v3108, 16
        %v3428 = vrot.slane %v3426, 5
        %v3429 = vsel %vm1225, %v3424, %v3428
        %v3431 = vshrl.u32 %v3109, 16
        %v3433 = vrot.slane %v3431, 4
        %v3434 = vshll.u32 %v3109, 16
        %v3436 = vrot.slane %v3434, 5
        %v3437 = vor.u32 %v3433, %v3436
        %v3438 = vrot.slane %v3437, 4
        %v3440 = vshll.u32 %v3110, 16
        %v3442 = vrot.slane %v3440, 5
        %v3443 = vsel %vm1225, %v3438, %v3442
        %v3444 = vshrl.u32 %v3110, 16
        %v3446 = vrot.slane %v3444, 4
        %v3447 = vor.u32 %v3446, %v3442
        %v3448 = vrot.slane %v3447, 4
        %v3450 = vshll.u32 %v3111, 16
        %v3452 = vrot.slane %v3450, 5
        %v3453 = vsel %vm1225, %v3448, %v3452
        %v3455 = vshrl.u32 %v3112, 16
        %v3457 = vrot.slane %v3455, 4
        %v3458 = vshll.u32 %v3112, 16
        %v3460 = vrot.slane %v3458, 5
        %v3461 = vor.u32 %v3457, %v3460
        %v3462 = vrot.slane %v3461, 4
        %v3464 = vshll.u32 %v3113, 16
        %v3466 = vrot.slane %v3464, 5
        %v3467 = vsel %vm1225, %v3462, %v3466
        %v3468 = vshrl.u32 %v3113, 16
        %v3470 = vrot.slane %v3468, 4
        %v3471 = vor.u32 %v3470, %v3466
        %v3472 = vrot.slane %v3471, 4
        %v3474 = vshll.u32 %v3114, 16
        %v3476 = vrot.slane %v3474, 5
        %v3477 = vsel %vm1225, %v3472, %v3476
        %v3479 = vshrl.u32 %v3115, 16
        %v3481 = vrot.slane %v3479, 4
        %v3482 = vshll.u32 %v3115, 16
        %v3484 = vrot.slane %v3482, 5
        %v3485 = vor.u32 %v3481, %v3484
        %v3486 = vrot.slane %v3485, 4
        %v3488 = vshll.u32 %v3116, 16
        %v3490 = vrot.slane %v3488, 5
        %v3491 = vsel %vm1225, %v3486, %v3490
        %v3492 = vshrl.u32 %v3116, 16
        %v3494 = vrot.slane %v3492, 4
        %v3495 = vor.u32 %v3494, %v3490
        %v3496 = vrot.slane %v3495, 4
        %v3498 = vshll.u32 %v3117, 16
        %v3500 = vrot.slane %v3498, 5
        %v3501 = vsel %vm1225, %v3496, %v3500
        %v3502 = vunpack.c.l.b16 %v3131
        %v3503 = vunpack.c.l.b16 %v3141
        %v3504 = vunpack.c.l.b16 %v3155
        %v3505 = vunpack.c.l.b16 %v3165
        %v3506 = vunpack.c.l.b16 %v3179
        %v3507 = vunpack.c.l.b16 %v3189
        %v3508 = vunpack.c.l.b16 %v3203
        %v3509 = vunpack.c.l.b16 %v3213
        %v3510 = vunpack.c.l.b16 %v3227
        %v3511 = vunpack.c.l.b16 %v3237
        %v3512 = vunpack.c.l.b16 %v3251
        %v3513 = vunpack.c.l.b16 %v3261
        %v3514 = vunpack.c.l.b16 %v3275
        %v3515 = vunpack.c.l.b16 %v3285
        %v3516 = vunpack.c.l.b16 %v3299
        %v3517 = vunpack.c.l.b16 %v3309
        %v3518 = vunpack.c.l.b16 %v3323
        %v3519 = vunpack.c.l.b16 %v3333
        %v3520 = vunpack.c.l.b16 %v3347
        %v3521 = vunpack.c.l.b16 %v3357
        %v3522 = vunpack.c.l.b16 %v3371
        %v3523 = vunpack.c.l.b16 %v3381
        %v3524 = vunpack.c.l.b16 %v3395
        %v3525 = vunpack.c.l.b16 %v3405
        %v3526 = vunpack.c.l.b16 %v3419
        %v3527 = vunpack.c.l.b16 %v3429
        %v3528 = vunpack.c.l.b16 %v3443
        %v3529 = vunpack.c.l.b16 %v3453
        %v3530 = vunpack.c.l.b16 %v3467
        %v3531 = vunpack.c.l.b16 %v3477
        %v3532 = vunpack.c.l.b16 %v3491
        %v3533 = vunpack.c.l.b16 %v3501
        %v3534 = vpack.c.b16 %v3503, %v3502
        %v3535 = vpack.c.b16 %v3505, %v3504
        %v3536 = vpack.c.b16 %v3507, %v3506
        %v3537 = vpack.c.b16 %v3509, %v3508
        %v3538 = vpack.c.b16 %v3511, %v3510
        %v3539 = vpack.c.b16 %v3513, %v3512
        %v3540 = vpack.c.b16 %v3515, %v3514
        %v3541 = vpack.c.b16 %v3517, %v3516
        %v3542 = vpack.c.b16 %v3519, %v3518
        %v3543 = vpack.c.b16 %v3521, %v3520
        %v3544 = vpack.c.b16 %v3523, %v3522
        %v3545 = vpack.c.b16 %v3525, %v3524
        %v3546 = vpack.c.b16 %v3527, %v3526
        %v3547 = vpack.c.b16 %v3529, %v3528
        %v3548 = vpack.c.b16 %v3531, %v3530
        %v3549 = vpack.c.b16 %v3533, %v3532
        %3566 = vst [vmem:[#allocation3 + $0x38] sm:$0xff] %v3534
        %3567 = vst [vmem:[#allocation3 + $0x80] sm:$0xff] %v3535
        %3568 = vst [vmem:[#allocation3 + $0xc8] sm:$0xff] %v3536
        %3569 = vst [vmem:[#allocation3 + $0x110] sm:$0xff] %v3537
        %3570 = vst [vmem:[#allocation3 + $0x158] sm:$0xff] %v3538
        %3571 = vst [vmem:[#allocation3 + $0x1a0] sm:$0xff] %v3539
        %3572 = vst [vmem:[#allocation3 + $0x1e8] sm:$0xff] %v3540
        %3573 = vst [vmem:[#allocation3 + $0x230] sm:$0xff] %v3541
        %3574 = vst [vmem:[#allocation3 + $0x278] sm:$0xff] %v3542
        %3575 = vst [vmem:[#allocation3 + $0x2c0] sm:$0xff] %v3543
        %3576 = vst [vmem:[#allocation3 + $0x308] sm:$0xff] %v3544
        %3577 = vst [vmem:[#allocation3 + $0x350] sm:$0xff] %v3545
        %3578 = vst [vmem:[#allocation3 + $0x398] sm:$0xff] %v3546
        %3579 = vst [vmem:[#allocation3 + $0x3e0] sm:$0xff] %v3547
        %3580 = vst [vmem:[#allocation3 + $0x428] sm:$0xff] %v3548
        %3581 = vst [vmem:[#allocation3 + $0x470] sm:$0xff] %v3549
        %v3582 = vld [vmem:[%s2925] sm:$0xe]
        %v3583 = vld [vmem:[%s2925 + $0x4] sm:$0xf]
        %v3584 = vld [vmem:[%s2925 + $0x8] sm:$0x1]
        %v3585 = vld [vmem:[%s2925 + $0xc] sm:$0xe]
        %v3586 = vld [vmem:[%s2925 + $0x10] sm:$0xf]
        %v3587 = vld [vmem:[%s2925 + $0x14] sm:$0x1]
        %v3588 = vld [vmem:[%s2925 + $0x18] sm:$0xe]
        %v3589 = vld [vmem:[%s2925 + $0x1c] sm:$0xf]
        %v3590 = vld [vmem:[%s2925 + $0x20] sm:$0x1]
        %v3591 = vld [vmem:[%s2925 + $0x24] sm:$0xe]
        %v3592 = vld [vmem:[%s2925 + $0x28] sm:$0xf]
        %v3593 = vld [vmem:[%s2925 + $0x2c] sm:$0x1]
        %v3594 = vld [vmem:[%s2925 + $0x30] sm:$0xe]
        %v3595 = vld [vmem:[%s2925 + $0x34] sm:$0xf]
        %v3596 = vld [vmem:[%s2925 + $0x38] sm:$0x1]
        %v3597 = vld [vmem:[%s2925 + $0x3c] sm:$0xe]
        %v3598 = vld [vmem:[%s2925 + $0x40] sm:$0xf]
        %v3599 = vld [vmem:[%s2925 + $0x44] sm:$0x1]
        %v3600 = vld [vmem:[%s2925 + $0x48] sm:$0xe]
        %v3601 = vld [vmem:[%s2925 + $0x4c] sm:$0xf]
        %v3602 = vld [vmem:[%s2925 + $0x50] sm:$0x1]
        %v3603 = vld [vmem:[%s2925 + $0x54] sm:$0xe]
        %v3604 = vld [vmem:[%s2925 + $0x58] sm:$0xf]
        %v3605 = vld [vmem:[%s2925 + $0x5c] sm:$0x1]
        %v3606 = vld [vmem:[%s2925 + $0x60] sm:$0xe]
        %v3607 = vld [vmem:[%s2925 + $0x64] sm:$0xf]
        %v3608 = vld [vmem:[%s2925 + $0x68] sm:$0x1]
        %v3609 = vld [vmem:[%s2925 + $0x6c] sm:$0xe]
        %v3610 = vld [vmem:[%s2925 + $0x70] sm:$0xf]
        %v3611 = vld [vmem:[%s2925 + $0x74] sm:$0x1]
        %v3612 = vld [vmem:[%s2925 + $0x78] sm:$0xe]
        %v3613 = vld [vmem:[%s2925 + $0x7c] sm:$0xf]
        %v3614 = vld [vmem:[%s2925 + $0x80] sm:$0x1]
        %v3615 = vld [vmem:[%s2925 + $0x84] sm:$0xe]
        %v3616 = vld [vmem:[%s2925 + $0x88] sm:$0xf]
        %v3617 = vld [vmem:[%s2925 + $0x8c] sm:$0x1]
        %v3618 = vld [vmem:[%s2925 + $0x90] sm:$0xe]
        %v3619 = vld [vmem:[%s2925 + $0x94] sm:$0xf]
        %v3620 = vld [vmem:[%s2925 + $0x98] sm:$0x1]
        %v3621 = vld [vmem:[%s2925 + $0x9c] sm:$0xe]
        %v3622 = vld [vmem:[%s2925 + $0xa0] sm:$0xf]
        %v3623 = vld [vmem:[%s2925 + $0xa4] sm:$0x1]
        %v3624 = vld [vmem:[%s2925 + $0xa8] sm:$0xe]
        %v3625 = vld [vmem:[%s2925 + $0xac] sm:$0xf]
        %v3626 = vld [vmem:[%s2925 + $0xb0] sm:$0x1]
        %v3627 = vld [vmem:[%s2925 + $0xb4] sm:$0xe]
        %v3628 = vld [vmem:[%s2925 + $0xb8] sm:$0xf]
        %v3629 = vld [vmem:[%s2925 + $0xbc] sm:$0x1]
        %v3678 = vrot.slane %v3582, 5
        %v3679 = vrot.slane %v3678, 4
        %v3680 = vrot.slane %v3583, 5
        %v3681 = vsel %vm1788, %v3679, %v3680
        %v3682 = vrot.slane %v3680, 4
        %v3683 = vrot.slane %v3584, 5
        %v3684 = vsel %vm1788, %v3682, %v3683
        %v3685 = vrot.slane %v3585, 5
        %v3686 = vrot.slane %v3685, 4
        %v3687 = vrot.slane %v3586, 5
        %v3688 = vsel %vm1788, %v3686, %v3687
        %v3689 = vrot.slane %v3687, 4
        %v3690 = vrot.slane %v3587, 5
        %v3691 = vsel %vm1788, %v3689, %v3690
        %v3692 = vrot.slane %v3588, 5
        %v3693 = vrot.slane %v3692, 4
        %v3694 = vrot.slane %v3589, 5
        %v3695 = vsel %vm1788, %v3693, %v3694
        %v3696 = vrot.slane %v3694, 4
        %v3697 = vrot.slane %v3590, 5
        %v3698 = vsel %vm1788, %v3696, %v3697
        %v3699 = vrot.slane %v3591, 5
        %v3700 = vrot.slane %v3699, 4
        %v3701 = vrot.slane %v3592, 5
        %v3702 = vsel %vm1788, %v3700, %v3701
        %v3703 = vrot.slane %v3701, 4
        %v3704 = vrot.slane %v3593, 5
        %v3705 = vsel %vm1788, %v3703, %v3704
        %v3706 = vrot.slane %v3594, 5
        %v3707 = vrot.slane %v3706, 4
        %v3708 = vrot.slane %v3595, 5
        %v3709 = vsel %vm1788, %v3707, %v3708
        %v3710 = vrot.slane %v3708, 4
        %v3711 = vrot.slane %v3596, 5
        %v3712 = vsel %vm1788, %v3710, %v3711
        %v3713 = vrot.slane %v3597, 5
        %v3714 = vrot.slane %v3713, 4
        %v3715 = vrot.slane %v3598, 5
        %v3716 = vsel %vm1788, %v3714, %v3715
        %v3717 = vrot.slane %v3715, 4
        %v3718 = vrot.slane %v3599, 5
        %v3719 = vsel %vm1788, %v3717, %v3718
        %v3720 = vrot.slane %v3600, 5
        %v3721 = vrot.slane %v3720, 4
        %v3722 = vrot.slane %v3601, 5
        %v3723 = vsel %vm1788, %v3721, %v3722
        %v3724 = vrot.slane %v3722, 4
        %v3725 = vrot.slane %v3602, 5
        %v3726 = vsel %vm1788, %v3724, %v3725
        %v3727 = vrot.slane %v3603, 5
        %v3728 = vrot.slane %v3727, 4
        %v3729 = vrot.slane %v3604, 5
        %v3730 = vsel %vm1788, %v3728, %v3729
        %v3731 = vrot.slane %v3729, 4
        %v3732 = vrot.slane %v3605, 5
        %v3733 = vsel %vm1788, %v3731, %v3732
        %v3734 = vrot.slane %v3606, 5
        %v3735 = vrot.slane %v3734, 4
        %v3736 = vrot.slane %v3607, 5
        %v3737 = vsel %vm1788, %v3735, %v3736
        %v3738 = vrot.slane %v3736, 4
        %v3739 = vrot.slane %v3608, 5
        %v3740 = vsel %vm1788, %v3738, %v3739
        %v3741 = vrot.slane %v3609, 5
        %v3742 = vrot.slane %v3741, 4
        %v3743 = vrot.slane %v3610, 5
        %v3744 = vsel %vm1788, %v3742, %v3743
        %v3745 = vrot.slane %v3743, 4
        %v3746 = vrot.slane %v3611, 5
        %v3747 = vsel %vm1788, %v3745, %v3746
        %v3748 = vrot.slane %v3612, 5
        %v3749 = vrot.slane %v3748, 4
        %v3750 = vrot.slane %v3613, 5
        %v3751 = vsel %vm1788, %v3749, %v3750
        %v3752 = vrot.slane %v3750, 4
        %v3753 = vrot.slane %v3614, 5
        %v3754 = vsel %vm1788, %v3752, %v3753
        %v3755 = vrot.slane %v3615, 5
        %v3756 = vrot.slane %v3755, 4
        %v3757 = vrot.slane %v3616, 5
        %v3758 = vsel %vm1788, %v3756, %v3757
        %v3759 = vrot.slane %v3757, 4
        %v3760 = vrot.slane %v3617, 5
        %v3761 = vsel %vm1788, %v3759, %v3760
        %v3762 = vrot.slane %v3618, 5
        %v3763 = vrot.slane %v3762, 4
        %v3764 = vrot.slane %v3619, 5
        %v3765 = vsel %vm1788, %v3763, %v3764
        %v3766 = vrot.slane %v3764, 4
        %v3767 = vrot.slane %v3620, 5
        %v3768 = vsel %vm1788, %v3766, %v3767
        %v3769 = vrot.slane %v3621, 5
        %v3770 = vrot.slane %v3769, 4
        %v3771 = vrot.slane %v3622, 5
        %v3772 = vsel %vm1788, %v3770, %v3771
        %v3773 = vrot.slane %v3771, 4
        %v3774 = vrot.slane %v3623, 5
        %v3775 = vsel %vm1788, %v3773, %v3774
        %v3776 = vrot.slane %v3624, 5
        %v3777 = vrot.slane %v3776, 4
        %v3778 = vrot.slane %v3625, 5
        %v3779 = vsel %vm1788, %v3777, %v3778
        %v3780 = vrot.slane %v3778, 4
        %v3781 = vrot.slane %v3626, 5
        %v3782 = vsel %vm1788, %v3780, %v3781
        %v3783 = vrot.slane %v3627, 5
        %v3784 = vrot.slane %v3783, 4
        %v3785 = vrot.slane %v3628, 5
        %v3786 = vsel %vm1788, %v3784, %v3785
        %v3787 = vrot.slane %v3785, 4
        %v3788 = vrot.slane %v3629, 5
        %v3789 = vsel %vm1788, %v3787, %v3788
        %v3790 = vunpack.c.l.b16 %v3681
        %v3791 = vunpack.c.l.b16 %v3684
        %v3792 = vunpack.c.l.b16 %v3688
        %v3793 = vunpack.c.l.b16 %v3691
        %v3794 = vunpack.c.l.b16 %v3695
        %v3795 = vunpack.c.l.b16 %v3698
        %v3796 = vunpack.c.l.b16 %v3702
        %v3797 = vunpack.c.l.b16 %v3705
        %v3798 = vunpack.c.l.b16 %v3709
        %v3799 = vunpack.c.l.b16 %v3712
        %v3800 = vunpack.c.l.b16 %v3716
        %v3801 = vunpack.c.l.b16 %v3719
        %v3802 = vunpack.c.l.b16 %v3723
        %v3803 = vunpack.c.l.b16 %v3726
        %v3804 = vunpack.c.l.b16 %v3730
        %v3805 = vunpack.c.l.b16 %v3733
        %v3806 = vunpack.c.l.b16 %v3737
        %v3807 = vunpack.c.l.b16 %v3740
        %v3808 = vunpack.c.l.b16 %v3744
        %v3809 = vunpack.c.l.b16 %v3747
        %v3810 = vunpack.c.l.b16 %v3751
        %v3811 = vunpack.c.l.b16 %v3754
        %v3812 = vunpack.c.l.b16 %v3758
        %v3813 = vunpack.c.l.b16 %v3761
        %v3814 = vunpack.c.l.b16 %v3765
        %v3815 = vunpack.c.l.b16 %v3768
        %v3816 = vunpack.c.l.b16 %v3772
        %v3817 = vunpack.c.l.b16 %v3775
        %v3818 = vunpack.c.l.b16 %v3779
        %v3819 = vunpack.c.l.b16 %v3782
        %v3820 = vunpack.c.l.b16 %v3786
        %v3821 = vunpack.c.l.b16 %v3789
        %v3822 = vpack.c.b16 %v3791, %v3790
        %v3823 = vpack.c.b16 %v3793, %v3792
        %v3824 = vpack.c.b16 %v3795, %v3794
        %v3825 = vpack.c.b16 %v3797, %v3796
        %v3826 = vpack.c.b16 %v3799, %v3798
        %v3827 = vpack.c.b16 %v3801, %v3800
        %v3828 = vpack.c.b16 %v3803, %v3802
        %v3829 = vpack.c.b16 %v3805, %v3804
        %v3830 = vpack.c.b16 %v3807, %v3806
        %v3831 = vpack.c.b16 %v3809, %v3808
        %v3832 = vpack.c.b16 %v3811, %v3810
        %v3833 = vpack.c.b16 %v3813, %v3812
        %v3834 = vpack.c.b16 %v3815, %v3814
        %v3835 = vpack.c.b16 %v3817, %v3816
        %v3836 = vpack.c.b16 %v3819, %v3818
        %v3837 = vpack.c.b16 %v3821, %v3820
        %3854 = vst [vmem:[#allocation3 + $0x40] sm:$0xff] %v3822
        %3855 = vst [vmem:[#allocation3 + $0x88] sm:$0xff] %v3823
        %3856 = vst [vmem:[#allocation3 + $0xd0] sm:$0xff] %v3824
        %3857 = vst [vmem:[#allocation3 + $0x118] sm:$0xff] %v3825
        %3858 = vst [vmem:[#allocation3 + $0x160] sm:$0xff] %v3826
        %3859 = vst [vmem:[#allocation3 + $0x1a8] sm:$0xff] %v3827
        %3860 = vst [vmem:[#allocation3 + $0x1f0] sm:$0xff] %v3828
        %3861 = vst [vmem:[#allocation3 + $0x238] sm:$0xff] %v3829
        %3862 = vst [vmem:[#allocation3 + $0x280] sm:$0xff] %v3830
        %3863 = vst [vmem:[#allocation3 + $0x2c8] sm:$0xff] %v3831
        %3864 = vst [vmem:[#allocation3 + $0x310] sm:$0xff] %v3832
        %3865 = vst [vmem:[#allocation3 + $0x358] sm:$0xff] %v3833
        %3866 = vst [vmem:[#allocation3 + $0x3a0] sm:$0xff] %v3834
        %3867 = vst [vmem:[#allocation3 + $0x3e8] sm:$0xff] %v3835
        %3868 = vst [vmem:[#allocation3 + $0x430] sm:$0xff] %v3836
        %3869 = vst [vmem:[#allocation3 + $0x478] sm:$0xff] %v3837
        %v3870 = vld [vmem:[#allocation3] sm:$0xff]
        %v3871 = vld [vmem:[#allocation3 + $0x8] sm:$0xff]
        %v3872 = vld [vmem:[#allocation3 + $0x10] sm:$0xff]
        %v3873 = vld [vmem:[#allocation3 + $0x18] sm:$0xff]
        %v3874 = vld [vmem:[#allocation3 + $0x20] sm:$0xff]
        %v3875 = vld [vmem:[#allocation3 + $0x28] sm:$0xff]
        %v3876 = vld [vmem:[#allocation3 + $0x30] sm:$0xff]
        %v3877 = vld [vmem:[#allocation3 + $0x38] sm:$0xff]
        %v3878 = vld [vmem:[#allocation3 + $0x40] sm:$0xff]
        %v3879 = vld [vmem:[#allocation3 + $0x48] sm:$0xff]
        %v3880 = vld [vmem:[#allocation3 + $0x50] sm:$0xff]
        %v3881 = vld [vmem:[#allocation3 + $0x58] sm:$0xff]
        %v3882 = vld [vmem:[#allocation3 + $0x60] sm:$0xff]
        %v3883 = vld [vmem:[#allocation3 + $0x68] sm:$0xff]
        %v3884 = vld [vmem:[#allocation3 + $0x70] sm:$0xff]
        %v3885 = vld [vmem:[#allocation3 + $0x78] sm:$0xff]
        %v3886 = vld [vmem:[#allocation3 + $0x80] sm:$0xff]
        %v3887 = vld [vmem:[#allocation3 + $0x88] sm:$0xff]
        %v3888 = vld [vmem:[#allocation3 + $0x90] sm:$0xff]
        %v3889 = vld [vmem:[#allocation3 + $0x98] sm:$0xff]
        %v3890 = vld [vmem:[#allocation3 + $0xa0] sm:$0xff]
        %v3891 = vld [vmem:[#allocation3 + $0xa8] sm:$0xff]
        %v3892 = vld [vmem:[#allocation3 + $0xb0] sm:$0xff]
        %v3893 = vld [vmem:[#allocation3 + $0xb8] sm:$0xff]
        %v3894 = vld [vmem:[#allocation3 + $0xc0] sm:$0xff]
        %v3895 = vld [vmem:[#allocation3 + $0xc8] sm:$0xff]
        %v3896 = vld [vmem:[#allocation3 + $0xd0] sm:$0xff]
        %v3897 = vld [vmem:[#allocation3 + $0xd8] sm:$0xff]
        %v3898 = vld [vmem:[#allocation3 + $0xe0] sm:$0xff]
        %v3899 = vld [vmem:[#allocation3 + $0xe8] sm:$0xff]
        %v3900 = vld [vmem:[#allocation3 + $0xf0] sm:$0xff]
        %v3901 = vld [vmem:[#allocation3 + $0xf8] sm:$0xff]
        %v3902 = vld [vmem:[#allocation3 + $0x100] sm:$0xff]
        %v3903 = vld [vmem:[#allocation3 + $0x108] sm:$0xff]
        %v3904 = vld [vmem:[#allocation3 + $0x110] sm:$0xff]
        %v3905 = vld [vmem:[#allocation3 + $0x118] sm:$0xff]
        %v3906 = vld [vmem:[#allocation3 + $0x120] sm:$0xff]
        %v3907 = vld [vmem:[#allocation3 + $0x128] sm:$0xff]
        %v3908 = vld [vmem:[#allocation3 + $0x130] sm:$0xff]
        %v3909 = vld [vmem:[#allocation3 + $0x138] sm:$0xff]
        %v3910 = vld [vmem:[#allocation3 + $0x140] sm:$0xff]
        %v3911 = vld [vmem:[#allocation3 + $0x148] sm:$0xff]
        %v3912 = vld [vmem:[#allocation3 + $0x150] sm:$0xff]
        %v3913 = vld [vmem:[#allocation3 + $0x158] sm:$0xff]
        %v3914 = vld [vmem:[#allocation3 + $0x160] sm:$0xff]
        %v3915 = vld [vmem:[#allocation3 + $0x168] sm:$0xff]
        %v3916 = vld [vmem:[#allocation3 + $0x170] sm:$0xff]
        %v3917 = vld [vmem:[#allocation3 + $0x178] sm:$0xff]
        %v3918 = vld [vmem:[#allocation3 + $0x180] sm:$0xff]
        %v3919 = vld [vmem:[#allocation3 + $0x188] sm:$0xff]
        %v3920 = vld [vmem:[#allocation3 + $0x190] sm:$0xff]
        %v3921 = vld [vmem:[#allocation3 + $0x198] sm:$0xff]
        %v3922 = vld [vmem:[#allocation3 + $0x1a0] sm:$0xff]
        %v3923 = vld [vmem:[#allocation3 + $0x1a8] sm:$0xff]
        %v3924 = vld [vmem:[#allocation3 + $0x1b0] sm:$0xff]
        %v3925 = vld [vmem:[#allocation3 + $0x1b8] sm:$0xff]
        %v3926 = vld [vmem:[#allocation3 + $0x1c0] sm:$0xff]
        %v3927 = vld [vmem:[#allocation3 + $0x1c8] sm:$0xff]
        %v3928 = vld [vmem:[#allocation3 + $0x1d0] sm:$0xff]
        %v3929 = vld [vmem:[#allocation3 + $0x1d8] sm:$0xff]
        %v3930 = vld [vmem:[#allocation3 + $0x1e0] sm:$0xff]
        %v3931 = vld [vmem:[#allocation3 + $0x1e8] sm:$0xff]
        %v3932 = vld [vmem:[#allocation3 + $0x1f0] sm:$0xff]
        %v3933 = vld [vmem:[#allocation3 + $0x1f8] sm:$0xff]
        %v3934 = vld [vmem:[#allocation3 + $0x200] sm:$0xff]
        %v3935 = vld [vmem:[#allocation3 + $0x208] sm:$0xff]
        %v3936 = vld [vmem:[#allocation3 + $0x210] sm:$0xff]
        %v3937 = vld [vmem:[#allocation3 + $0x218] sm:$0xff]
        %v3938 = vld [vmem:[#allocation3 + $0x220] sm:$0xff]
        %v3939 = vld [vmem:[#allocation3 + $0x228] sm:$0xff]
        %v3940 = vld [vmem:[#allocation3 + $0x230] sm:$0xff]
        %v3941 = vld [vmem:[#allocation3 + $0x238] sm:$0xff]
        %v3942 = vld [vmem:[#allocation3 + $0x240] sm:$0xff]
        %v3943 = vld [vmem:[#allocation3 + $0x248] sm:$0xff]
        %v3944 = vld [vmem:[#allocation3 + $0x250] sm:$0xff]
        %v3945 = vld [vmem:[#allocation3 + $0x258] sm:$0xff]
        %v3946 = vld [vmem:[#allocation3 + $0x260] sm:$0xff]
        %v3947 = vld [vmem:[#allocation3 + $0x268] sm:$0xff]
        %v3948 = vld [vmem:[#allocation3 + $0x270] sm:$0xff]
        %v3949 = vld [vmem:[#allocation3 + $0x278] sm:$0xff]
        %v3950 = vld [vmem:[#allocation3 + $0x280] sm:$0xff]
        %v3951 = vld [vmem:[#allocation3 + $0x288] sm:$0xff]
        %v3952 = vld [vmem:[#allocation3 + $0x290] sm:$0xff]
        %v3953 = vld [vmem:[#allocation3 + $0x298] sm:$0xff]
        %v3954 = vld [vmem:[#allocation3 + $0x2a0] sm:$0xff]
        %v3955 = vld [vmem:[#allocation3 + $0x2a8] sm:$0xff]
        %v3956 = vld [vmem:[#allocation3 + $0x2b0] sm:$0xff]
        %v3957 = vld [vmem:[#allocation3 + $0x2b8] sm:$0xff]
        %v3958 = vld [vmem:[#allocation3 + $0x2c0] sm:$0xff]
        %v3959 = vld [vmem:[#allocation3 + $0x2c8] sm:$0xff]
        %v3960 = vld [vmem:[#allocation3 + $0x2d0] sm:$0xff]
        %v3961 = vld [vmem:[#allocation3 + $0x2d8] sm:$0xff]
        %v3962 = vld [vmem:[#allocation3 + $0x2e0] sm:$0xff]
        %v3963 = vld [vmem:[#allocation3 + $0x2e8] sm:$0xff]
        %v3964 = vld [vmem:[#allocation3 + $0x2f0] sm:$0xff]
        %v3965 = vld [vmem:[#allocation3 + $0x2f8] sm:$0xff]
        %v3966 = vld [vmem:[#allocation3 + $0x300] sm:$0xff]
        %v3967 = vld [vmem:[#allocation3 + $0x308] sm:$0xff]
        %v3968 = vld [vmem:[#allocation3 + $0x310] sm:$0xff]
        %v3969 = vld [vmem:[#allocation3 + $0x318] sm:$0xff]
        %v3970 = vld [vmem:[#allocation3 + $0x320] sm:$0xff]
        %v3971 = vld [vmem:[#allocation3 + $0x328] sm:$0xff]
        %v3972 = vld [vmem:[#allocation3 + $0x330] sm:$0xff]
        %v3973 = vld [vmem:[#allocation3 + $0x338] sm:$0xff]
        %v3974 = vld [vmem:[#allocation3 + $0x340] sm:$0xff]
        %v3975 = vld [vmem:[#allocation3 + $0x348] sm:$0xff]
        %v3976 = vld [vmem:[#allocation3 + $0x350] sm:$0xff]
        %v3977 = vld [vmem:[#allocation3 + $0x358] sm:$0xff]
        %v3978 = vld [vmem:[#allocation3 + $0x360] sm:$0xff]
        %v3979 = vld [vmem:[#allocation3 + $0x368] sm:$0xff]
        %v3980 = vld [vmem:[#allocation3 + $0x370] sm:$0xff]
        %v3981 = vld [vmem:[#allocation3 + $0x378] sm:$0xff]
        %v3982 = vld [vmem:[#allocation3 + $0x380] sm:$0xff]
        %v3983 = vld [vmem:[#allocation3 + $0x388] sm:$0xff]
        %v3984 = vld [vmem:[#allocation3 + $0x390] sm:$0xff]
        %v3985 = vld [vmem:[#allocation3 + $0x398] sm:$0xff]
        %v3986 = vld [vmem:[#allocation3 + $0x3a0] sm:$0xff]
        %v3987 = vld [vmem:[#allocation3 + $0x3a8] sm:$0xff]
        %v3988 = vld [vmem:[#allocation3 + $0x3b0] sm:$0xff]
        %v3989 = vld [vmem:[#allocation3 + $0x3b8] sm:$0xff]
        %v3990 = vld [vmem:[#allocation3 + $0x3c0] sm:$0xff]
        %v3991 = vld [vmem:[#allocation3 + $0x3c8] sm:$0xff]
        %v3992 = vld [vmem:[#allocation3 + $0x3d0] sm:$0xff]
        %v3993 = vld [vmem:[#allocation3 + $0x3d8] sm:$0xff]
        %v3994 = vld [vmem:[#allocation3 + $0x3e0] sm:$0xff]
        %v3995 = vld [vmem:[#allocation3 + $0x3e8] sm:$0xff]
        %v3996 = vld [vmem:[#allocation3 + $0x3f0] sm:$0xff]
        %v3997 = vld [vmem:[#allocation3 + $0x3f8] sm:$0xff]
        %v3998 = vld [vmem:[#allocation3 + $0x400] sm:$0xff]
        %v3999 = vld [vmem:[#allocation3 + $0x408] sm:$0xff]
        %v4000 = vld [vmem:[#allocation3 + $0x410] sm:$0xff]
        %v4001 = vld [vmem:[#allocation3 + $0x418] sm:$0xff]
        %v4002 = vld [vmem:[#allocation3 + $0x420] sm:$0xff]
        %v4003 = vld [vmem:[#allocation3 + $0x428] sm:$0xff]
        %v4004 = vld [vmem:[#allocation3 + $0x430] sm:$0xff]
        %v4005 = vld [vmem:[#allocation3 + $0x438] sm:$0xff]
        %v4006 = vld [vmem:[#allocation3 + $0x440] sm:$0xff]
        %v4007 = vld [vmem:[#allocation3 + $0x448] sm:$0xff]
        %v4008 = vld [vmem:[#allocation3 + $0x450] sm:$0xff]
        %v4009 = vld [vmem:[#allocation3 + $0x458] sm:$0xff]
        %v4010 = vld [vmem:[#allocation3 + $0x460] sm:$0xff]
        %v4011 = vld [vmem:[#allocation3 + $0x468] sm:$0xff]
        %v4012 = vld [vmem:[#allocation3 + $0x470] sm:$0xff]
        %v4013 = vld [vmem:[#allocation3 + $0x478] sm:$0xff]
        %v4014 = vld [vmem:[#allocation9] sm:$0xf]
        %v4015 = vld [vmem:[#allocation9 + $0x4] sm:$0xf]
        %v4016 = vld [vmem:[#allocation9 + $0x8] sm:$0xf]
        %v4017 = vld [vmem:[#allocation9 + $0xc] sm:$0xf]
        %v4018 = vld [vmem:[#allocation9 + $0x10] sm:$0xf]
        %v4019 = vld [vmem:[#allocation9 + $0x14] sm:$0xf]
        %v4020 = vld [vmem:[#allocation9 + $0x18] sm:$0xf]
        %v4021 = vld [vmem:[#allocation9 + $0x1c] sm:$0xf]
        %v4022 = vld [vmem:[#allocation9 + $0x20] sm:$0xf]
        %v4023 = vld [vmem:[#allocation9 + $0x24] sm:$0xf]
        %v4024 = vld [vmem:[#allocation9 + $0x28] sm:$0xf]
        %v4025 = vld [vmem:[#allocation9 + $0x2c] sm:$0xf]
        %v4026 = vld [vmem:[#allocation9 + $0x30] sm:$0xf]
        %v4027 = vld [vmem:[#allocation9 + $0x34] sm:$0xf]
        %v4028 = vld [vmem:[#allocation9 + $0x38] sm:$0xf]
        %v4029 = vld [vmem:[#allocation9 + $0x3c] sm:$0xf]
        %v4030 = vld [vmem:[#allocation9 + $0x40] sm:$0xf]
        %v4031 = vld [vmem:[#allocation9 + $0x44] sm:$0xf]
        %v4032 = vld [vmem:[#allocation9 + $0x48] sm:$0xf]
        %v4033 = vld [vmem:[#allocation9 + $0x4c] sm:$0xf]
        %v4034 = vld [vmem:[#allocation9 + $0x50] sm:$0xf]
        %v4035 = vld [vmem:[#allocation9 + $0x54] sm:$0xf]
        %v4036 = vld [vmem:[#allocation9 + $0x58] sm:$0xf]
        %v4037 = vld [vmem:[#allocation9 + $0x5c] sm:$0xf]
        %v4038 = vld [vmem:[#allocation9 + $0x60] sm:$0xf]
        %v4039 = vld [vmem:[#allocation9 + $0x64] sm:$0xf]
        %v4040 = vld [vmem:[#allocation9 + $0x68] sm:$0xf]
        %v4041 = vld [vmem:[#allocation9 + $0x6c] sm:$0xf]
        %v4042 = vld [vmem:[#allocation9 + $0x70] sm:$0xf]
        %v4043 = vld [vmem:[#allocation9 + $0x74] sm:$0xf]
        %v4044 = vld [vmem:[#allocation9 + $0x78] sm:$0xf]
        %v4045 = vld [vmem:[#allocation9 + $0x7c] sm:$0xf]
        %v4046 = vld [vmem:[#allocation9 + $0x80] sm:$0xf]
        %v4047 = vld [vmem:[#allocation9 + $0x84] sm:$0xf]
        %v4048 = vld [vmem:[#allocation9 + $0x88] sm:$0xf]
        %v4049 = vld [vmem:[#allocation9 + $0x8c] sm:$0xf]
        %v4050 = vld [vmem:[#allocation9 + $0x90] sm:$0xf]
        %v4051 = vld [vmem:[#allocation9 + $0x94] sm:$0xf]
        %v4052 = vld [vmem:[#allocation9 + $0x98] sm:$0xf]
        %v4053 = vld [vmem:[#allocation9 + $0x9c] sm:$0xf]
        %v4054 = vld [vmem:[#allocation9 + $0xa0] sm:$0xf]
        %v4055 = vld [vmem:[#allocation9 + $0xa4] sm:$0xf]
        %v4056 = vld [vmem:[#allocation9 + $0xa8] sm:$0xf]
        %v4057 = vld [vmem:[#allocation9 + $0xac] sm:$0xf]
        %v4058 = vld [vmem:[#allocation9 + $0xb0] sm:$0xf]
        %v4059 = vld [vmem:[#allocation9 + $0xb4] sm:$0xf]
        %v4060 = vld [vmem:[#allocation9 + $0xb8] sm:$0xf]
        %v4061 = vld [vmem:[#allocation9 + $0xbc] sm:$0xf]
        %v4062 = vld [vmem:[#allocation9 + $0xc0] sm:$0xf]
        %v4063 = vld [vmem:[#allocation9 + $0xc4] sm:$0xf]
        %v4064 = vld [vmem:[#allocation9 + $0xc8] sm:$0xf]
        %v4065 = vld [vmem:[#allocation9 + $0xcc] sm:$0xf]
        %v4066 = vld [vmem:[#allocation9 + $0xd0] sm:$0xf]
        %v4067 = vld [vmem:[#allocation9 + $0xd4] sm:$0xf]
        %v4068 = vld [vmem:[#allocation9 + $0xd8] sm:$0xf]
        %v4069 = vld [vmem:[#allocation9 + $0xdc] sm:$0xf]
        %v4070 = vld [vmem:[#allocation9 + $0xe0] sm:$0xf]
        %v4071 = vld [vmem:[#allocation9 + $0xe4] sm:$0xf]
        %v4072 = vld [vmem:[#allocation9 + $0xe8] sm:$0xf]
        %v4073 = vld [vmem:[#allocation9 + $0xec] sm:$0xf]
        %v4074 = vld [vmem:[#allocation9 + $0xf0] sm:$0xf]
        %v4075 = vld [vmem:[#allocation9 + $0xf4] sm:$0xf]
        %v4076 = vld [vmem:[#allocation9 + $0xf8] sm:$0xf]
        %v4077 = vld [vmem:[#allocation9 + $0xfc] sm:$0xf]
        %v4078 = vld [vmem:[#allocation9 + $0x100] sm:$0xf]
        %v4079 = vld [vmem:[#allocation9 + $0x104] sm:$0xf]
        %v4080 = vld [vmem:[#allocation9 + $0x108] sm:$0xf]
        %v4081 = vld [vmem:[#allocation9 + $0x10c] sm:$0xf]
        %v4082 = vld [vmem:[#allocation9 + $0x110] sm:$0xf]
        %v4083 = vld [vmem:[#allocation9 + $0x114] sm:$0xf]
        %v4084 = vld [vmem:[#allocation9 + $0x118] sm:$0xf]
        %v4085 = vld [vmem:[#allocation9 + $0x11c] sm:$0xf]
        %v4086 = vld [vmem:[#allocation9 + $0x120] sm:$0xf]
        %v4087 = vld [vmem:[#allocation9 + $0x124] sm:$0xf]
        %v4088 = vld [vmem:[#allocation9 + $0x128] sm:$0xf]
        %v4089 = vld [vmem:[#allocation9 + $0x12c] sm:$0xf]
        %v4090 = vld [vmem:[#allocation9 + $0x130] sm:$0xf]
        %v4091 = vld [vmem:[#allocation9 + $0x134] sm:$0xf]
        %v4092 = vld [vmem:[#allocation9 + $0x138] sm:$0xf]
        %v4093 = vld [vmem:[#allocation9 + $0x13c] sm:$0xf]
        %v4094 = vld [vmem:[#allocation9 + $0x140] sm:$0xf]
        %v4095 = vld [vmem:[#allocation9 + $0x144] sm:$0xf]
        %v4096 = vld [vmem:[#allocation9 + $0x148] sm:$0xf]
        %v4097 = vld [vmem:[#allocation9 + $0x14c] sm:$0xf]
        %v4098 = vld [vmem:[#allocation9 + $0x150] sm:$0xf]
        %v4099 = vld [vmem:[#allocation9 + $0x154] sm:$0xf]
        %v4100 = vld [vmem:[#allocation9 + $0x158] sm:$0xf]
        %v4101 = vld [vmem:[#allocation9 + $0x15c] sm:$0xf]
        %v4102 = vld [vmem:[#allocation9 + $0x160] sm:$0xf]
        %v4103 = vld [vmem:[#allocation9 + $0x164] sm:$0xf]
        %v4104 = vld [vmem:[#allocation9 + $0x168] sm:$0xf]
        %v4105 = vld [vmem:[#allocation9 + $0x16c] sm:$0xf]
        %v4106 = vld [vmem:[#allocation9 + $0x170] sm:$0xf]
        %v4107 = vld [vmem:[#allocation9 + $0x174] sm:$0xf]
        %v4108 = vld [vmem:[#allocation9 + $0x178] sm:$0xf]
        %v4109 = vld [vmem:[#allocation9 + $0x17c] sm:$0xf]
        %v4110 = vld [vmem:[#allocation9 + $0x180] sm:$0xf]
        %v4111 = vld [vmem:[#allocation9 + $0x184] sm:$0xf]
        %v4112 = vld [vmem:[#allocation9 + $0x188] sm:$0xf]
        %v4113 = vld [vmem:[#allocation9 + $0x18c] sm:$0xf]
        %v4114 = vld [vmem:[#allocation9 + $0x190] sm:$0xf]
        %v4115 = vld [vmem:[#allocation9 + $0x194] sm:$0xf]
        %v4116 = vld [vmem:[#allocation9 + $0x198] sm:$0xf]
        %v4117 = vld [vmem:[#allocation9 + $0x19c] sm:$0xf]
        %v4118 = vld [vmem:[#allocation9 + $0x1a0] sm:$0xf]
        %v4119 = vld [vmem:[#allocation9 + $0x1a4] sm:$0xf]
        %v4120 = vld [vmem:[#allocation9 + $0x1a8] sm:$0xf]
        %v4121 = vld [vmem:[#allocation9 + $0x1ac] sm:$0xf]
        %v4122 = vld [vmem:[#allocation9 + $0x1b0] sm:$0xf]
        %v4123 = vld [vmem:[#allocation9 + $0x1b4] sm:$0xf]
        %v4124 = vld [vmem:[#allocation9 + $0x1b8] sm:$0xf]
        %v4125 = vld [vmem:[#allocation9 + $0x1bc] sm:$0xf]
        %v4126 = vld [vmem:[#allocation9 + $0x1c0] sm:$0xf]
        %v4127 = vld [vmem:[#allocation9 + $0x1c4] sm:$0xf]
        %v4128 = vld [vmem:[#allocation9 + $0x1c8] sm:$0xf]
        %v4129 = vld [vmem:[#allocation9 + $0x1cc] sm:$0xf]
        %v4130 = vld [vmem:[#allocation9 + $0x1d0] sm:$0xf]
        %v4131 = vld [vmem:[#allocation9 + $0x1d4] sm:$0xf]
        %v4132 = vld [vmem:[#allocation9 + $0x1d8] sm:$0xf]
        %v4133 = vld [vmem:[#allocation9 + $0x1dc] sm:$0xf]
        %v4134 = vld [vmem:[#allocation9 + $0x1e0] sm:$0xf]
        %v4135 = vld [vmem:[#allocation9 + $0x1e4] sm:$0xf]
        %v4136 = vld [vmem:[#allocation9 + $0x1e8] sm:$0xf]
        %v4137 = vld [vmem:[#allocation9 + $0x1ec] sm:$0xf]
        %v4138 = vld [vmem:[#allocation9 + $0x1f0] sm:$0xf]
        %v4139 = vld [vmem:[#allocation9 + $0x1f4] sm:$0xf]
        %v4140 = vld [vmem:[#allocation9 + $0x1f8] sm:$0xf]
        %v4141 = vld [vmem:[#allocation9 + $0x1fc] sm:$0xf]
        %v4142 = vld [vmem:[#allocation9 + $0x200] sm:$0xf]
        %v4143 = vld [vmem:[#allocation9 + $0x204] sm:$0xf]
        %v4144 = vld [vmem:[#allocation9 + $0x208] sm:$0xf]
        %v4145 = vld [vmem:[#allocation9 + $0x20c] sm:$0xf]
        %v4146 = vld [vmem:[#allocation9 + $0x210] sm:$0xf]
        %v4147 = vld [vmem:[#allocation9 + $0x214] sm:$0xf]
        %v4148 = vld [vmem:[#allocation9 + $0x218] sm:$0xf]
        %v4149 = vld [vmem:[#allocation9 + $0x21c] sm:$0xf]
        %v4150 = vld [vmem:[#allocation9 + $0x220] sm:$0xf]
        %v4151 = vld [vmem:[#allocation9 + $0x224] sm:$0xf]
        %v4152 = vld [vmem:[#allocation9 + $0x228] sm:$0xf]
        %v4153 = vld [vmem:[#allocation9 + $0x22c] sm:$0xf]
        %v4154 = vld [vmem:[#allocation9 + $0x230] sm:$0xf]
        %v4155 = vld [vmem:[#allocation9 + $0x234] sm:$0xf]
        %v4156 = vld [vmem:[#allocation9 + $0x238] sm:$0xf]
        %v4157 = vld [vmem:[#allocation9 + $0x23c] sm:$0xf]
        %v4302 = vunpack.c.l.b16 %v4014
        %v4303 = vunpack.c.l.b16 %v4015
        %v4304 = vunpack.c.l.b16 %v4016
        %v4305 = vunpack.c.l.b16 %v4017
        %v4306 = vunpack.c.l.b16 %v4018
        %v4307 = vunpack.c.l.b16 %v4019
        %v4308 = vunpack.c.l.b16 %v4020
        %v4309 = vunpack.c.l.b16 %v4021
        %v4310 = vunpack.c.l.b16 %v4022
        %v4311 = vunpack.c.l.b16 %v4023
        %v4312 = vunpack.c.l.b16 %v4024
        %v4313 = vunpack.c.l.b16 %v4025
        %v4314 = vunpack.c.l.b16 %v4026
        %v4315 = vunpack.c.l.b16 %v4027
        %v4316 = vunpack.c.l.b16 %v4028
        %v4317 = vunpack.c.l.b16 %v4029
        %v4318 = vunpack.c.l.b16 %v4030
        %v4319 = vunpack.c.l.b16 %v4031
        %v4320 = vunpack.c.l.b16 %v4032
        %v4321 = vunpack.c.l.b16 %v4033
        %v4322 = vunpack.c.l.b16 %v4034
        %v4323 = vunpack.c.l.b16 %v4035
        %v4324 = vunpack.c.l.b16 %v4036
        %v4325 = vunpack.c.l.b16 %v4037
        %v4326 = vunpack.c.l.b16 %v4038
        %v4327 = vunpack.c.l.b16 %v4039
        %v4328 = vunpack.c.l.b16 %v4040
        %v4329 = vunpack.c.l.b16 %v4041
        %v4330 = vunpack.c.l.b16 %v4042
        %v4331 = vunpack.c.l.b16 %v4043
        %v4332 = vunpack.c.l.b16 %v4044
        %v4333 = vunpack.c.l.b16 %v4045
        %v4334 = vunpack.c.l.b16 %v4046
        %v4335 = vunpack.c.l.b16 %v4047
        %v4336 = vunpack.c.l.b16 %v4048
        %v4337 = vunpack.c.l.b16 %v4049
        %v4338 = vunpack.c.l.b16 %v4050
        %v4339 = vunpack.c.l.b16 %v4051
        %v4340 = vunpack.c.l.b16 %v4052
        %v4341 = vunpack.c.l.b16 %v4053
        %v4342 = vunpack.c.l.b16 %v4054
        %v4343 = vunpack.c.l.b16 %v4055
        %v4344 = vunpack.c.l.b16 %v4056
        %v4345 = vunpack.c.l.b16 %v4057
        %v4346 = vunpack.c.l.b16 %v4058
        %v4347 = vunpack.c.l.b16 %v4059
        %v4348 = vunpack.c.l.b16 %v4060
        %v4349 = vunpack.c.l.b16 %v4061
        %v4350 = vunpack.c.l.b16 %v4062
        %v4351 = vunpack.c.l.b16 %v4063
        %v4352 = vunpack.c.l.b16 %v4064
        %v4353 = vunpack.c.l.b16 %v4065
        %v4354 = vunpack.c.l.b16 %v4066
        %v4355 = vunpack.c.l.b16 %v4067
        %v4356 = vunpack.c.l.b16 %v4068
        %v4357 = vunpack.c.l.b16 %v4069
        %v4358 = vunpack.c.l.b16 %v4070
        %v4359 = vunpack.c.l.b16 %v4071
        %v4360 = vunpack.c.l.b16 %v4072
        %v4361 = vunpack.c.l.b16 %v4073
        %v4362 = vunpack.c.l.b16 %v4074
        %v4363 = vunpack.c.l.b16 %v4075
        %v4364 = vunpack.c.l.b16 %v4076
        %v4365 = vunpack.c.l.b16 %v4077
        %v4366 = vunpack.c.l.b16 %v4078
        %v4367 = vunpack.c.l.b16 %v4079
        %v4368 = vunpack.c.l.b16 %v4080
        %v4369 = vunpack.c.l.b16 %v4081
        %v4370 = vunpack.c.l.b16 %v4082
        %v4371 = vunpack.c.l.b16 %v4083
        %v4372 = vunpack.c.l.b16 %v4084
        %v4373 = vunpack.c.l.b16 %v4085
        %v4374 = vunpack.c.l.b16 %v4086
        %v4375 = vunpack.c.l.b16 %v4087
        %v4376 = vunpack.c.l.b16 %v4088
        %v4377 = vunpack.c.l.b16 %v4089
        %v4378 = vunpack.c.l.b16 %v4090
        %v4379 = vunpack.c.l.b16 %v4091
        %v4380 = vunpack.c.l.b16 %v4092
        %v4381 = vunpack.c.l.b16 %v4093
        %v4382 = vunpack.c.l.b16 %v4094
        %v4383 = vunpack.c.l.b16 %v4095
        %v4384 = vunpack.c.l.b16 %v4096
        %v4385 = vunpack.c.l.b16 %v4097
        %v4386 = vunpack.c.l.b16 %v4098
        %v4387 = vunpack.c.l.b16 %v4099
        %v4388 = vunpack.c.l.b16 %v4100
        %v4389 = vunpack.c.l.b16 %v4101
        %v4390 = vunpack.c.l.b16 %v4102
        %v4391 = vunpack.c.l.b16 %v4103
        %v4392 = vunpack.c.l.b16 %v4104
        %v4393 = vunpack.c.l.b16 %v4105
        %v4394 = vunpack.c.l.b16 %v4106
        %v4395 = vunpack.c.l.b16 %v4107
        %v4396 = vunpack.c.l.b16 %v4108
        %v4397 = vunpack.c.l.b16 %v4109
        %v4398 = vunpack.c.l.b16 %v4110
        %v4399 = vunpack.c.l.b16 %v4111
        %v4400 = vunpack.c.l.b16 %v4112
        %v4401 = vunpack.c.l.b16 %v4113
        %v4402 = vunpack.c.l.b16 %v4114
        %v4403 = vunpack.c.l.b16 %v4115
        %v4404 = vunpack.c.l.b16 %v4116
        %v4405 = vunpack.c.l.b16 %v4117
        %v4406 = vunpack.c.l.b16 %v4118
        %v4407 = vunpack.c.l.b16 %v4119
        %v4408 = vunpack.c.l.b16 %v4120
        %v4409 = vunpack.c.l.b16 %v4121
        %v4410 = vunpack.c.l.b16 %v4122
        %v4411 = vunpack.c.l.b16 %v4123
        %v4412 = vunpack.c.l.b16 %v4124
        %v4413 = vunpack.c.l.b16 %v4125
        %v4414 = vunpack.c.l.b16 %v4126
        %v4415 = vunpack.c.l.b16 %v4127
        %v4416 = vunpack.c.l.b16 %v4128
        %v4417 = vunpack.c.l.b16 %v4129
        %v4418 = vunpack.c.l.b16 %v4130
        %v4419 = vunpack.c.l.b16 %v4131
        %v4420 = vunpack.c.l.b16 %v4132
        %v4421 = vunpack.c.l.b16 %v4133
        %v4422 = vunpack.c.l.b16 %v4134
        %v4423 = vunpack.c.l.b16 %v4135
        %v4424 = vunpack.c.l.b16 %v4136
        %v4425 = vunpack.c.l.b16 %v4137
        %v4426 = vunpack.c.l.b16 %v4138
        %v4427 = vunpack.c.l.b16 %v4139
        %v4428 = vunpack.c.l.b16 %v4140
        %v4429 = vunpack.c.l.b16 %v4141
        %v4430 = vunpack.c.l.b16 %v4142
        %v4431 = vunpack.c.l.b16 %v4143
        %v4432 = vunpack.c.l.b16 %v4144
        %v4433 = vunpack.c.l.b16 %v4145
        %v4434 = vunpack.c.l.b16 %v4146
        %v4435 = vunpack.c.l.b16 %v4147
        %v4436 = vunpack.c.l.b16 %v4148
        %v4437 = vunpack.c.l.b16 %v4149
        %v4438 = vunpack.c.l.b16 %v4150
        %v4439 = vunpack.c.l.b16 %v4151
        %v4440 = vunpack.c.l.b16 %v4152
        %v4441 = vunpack.c.l.b16 %v4153
        %v4442 = vunpack.c.l.b16 %v4154
        %v4443 = vunpack.c.l.b16 %v4155
        %v4444 = vunpack.c.l.b16 %v4156
        %v4445 = vunpack.c.l.b16 %v4157
        %v4446 = vpack.c.b16 %v4303, %v4302
        %v4447 = vpack.c.b16 %v4305, %v4304
        %v4448 = vpack.c.b16 %v4307, %v4306
        %v4449 = vpack.c.b16 %v4309, %v4308
        %v4450 = vpack.c.b16 %v4311, %v4310
        %v4451 = vpack.c.b16 %v4313, %v4312
        %v4452 = vpack.c.b16 %v4315, %v4314
        %v4453 = vpack.c.b16 %v4317, %v4316
        %v4454 = vpack.c.b16 %v4319, %v4318
        %v4455 = vpack.c.b16 %v4321, %v4320
        %v4456 = vpack.c.b16 %v4323, %v4322
        %v4457 = vpack.c.b16 %v4325, %v4324
        %v4458 = vpack.c.b16 %v4327, %v4326
        %v4459 = vpack.c.b16 %v4329, %v4328
        %v4460 = vpack.c.b16 %v4331, %v4330
        %v4461 = vpack.c.b16 %v4333, %v4332
        %v4462 = vpack.c.b16 %v4335, %v4334
        %v4463 = vpack.c.b16 %v4337, %v4336
        %v4464 = vpack.c.b16 %v4339, %v4338
        %v4465 = vpack.c.b16 %v4341, %v4340
        %v4466 = vpack.c.b16 %v4343, %v4342
        %v4467 = vpack.c.b16 %v4345, %v4344
        %v4468 = vpack.c.b16 %v4347, %v4346
        %v4469 = vpack.c.b16 %v4349, %v4348
        %v4470 = vpack.c.b16 %v4351, %v4350
        %v4471 = vpack.c.b16 %v4353, %v4352
        %v4472 = vpack.c.b16 %v4355, %v4354
        %v4473 = vpack.c.b16 %v4357, %v4356
        %v4474 = vpack.c.b16 %v4359, %v4358
        %v4475 = vpack.c.b16 %v4361, %v4360
        %v4476 = vpack.c.b16 %v4363, %v4362
        %v4477 = vpack.c.b16 %v4365, %v4364
        %v4478 = vpack.c.b16 %v4367, %v4366
        %v4479 = vpack.c.b16 %v4369, %v4368
        %v4480 = vpack.c.b16 %v4371, %v4370
        %v4481 = vpack.c.b16 %v4373, %v4372
        %v4482 = vpack.c.b16 %v4375, %v4374
        %v4483 = vpack.c.b16 %v4377, %v4376
        %v4484 = vpack.c.b16 %v4379, %v4378
        %v4485 = vpack.c.b16 %v4381, %v4380
        %v4486 = vpack.c.b16 %v4383, %v4382
        %v4487 = vpack.c.b16 %v4385, %v4384
        %v4488 = vpack.c.b16 %v4387, %v4386
        %v4489 = vpack.c.b16 %v4389, %v4388
        %v4490 = vpack.c.b16 %v4391, %v4390
        %v4491 = vpack.c.b16 %v4393, %v4392
        %v4492 = vpack.c.b16 %v4395, %v4394
        %v4493 = vpack.c.b16 %v4397, %v4396
        %v4494 = vpack.c.b16 %v4399, %v4398
        %v4495 = vpack.c.b16 %v4401, %v4400
        %v4496 = vpack.c.b16 %v4403, %v4402
        %v4497 = vpack.c.b16 %v4405, %v4404
        %v4498 = vpack.c.b16 %v4407, %v4406
        %v4499 = vpack.c.b16 %v4409, %v4408
        %v4500 = vpack.c.b16 %v4411, %v4410
        %v4501 = vpack.c.b16 %v4413, %v4412
        %v4502 = vpack.c.b16 %v4415, %v4414
        %v4503 = vpack.c.b16 %v4417, %v4416
        %v4504 = vpack.c.b16 %v4419, %v4418
        %v4505 = vpack.c.b16 %v4421, %v4420
        %v4506 = vpack.c.b16 %v4423, %v4422
        %v4507 = vpack.c.b16 %v4425, %v4424
        %v4508 = vpack.c.b16 %v4427, %v4426
        %v4509 = vpack.c.b16 %v4429, %v4428
        %v4510 = vpack.c.b16 %v4431, %v4430
        %v4511 = vpack.c.b16 %v4433, %v4432
        %v4512 = vpack.c.b16 %v4435, %v4434
        %v4513 = vpack.c.b16 %v4437, %v4436
        %v4514 = vpack.c.b16 %v4439, %v4438
        %v4515 = vpack.c.b16 %v4441, %v4440
        %v4516 = vpack.c.b16 %v4443, %v4442
        %v4517 = vpack.c.b16 %v4445, %v4444
        %4590 = vmatprep.subr.bf16.mxu0 0
        %4591 = vmatpush1.bf16.msra.mxu0 %v4446
        %4592 = vmatprep.subr.bf16.mxu0 0
        %4593 = vmatpush1.bf16.msra.mxu0 %v4447
        %4594 = vmatprep.subr.bf16.mxu0 0
        %4595 = vmatpush1.bf16.msra.mxu0 %v4448
        %4596 = vmatprep.subr.bf16.mxu0 0
        %4597 = vmatpush1.bf16.msra.mxu0 %v4449
        %4598 = vmatprep.subr.bf16.mxu0 0
        %4599 = vmatpush1.bf16.msra.mxu0 %v4450
        %4600 = vmatprep.subr.bf16.mxu0 0
        %4601 = vmatpush1.bf16.msra.mxu0 %v4451
        %4602 = vmatprep.subr.bf16.mxu0 0
        %4603 = vmatpush1.bf16.msra.mxu0 %v4452
        %4604 = vmatprep.subr.bf16.mxu0 0
        %4605 = vmatpush1.bf16.msra.mxu0 %v4453
        %4606 = vmatprep.subr.bf16.mxu0 0
        %4607 = vmatpush1.bf16.msra.mxu0 %v4454
        %4608 = vmatprep.subr.bf16.mxu0 0
        %4609 = vmatpush1.bf16.msra.mxu0 %v4455
        %4610 = vmatprep.subr.bf16.mxu0 0
        %4611 = vmatpush1.bf16.msra.mxu0 %v4456
        %4612 = vmatprep.subr.bf16.mxu0 0
        %4613 = vmatpush1.bf16.msra.mxu0 %v4457
        %4614 = vmatprep.subr.bf16.mxu0 0
        %4615 = vmatpush1.bf16.msra.mxu0 %v4458
        %4616 = vmatprep.subr.bf16.mxu0 0
        %4617 = vmatpush1.bf16.msra.mxu0 %v4459
        %4618 = vmatprep.subr.bf16.mxu0 0
        %4619 = vmatpush1.bf16.msra.mxu0 %v4460
        %4620 = vmatprep.subr.bf16.mxu0 0
        %4621 = vmatpush1.bf16.msra.mxu0 %v4461
        %4622 = vmatprep.mubr.bf16.mxu0 %v3871
        %4623 = vmatmul.mubr.bf16.gmra.mrb[0].mxu0 %v3870
        %v4624 = vpop.f32.mrb[0].mxu0
        %v4625 = vadd.f32 0.0, %v4624
        %v4626 = vpop.f32.mrb[0].mxu0
        %v4627 = vpop.f32.mrb[0].mxu0
        %v4628 = vadd.f32 0.0, %v4627
        %v4629 = vpop.f32.mrb[0].mxu0
        %4630 = vmatprep.mubr.bf16.mxu0 %v3880
        %4631 = vmatmul.mubr.bf16.gmra.mrb[0].mxu0 %v3879
        %v4632 = vpop.f32.mrb[0].mxu0
        %v4633 = vadd.f32 0.0, %v4632
        %v4634 = vpop.f32.mrb[0].mxu0
        %v4635 = vpop.f32.mrb[0].mxu0
        %v4636 = vadd.f32 0.0, %v4635
        %v4637 = vpop.f32.mrb[0].mxu0
        %4638 = vmatprep.mubr.bf16.mxu0 %v3889
        %4639 = vmatmul.mubr.bf16.gmra.mrb[0].mxu0 %v3888
        %v4640 = vpop.f32.mrb[0].mxu0
        %v4641 = vadd.f32 0.0, %v4640
        %v4642 = vpop.f32.mrb[0].mxu0
        %v4643 = vpop.f32.mrb[0].mxu0
        %v4644 = vadd.f32 0.0, %v4643
        %v4645 = vpop.f32.mrb[0].mxu0
        %4646 = vmatprep.mubr.bf16.mxu0 %v3898
        %4647 = vmatmul.mubr.bf16.gmra.mrb[0].mxu0 %v3897
        %v4648 = vpop.f32.mrb[0].mxu0
        %v4649 = vadd.f32 0.0, %v4648
        %v4650 = vpop.f32.mrb[0].mxu0
        %v4651 = vpop.f32.mrb[0].mxu0
        %v4652 = vadd.f32 0.0, %v4651
        %v4653 = vpop.f32.mrb[0].mxu0
        %4654 = vmatprep.mubr.bf16.mxu0 %v3907
        %4655 = vmatmul.mubr.bf16.gmra.mrb[0].mxu0 %v3906
        %v4656 = vpop.f32.mrb[0].mxu0
        %v4657 = vadd.f32 0.0, %v4656
        %v4658 = vpop.f32.mrb[0].mxu0
        %v4659 = vpop.f32.mrb[0].mxu0
        %v4660 = vadd.f32 0.0, %v4659
        %v4661 = vpop.f32.mrb[0].mxu0
        %4662 = vmatprep.mubr.bf16.mxu0 %v3916
        %4663 = vmatmul.mubr.bf16.gmra.mrb[0].mxu0 %v3915
        %v4664 = vpop.f32.mrb[0].mxu0
        %v4665 = vadd.f32 0.0, %v4664
        %v4666 = vpop.f32.mrb[0].mxu0
        %v4667 = vpop.f32.mrb[0].mxu0
        %v4668 = vadd.f32 0.0, %v4667
        %v4669 = vpop.f32.mrb[0].mxu0
        %4670 = vmatprep.mubr.bf16.mxu0 %v3925
        %4671 = vmatmul.mubr.bf16.gmra.mrb[0].mxu0 %v3924
        %v4672 = vpop.f32.mrb[0].mxu0
        %v4673 = vadd.f32 0.0, %v4672
        %v4674 = vpop.f32.mrb[0].mxu0
        %v4675 = vpop.f32.mrb[0].mxu0
        %v4676 = vadd.f32 0.0, %v4675
        %v4677 = vpop.f32.mrb[0].mxu0
        %4678 = vmatprep.mubr.bf16.mxu0 %v3934
        %4679 = vmatmul.mubr.bf16.gmra.mrb[0].mxu0 %v3933
        %v4680 = vpop.f32.mrb[0].mxu0
        %v4681 = vadd.f32 0.0, %v4680
        %v4682 = vpop.f32.mrb[0].mxu0
        %v4683 = vpop.f32.mrb[0].mxu0
        %v4684 = vadd.f32 0.0, %v4683
        %v4685 = vpop.f32.mrb[0].mxu0
        %4686 = vmatprep.mubr.bf16.mxu0 %v3943
        %4687 = vmatmul.mubr.bf16.gmra.mrb[0].mxu0 %v3942
        %v4688 = vpop.f32.mrb[0].mxu0
        %v4689 = vadd.f32 0.0, %v4688
        %v4690 = vpop.f32.mrb[0].mxu0
        %v4691 = vpop.f32.mrb[0].mxu0
        %v4692 = vadd.f32 0.0, %v4691
        %v4693 = vpop.f32.mrb[0].mxu0
        %4694 = vmatprep.mubr.bf16.mxu0 %v3952
        %4695 = vmatmul.mubr.bf16.gmra.mrb[0].mxu0 %v3951
        %v4696 = vpop.f32.mrb[0].mxu0
        %v4697 = vadd.f32 0.0, %v4696
        %v4698 = vpop.f32.mrb[0].mxu0
        %v4699 = vpop.f32.mrb[0].mxu0
        %v4700 = vadd.f32 0.0, %v4699
        %v4701 = vpop.f32.mrb[0].mxu0
        %4702 = vmatprep.mubr.bf16.mxu0 %v3961
        %4703 = vmatmul.mubr.bf16.gmra.mrb[0].mxu0 %v3960
        %v4704 = vpop.f32.mrb[0].mxu0
        %v4705 = vadd.f32 0.0, %v4704
        %v4706 = vpop.f32.mrb[0].mxu0
        %v4707 = vpop.f32.mrb[0].mxu0
        %v4708 = vadd.f32 0.0, %v4707
        %v4709 = vpop.f32.mrb[0].mxu0
        %4710 = vmatprep.mubr.bf16.mxu0 %v3970
        %4711 = vmatmul.mubr.bf16.gmra.mrb[0].mxu0 %v3969
        %v4712 = vpop.f32.mrb[0].mxu0
        %v4713 = vadd.f32 0.0, %v4712
        %v4714 = vpop.f32.mrb[0].mxu0
        %v4715 = vpop.f32.mrb[0].mxu0
        %v4716 = vadd.f32 0.0, %v4715
        %v4717 = vpop.f32.mrb[0].mxu0
        %4718 = vmatprep.mubr.bf16.mxu0 %v3979
        %4719 = vmatmul.mubr.bf16.gmra.mrb[0].mxu0 %v3978
        %v4720 = vpop.f32.mrb[0].mxu0
        %v4721 = vadd.f32 0.0, %v4720
        %v4722 = vpop.f32.mrb[0].mxu0
        %v4723 = vpop.f32.mrb[0].mxu0
        %v4724 = vadd.f32 0.0, %v4723
        %v4725 = vpop.f32.mrb[0].mxu0
        %4726 = vmatprep.mubr.bf16.mxu0 %v3988
        %4727 = vmatmul.mubr.bf16.gmra.mrb[0].mxu0 %v3987
        %v4728 = vpop.f32.mrb[0].mxu0
        %v4729 = vadd.f32 0.0, %v4728
        %v4730 = vpop.f32.mrb[0].mxu0
        %v4731 = vpop.f32.mrb[0].mxu0
        %v4732 = vadd.f32 0.0, %v4731
        %v4733 = vpop.f32.mrb[0].mxu0
        %4734 = vmatprep.mubr.bf16.mxu0 %v3997
        %4735 = vmatmul.mubr.bf16.gmra.mrb[0].mxu0 %v3996
        %v4736 = vpop.f32.mrb[0].mxu0
        %v4737 = vadd.f32 0.0, %v4736
        %v4738 = vpop.f32.mrb[0].mxu0
        %v4739 = vpop.f32.mrb[0].mxu0
        %v4740 = vadd.f32 0.0, %v4739
        %v4741 = vpop.f32.mrb[0].mxu0
        %4742 = vmatprep.mubr.bf16.mxu0 %v4006
        %4743 = vmatmul.mubr.bf16.gmra.mrb[0].mxu0 %v4005
        %v4744 = vpop.f32.mrb[0].mxu0
        %v4745 = vadd.f32 0.0, %v4744
        %v4746 = vpop.f32.mrb[0].mxu0
        %v4747 = vpop.f32.mrb[0].mxu0
        %v4748 = vadd.f32 0.0, %v4747
        %v4749 = vpop.f32.mrb[0].mxu0
        %4750 = vdwg.mxu0
        %4751 = vmatprep.subr.bf16.mxu0 0
        %4752 = vmatpush1.bf16.msra.mxu0 %v4462
        %4753 = vmatprep.subr.bf16.mxu0 0
        %4754 = vmatpush1.bf16.msra.mxu0 %v4463
        %4755 = vmatprep.subr.bf16.mxu0 0
        %4756 = vmatpush1.bf16.msra.mxu0 %v4464
        %4757 = vmatprep.subr.bf16.mxu0 0
        %4758 = vmatpush1.bf16.msra.mxu0 %v4465
        %4759 = vmatprep.subr.bf16.mxu0 0
        %4760 = vmatpush1.bf16.msra.mxu0 %v4466
        %4761 = vmatprep.subr.bf16.mxu0 0
        %4762 = vmatpush1.bf16.msra.mxu0 %v4467
        %4763 = vmatprep.subr.bf16.mxu0 0
        %4764 = vmatpush1.bf16.msra.mxu0 %v4468
        %4765 = vmatprep.subr.bf16.mxu0 0
        %4766 = vmatpush1.bf16.msra.mxu0 %v4469
        %4767 = vmatprep.subr.bf16.mxu0 0
        %4768 = vmatpush1.bf16.msra.mxu0 %v4470
        %4769 = vmatprep.subr.bf16.mxu0 0
        %4770 = vmatpush1.bf16.msra.mxu0 %v4471
        %4771 = vmatprep.subr.bf16.mxu0 0
        %4772 = vmatpush1.bf16.msra.mxu0 %v4472
        %4773 = vmatprep.subr.bf16.mxu0 0
        %4774 = vmatpush1.bf16.msra.mxu0 %v4473
        %4775 = vmatprep.subr.bf16.mxu0 0
        %4776 = vmatpush1.bf16.msra.mxu0 %v4474
        %4777 = vmatprep.subr.bf16.mxu0 0
        %4778 = vmatpush1.bf16.msra.mxu0 %v4475
        %4779 = vmatprep.subr.bf16.mxu0 0
        %4780 = vmatpush1.bf16.msra.mxu0 %v4476
        %4781 = vmatprep.subr.bf16.mxu0 0
        %4782 = vmatpush1.bf16.msra.mxu0 %v4477
        %4783 = vmatprep.mubr.bf16.mxu0 %v3873
        %4784 = vmatmul.mubr.bf16.gmra.mrb[0].mxu0 %v3872
        %v4785 = vpop.f32.mrb[0].mxu0
        %v4786 = vadd.f32 %v4625, %v4785
        %v4787 = vpop.f32.mrb[0].mxu0
        %v4788 = vpop.f32.mrb[0].mxu0
        %v4789 = vadd.f32 %v4628, %v4788
        %v4790 = vpop.f32.mrb[0].mxu0
        %4791 = vmatprep.mubr.bf16.mxu0 %v3882
        %4792 = vmatmul.mubr.bf16.gmra.mrb[0].mxu0 %v3881
        %v4793 = vpop.f32.mrb[0].mxu0
        %v4794 = vadd.f32 %v4633, %v4793
        %v4795 = vpop.f32.mrb[0].mxu0
        %v4796 = vpop.f32.mrb[0].mxu0
        %v4797 = vadd.f32 %v4636, %v4796
        %v4798 = vpop.f32.mrb[0].mxu0
        %4799 = vmatprep.mubr.bf16.mxu0 %v3891
        %4800 = vmatmul.mubr.bf16.gmra.mrb[0].mxu0 %v3890
        %v4801 = vpop.f32.mrb[0].mxu0
        %v4802 = vadd.f32 %v4641, %v4801
        %v4803 = vpop.f32.mrb[0].mxu0
        %v4804 = vpop.f32.mrb[0].mxu0
        %v4805 = vadd.f32 %v4644, %v4804
        %v4806 = vpop.f32.mrb[0].mxu0
        %4807 = vmatprep.mubr.bf16.mxu0 %v3900
        %4808 = vmatmul.mubr.bf16.gmra.mrb[0].mxu0 %v3899
        %v4809 = vpop.f32.mrb[0].mxu0
        %v4810 = vadd.f32 %v4649, %v4809
        %v4811 = vpop.f32.mrb[0].mxu0
        %v4812 = vpop.f32.mrb[0].mxu0
        %v4813 = vadd.f32 %v4652, %v4812
        %v4814 = vpop.f32.mrb[0].mxu0
        %4815 = vmatprep.mubr.bf16.mxu0 %v3909
        %4816 = vmatmul.mubr.bf16.gmra.mrb[0].mxu0 %v3908
        %v4817 = vpop.f32.mrb[0].mxu0
        %v4818 = vadd.f32 %v4657, %v4817
        %v4819 = vpop.f32.mrb[0].mxu0
        %v4820 = vpop.f32.mrb[0].mxu0
        %v4821 = vadd.f32 %v4660, %v4820
        %v4822 = vpop.f32.mrb[0].mxu0
        %4823 = vmatprep.mubr.bf16.mxu0 %v3918
        %4824 = vmatmul.mubr.bf16.gmra.mrb[0].mxu0 %v3917
        %v4825 = vpop.f32.mrb[0].mxu0
        %v4826 = vadd.f32 %v4665, %v4825
        %v4827 = vpop.f32.mrb[0].mxu0
        %v4828 = vpop.f32.mrb[0].mxu0
        %v4829 = vadd.f32 %v4668, %v4828
        %v4830 = vpop.f32.mrb[0].mxu0
        %4831 = vmatprep.mubr.bf16.mxu0 %v3927
        %4832 = vmatmul.mubr.bf16.gmra.mrb[0].mxu0 %v3926
        %v4833 = vpop.f32.mrb[0].mxu0
        %v4834 = vadd.f32 %v4673, %v4833
        %v4835 = vpop.f32.mrb[0].mxu0
        %v4836 = vpop.f32.mrb[0].mxu0
        %v4837 = vadd.f32 %v4676, %v4836
        %v4838 = vpop.f32.mrb[0].mxu0
        %4839 = vmatprep.mubr.bf16.mxu0 %v3936
        %4840 = vmatmul.mubr.bf16.gmra.mrb[0].mxu0 %v3935
        %v4841 = vpop.f32.mrb[0].mxu0
        %v4842 = vadd.f32 %v4681, %v4841
        %v4843 = vpop.f32.mrb[0].mxu0
        %v4844 = vpop.f32.mrb[0].mxu0
        %v4845 = vadd.f32 %v4684, %v4844
        %v4846 = vpop.f32.mrb[0].mxu0
        %4847 = vmatprep.mubr.bf16.mxu0 %v3945
        %4848 = vmatmul.mubr.bf16.gmra.mrb[0].mxu0 %v3944
        %v4849 = vpop.f32.mrb[0].mxu0
        %v4850 = vadd.f32 %v4689, %v4849
        %v4851 = vpop.f32.mrb[0].mxu0
        %v4852 = vpop.f32.mrb[0].mxu0
        %v4853 = vadd.f32 %v4692, %v4852
        %v4854 = vpop.f32.mrb[0].mxu0
        %4855 = vmatprep.mubr.bf16.mxu0 %v3954
        %4856 = vmatmul.mubr.bf16.gmra.mrb[0].mxu0 %v3953
        %v4857 = vpop.f32.mrb[0].mxu0
        %v4858 = vadd.f32 %v4697, %v4857
        %v4859 = vpop.f32.mrb[0].mxu0
        %v4860 = vpop.f32.mrb[0].mxu0
        %v4861 = vadd.f32 %v4700, %v4860
        %v4862 = vpop.f32.mrb[0].mxu0
        %4863 = vmatprep.mubr.bf16.mxu0 %v3963
        %4864 = vmatmul.mubr.bf16.gmra.mrb[0].mxu0 %v3962
        %v4865 = vpop.f32.mrb[0].mxu0
        %v4866 = vadd.f32 %v4705, %v4865
        %v4867 = vpop.f32.mrb[0].mxu0
        %v4868 = vpop.f32.mrb[0].mxu0
        %v4869 = vadd.f32 %v4708, %v4868
        %v4870 = vpop.f32.mrb[0].mxu0
        %4871 = vmatprep.mubr.bf16.mxu0 %v3972
        %4872 = vmatmul.mubr.bf16.gmra.mrb[0].mxu0 %v3971
        %v4873 = vpop.f32.mrb[0].mxu0
        %v4874 = vadd.f32 %v4713, %v4873
        %v4875 = vpop.f32.mrb[0].mxu0
        %v4876 = vpop.f32.mrb[0].mxu0
        %v4877 = vadd.f32 %v4716, %v4876
        %v4878 = vpop.f32.mrb[0].mxu0
        %4879 = vmatprep.mubr.bf16.mxu0 %v3981
        %4880 = vmatmul.mubr.bf16.gmra.mrb[0].mxu0 %v3980
        %v4881 = vpop.f32.mrb[0].mxu0
        %v4882 = vadd.f32 %v4721, %v4881
        %v4883 = vpop.f32.mrb[0].mxu0
        %v4884 = vpop.f32.mrb[0].mxu0
        %v4885 = vadd.f32 %v4724, %v4884
        %v4886 = vpop.f32.mrb[0].mxu0
        %4887 = vmatprep.mubr.bf16.mxu0 %v3990
        %4888 = vmatmul.mubr.bf16.gmra.mrb[0].mxu0 %v3989
        %v4889 = vpop.f32.mrb[0].mxu0
        %v4890 = vadd.f32 %v4729, %v4889
        %v4891 = vpop.f32.mrb[0].mxu0
        %v4892 = vpop.f32.mrb[0].mxu0
        %v4893 = vadd.f32 %v4732, %v4892
        %v4894 = vpop.f32.mrb[0].mxu0
        %4895 = vmatprep.mubr.bf16.mxu0 %v3999
        %4896 = vmatmul.mubr.bf16.gmra.mrb[0].mxu0 %v3998
        %v4897 = vpop.f32.mrb[0].mxu0
        %v4898 = vadd.f32 %v4737, %v4897
        %v4899 = vpop.f32.mrb[0].mxu0
        %v4900 = vpop.f32.mrb[0].mxu0
        %v4901 = vadd.f32 %v4740, %v4900
        %v4902 = vpop.f32.mrb[0].mxu0
        %4903 = vmatprep.mubr.bf16.mxu0 %v4008
        %4904 = vmatmul.mubr.bf16.gmra.mrb[0].mxu0 %v4007
        %v4905 = vpop.f32.mrb[0].mxu0
        %v4906 = vadd.f32 %v4745, %v4905
        %v4907 = vpop.f32.mrb[0].mxu0
        %v4908 = vpop.f32.mrb[0].mxu0
        %v4909 = vadd.f32 %v4748, %v4908
        %v4910 = vpop.f32.mrb[0].mxu0
        %4911 = vdwg.mxu0
        %4912 = vmatprep.subr.bf16.mxu0 0
        %4913 = vmatpush1.bf16.msra.mxu0 %v4478
        %4914 = vmatprep.subr.bf16.mxu0 0
        %4915 = vmatpush1.bf16.msra.mxu0 %v4479
        %4916 = vmatprep.subr.bf16.mxu0 0
        %4917 = vmatpush1.bf16.msra.mxu0 %v4480
        %4918 = vmatprep.subr.bf16.mxu0 0
        %4919 = vmatpush1.bf16.msra.mxu0 %v4481
        %4920 = vmatprep.subr.bf16.mxu0 0
        %4921 = vmatpush1.bf16.msra.mxu0 %v4482
        %4922 = vmatprep.subr.bf16.mxu0 0
        %4923 = vmatpush1.bf16.msra.mxu0 %v4483
        %4924 = vmatprep.subr.bf16.mxu0 0
        %4925 = vmatpush1.bf16.msra.mxu0 %v4484
        %4926 = vmatprep.subr.bf16.mxu0 0
        %4927 = vmatpush1.bf16.msra.mxu0 %v4485
        %4928 = vmatprep.subr.bf16.mxu0 0
        %4929 = vmatpush1.bf16.msra.mxu0 %v4486
        %4930 = vmatprep.subr.bf16.mxu0 0
        %4931 = vmatpush1.bf16.msra.mxu0 %v4487
        %4932 = vmatprep.subr.bf16.mxu0 0
        %4933 = vmatpush1.bf16.msra.mxu0 %v4488
        %4934 = vmatprep.subr.bf16.mxu0 0
        %4935 = vmatpush1.bf16.msra.mxu0 %v4489
        %4936 = vmatprep.subr.bf16.mxu0 0
        %4937 = vmatpush1.bf16.msra.mxu0 %v4490
        %4938 = vmatprep.subr.bf16.mxu0 0
        %4939 = vmatpush1.bf16.msra.mxu0 %v4491
        %4940 = vmatprep.subr.bf16.mxu0 0
        %4941 = vmatpush1.bf16.msra.mxu0 %v4492
        %4942 = vmatprep.subr.bf16.mxu0 0
        %4943 = vmatpush1.bf16.msra.mxu0 %v4493
        %4944 = vmatprep.mubr.bf16.mxu0 %v3875
        %4945 = vmatmul.mubr.bf16.gmra.mrb[0].mxu0 %v3874
        %v4946 = vpop.f32.mrb[0].mxu0
        %v4947 = vadd.f32 %v4786, %v4946
        %v4948 = vpop.f32.mrb[0].mxu0
        %v4949 = vpop.f32.mrb[0].mxu0
        %v4950 = vadd.f32 %v4789, %v4949
        %v4951 = vpop.f32.mrb[0].mxu0
        %4952 = vmatprep.mubr.bf16.mxu0 %v3884
        %4953 = vmatmul.mubr.bf16.gmra.mrb[0].mxu0 %v3883
        %v4954 = vpop.f32.mrb[0].mxu0
        %v4955 = vadd.f32 %v4794, %v4954
        %v4956 = vpop.f32.mrb[0].mxu0
        %v4957 = vpop.f32.mrb[0].mxu0
        %v4958 = vadd.f32 %v4797, %v4957
        %v4959 = vpop.f32.mrb[0].mxu0
        %4960 = vmatprep.mubr.bf16.mxu0 %v3893
        %4961 = vmatmul.mubr.bf16.gmra.mrb[0].mxu0 %v3892
        %v4962 = vpop.f32.mrb[0].mxu0
        %v4963 = vadd.f32 %v4802, %v4962
        %v4964 = vpop.f32.mrb[0].mxu0
        %v4965 = vpop.f32.mrb[0].mxu0
        %v4966 = vadd.f32 %v4805, %v4965
        %v4967 = vpop.f32.mrb[0].mxu0
        %4968 = vmatprep.mubr.bf16.mxu0 %v3902
        %4969 = vmatmul.mubr.bf16.gmra.mrb[0].mxu0 %v3901
        %v4970 = vpop.f32.mrb[0].mxu0
        %v4971 = vadd.f32 %v4810, %v4970
        %v4972 = vpop.f32.mrb[0].mxu0
        %v4973 = vpop.f32.mrb[0].mxu0
        %v4974 = vadd.f32 %v4813, %v4973
        %v4975 = vpop.f32.mrb[0].mxu0
        %4976 = vmatprep.mubr.bf16.mxu0 %v3911
        %4977 = vmatmul.mubr.bf16.gmra.mrb[0].mxu0 %v3910
        %v4978 = vpop.f32.mrb[0].mxu0
        %v4979 = vadd.f32 %v4818, %v4978
        %v4980 = vpop.f32.mrb[0].mxu0
        %v4981 = vpop.f32.mrb[0].mxu0
        %v4982 = vadd.f32 %v4821, %v4981
        %v4983 = vpop.f32.mrb[0].mxu0
        %4984 = vmatprep.mubr.bf16.mxu0 %v3920
        %4985 = vmatmul.mubr.bf16.gmra.mrb[0].mxu0 %v3919
        %v4986 = vpop.f32.mrb[0].mxu0
        %v4987 = vadd.f32 %v4826, %v4986
        %v4988 = vpop.f32.mrb[0].mxu0
        %v4989 = vpop.f32.mrb[0].mxu0
        %v4990 = vadd.f32 %v4829, %v4989
        %v4991 = vpop.f32.mrb[0].mxu0
        %4992 = vmatprep.mubr.bf16.mxu0 %v3929
        %4993 = vmatmul.mubr.bf16.gmra.mrb[0].mxu0 %v3928
        %v4994 = vpop.f32.mrb[0].mxu0
        %v4995 = vadd.f32 %v4834, %v4994
        %v4996 = vpop.f32.mrb[0].mxu0
        %v4997 = vpop.f32.mrb[0].mxu0
        %v4998 = vadd.f32 %v4837, %v4997
        %v4999 = vpop.f32.mrb[0].mxu0
        %5000 = vmatprep.mubr.bf16.mxu0 %v3938
        %5001 = vmatmul.mubr.bf16.gmra.mrb[0].mxu0 %v3937
        %v5002 = vpop.f32.mrb[0].mxu0
        %v5003 = vadd.f32 %v4842, %v5002
        %v5004 = vpop.f32.mrb[0].mxu0
        %v5005 = vpop.f32.mrb[0].mxu0
        %v5006 = vadd.f32 %v4845, %v5005
        %v5007 = vpop.f32.mrb[0].mxu0
        %5008 = vmatprep.mubr.bf16.mxu0 %v3947
        %5009 = vmatmul.mubr.bf16.gmra.mrb[0].mxu0 %v3946
        %v5010 = vpop.f32.mrb[0].mxu0
        %v5011 = vadd.f32 %v4850, %v5010
        %v5012 = vpop.f32.mrb[0].mxu0
        %v5013 = vpop.f32.mrb[0].mxu0
        %v5014 = vadd.f32 %v4853, %v5013
        %v5015 = vpop.f32.mrb[0].mxu0
        %5016 = vmatprep.mubr.bf16.mxu0 %v3956
        %5017 = vmatmul.mubr.bf16.gmra.mrb[0].mxu0 %v3955
        %v5018 = vpop.f32.mrb[0].mxu0
        %v5019 = vadd.f32 %v4858, %v5018
        %v5020 = vpop.f32.mrb[0].mxu0
        %v5021 = vpop.f32.mrb[0].mxu0
        %v5022 = vadd.f32 %v4861, %v5021
        %v5023 = vpop.f32.mrb[0].mxu0
        %5024 = vmatprep.mubr.bf16.mxu0 %v3965
        %5025 = vmatmul.mubr.bf16.gmra.mrb[0].mxu0 %v3964
        %v5026 = vpop.f32.mrb[0].mxu0
        %v5027 = vadd.f32 %v4866, %v5026
        %v5028 = vpop.f32.mrb[0].mxu0
        %v5029 = vpop.f32.mrb[0].mxu0
        %v5030 = vadd.f32 %v4869, %v5029
        %v5031 = vpop.f32.mrb[0].mxu0
        %5032 = vmatprep.mubr.bf16.mxu0 %v3974
        %5033 = vmatmul.mubr.bf16.gmra.mrb[0].mxu0 %v3973
        %v5034 = vpop.f32.mrb[0].mxu0
        %v5035 = vadd.f32 %v4874, %v5034
        %v5036 = vpop.f32.mrb[0].mxu0
        %v5037 = vpop.f32.mrb[0].mxu0
        %v5038 = vadd.f32 %v4877, %v5037
        %v5039 = vpop.f32.mrb[0].mxu0
        %5040 = vmatprep.mubr.bf16.mxu0 %v3983
        %5041 = vmatmul.mubr.bf16.gmra.mrb[0].mxu0 %v3982
        %v5042 = vpop.f32.mrb[0].mxu0
        %v5043 = vadd.f32 %v4882, %v5042
        %v5044 = vpop.f32.mrb[0].mxu0
        %v5045 = vpop.f32.mrb[0].mxu0
        %v5046 = vadd.f32 %v4885, %v5045
        %v5047 = vpop.f32.mrb[0].mxu0
        %5048 = vmatprep.mubr.bf16.mxu0 %v3992
        %5049 = vmatmul.mubr.bf16.gmra.mrb[0].mxu0 %v3991
        %v5050 = vpop.f32.mrb[0].mxu0
        %v5051 = vadd.f32 %v4890, %v5050
        %v5052 = vpop.f32.mrb[0].mxu0
        %v5053 = vpop.f32.mrb[0].mxu0
        %v5054 = vadd.f32 %v4893, %v5053
        %v5055 = vpop.f32.mrb[0].mxu0
        %5056 = vmatprep.mubr.bf16.mxu0 %v4001
        %5057 = vmatmul.mubr.bf16.gmra.mrb[0].mxu0 %v4000
        %v5058 = vpop.f32.mrb[0].mxu0
        %v5059 = vadd.f32 %v4898, %v5058
        %v5060 = vpop.f32.mrb[0].mxu0
        %v5061 = vpop.f32.mrb[0].mxu0
        %v5062 = vadd.f32 %v4901, %v5061
        %v5063 = vpop.f32.mrb[0].mxu0
        %5064 = vmatprep.mubr.bf16.mxu0 %v4010
        %5065 = vmatmul.mubr.bf16.gmra.mrb[0].mxu0 %v4009
        %v5066 = vpop.f32.mrb[0].mxu0
        %v5067 = vadd.f32 %v4906, %v5066
        %v5068 = vpop.f32.mrb[0].mxu0
        %v5069 = vpop.f32.mrb[0].mxu0
        %v5070 = vadd.f32 %v4909, %v5069
        %v5071 = vpop.f32.mrb[0].mxu0
        %5072 = vdwg.mxu0
        %5073 = vmatprep.subr.bf16.mxu0 0
        %5074 = vmatpush1.bf16.msra.mxu0 %v4494
        %5075 = vmatprep.subr.bf16.mxu0 0
        %5076 = vmatpush1.bf16.msra.mxu0 %v4495
        %5077 = vmatprep.subr.bf16.mxu0 0
        %5078 = vmatpush1.bf16.msra.mxu0 %v4496
        %5079 = vmatprep.subr.bf16.mxu0 0
        %5080 = vmatpush1.bf16.msra.mxu0 %v4497
        %5081 = vmatprep.subr.bf16.mxu0 0
        %5082 = vmatpush1.bf16.msra.mxu0 %v4498
        %5083 = vmatprep.subr.bf16.mxu0 0
        %5084 = vmatpush1.bf16.msra.mxu0 %v4499
        %5085 = vmatprep.subr.bf16.mxu0 0
        %5086 = vmatpush1.bf16.msra.mxu0 %v4500
        %5087 = vmatprep.subr.bf16.mxu0 0
        %5088 = vmatpush1.bf16.msra.mxu0 %v4501
        %5089 = vmatprep.subr.bf16.mxu0 0
        %5090 = vmatpush1.bf16.msra.mxu0 %v4502
        %5091 = vmatprep.subr.bf16.mxu0 0
        %5092 = vmatpush1.bf16.msra.mxu0 %v4503
        %5093 = vmatprep.subr.bf16.mxu0 0
        %5094 = vmatpush1.bf16.msra.mxu0 %v4504
        %5095 = vmatprep.subr.bf16.mxu0 0
        %5096 = vmatpush1.bf16.msra.mxu0 %v4505
        %5097 = vmatprep.subr.bf16.mxu0 0
        %5098 = vmatpush1.bf16.msra.mxu0 %v4506
        %5099 = vmatprep.subr.bf16.mxu0 0
        %5100 = vmatpush1.bf16.msra.mxu0 %v4507
        %5101 = vmatprep.subr.bf16.mxu0 0
        %5102 = vmatpush1.bf16.msra.mxu0 %v4508
        %5103 = vmatprep.subr.bf16.mxu0 0
        %5104 = vmatpush1.bf16.msra.mxu0 %v4509
        %5105 = vmatprep.mubr.bf16.mxu0 %v3877
        %5106 = vmatmul.mubr.bf16.gmra.mrb[0].mxu0 %v3876
        %v5107 = vpop.f32.mrb[0].mxu0
        %v5108 = vadd.f32 %v4947, %v5107
        %v5109 = vpop.f32.mrb[0].mxu0
        %v5110 = vpop.f32.mrb[0].mxu0
        %v5111 = vadd.f32 %v4950, %v5110
        %v5112 = vpop.f32.mrb[0].mxu0
        %5113 = vmatprep.mubr.bf16.mxu0 %v3886
        %5114 = vmatmul.mubr.bf16.gmra.mrb[0].mxu0 %v3885
        %v5115 = vpop.f32.mrb[0].mxu0
        %v5116 = vadd.f32 %v4955, %v5115
        %v5117 = vpop.f32.mrb[0].mxu0
        %v5118 = vpop.f32.mrb[0].mxu0
        %v5119 = vadd.f32 %v4958, %v5118
        %v5120 = vpop.f32.mrb[0].mxu0
        %5121 = vmatprep.mubr.bf16.mxu0 %v3895
        %5122 = vmatmul.mubr.bf16.gmra.mrb[0].mxu0 %v3894
        %v5123 = vpop.f32.mrb[0].mxu0
        %v5124 = vadd.f32 %v4963, %v5123
        %v5125 = vpop.f32.mrb[0].mxu0
        %v5126 = vpop.f32.mrb[0].mxu0
        %v5127 = vadd.f32 %v4966, %v5126
        %v5128 = vpop.f32.mrb[0].mxu0
        %5129 = vmatprep.mubr.bf16.mxu0 %v3904
        %5130 = vmatmul.mubr.bf16.gmra.mrb[0].mxu0 %v3903
        %v5131 = vpop.f32.mrb[0].mxu0
        %v5132 = vadd.f32 %v4971, %v5131
        %v5133 = vpop.f32.mrb[0].mxu0
        %v5134 = vpop.f32.mrb[0].mxu0
        %v5135 = vadd.f32 %v4974, %v5134
        %v5136 = vpop.f32.mrb[0].mxu0
        %5137 = vmatprep.mubr.bf16.mxu0 %v3913
        %5138 = vmatmul.mubr.bf16.gmra.mrb[0].mxu0 %v3912
        %v5139 = vpop.f32.mrb[0].mxu0
        %v5140 = vadd.f32 %v4979, %v5139
        %v5141 = vpop.f32.mrb[0].mxu0
        %v5142 = vpop.f32.mrb[0].mxu0
        %v5143 = vadd.f32 %v4982, %v5142
        %v5144 = vpop.f32.mrb[0].mxu0
        %5145 = vmatprep.mubr.bf16.mxu0 %v3922
        %5146 = vmatmul.mubr.bf16.gmra.mrb[0].mxu0 %v3921
        %v5147 = vpop.f32.mrb[0].mxu0
        %v5148 = vadd.f32 %v4987, %v5147
        %v5149 = vpop.f32.mrb[0].mxu0
        %v5150 = vpop.f32.mrb[0].mxu0
        %v5151 = vadd.f32 %v4990, %v5150
        %v5152 = vpop.f32.mrb[0].mxu0
        %5153 = vmatprep.mubr.bf16.mxu0 %v3931
        %5154 = vmatmul.mubr.bf16.gmra.mrb[0].mxu0 %v3930
        %v5155 = vpop.f32.mrb[0].mxu0
        %v5156 = vadd.f32 %v4995, %v5155
        %v5157 = vpop.f32.mrb[0].mxu0
        %v5158 = vpop.f32.mrb[0].mxu0
        %v5159 = vadd.f32 %v4998, %v5158
        %v5160 = vpop.f32.mrb[0].mxu0
        %5161 = vmatprep.mubr.bf16.mxu0 %v3940
        %5162 = vmatmul.mubr.bf16.gmra.mrb[0].mxu0 %v3939
        %v5163 = vpop.f32.mrb[0].mxu0
        %v5164 = vadd.f32 %v5003, %v5163
        %v5165 = vpop.f32.mrb[0].mxu0
        %v5166 = vpop.f32.mrb[0].mxu0
        %v5167 = vadd.f32 %v5006, %v5166
        %v5168 = vpop.f32.mrb[0].mxu0
        %5169 = vmatprep.mubr.bf16.mxu0 %v3949
        %5170 = vmatmul.mubr.bf16.gmra.mrb[0].mxu0 %v3948
        %v5171 = vpop.f32.mrb[0].mxu0
        %v5172 = vadd.f32 %v5011, %v5171
        %v5173 = vpop.f32.mrb[0].mxu0
        %v5174 = vpop.f32.mrb[0].mxu0
        %v5175 = vadd.f32 %v5014, %v5174
        %v5176 = vpop.f32.mrb[0].mxu0
        %5177 = vmatprep.mubr.bf16.mxu0 %v3958
        %5178 = vmatmul.mubr.bf16.gmra.mrb[0].mxu0 %v3957
        %v5179 = vpop.f32.mrb[0].mxu0
        %v5180 = vadd.f32 %v5019, %v5179
        %v5181 = vpop.f32.mrb[0].mxu0
        %v5182 = vpop.f32.mrb[0].mxu0
        %v5183 = vadd.f32 %v5022, %v5182
        %v5184 = vpop.f32.mrb[0].mxu0
        %5185 = vmatprep.mubr.bf16.mxu0 %v3967
        %5186 = vmatmul.mubr.bf16.gmra.mrb[0].mxu0 %v3966
        %v5187 = vpop.f32.mrb[0].mxu0
        %v5188 = vadd.f32 %v5027, %v5187
        %v5189 = vpop.f32.mrb[0].mxu0
        %v5190 = vpop.f32.mrb[0].mxu0
        %v5191 = vadd.f32 %v5030, %v5190
        %v5192 = vpop.f32.mrb[0].mxu0
        %5193 = vmatprep.mubr.bf16.mxu0 %v3976
        %5194 = vmatmul.mubr.bf16.gmra.mrb[0].mxu0 %v3975
        %v5195 = vpop.f32.mrb[0].mxu0
        %v5196 = vadd.f32 %v5035, %v5195
        %v5197 = vpop.f32.mrb[0].mxu0
        %v5198 = vpop.f32.mrb[0].mxu0
        %v5199 = vadd.f32 %v5038, %v5198
        %v5200 = vpop.f32.mrb[0].mxu0
        %5201 = vmatprep.mubr.bf16.mxu0 %v3985
        %5202 = vmatmul.mubr.bf16.gmra.mrb[0].mxu0 %v3984
        %v5203 = vpop.f32.mrb[0].mxu0
        %v5204 = vadd.f32 %v5043, %v5203
        %v5205 = vpop.f32.mrb[0].mxu0
        %v5206 = vpop.f32.mrb[0].mxu0
        %v5207 = vadd.f32 %v5046, %v5206
        %v5208 = vpop.f32.mrb[0].mxu0
        %5209 = vmatprep.mubr.bf16.mxu0 %v3994
        %5210 = vmatmul.mubr.bf16.gmra.mrb[0].mxu0 %v3993
        %v5211 = vpop.f32.mrb[0].mxu0
        %v5212 = vadd.f32 %v5051, %v5211
        %v5213 = vpop.f32.mrb[0].mxu0
        %v5214 = vpop.f32.mrb[0].mxu0
        %v5215 = vadd.f32 %v5054, %v5214
        %v5216 = vpop.f32.mrb[0].mxu0
        %5217 = vmatprep.mubr.bf16.mxu0 %v4003
        %5218 = vmatmul.mubr.bf16.gmra.mrb[0].mxu0 %v4002
        %v5219 = vpop.f32.mrb[0].mxu0
        %v5220 = vadd.f32 %v5059, %v5219
        %v5221 = vpop.f32.mrb[0].mxu0
        %v5222 = vpop.f32.mrb[0].mxu0
        %v5223 = vadd.f32 %v5062, %v5222
        %v5224 = vpop.f32.mrb[0].mxu0
        %5225 = vmatprep.mubr.bf16.mxu0 %v4012
        %5226 = vmatmul.mubr.bf16.gmra.mrb[0].mxu0 %v4011
        %v5227 = vpop.f32.mrb[0].mxu0
        %v5228 = vadd.f32 %v5067, %v5227
        %v5229 = vpop.f32.mrb[0].mxu0
        %v5230 = vpop.f32.mrb[0].mxu0
        %v5231 = vadd.f32 %v5070, %v5230
        %v5232 = vpop.f32.mrb[0].mxu0
        %5233 = vdwg.mxu0
        %5234 = vmatprep.subr.bf16.mxu0 0
        %5235 = vmatpush1.bf16.msra.mxu0 %v4510
        %5236 = vmatprep.subr.bf16.mxu0 0
        %5237 = vmatpush1.bf16.msra.mxu0 %v4511
        %5238 = vmatprep.subr.bf16.mxu0 0
        %5239 = vmatpush1.bf16.msra.mxu0 %v4512
        %5240 = vmatprep.subr.bf16.mxu0 0
        %5241 = vmatpush1.bf16.msra.mxu0 %v4513
        %5242 = vmatprep.subr.bf16.mxu0 0
        %5243 = vmatpush1.bf16.msra.mxu0 %v4514
        %5244 = vmatprep.subr.bf16.mxu0 0
        %5245 = vmatpush1.bf16.msra.mxu0 %v4515
        %5246 = vmatprep.subr.bf16.mxu0 0
        %5247 = vmatpush1.bf16.msra.mxu0 %v4516
        %5248 = vmatprep.subr.bf16.mxu0 0
        %5249 = vmatpush1.bf16.msra.mxu0 %v4517
        %5250 = vmatprep.subr.bf16.mxu0 0
        %5251 = vmatpush1.bf16.msra.mxu0 0
        %5252 = vmatprep.subr.bf16.mxu0 0
        %5253 = vmatpush1.bf16.msra.mxu0 0
        %5254 = vmatprep.subr.bf16.mxu0 0
        %5255 = vmatpush1.bf16.msra.mxu0 0
        %5256 = vmatprep.subr.bf16.mxu0 0
        %5257 = vmatpush1.bf16.msra.mxu0 0
        %5258 = vmatprep.subr.bf16.mxu0 0
        %5259 = vmatpush1.bf16.msra.mxu0 0
        %5260 = vmatprep.subr.bf16.mxu0 0
        %5261 = vmatpush1.bf16.msra.mxu0 0
        %5262 = vmatprep.subr.bf16.mxu0 0
        %5263 = vmatpush1.bf16.msra.mxu0 0
        %5264 = vmatprep.subr.bf16.mxu0 0
        %5265 = vmatpush1.bf16.msra.mxu0 0
        %5266 = vmatprep.mubr.bf16.mxu0 0
        %5267 = vmatmul.mubr.bf16.gmra.mrb[0].mxu0 %v3878
        %v5268 = vpop.f32.mrb[0].mxu0
        %v5269 = vadd.f32 %v5108, %v5268
        %v5270 = vpop.f32.mrb[0].mxu0
        %v5271 = vpop.f32.mrb[0].mxu0
        %v5272 = vadd.f32 %v5111, %v5271
        %v5273 = vpop.f32.mrb[0].mxu0
        %5274 = vmatprep.mubr.bf16.mxu0 0
        %5275 = vmatmul.mubr.bf16.gmra.mrb[0].mxu0 %v3887
        %v5276 = vpop.f32.mrb[0].mxu0
        %v5277 = vadd.f32 %v5116, %v5276
        %v5278 = vpop.f32.mrb[0].mxu0
        %v5279 = vpop.f32.mrb[0].mxu0
        %v5280 = vadd.f32 %v5119, %v5279
        %v5281 = vpop.f32.mrb[0].mxu0
        %5282 = vmatprep.mubr.bf16.mxu0 0
        %5283 = vmatmul.mubr.bf16.gmra.mrb[0].mxu0 %v3896
        %v5284 = vpop.f32.mrb[0].mxu0
        %v5285 = vadd.f32 %v5124, %v5284
        %v5286 = vpop.f32.mrb[0].mxu0
        %v5287 = vpop.f32.mrb[0].mxu0
        %v5288 = vadd.f32 %v5127, %v5287
        %v5289 = vpop.f32.mrb[0].mxu0
        %5290 = vmatprep.mubr.bf16.mxu0 0
        %5291 = vmatmul.mubr.bf16.gmra.mrb[0].mxu0 %v3905
        %v5292 = vpop.f32.mrb[0].mxu0
        %v5293 = vadd.f32 %v5132, %v5292
        %v5294 = vpop.f32.mrb[0].mxu0
        %v5295 = vpop.f32.mrb[0].mxu0
        %v5296 = vadd.f32 %v5135, %v5295
        %v5297 = vpop.f32.mrb[0].mxu0
        %5298 = vmatprep.mubr.bf16.mxu0 0
        %5299 = vmatmul.mubr.bf16.gmra.mrb[0].mxu0 %v3914
        %v5300 = vpop.f32.mrb[0].mxu0
        %v5301 = vadd.f32 %v5140, %v5300
        %v5302 = vpop.f32.mrb[0].mxu0
        %v5303 = vpop.f32.mrb[0].mxu0
        %v5304 = vadd.f32 %v5143, %v5303
        %v5305 = vpop.f32.mrb[0].mxu0
        %5306 = vmatprep.mubr.bf16.mxu0 0
        %5307 = vmatmul.mubr.bf16.gmra.mrb[0].mxu0 %v3923
        %v5308 = vpop.f32.mrb[0].mxu0
        %v5309 = vadd.f32 %v5148, %v5308
        %v5310 = vpop.f32.mrb[0].mxu0
        %v5311 = vpop.f32.mrb[0].mxu0
        %v5312 = vadd.f32 %v5151, %v5311
        %v5313 = vpop.f32.mrb[0].mxu0
        %5314 = vmatprep.mubr.bf16.mxu0 0
        %5315 = vmatmul.mubr.bf16.gmra.mrb[0].mxu0 %v3932
        %v5316 = vpop.f32.mrb[0].mxu0
        %v5317 = vadd.f32 %v5156, %v5316
        %v5318 = vpop.f32.mrb[0].mxu0
        %v5319 = vpop.f32.mrb[0].mxu0
        %v5320 = vadd.f32 %v5159, %v5319
        %v5321 = vpop.f32.mrb[0].mxu0
        %5322 = vmatprep.mubr.bf16.mxu0 0
        %5323 = vmatmul.mubr.bf16.gmra.mrb[0].mxu0 %v3941
        %v5324 = vpop.f32.mrb[0].mxu0
        %v5325 = vadd.f32 %v5164, %v5324
        %v5326 = vpop.f32.mrb[0].mxu0
        %v5327 = vpop.f32.mrb[0].mxu0
        %v5328 = vadd.f32 %v5167, %v5327
        %v5329 = vpop.f32.mrb[0].mxu0
        %5330 = vmatprep.mubr.bf16.mxu0 0
        %5331 = vmatmul.mubr.bf16.gmra.mrb[0].mxu0 %v3950
        %v5332 = vpop.f32.mrb[0].mxu0
        %v5333 = vadd.f32 %v5172, %v5332
        %v5334 = vpop.f32.mrb[0].mxu0
        %v5335 = vpop.f32.mrb[0].mxu0
        %v5336 = vadd.f32 %v5175, %v5335
        %v5337 = vpop.f32.mrb[0].mxu0
        %5338 = vmatprep.mubr.bf16.mxu0 0
        %5339 = vmatmul.mubr.bf16.gmra.mrb[0].mxu0 %v3959
        %v5340 = vpop.f32.mrb[0].mxu0
        %v5341 = vadd.f32 %v5180, %v5340
        %v5342 = vpop.f32.mrb[0].mxu0
        %v5343 = vpop.f32.mrb[0].mxu0
        %v5344 = vadd.f32 %v5183, %v5343
        %v5345 = vpop.f32.mrb[0].mxu0
        %5346 = vmatprep.mubr.bf16.mxu0 0
        %5347 = vmatmul.mubr.bf16.gmra.mrb[0].mxu0 %v3968
        %v5348 = vpop.f32.mrb[0].mxu0
        %v5349 = vadd.f32 %v5188, %v5348
        %v5350 = vpop.f32.mrb[0].mxu0
        %v5351 = vpop.f32.mrb[0].mxu0
        %v5352 = vadd.f32 %v5191, %v5351
        %v5353 = vpop.f32.mrb[0].mxu0
        %5354 = vmatprep.mubr.bf16.mxu0 0
        %5355 = vmatmul.mubr.bf16.gmra.mrb[0].mxu0 %v3977
        %v5356 = vpop.f32.mrb[0].mxu0
        %v5357 = vadd.f32 %v5196, %v5356
        %v5358 = vpop.f32.mrb[0].mxu0
        %v5359 = vpop.f32.mrb[0].mxu0
        %v5360 = vadd.f32 %v5199, %v5359
        %v5361 = vpop.f32.mrb[0].mxu0
        %5362 = vmatprep.mubr.bf16.mxu0 0
        %5363 = vmatmul.mubr.bf16.gmra.mrb[0].mxu0 %v3986
        %v5364 = vpop.f32.mrb[0].mxu0
        %v5365 = vadd.f32 %v5204, %v5364
        %v5366 = vpop.f32.mrb[0].mxu0
        %v5367 = vpop.f32.mrb[0].mxu0
        %v5368 = vadd.f32 %v5207, %v5367
        %v5369 = vpop.f32.mrb[0].mxu0
        %5370 = vmatprep.mubr.bf16.mxu0 0
        %5371 = vmatmul.mubr.bf16.gmra.mrb[0].mxu0 %v3995
        %v5372 = vpop.f32.mrb[0].mxu0
        %v5373 = vadd.f32 %v5212, %v5372
        %v5374 = vpop.f32.mrb[0].mxu0
        %v5375 = vpop.f32.mrb[0].mxu0
        %v5376 = vadd.f32 %v5215, %v5375
        %v5377 = vpop.f32.mrb[0].mxu0
        %5378 = vmatprep.mubr.bf16.mxu0 0
        %5379 = vmatmul.mubr.bf16.gmra.mrb[0].mxu0 %v4004
        %v5380 = vpop.f32.mrb[0].mxu0
        %v5381 = vadd.f32 %v5220, %v5380
        %v5382 = vpop.f32.mrb[0].mxu0
        %v5383 = vpop.f32.mrb[0].mxu0
        %v5384 = vadd.f32 %v5223, %v5383
        %v5385 = vpop.f32.mrb[0].mxu0
        %5386 = vmatprep.mubr.bf16.mxu0 0
        %5387 = vmatmul.mubr.bf16.gmra.mrb[0].mxu0 %v4013
        %v5388 = vpop.f32.mrb[0].mxu0
        %v5389 = vadd.f32 %v5228, %v5388
        %v5390 = vpop.f32.mrb[0].mxu0
        %v5391 = vpop.f32.mrb[0].mxu0
        %v5392 = vadd.f32 %v5231, %v5391
        %v5393 = vpop.f32.mrb[0].mxu0
        %5394 = vdwg.mxu0
        %v5395 = vld [vmem:[%s2] sm:$0x1]
        %v5397 = vlaneseq
        %v5398 = vshrl.u32 %v5397, 7
        %v5399 = vsub.s32 0, %v5398
        %v5400 = vrot.slane %v5395, %v5399
        %v5402 = vmul.f32 %v5269, %v5400
        %v5403 = vmul.f32 %v5272, %v5400
        %v5404 = vmul.f32 %v5277, %v5400
        %v5405 = vmul.f32 %v5280, %v5400
        %v5406 = vmul.f32 %v5285, %v5400
        %v5407 = vmul.f32 %v5288, %v5400
        %v5408 = vmul.f32 %v5293, %v5400
        %v5409 = vmul.f32 %v5296, %v5400
        %v5410 = vmul.f32 %v5301, %v5400
        %v5411 = vmul.f32 %v5304, %v5400
        %v5412 = vmul.f32 %v5309, %v5400
        %v5413 = vmul.f32 %v5312, %v5400
        %v5414 = vmul.f32 %v5317, %v5400
        %v5415 = vmul.f32 %v5320, %v5400
        %v5416 = vmul.f32 %v5325, %v5400
        %v5417 = vmul.f32 %v5328, %v5400
        %v5418 = vmul.f32 %v5333, %v5400
        %v5419 = vmul.f32 %v5336, %v5400
        %v5420 = vmul.f32 %v5341, %v5400
        %v5421 = vmul.f32 %v5344, %v5400
        %v5422 = vmul.f32 %v5349, %v5400
        %v5423 = vmul.f32 %v5352, %v5400
        %v5424 = vmul.f32 %v5357, %v5400
        %v5425 = vmul.f32 %v5360, %v5400
        %v5426 = vmul.f32 %v5365, %v5400
        %v5427 = vmul.f32 %v5368, %v5400
        %v5428 = vmul.f32 %v5373, %v5400
        %v5429 = vmul.f32 %v5376, %v5400
        %v5430 = vmul.f32 %v5381, %v5400
        %v5431 = vmul.f32 %v5384, %v5400
        %v5432 = vmul.f32 %v5389, %v5400
        %v5433 = vmul.f32 %v5392, %v5400
        %v5434 = vld [vmem:[%s3] sm:$0x1]
        %v5436 = vlaneseq
        %v5437 = vshrl.u32 %v5436, 7
        %v5438 = vsub.s32 0, %v5437
        %v5439 = vrot.slane %v5434, %v5438
        %v5441 = vadd.f32 %v5402, %v5439
        %v5442 = vadd.f32 %v5403, %v5439
        %v5443 = vadd.f32 %v5404, %v5439
        %v5444 = vadd.f32 %v5405, %v5439
        %v5445 = vadd.f32 %v5406, %v5439
        %v5446 = vadd.f32 %v5407, %v5439
        %v5447 = vadd.f32 %v5408, %v5439
        %v5448 = vadd.f32 %v5409, %v5439
        %v5449 = vadd.f32 %v5410, %v5439
        %v5450 = vadd.f32 %v5411, %v5439
        %v5451 = vadd.f32 %v5412, %v5439
        %v5452 = vadd.f32 %v5413, %v5439
        %v5453 = vadd.f32 %v5414, %v5439
        %v5454 = vadd.f32 %v5415, %v5439
        %v5455 = vadd.f32 %v5416, %v5439
        %v5456 = vadd.f32 %v5417, %v5439
        %v5457 = vadd.f32 %v5418, %v5439
        %v5458 = vadd.f32 %v5419, %v5439
        %v5459 = vadd.f32 %v5420, %v5439
        %v5460 = vadd.f32 %v5421, %v5439
        %v5461 = vadd.f32 %v5422, %v5439
        %v5462 = vadd.f32 %v5423, %v5439
        %v5463 = vadd.f32 %v5424, %v5439
        %v5464 = vadd.f32 %v5425, %v5439
        %v5465 = vadd.f32 %v5426, %v5439
        %v5466 = vadd.f32 %v5427, %v5439
        %v5467 = vadd.f32 %v5428, %v5439
        %v5468 = vadd.f32 %v5429, %v5439
        %v5469 = vadd.f32 %v5430, %v5439
        %v5470 = vadd.f32 %v5431, %v5439
        %v5471 = vadd.f32 %v5432, %v5439
        %v5472 = vadd.f32 %v5433, %v5439
        %v5473 = vmax.f32 %v5441, 0.0
        %v5474 = vmax.f32 %v5442, 0.0
        %v5475 = vmax.f32 %v5443, 0.0
        %v5476 = vmax.f32 %v5444, 0.0
        %v5477 = vmax.f32 %v5445, 0.0
        %v5478 = vmax.f32 %v5446, 0.0
        %v5479 = vmax.f32 %v5447, 0.0
        %v5480 = vmax.f32 %v5448, 0.0
        %v5481 = vmax.f32 %v5449, 0.0
        %v5482 = vmax.f32 %v5450, 0.0
        %v5483 = vmax.f32 %v5451, 0.0
        %v5484 = vmax.f32 %v5452, 0.0
        %v5485 = vmax.f32 %v5453, 0.0
        %v5486 = vmax.f32 %v5454, 0.0
        %v5487 = vmax.f32 %v5455, 0.0
        %v5488 = vmax.f32 %v5456, 0.0
        %v5489 = vmax.f32 %v5457, 0.0
        %v5490 = vmax.f32 %v5458, 0.0
        %v5491 = vmax.f32 %v5459, 0.0
        %v5492 = vmax.f32 %v5460, 0.0
        %v5493 = vmax.f32 %v5461, 0.0
        %v5494 = vmax.f32 %v5462, 0.0
        %v5495 = vmax.f32 %v5463, 0.0
        %v5496 = vmax.f32 %v5464, 0.0
        %v5497 = vmax.f32 %v5465, 0.0
        %v5498 = vmax.f32 %v5466, 0.0
        %v5499 = vmax.f32 %v5467, 0.0
        %v5500 = vmax.f32 %v5468, 0.0
        %v5501 = vmax.f32 %v5469, 0.0
        %v5502 = vmax.f32 %v5470, 0.0
        %v5503 = vmax.f32 %v5471, 0.0
        %v5504 = vmax.f32 %v5472, 0.0
        %v5505 = vpack.c.bf16 %v5474, %v5473
        %v5506 = vpack.c.bf16 %v5476, %v5475
        %v5507 = vpack.c.bf16 %v5478, %v5477
        %v5508 = vpack.c.bf16 %v5480, %v5479
        %v5509 = vpack.c.bf16 %v5482, %v5481
        %v5510 = vpack.c.bf16 %v5484, %v5483
        %v5511 = vpack.c.bf16 %v5486, %v5485
        %v5512 = vpack.c.bf16 %v5488, %v5487
        %v5513 = vpack.c.bf16 %v5490, %v5489
        %v5514 = vpack.c.bf16 %v5492, %v5491
        %v5515 = vpack.c.bf16 %v5494, %v5493
        %v5516 = vpack.c.bf16 %v5496, %v5495
        %v5517 = vpack.c.bf16 %v5498, %v5497
        %v5518 = vpack.c.bf16 %v5500, %v5499
        %v5519 = vpack.c.bf16 %v5502, %v5501
        %v5520 = vpack.c.bf16 %v5504, %v5503
        %v5537 = vunpack.c.l.b16 %v5505
        %v5538 = vunpack.c.h.b16 %v5505
        %v5539 = vunpack.c.l.b16 %v5506
        %v5540 = vunpack.c.h.b16 %v5506
        %v5541 = vunpack.c.l.b16 %v5507
        %v5542 = vunpack.c.h.b16 %v5507
        %v5543 = vunpack.c.l.b16 %v5508
        %v5544 = vunpack.c.h.b16 %v5508
        %v5545 = vunpack.c.l.b16 %v5509
        %v5546 = vunpack.c.h.b16 %v5509
        %v5547 = vunpack.c.l.b16 %v5510
        %v5548 = vunpack.c.h.b16 %v5510
        %v5549 = vunpack.c.l.b16 %v5511
        %v5550 = vunpack.c.h.b16 %v5511
        %v5551 = vunpack.c.l.b16 %v5512
        %v5552 = vunpack.c.h.b16 %v5512
        %v5553 = vunpack.c.l.b16 %v5513
        %v5554 = vunpack.c.h.b16 %v5513
        %v5555 = vunpack.c.l.b16 %v5514
        %v5556 = vunpack.c.h.b16 %v5514
        %v5557 = vunpack.c.l.b16 %v5515
        %v5558 = vunpack.c.h.b16 %v5515
        %v5559 = vunpack.c.l.b16 %v5516
        %v5560 = vunpack.c.h.b16 %v5516
        %v5561 = vunpack.c.l.b16 %v5517
        %v5562 = vunpack.c.h.b16 %v5517
        %v5563 = vunpack.c.l.b16 %v5518
        %v5564 = vunpack.c.h.b16 %v5518
        %v5565 = vunpack.c.l.b16 %v5519
        %v5566 = vunpack.c.h.b16 %v5519
        %v5567 = vunpack.c.l.b16 %v5520
        %v5568 = vunpack.c.h.b16 %v5520
        %v5569 = vpack.c.b16 %v5537, %v5537
        %v5570 = vpack.c.b16 %v5538, %v5538
        %v5571 = vpack.c.b16 %v5539, %v5539
        %v5572 = vpack.c.b16 %v5540, %v5540
        %v5573 = vpack.c.b16 %v5541, %v5541
        %v5574 = vpack.c.b16 %v5542, %v5542
        %v5575 = vpack.c.b16 %v5543, %v5543
        %v5576 = vpack.c.b16 %v5544, %v5544
        %v5577 = vpack.c.b16 %v5545, %v5545
        %v5578 = vpack.c.b16 %v5546, %v5546
        %v5579 = vpack.c.b16 %v5547, %v5547
        %v5580 = vpack.c.b16 %v5548, %v5548
        %v5581 = vpack.c.b16 %v5549, %v5549
        %v5582 = vpack.c.b16 %v5550, %v5550
        %v5583 = vpack.c.b16 %v5551, %v5551
        %v5584 = vpack.c.b16 %v5552, %v5552
        %v5585 = vpack.c.b16 %v5553, %v5553
        %v5586 = vpack.c.b16 %v5554, %v5554
        %v5587 = vpack.c.b16 %v5555, %v5555
        %v5588 = vpack.c.b16 %v5556, %v5556
        %v5589 = vpack.c.b16 %v5557, %v5557
        %v5590 = vpack.c.b16 %v5558, %v5558
        %v5591 = vpack.c.b16 %v5559, %v5559
        %v5592 = vpack.c.b16 %v5560, %v5560
        %v5593 = vpack.c.b16 %v5561, %v5561
        %v5594 = vpack.c.b16 %v5562, %v5562
        %v5595 = vpack.c.b16 %v5563, %v5563
        %v5596 = vpack.c.b16 %v5564, %v5564
        %v5597 = vpack.c.b16 %v5565, %v5565
        %v5598 = vpack.c.b16 %v5566, %v5566
        %v5599 = vpack.c.b16 %v5567, %v5567
        %v5600 = vpack.c.b16 %v5568, %v5568
        %v5602 = vshrl.u32 %v5569, 16
        %v5604 = vrot.slane %v5602, 7
        %v5605 = vshll.u32 %v5569, 16
        %v5607 = vor.u32 %v5604, %v5605
        %v5608 = vrot.slane %v5604, 4
        %v5610 = vshrl.u32 %v5570, 16
        %v5612 = vrot.slane %v5610, 7
        %v5613 = vshll.u32 %v5570, 16
        %v5615 = vor.u32 %v5612, %v5613
        %v5616 = vsel %vm595, %v5608, %v5615
        %v5617 = vrot.slane %v5612, 4
        %v5619 = vshrl.u32 %v5571, 16
        %v5621 = vrot.slane %v5619, 7
        %v5622 = vshll.u32 %v5571, 16
        %v5624 = vor.u32 %v5621, %v5622
        %v5625 = vrot.slane %v5621, 4
        %v5627 = vshrl.u32 %v5572, 16
        %v5629 = vrot.slane %v5627, 7
        %v5630 = vshll.u32 %v5572, 16
        %v5632 = vor.u32 %v5629, %v5630
        %v5633 = vsel %vm595, %v5625, %v5632
        %v5634 = vrot.slane %v5629, 4
        %v5636 = vshrl.u32 %v5573, 16
        %v5638 = vrot.slane %v5636, 7
        %v5639 = vshll.u32 %v5573, 16
        %v5641 = vor.u32 %v5638, %v5639
        %v5642 = vrot.slane %v5638, 4
        %v5644 = vshrl.u32 %v5574, 16
        %v5646 = vrot.slane %v5644, 7
        %v5647 = vshll.u32 %v5574, 16
        %v5649 = vor.u32 %v5646, %v5647
        %v5650 = vsel %vm595, %v5642, %v5649
        %v5651 = vrot.slane %v5646, 4
        %v5653 = vshrl.u32 %v5575, 16
        %v5655 = vrot.slane %v5653, 7
        %v5656 = vshll.u32 %v5575, 16
        %v5658 = vor.u32 %v5655, %v5656
        %v5659 = vrot.slane %v5655, 4
        %v5661 = vshrl.u32 %v5576, 16
        %v5663 = vrot.slane %v5661, 7
        %v5664 = vshll.u32 %v5576, 16
        %v5666 = vor.u32 %v5663, %v5664
        %v5667 = vsel %vm595, %v5659, %v5666
        %v5668 = vrot.slane %v5663, 4
        %v5670 = vshrl.u32 %v5577, 16
        %v5672 = vrot.slane %v5670, 7
        %v5673 = vshll.u32 %v5577, 16
        %v5675 = vor.u32 %v5672, %v5673
        %v5676 = vrot.slane %v5672, 4
        %v5678 = vshrl.u32 %v5578, 16
        %v5680 = vrot.slane %v5678, 7
        %v5681 = vshll.u32 %v5578, 16
        %v5683 = vor.u32 %v5680, %v5681
        %v5684 = vsel %vm595, %v5676, %v5683
        %v5685 = vrot.slane %v5680, 4
        %v5687 = vshrl.u32 %v5579, 16
        %v5689 = vrot.slane %v5687, 7
        %v5690 = vshll.u32 %v5579, 16
        %v5692 = vor.u32 %v5689, %v5690
        %v5693 = vrot.slane %v5689, 4
        %v5695 = vshrl.u32 %v5580, 16
        %v5697 = vrot.slane %v5695, 7
        %v5698 = vshll.u32 %v5580, 16
        %v5700 = vor.u32 %v5697, %v5698
        %v5701 = vsel %vm595, %v5693, %v5700
        %v5702 = vrot.slane %v5697, 4
        %v5704 = vshrl.u32 %v5581, 16
        %v5706 = vrot.slane %v5704, 7
        %v5707 = vshll.u32 %v5581, 16
        %v5709 = vor.u32 %v5706, %v5707
        %v5710 = vrot.slane %v5706, 4
        %v5712 = vshrl.u32 %v5582, 16
        %v5714 = vrot.slane %v5712, 7
        %v5715 = vshll.u32 %v5582, 16
        %v5717 = vor.u32 %v5714, %v5715
        %v5718 = vsel %vm595, %v5710, %v5717
        %v5719 = vrot.slane %v5714, 4
        %v5721 = vshrl.u32 %v5583, 16
        %v5723 = vrot.slane %v5721, 7
        %v5724 = vshll.u32 %v5583, 16
        %v5726 = vor.u32 %v5723, %v5724
        %v5727 = vrot.slane %v5723, 4
        %v5729 = vshrl.u32 %v5584, 16
        %v5731 = vrot.slane %v5729, 7
        %v5732 = vshll.u32 %v5584, 16
        %v5734 = vor.u32 %v5731, %v5732
        %v5735 = vsel %vm595, %v5727, %v5734
        %v5736 = vrot.slane %v5731, 4
        %v5738 = vshrl.u32 %v5585, 16
        %v5740 = vrot.slane %v5738, 7
        %v5741 = vshll.u32 %v5585, 16
        %v5743 = vor.u32 %v5740, %v5741
        %v5744 = vrot.slane %v5740, 4
        %v5746 = vshrl.u32 %v5586, 16
        %v5748 = vrot.slane %v5746, 7
        %v5749 = vshll.u32 %v5586, 16
        %v5751 = vor.u32 %v5748, %v5749
        %v5752 = vsel %vm595, %v5744, %v5751
        %v5753 = vrot.slane %v5748, 4
        %v5755 = vshrl.u32 %v5587, 16
        %v5757 = vrot.slane %v5755, 7
        %v5758 = vshll.u32 %v5587, 16
        %v5760 = vor.u32 %v5757, %v5758
        %v5761 = vrot.slane %v5757, 4
        %v5763 = vshrl.u32 %v5588, 16
        %v5765 = vrot.slane %v5763, 7
        %v5766 = vshll.u32 %v5588, 16
        %v5768 = vor.u32 %v5765, %v5766
        %v5769 = vsel %vm595, %v5761, %v5768
        %v5770 = vrot.slane %v5765, 4
        %v5772 = vshrl.u32 %v5589, 16
        %v5774 = vrot.slane %v5772, 7
        %v5775 = vshll.u32 %v5589, 16
        %v5777 = vor.u32 %v5774, %v5775
        %v5778 = vrot.slane %v5774, 4
        %v5780 = vshrl.u32 %v5590, 16
        %v5782 = vrot.slane %v5780, 7
        %v5783 = vshll.u32 %v5590, 16
        %v5785 = vor.u32 %v5782, %v5783
        %v5786 = vsel %vm595, %v5778, %v5785
        %v5787 = vrot.slane %v5782, 4
        %v5789 = vshrl.u32 %v5591, 16
        %v5791 = vrot.slane %v5789, 7
        %v5792 = vshll.u32 %v5591, 16
        %v5794 = vor.u32 %v5791, %v5792
        %v5795 = vrot.slane %v5791, 4
        %v5797 = vshrl.u32 %v5592, 16
        %v5799 = vrot.slane %v5797, 7
        %v5800 = vshll.u32 %v5592, 16
        %v5802 = vor.u32 %v5799, %v5800
        %v5803 = vsel %vm595, %v5795, %v5802
        %v5804 = vrot.slane %v5799, 4
        %v5806 = vshrl.u32 %v5593, 16
        %v5808 = vrot.slane %v5806, 7
        %v5809 = vshll.u32 %v5593, 16
        %v5811 = vor.u32 %v5808, %v5809
        %v5812 = vrot.slane %v5808, 4
        %v5814 = vshrl.u32 %v5594, 16
        %v5816 = vrot.slane %v5814, 7
        %v5817 = vshll.u32 %v5594, 16
        %v5819 = vor.u32 %v5816, %v5817
        %v5820 = vsel %vm595, %v5812, %v5819
        %v5821 = vrot.slane %v5816, 4
        %v5823 = vshrl.u32 %v5595, 16
        %v5825 = vrot.slane %v5823, 7
        %v5826 = vshll.u32 %v5595, 16
        %v5828 = vor.u32 %v5825, %v5826
        %v5829 = vrot.slane %v5825, 4
        %v5831 = vshrl.u32 %v5596, 16
        %v5833 = vrot.slane %v5831, 7
        %v5834 = vshll.u32 %v5596, 16
        %v5836 = vor.u32 %v5833, %v5834
        %v5837 = vsel %vm595, %v5829, %v5836
        %v5838 = vrot.slane %v5833, 4
        %v5840 = vshrl.u32 %v5597, 16
        %v5842 = vrot.slane %v5840, 7
        %v5843 = vshll.u32 %v5597, 16
        %v5845 = vor.u32 %v5842, %v5843
        %v5846 = vrot.slane %v5842, 4
        %v5848 = vshrl.u32 %v5598, 16
        %v5850 = vrot.slane %v5848, 7
        %v5851 = vshll.u32 %v5598, 16
        %v5853 = vor.u32 %v5850, %v5851
        %v5854 = vsel %vm595, %v5846, %v5853
        %v5855 = vrot.slane %v5850, 4
        %v5857 = vshrl.u32 %v5599, 16
        %v5859 = vrot.slane %v5857, 7
        %v5860 = vshll.u32 %v5599, 16
        %v5862 = vor.u32 %v5859, %v5860
        %v5863 = vrot.slane %v5859, 4
        %v5865 = vshrl.u32 %v5600, 16
        %v5867 = vrot.slane %v5865, 7
        %v5868 = vshll.u32 %v5600, 16
        %v5870 = vor.u32 %v5867, %v5868
        %v5871 = vsel %vm595, %v5863, %v5870
        %v5872 = vrot.slane %v5867, 4
        %s5921 = scalar_lea.vmem [#allocation4], 12
        %v5922 = vld [vmem:[%s5921] sm:$0xf]
        %v5923 = vsel %vm918, %v5607, %v5922
        %5924 = vst [vmem:[%s5921] sm:$0xf] %v5923
        %5925 = vst [vmem:[%s5921 + $0x4] sm:$0xf] %v5616
        %v5926 = vld [vmem:[%s5921 + $0x8] sm:$0x1]
        %v5927 = vsel %vm336, %v5617, %v5926
        %5928 = vst [vmem:[%s5921 + $0x8] sm:$0x1] %v5927
        %v5929 = vld [vmem:[%s5921 + $0xc] sm:$0xf]
        %v5930 = vsel %vm918, %v5624, %v5929
        %5931 = vst [vmem:[%s5921 + $0xc] sm:$0xf] %v5930
        %5932 = vst [vmem:[%s5921 + $0x10] sm:$0xf] %v5633
        %v5933 = vld [vmem:[%s5921 + $0x14] sm:$0x1]
        %v5934 = vsel %vm336, %v5634, %v5933
        %5935 = vst [vmem:[%s5921 + $0x14] sm:$0x1] %v5934
        %v5936 = vld [vmem:[%s5921 + $0x18] sm:$0xf]
        %v5937 = vsel %vm918, %v5641, %v5936
        %5938 = vst [vmem:[%s5921 + $0x18] sm:$0xf] %v5937
        %5939 = vst [vmem:[%s5921 + $0x1c] sm:$0xf] %v5650
        %v5940 = vld [vmem:[%s5921 + $0x20] sm:$0x1]
        %v5941 = vsel %vm336, %v5651, %v5940
        %5942 = vst [vmem:[%s5921 + $0x20] sm:$0x1] %v5941
        %v5943 = vld [vmem:[%s5921 + $0x24] sm:$0xf]
        %v5944 = vsel %vm918, %v5658, %v5943
        %5945 = vst [vmem:[%s5921 + $0x24] sm:$0xf] %v5944
        %5946 = vst [vmem:[%s5921 + $0x28] sm:$0xf] %v5667
        %v5947 = vld [vmem:[%s5921 + $0x2c] sm:$0x1]
        %v5948 = vsel %vm336, %v5668, %v5947
        %5949 = vst [vmem:[%s5921 + $0x2c] sm:$0x1] %v5948
        %v5950 = vld [vmem:[%s5921 + $0x30] sm:$0xf]
        %v5951 = vsel %vm918, %v5675, %v5950
        %5952 = vst [vmem:[%s5921 + $0x30] sm:$0xf] %v5951
        %5953 = vst [vmem:[%s5921 + $0x34] sm:$0xf] %v5684
        %v5954 = vld [vmem:[%s5921 + $0x38] sm:$0x1]
        %v5955 = vsel %vm336, %v5685, %v5954
        %5956 = vst [vmem:[%s5921 + $0x38] sm:$0x1] %v5955
        %v5957 = vld [vmem:[%s5921 + $0x3c] sm:$0xf]
        %v5958 = vsel %vm918, %v5692, %v5957
        %5959 = vst [vmem:[%s5921 + $0x3c] sm:$0xf] %v5958
        %5960 = vst [vmem:[%s5921 + $0x40] sm:$0xf] %v5701
        %v5961 = vld [vmem:[%s5921 + $0x44] sm:$0x1]
        %v5962 = vsel %vm336, %v5702, %v5961
        %5963 = vst [vmem:[%s5921 + $0x44] sm:$0x1] %v5962
        %v5964 = vld [vmem:[%s5921 + $0x48] sm:$0xf]
        %v5965 = vsel %vm918, %v5709, %v5964
        %5966 = vst [vmem:[%s5921 + $0x48] sm:$0xf] %v5965
        %5967 = vst [vmem:[%s5921 + $0x4c] sm:$0xf] %v5718
        %v5968 = vld [vmem:[%s5921 + $0x50] sm:$0x1]
        %v5969 = vsel %vm336, %v5719, %v5968
        %5970 = vst [vmem:[%s5921 + $0x50] sm:$0x1] %v5969
        %v5971 = vld [vmem:[%s5921 + $0x54] sm:$0xf]
        %v5972 = vsel %vm918, %v5726, %v5971
        %5973 = vst [vmem:[%s5921 + $0x54] sm:$0xf] %v5972
        %5974 = vst [vmem:[%s5921 + $0x58] sm:$0xf] %v5735
        %v5975 = vld [vmem:[%s5921 + $0x5c] sm:$0x1]
        %v5976 = vsel %vm336, %v5736, %v5975
        %5977 = vst [vmem:[%s5921 + $0x5c] sm:$0x1] %v5976
        %v5978 = vld [vmem:[%s5921 + $0x60] sm:$0xf]
        %v5979 = vsel %vm918, %v5743, %v5978
        %5980 = vst [vmem:[%s5921 + $0x60] sm:$0xf] %v5979
        %5981 = vst [vmem:[%s5921 + $0x64] sm:$0xf] %v5752
        %v5982 = vld [vmem:[%s5921 + $0x68] sm:$0x1]
        %v5983 = vsel %vm336, %v5753, %v5982
        %5984 = vst [vmem:[%s5921 + $0x68] sm:$0x1] %v5983
        %v5985 = vld [vmem:[%s5921 + $0x6c] sm:$0xf]
        %v5986 = vsel %vm918, %v5760, %v5985
        %5987 = vst [vmem:[%s5921 + $0x6c] sm:$0xf] %v5986
        %5988 = vst [vmem:[%s5921 + $0x70] sm:$0xf] %v5769
        %v5989 = vld [vmem:[%s5921 + $0x74] sm:$0x1]
        %v5990 = vsel %vm336, %v5770, %v5989
        %5991 = vst [vmem:[%s5921 + $0x74] sm:$0x1] %v5990
        %v5992 = vld [vmem:[%s5921 + $0x78] sm:$0xf]
        %v5993 = vsel %vm918, %v5777, %v5992
        %5994 = vst [vmem:[%s5921 + $0x78] sm:$0xf] %v5993
        %5995 = vst [vmem:[%s5921 + $0x7c] sm:$0xf] %v5786
        %v5996 = vld [vmem:[%s5921 + $0x80] sm:$0x1]
        %v5997 = vsel %vm336, %v5787, %v5996
        %5998 = vst [vmem:[%s5921 + $0x80] sm:$0x1] %v5997
        %v5999 = vld [vmem:[%s5921 + $0x84] sm:$0xf]
        %v6000 = vsel %vm918, %v5794, %v5999
        %6001 = vst [vmem:[%s5921 + $0x84] sm:$0xf] %v6000
        %6002 = vst [vmem:[%s5921 + $0x88] sm:$0xf] %v5803
        %v6003 = vld [vmem:[%s5921 + $0x8c] sm:$0x1]
        %v6004 = vsel %vm336, %v5804, %v6003
        %6005 = vst [vmem:[%s5921 + $0x8c] sm:$0x1] %v6004
        %v6006 = vld [vmem:[%s5921 + $0x90] sm:$0xf]
        %v6007 = vsel %vm918, %v5811, %v6006
        %6008 = vst [vmem:[%s5921 + $0x90] sm:$0xf] %v6007
        %6009 = vst [vmem:[%s5921 + $0x94] sm:$0xf] %v5820
        %v6010 = vld [vmem:[%s5921 + $0x98] sm:$0x1]
        %v6011 = vsel %vm336, %v5821, %v6010
        %6012 = vst [vmem:[%s5921 + $0x98] sm:$0x1] %v6011
        %v6013 = vld [vmem:[%s5921 + $0x9c] sm:$0xf]
        %v6014 = vsel %vm918, %v5828, %v6013
        %6015 = vst [vmem:[%s5921 + $0x9c] sm:$0xf] %v6014
        %6016 = vst [vmem:[%s5921 + $0xa0] sm:$0xf] %v5837
        %v6017 = vld [vmem:[%s5921 + $0xa4] sm:$0x1]
        %v6018 = vsel %vm336, %v5838, %v6017
        %6019 = vst [vmem:[%s5921 + $0xa4] sm:$0x1] %v6018
        %v6020 = vld [vmem:[%s5921 + $0xa8] sm:$0xf]
        %v6021 = vsel %vm918, %v5845, %v6020
        %6022 = vst [vmem:[%s5921 + $0xa8] sm:$0xf] %v6021
        %6023 = vst [vmem:[%s5921 + $0xac] sm:$0xf] %v5854
        %v6024 = vld [vmem:[%s5921 + $0xb0] sm:$0x1]
        %v6025 = vsel %vm336, %v5855, %v6024
        %6026 = vst [vmem:[%s5921 + $0xb0] sm:$0x1] %v6025
        %v6027 = vld [vmem:[%s5921 + $0xb4] sm:$0xf]
        %v6028 = vsel %vm918, %v5862, %v6027
        %6029 = vst [vmem:[%s5921 + $0xb4] sm:$0xf] %v6028
        %6030 = vst [vmem:[%s5921 + $0xb8] sm:$0xf] %v5871
        %v6031 = vld [vmem:[%s5921 + $0xbc] sm:$0x1]
        %v6032 = vsel %vm336, %v5872, %v6031
        %6033 = vst [vmem:[%s5921 + $0xbc] sm:$0x1] %v6032
        %v6034 = vld [vmem:[#allocation4] sm:$0xf]
        %v6035 = vld [vmem:[#allocation4 + $0x4] sm:$0xf]
        %v6036 = vld [vmem:[#allocation4 + $0xc] sm:$0xf]
        %v6037 = vld [vmem:[#allocation4 + $0x10] sm:$0xf]
        %v6038 = vld [vmem:[#allocation4 + $0x18] sm:$0xf]
        %v6039 = vld [vmem:[#allocation4 + $0x1c] sm:$0xf]
        %v6040 = vld [vmem:[#allocation4 + $0x24] sm:$0xf]
        %v6041 = vld [vmem:[#allocation4 + $0x28] sm:$0xf]
        %v6042 = vld [vmem:[#allocation4 + $0x30] sm:$0xf]
        %v6043 = vld [vmem:[#allocation4 + $0x34] sm:$0xf]
        %v6044 = vld [vmem:[#allocation4 + $0x3c] sm:$0xf]
        %v6045 = vld [vmem:[#allocation4 + $0x40] sm:$0xf]
        %v6046 = vld [vmem:[#allocation4 + $0x48] sm:$0xf]
        %v6047 = vld [vmem:[#allocation4 + $0x4c] sm:$0xf]
        %v6048 = vld [vmem:[#allocation4 + $0x54] sm:$0xf]
        %v6049 = vld [vmem:[#allocation4 + $0x58] sm:$0xf]
        %v6050 = vld [vmem:[#allocation4 + $0x60] sm:$0xf]
        %v6051 = vld [vmem:[#allocation4 + $0x64] sm:$0xf]
        %v6052 = vld [vmem:[#allocation4 + $0x6c] sm:$0xf]
        %v6053 = vld [vmem:[#allocation4 + $0x70] sm:$0xf]
        %v6054 = vld [vmem:[#allocation4 + $0x78] sm:$0xf]
        %v6055 = vld [vmem:[#allocation4 + $0x7c] sm:$0xf]
        %v6056 = vld [vmem:[#allocation4 + $0x84] sm:$0xf]
        %v6057 = vld [vmem:[#allocation4 + $0x88] sm:$0xf]
        %v6058 = vld [vmem:[#allocation4 + $0x90] sm:$0xf]
        %v6059 = vld [vmem:[#allocation4 + $0x94] sm:$0xf]
        %v6060 = vld [vmem:[#allocation4 + $0x9c] sm:$0xf]
        %v6061 = vld [vmem:[#allocation4 + $0xa0] sm:$0xf]
        %v6062 = vld [vmem:[#allocation4 + $0xa8] sm:$0xf]
        %v6063 = vld [vmem:[#allocation4 + $0xac] sm:$0xf]
        %v6064 = vld [vmem:[#allocation4 + $0xb4] sm:$0xf]
        %v6065 = vld [vmem:[#allocation4 + $0xb8] sm:$0xf]
        %v6098 = vunpack.c.l.b16 %v6034
        %v6099 = vunpack.c.l.b16 %v6035
        %v6100 = vunpack.c.l.b16 %v6036
        %v6101 = vunpack.c.l.b16 %v6037
        %v6102 = vunpack.c.l.b16 %v6038
        %v6103 = vunpack.c.l.b16 %v6039
        %v6104 = vunpack.c.l.b16 %v6040
        %v6105 = vunpack.c.l.b16 %v6041
        %v6106 = vunpack.c.l.b16 %v6042
        %v6107 = vunpack.c.l.b16 %v6043
        %v6108 = vunpack.c.l.b16 %v6044
        %v6109 = vunpack.c.l.b16 %v6045
        %v6110 = vunpack.c.l.b16 %v6046
        %v6111 = vunpack.c.l.b16 %v6047
        %v6112 = vunpack.c.l.b16 %v6048
        %v6113 = vunpack.c.l.b16 %v6049
        %v6114 = vunpack.c.l.b16 %v6050
        %v6115 = vunpack.c.l.b16 %v6051
        %v6116 = vunpack.c.l.b16 %v6052
        %v6117 = vunpack.c.l.b16 %v6053
        %v6118 = vunpack.c.l.b16 %v6054
        %v6119 = vunpack.c.l.b16 %v6055
        %v6120 = vunpack.c.l.b16 %v6056
        %v6121 = vunpack.c.l.b16 %v6057
        %v6122 = vunpack.c.l.b16 %v6058
        %v6123 = vunpack.c.l.b16 %v6059
        %v6124 = vunpack.c.l.b16 %v6060
        %v6125 = vunpack.c.l.b16 %v6061
        %v6126 = vunpack.c.l.b16 %v6062
        %v6127 = vunpack.c.l.b16 %v6063
        %v6128 = vunpack.c.l.b16 %v6064
        %v6129 = vunpack.c.l.b16 %v6065
        %v6130 = vpack.c.b16 %v6099, %v6098
        %v6131 = vpack.c.b16 %v6101, %v6100
        %v6132 = vpack.c.b16 %v6103, %v6102
        %v6133 = vpack.c.b16 %v6105, %v6104
        %v6134 = vpack.c.b16 %v6107, %v6106
        %v6135 = vpack.c.b16 %v6109, %v6108
        %v6136 = vpack.c.b16 %v6111, %v6110
        %v6137 = vpack.c.b16 %v6113, %v6112
        %v6138 = vpack.c.b16 %v6115, %v6114
        %v6139 = vpack.c.b16 %v6117, %v6116
        %v6140 = vpack.c.b16 %v6119, %v6118
        %v6141 = vpack.c.b16 %v6121, %v6120
        %v6142 = vpack.c.b16 %v6123, %v6122
        %v6143 = vpack.c.b16 %v6125, %v6124
        %v6144 = vpack.c.b16 %v6127, %v6126
        %v6145 = vpack.c.b16 %v6129, %v6128
        %6162 = vst [vmem:[#allocation5] sm:$0xff] %v6130
        %6163 = vst [vmem:[#allocation5 + $0x48] sm:$0xff] %v6131
        %6164 = vst [vmem:[#allocation5 + $0x90] sm:$0xff] %v6132
        %6165 = vst [vmem:[#allocation5 + $0xd8] sm:$0xff] %v6133
        %6166 = vst [vmem:[#allocation5 + $0x120] sm:$0xff] %v6134
        %6167 = vst [vmem:[#allocation5 + $0x168] sm:$0xff] %v6135
        %6168 = vst [vmem:[#allocation5 + $0x1b0] sm:$0xff] %v6136
        %6169 = vst [vmem:[#allocation5 + $0x1f8] sm:$0xff] %v6137
        %6170 = vst [vmem:[#allocation5 + $0x240] sm:$0xff] %v6138
        %6171 = vst [vmem:[#allocation5 + $0x288] sm:$0xff] %v6139
        %6172 = vst [vmem:[#allocation5 + $0x2d0] sm:$0xff] %v6140
        %6173 = vst [vmem:[#allocation5 + $0x318] sm:$0xff] %v6141
        %6174 = vst [vmem:[#allocation5 + $0x360] sm:$0xff] %v6142
        %6175 = vst [vmem:[#allocation5 + $0x3a8] sm:$0xff] %v6143
        %6176 = vst [vmem:[#allocation5 + $0x3f0] sm:$0xff] %v6144
        %6177 = vst [vmem:[#allocation5 + $0x438] sm:$0xff] %v6145
        %v6178 = vld [vmem:[#allocation4] sm:$0xf]
        %v6179 = vld [vmem:[#allocation4 + $0x4] sm:$0xf]
        %v6180 = vld [vmem:[#allocation4 + $0x8] sm:$0x1]
        %v6181 = vld [vmem:[#allocation4 + $0xc] sm:$0xf]
        %v6182 = vld [vmem:[#allocation4 + $0x10] sm:$0xf]
        %v6183 = vld [vmem:[#allocation4 + $0x14] sm:$0x1]
        %v6184 = vld [vmem:[#allocation4 + $0x18] sm:$0xf]
        %v6185 = vld [vmem:[#allocation4 + $0x1c] sm:$0xf]
        %v6186 = vld [vmem:[#allocation4 + $0x20] sm:$0x1]
        %v6187 = vld [vmem:[#allocation4 + $0x24] sm:$0xf]
        %v6188 = vld [vmem:[#allocation4 + $0x28] sm:$0xf]
        %v6189 = vld [vmem:[#allocation4 + $0x2c] sm:$0x1]
        %v6190 = vld [vmem:[#allocation4 + $0x30] sm:$0xf]
        %v6191 = vld [vmem:[#allocation4 + $0x34] sm:$0xf]
        %v6192 = vld [vmem:[#allocation4 + $0x38] sm:$0x1]
        %v6193 = vld [vmem:[#allocation4 + $0x3c] sm:$0xf]
        %v6194 = vld [vmem:[#allocation4 + $0x40] sm:$0xf]
        %v6195 = vld [vmem:[#allocation4 + $0x44] sm:$0x1]
        %v6196 = vld [vmem:[#allocation4 + $0x48] sm:$0xf]
        %v6197 = vld [vmem:[#allocation4 + $0x4c] sm:$0xf]
        %v6198 = vld [vmem:[#allocation4 + $0x50] sm:$0x1]
        %v6199 = vld [vmem:[#allocation4 + $0x54] sm:$0xf]
        %v6200 = vld [vmem:[#allocation4 + $0x58] sm:$0xf]
        %v6201 = vld [vmem:[#allocation4 + $0x5c] sm:$0x1]
        %v6202 = vld [vmem:[#allocation4 + $0x60] sm:$0xf]
        %v6203 = vld [vmem:[#allocation4 + $0x64] sm:$0xf]
        %v6204 = vld [vmem:[#allocation4 + $0x68] sm:$0x1]
        %v6205 = vld [vmem:[#allocation4 + $0x6c] sm:$0xf]
        %v6206 = vld [vmem:[#allocation4 + $0x70] sm:$0xf]
        %v6207 = vld [vmem:[#allocation4 + $0x74] sm:$0x1]
        %v6208 = vld [vmem:[#allocation4 + $0x78] sm:$0xf]
        %v6209 = vld [vmem:[#allocation4 + $0x7c] sm:$0xf]
        %v6210 = vld [vmem:[#allocation4 + $0x80] sm:$0x1]
        %v6211 = vld [vmem:[#allocation4 + $0x84] sm:$0xf]
        %v6212 = vld [vmem:[#allocation4 + $0x88] sm:$0xf]
        %v6213 = vld [vmem:[#allocation4 + $0x8c] sm:$0x1]
        %v6214 = vld [vmem:[#allocation4 + $0x90] sm:$0xf]
        %v6215 = vld [vmem:[#allocation4 + $0x94] sm:$0xf]
        %v6216 = vld [vmem:[#allocation4 + $0x98] sm:$0x1]
        %v6217 = vld [vmem:[#allocation4 + $0x9c] sm:$0xf]
        %v6218 = vld [vmem:[#allocation4 + $0xa0] sm:$0xf]
        %v6219 = vld [vmem:[#allocation4 + $0xa4] sm:$0x1]
        %v6220 = vld [vmem:[#allocation4 + $0xa8] sm:$0xf]
        %v6221 = vld [vmem:[#allocation4 + $0xac] sm:$0xf]
        %v6222 = vld [vmem:[#allocation4 + $0xb0] sm:$0x1]
        %v6223 = vld [vmem:[#allocation4 + $0xb4] sm:$0xf]
        %v6224 = vld [vmem:[#allocation4 + $0xb8] sm:$0xf]
        %v6225 = vld [vmem:[#allocation4 + $0xbc] sm:$0x1]
        %v6227 = vshrl.u32 %v6178, 16
        %v6229 = vrot.slane %v6227, 4
        %v6230 = vshll.u32 %v6178, 16
        %v6232 = vrot.slane %v6230, 5
        %v6233 = vor.u32 %v6229, %v6232
        %v6234 = vrot.slane %v6233, 4
        %v6236 = vshll.u32 %v6179, 16
        %v6238 = vrot.slane %v6236, 5
        %v6239 = vsel %vm1225, %v6234, %v6238
        %v6240 = vshrl.u32 %v6179, 16
        %v6242 = vrot.slane %v6240, 4
        %v6243 = vor.u32 %v6242, %v6238
        %v6244 = vrot.slane %v6243, 4
        %v6246 = vshll.u32 %v6180, 16
        %v6248 = vrot.slane %v6246, 5
        %v6249 = vsel %vm1225, %v6244, %v6248
        %v6251 = vshrl.u32 %v6181, 16
        %v6253 = vrot.slane %v6251, 4
        %v6254 = vshll.u32 %v6181, 16
        %v6256 = vrot.slane %v6254, 5
        %v6257 = vor.u32 %v6253, %v6256
        %v6258 = vrot.slane %v6257, 4
        %v6260 = vshll.u32 %v6182, 16
        %v6262 = vrot.slane %v6260, 5
        %v6263 = vsel %vm1225, %v6258, %v6262
        %v6264 = vshrl.u32 %v6182, 16
        %v6266 = vrot.slane %v6264, 4
        %v6267 = vor.u32 %v6266, %v6262
        %v6268 = vrot.slane %v6267, 4
        %v6270 = vshll.u32 %v6183, 16
        %v6272 = vrot.slane %v6270, 5
        %v6273 = vsel %vm1225, %v6268, %v6272
        %v6275 = vshrl.u32 %v6184, 16
        %v6277 = vrot.slane %v6275, 4
        %v6278 = vshll.u32 %v6184, 16
        %v6280 = vrot.slane %v6278, 5
        %v6281 = vor.u32 %v6277, %v6280
        %v6282 = vrot.slane %v6281, 4
        %v6284 = vshll.u32 %v6185, 16
        %v6286 = vrot.slane %v6284, 5
        %v6287 = vsel %vm1225, %v6282, %v6286
        %v6288 = vshrl.u32 %v6185, 16
        %v6290 = vrot.slane %v6288, 4
        %v6291 = vor.u32 %v6290, %v6286
        %v6292 = vrot.slane %v6291, 4
        %v6294 = vshll.u32 %v6186, 16
        %v6296 = vrot.slane %v6294, 5
        %v6297 = vsel %vm1225, %v6292, %v6296
        %v6299 = vshrl.u32 %v6187, 16
        %v6301 = vrot.slane %v6299, 4
        %v6302 = vshll.u32 %v6187, 16
        %v6304 = vrot.slane %v6302, 5
        %v6305 = vor.u32 %v6301, %v6304
        %v6306 = vrot.slane %v6305, 4
        %v6308 = vshll.u32 %v6188, 16
        %v6310 = vrot.slane %v6308, 5
        %v6311 = vsel %vm1225, %v6306, %v6310
        %v6312 = vshrl.u32 %v6188, 16
        %v6314 = vrot.slane %v6312, 4
        %v6315 = vor.u32 %v6314, %v6310
        %v6316 = vrot.slane %v6315, 4
        %v6318 = vshll.u32 %v6189, 16
        %v6320 = vrot.slane %v6318, 5
        %v6321 = vsel %vm1225, %v6316, %v6320
        %v6323 = vshrl.u32 %v6190, 16
        %v6325 = vrot.slane %v6323, 4
        %v6326 = vshll.u32 %v6190, 16
        %v6328 = vrot.slane %v6326, 5
        %v6329 = vor.u32 %v6325, %v6328
        %v6330 = vrot.slane %v6329, 4
        %v6332 = vshll.u32 %v6191, 16
        %v6334 = vrot.slane %v6332, 5
        %v6335 = vsel %vm1225, %v6330, %v6334
        %v6336 = vshrl.u32 %v6191, 16
        %v6338 = vrot.slane %v6336, 4
        %v6339 = vor.u32 %v6338, %v6334
        %v6340 = vrot.slane %v6339, 4
        %v6342 = vshll.u32 %v6192, 16
        %v6344 = vrot.slane %v6342, 5
        %v6345 = vsel %vm1225, %v6340, %v6344
        %v6347 = vshrl.u32 %v6193, 16
        %v6349 = vrot.slane %v6347, 4
        %v6350 = vshll.u32 %v6193, 16
        %v6352 = vrot.slane %v6350, 5
        %v6353 = vor.u32 %v6349, %v6352
        %v6354 = vrot.slane %v6353, 4
        %v6356 = vshll.u32 %v6194, 16
        %v6358 = vrot.slane %v6356, 5
        %v6359 = vsel %vm1225, %v6354, %v6358
        %v6360 = vshrl.u32 %v6194, 16
        %v6362 = vrot.slane %v6360, 4
        %v6363 = vor.u32 %v6362, %v6358
        %v6364 = vrot.slane %v6363, 4
        %v6366 = vshll.u32 %v6195, 16
        %v6368 = vrot.slane %v6366, 5
        %v6369 = vsel %vm1225, %v6364, %v6368
        %v6371 = vshrl.u32 %v6196, 16
        %v6373 = vrot.slane %v6371, 4
        %v6374 = vshll.u32 %v6196, 16
        %v6376 = vrot.slane %v6374, 5
        %v6377 = vor.u32 %v6373, %v6376
        %v6378 = vrot.slane %v6377, 4
        %v6380 = vshll.u32 %v6197, 16
        %v6382 = vrot.slane %v6380, 5
        %v6383 = vsel %vm1225, %v6378, %v6382
        %v6384 = vshrl.u32 %v6197, 16
        %v6386 = vrot.slane %v6384, 4
        %v6387 = vor.u32 %v6386, %v6382
        %v6388 = vrot.slane %v6387, 4
        %v6390 = vshll.u32 %v6198, 16
        %v6392 = vrot.slane %v6390, 5
        %v6393 = vsel %vm1225, %v6388, %v6392
        %v6395 = vshrl.u32 %v6199, 16
        %v6397 = vrot.slane %v6395, 4
        %v6398 = vshll.u32 %v6199, 16
        %v6400 = vrot.slane %v6398, 5
        %v6401 = vor.u32 %v6397, %v6400
        %v6402 = vrot.slane %v6401, 4
        %v6404 = vshll.u32 %v6200, 16
        %v6406 = vrot.slane %v6404, 5
        %v6407 = vsel %vm1225, %v6402, %v6406
        %v6408 = vshrl.u32 %v6200, 16
        %v6410 = vrot.slane %v6408, 4
        %v6411 = vor.u32 %v6410, %v6406
        %v6412 = vrot.slane %v6411, 4
        %v6414 = vshll.u32 %v6201, 16
        %v6416 = vrot.slane %v6414, 5
        %v6417 = vsel %vm1225, %v6412, %v6416
        %v6419 = vshrl.u32 %v6202, 16
        %v6421 = vrot.slane %v6419, 4
        %v6422 = vshll.u32 %v6202, 16
        %v6424 = vrot.slane %v6422, 5
        %v6425 = vor.u32 %v6421, %v6424
        %v6426 = vrot.slane %v6425, 4
        %v6428 = vshll.u32 %v6203, 16
        %v6430 = vrot.slane %v6428, 5
        %v6431 = vsel %vm1225, %v6426, %v6430
        %v6432 = vshrl.u32 %v6203, 16
        %v6434 = vrot.slane %v6432, 4
        %v6435 = vor.u32 %v6434, %v6430
        %v6436 = vrot.slane %v6435, 4
        %v6438 = vshll.u32 %v6204, 16
        %v6440 = vrot.slane %v6438, 5
        %v6441 = vsel %vm1225, %v6436, %v6440
        %v6443 = vshrl.u32 %v6205, 16
        %v6445 = vrot.slane %v6443, 4
        %v6446 = vshll.u32 %v6205, 16
        %v6448 = vrot.slane %v6446, 5
        %v6449 = vor.u32 %v6445, %v6448
        %v6450 = vrot.slane %v6449, 4
        %v6452 = vshll.u32 %v6206, 16
        %v6454 = vrot.slane %v6452, 5
        %v6455 = vsel %vm1225, %v6450, %v6454
        %v6456 = vshrl.u32 %v6206, 16
        %v6458 = vrot.slane %v6456, 4
        %v6459 = vor.u32 %v6458, %v6454
        %v6460 = vrot.slane %v6459, 4
        %v6462 = vshll.u32 %v6207, 16
        %v6464 = vrot.slane %v6462, 5
        %v6465 = vsel %vm1225, %v6460, %v6464
        %v6467 = vshrl.u32 %v6208, 16
        %v6469 = vrot.slane %v6467, 4
        %v6470 = vshll.u32 %v6208, 16
        %v6472 = vrot.slane %v6470, 5
        %v6473 = vor.u32 %v6469, %v6472
        %v6474 = vrot.slane %v6473, 4
        %v6476 = vshll.u32 %v6209, 16
        %v6478 = vrot.slane %v6476, 5
        %v6479 = vsel %vm1225, %v6474, %v6478
        %v6480 = vshrl.u32 %v6209, 16
        %v6482 = vrot.slane %v6480, 4
        %v6483 = vor.u32 %v6482, %v6478
        %v6484 = vrot.slane %v6483, 4
        %v6486 = vshll.u32 %v6210, 16
        %v6488 = vrot.slane %v6486, 5
        %v6489 = vsel %vm1225, %v6484, %v6488
        %v6491 = vshrl.u32 %v6211, 16
        %v6493 = vrot.slane %v6491, 4
        %v6494 = vshll.u32 %v6211, 16
        %v6496 = vrot.slane %v6494, 5
        %v6497 = vor.u32 %v6493, %v6496
        %v6498 = vrot.slane %v6497, 4
        %v6500 = vshll.u32 %v6212, 16
        %v6502 = vrot.slane %v6500, 5
        %v6503 = vsel %vm1225, %v6498, %v6502
        %v6504 = vshrl.u32 %v6212, 16
        %v6506 = vrot.slane %v6504, 4
        %v6507 = vor.u32 %v6506, %v6502
        %v6508 = vrot.slane %v6507, 4
        %v6510 = vshll.u32 %v6213, 16
        %v6512 = vrot.slane %v6510, 5
        %v6513 = vsel %vm1225, %v6508, %v6512
        %v6515 = vshrl.u32 %v6214, 16
        %v6517 = vrot.slane %v6515, 4
        %v6518 = vshll.u32 %v6214, 16
        %v6520 = vrot.slane %v6518, 5
        %v6521 = vor.u32 %v6517, %v6520
        %v6522 = vrot.slane %v6521, 4
        %v6524 = vshll.u32 %v6215, 16
        %v6526 = vrot.slane %v6524, 5
        %v6527 = vsel %vm1225, %v6522, %v6526
        %v6528 = vshrl.u32 %v6215, 16
        %v6530 = vrot.slane %v6528, 4
        %v6531 = vor.u32 %v6530, %v6526
        %v6532 = vrot.slane %v6531, 4
        %v6534 = vshll.u32 %v6216, 16
        %v6536 = vrot.slane %v6534, 5
        %v6537 = vsel %vm1225, %v6532, %v6536
        %v6539 = vshrl.u32 %v6217, 16
        %v6541 = vrot.slane %v6539, 4
        %v6542 = vshll.u32 %v6217, 16
        %v6544 = vrot.slane %v6542, 5
        %v6545 = vor.u32 %v6541, %v6544
        %v6546 = vrot.slane %v6545, 4
        %v6548 = vshll.u32 %v6218, 16
        %v6550 = vrot.slane %v6548, 5
        %v6551 = vsel %vm1225, %v6546, %v6550
        %v6552 = vshrl.u32 %v6218, 16
        %v6554 = vrot.slane %v6552, 4
        %v6555 = vor.u32 %v6554, %v6550
        %v6556 = vrot.slane %v6555, 4
        %v6558 = vshll.u32 %v6219, 16
        %v6560 = vrot.slane %v6558, 5
        %v6561 = vsel %vm1225, %v6556, %v6560
        %v6563 = vshrl.u32 %v6220, 16
        %v6565 = vrot.slane %v6563, 4
        %v6566 = vshll.u32 %v6220, 16
        %v6568 = vrot.slane %v6566, 5
        %v6569 = vor.u32 %v6565, %v6568
        %v6570 = vrot.slane %v6569, 4
        %v6572 = vshll.u32 %v6221, 16
        %v6574 = vrot.slane %v6572, 5
        %v6575 = vsel %vm1225, %v6570, %v6574
        %v6576 = vshrl.u32 %v6221, 16
        %v6578 = vrot.slane %v6576, 4
        %v6579 = vor.u32 %v6578, %v6574
        %v6580 = vrot.slane %v6579, 4
        %v6582 = vshll.u32 %v6222, 16
        %v6584 = vrot.slane %v6582, 5
        %v6585 = vsel %vm1225, %v6580, %v6584
        %v6587 = vshrl.u32 %v6223, 16
        %v6589 = vrot.slane %v6587, 4
        %v6590 = vshll.u32 %v6223, 16
        %v6592 = vrot.slane %v6590, 5
        %v6593 = vor.u32 %v6589, %v6592
        %v6594 = vrot.slane %v6593, 4
        %v6596 = vshll.u32 %v6224, 16
        %v6598 = vrot.slane %v6596, 5
        %v6599 = vsel %vm1225, %v6594, %v6598
        %v6600 = vshrl.u32 %v6224, 16
        %v6602 = vrot.slane %v6600, 4
        %v6603 = vor.u32 %v6602, %v6598
        %v6604 = vrot.slane %v6603, 4
        %v6606 = vshll.u32 %v6225, 16
        %v6608 = vrot.slane %v6606, 5
        %v6609 = vsel %vm1225, %v6604, %v6608
        %v6610 = vunpack.c.l.b16 %v6239
        %v6611 = vunpack.c.l.b16 %v6249
        %v6612 = vunpack.c.l.b16 %v6263
        %v6613 = vunpack.c.l.b16 %v6273
        %v6614 = vunpack.c.l.b16 %v6287
        %v6615 = vunpack.c.l.b16 %v6297
        %v6616 = vunpack.c.l.b16 %v6311
        %v6617 = vunpack.c.l.b16 %v6321
        %v6618 = vunpack.c.l.b16 %v6335
        %v6619 = vunpack.c.l.b16 %v6345
        %v6620 = vunpack.c.l.b16 %v6359
        %v6621 = vunpack.c.l.b16 %v6369
        %v6622 = vunpack.c.l.b16 %v6383
        %v6623 = vunpack.c.l.b16 %v6393
        %v6624 = vunpack.c.l.b16 %v6407
        %v6625 = vunpack.c.l.b16 %v6417
        %v6626 = vunpack.c.l.b16 %v6431
        %v6627 = vunpack.c.l.b16 %v6441
        %v6628 = vunpack.c.l.b16 %v6455
        %v6629 = vunpack.c.l.b16 %v6465
        %v6630 = vunpack.c.l.b16 %v6479
        %v6631 = vunpack.c.l.b16 %v6489
        %v6632 = vunpack.c.l.b16 %v6503
        %v6633 = vunpack.c.l.b16 %v6513
        %v6634 = vunpack.c.l.b16 %v6527
        %v6635 = vunpack.c.l.b16 %v6537
        %v6636 = vunpack.c.l.b16 %v6551
        %v6637 = vunpack.c.l.b16 %v6561
        %v6638 = vunpack.c.l.b16 %v6575
        %v6639 = vunpack.c.l.b16 %v6585
        %v6640 = vunpack.c.l.b16 %v6599
        %v6641 = vunpack.c.l.b16 %v6609
        %v6642 = vpack.c.b16 %v6611, %v6610
        %v6643 = vpack.c.b16 %v6613, %v6612
        %v6644 = vpack.c.b16 %v6615, %v6614
        %v6645 = vpack.c.b16 %v6617, %v6616
        %v6646 = vpack.c.b16 %v6619, %v6618
        %v6647 = vpack.c.b16 %v6621, %v6620
        %v6648 = vpack.c.b16 %v6623, %v6622
        %v6649 = vpack.c.b16 %v6625, %v6624
        %v6650 = vpack.c.b16 %v6627, %v6626
        %v6651 = vpack.c.b16 %v6629, %v6628
        %v6652 = vpack.c.b16 %v6631, %v6630
        %v6653 = vpack.c.b16 %v6633, %v6632
        %v6654 = vpack.c.b16 %v6635, %v6634
        %v6655 = vpack.c.b16 %v6637, %v6636
        %v6656 = vpack.c.b16 %v6639, %v6638
        %v6657 = vpack.c.b16 %v6641, %v6640
        %6674 = vst [vmem:[#allocation5 + $0x8] sm:$0xff] %v6642
        %6675 = vst [vmem:[#allocation5 + $0x50] sm:$0xff] %v6643
        %6676 = vst [vmem:[#allocation5 + $0x98] sm:$0xff] %v6644
        %6677 = vst [vmem:[#allocation5 + $0xe0] sm:$0xff] %v6645
        %6678 = vst [vmem:[#allocation5 + $0x128] sm:$0xff] %v6646
        %6679 = vst [vmem:[#allocation5 + $0x170] sm:$0xff] %v6647
        %6680 = vst [vmem:[#allocation5 + $0x1b8] sm:$0xff] %v6648
        %6681 = vst [vmem:[#allocation5 + $0x200] sm:$0xff] %v6649
        %6682 = vst [vmem:[#allocation5 + $0x248] sm:$0xff] %v6650
        %6683 = vst [vmem:[#allocation5 + $0x290] sm:$0xff] %v6651
        %6684 = vst [vmem:[#allocation5 + $0x2d8] sm:$0xff] %v6652
        %6685 = vst [vmem:[#allocation5 + $0x320] sm:$0xff] %v6653
        %6686 = vst [vmem:[#allocation5 + $0x368] sm:$0xff] %v6654
        %6687 = vst [vmem:[#allocation5 + $0x3b0] sm:$0xff] %v6655
        %6688 = vst [vmem:[#allocation5 + $0x3f8] sm:$0xff] %v6656
        %6689 = vst [vmem:[#allocation5 + $0x440] sm:$0xff] %v6657
        %v6690 = vld [vmem:[#allocation4] sm:$0xe]
        %v6691 = vld [vmem:[#allocation4 + $0x4] sm:$0xf]
        %v6692 = vld [vmem:[#allocation4 + $0x8] sm:$0x1]
        %v6693 = vld [vmem:[#allocation4 + $0xc] sm:$0xe]
        %v6694 = vld [vmem:[#allocation4 + $0x10] sm:$0xf]
        %v6695 = vld [vmem:[#allocation4 + $0x14] sm:$0x1]
        %v6696 = vld [vmem:[#allocation4 + $0x18] sm:$0xe]
        %v6697 = vld [vmem:[#allocation4 + $0x1c] sm:$0xf]
        %v6698 = vld [vmem:[#allocation4 + $0x20] sm:$0x1]
        %v6699 = vld [vmem:[#allocation4 + $0x24] sm:$0xe]
        %v6700 = vld [vmem:[#allocation4 + $0x28] sm:$0xf]
        %v6701 = vld [vmem:[#allocation4 + $0x2c] sm:$0x1]
        %v6702 = vld [vmem:[#allocation4 + $0x30] sm:$0xe]
        %v6703 = vld [vmem:[#allocation4 + $0x34] sm:$0xf]
        %v6704 = vld [vmem:[#allocation4 + $0x38] sm:$0x1]
        %v6705 = vld [vmem:[#allocation4 + $0x3c] sm:$0xe]
        %v6706 = vld [vmem:[#allocation4 + $0x40] sm:$0xf]
        %v6707 = vld [vmem:[#allocation4 + $0x44] sm:$0x1]
        %v6708 = vld [vmem:[#allocation4 + $0x48] sm:$0xe]
        %v6709 = vld [vmem:[#allocation4 + $0x4c] sm:$0xf]
        %v6710 = vld [vmem:[#allocation4 + $0x50] sm:$0x1]
        %v6711 = vld [vmem:[#allocation4 + $0x54] sm:$0xe]
        %v6712 = vld [vmem:[#allocation4 + $0x58] sm:$0xf]
        %v6713 = vld [vmem:[#allocation4 + $0x5c] sm:$0x1]
        %v6714 = vld [vmem:[#allocation4 + $0x60] sm:$0xe]
        %v6715 = vld [vmem:[#allocation4 + $0x64] sm:$0xf]
        %v6716 = vld [vmem:[#allocation4 + $0x68] sm:$0x1]
        %v6717 = vld [vmem:[#allocation4 + $0x6c] sm:$0xe]
        %v6718 = vld [vmem:[#allocation4 + $0x70] sm:$0xf]
        %v6719 = vld [vmem:[#allocation4 + $0x74] sm:$0x1]
        %v6720 = vld [vmem:[#allocation4 + $0x78] sm:$0xe]
        %v6721 = vld [vmem:[#allocation4 + $0x7c] sm:$0xf]
        %v6722 = vld [vmem:[#allocation4 + $0x80] sm:$0x1]
        %v6723 = vld [vmem:[#allocation4 + $0x84] sm:$0xe]
        %v6724 = vld [vmem:[#allocation4 + $0x88] sm:$0xf]
        %v6725 = vld [vmem:[#allocation4 + $0x8c] sm:$0x1]
        %v6726 = vld [vmem:[#allocation4 + $0x90] sm:$0xe]
        %v6727 = vld [vmem:[#allocation4 + $0x94] sm:$0xf]
        %v6728 = vld [vmem:[#allocation4 + $0x98] sm:$0x1]
        %v6729 = vld [vmem:[#allocation4 + $0x9c] sm:$0xe]
        %v6730 = vld [vmem:[#allocation4 + $0xa0] sm:$0xf]
        %v6731 = vld [vmem:[#allocation4 + $0xa4] sm:$0x1]
        %v6732 = vld [vmem:[#allocation4 + $0xa8] sm:$0xe]
        %v6733 = vld [vmem:[#allocation4 + $0xac] sm:$0xf]
        %v6734 = vld [vmem:[#allocation4 + $0xb0] sm:$0x1]
        %v6735 = vld [vmem:[#allocation4 + $0xb4] sm:$0xe]
        %v6736 = vld [vmem:[#allocation4 + $0xb8] sm:$0xf]
        %v6737 = vld [vmem:[#allocation4 + $0xbc] sm:$0x1]
        %v6786 = vrot.slane %v6690, 5
        %v6787 = vrot.slane %v6786, 4
        %v6788 = vrot.slane %v6691, 5
        %v6789 = vsel %vm1788, %v6787, %v6788
        %v6790 = vrot.slane %v6788, 4
        %v6791 = vrot.slane %v6692, 5
        %v6792 = vsel %vm1788, %v6790, %v6791
        %v6793 = vrot.slane %v6693, 5
        %v6794 = vrot.slane %v6793, 4
        %v6795 = vrot.slane %v6694, 5
        %v6796 = vsel %vm1788, %v6794, %v6795
        %v6797 = vrot.slane %v6795, 4
        %v6798 = vrot.slane %v6695, 5
        %v6799 = vsel %vm1788, %v6797, %v6798
        %v6800 = vrot.slane %v6696, 5
        %v6801 = vrot.slane %v6800, 4
        %v6802 = vrot.slane %v6697, 5
        %v6803 = vsel %vm1788, %v6801, %v6802
        %v6804 = vrot.slane %v6802, 4
        %v6805 = vrot.slane %v6698, 5
        %v6806 = vsel %vm1788, %v6804, %v6805
        %v6807 = vrot.slane %v6699, 5
        %v6808 = vrot.slane %v6807, 4
        %v6809 = vrot.slane %v6700, 5
        %v6810 = vsel %vm1788, %v6808, %v6809
        %v6811 = vrot.slane %v6809, 4
        %v6812 = vrot.slane %v6701, 5
        %v6813 = vsel %vm1788, %v6811, %v6812
        %v6814 = vrot.slane %v6702, 5
        %v6815 = vrot.slane %v6814, 4
        %v6816 = vrot.slane %v6703, 5
        %v6817 = vsel %vm1788, %v6815, %v6816
        %v6818 = vrot.slane %v6816, 4
        %v6819 = vrot.slane %v6704, 5
        %v6820 = vsel %vm1788, %v6818, %v6819
        %v6821 = vrot.slane %v6705, 5
        %v6822 = vrot.slane %v6821, 4
        %v6823 = vrot.slane %v6706, 5
        %v6824 = vsel %vm1788, %v6822, %v6823
        %v6825 = vrot.slane %v6823, 4
        %v6826 = vrot.slane %v6707, 5
        %v6827 = vsel %vm1788, %v6825, %v6826
        %v6828 = vrot.slane %v6708, 5
        %v6829 = vrot.slane %v6828, 4
        %v6830 = vrot.slane %v6709, 5
        %v6831 = vsel %vm1788, %v6829, %v6830
        %v6832 = vrot.slane %v6830, 4
        %v6833 = vrot.slane %v6710, 5
        %v6834 = vsel %vm1788, %v6832, %v6833
        %v6835 = vrot.slane %v6711, 5
        %v6836 = vrot.slane %v6835, 4
        %v6837 = vrot.slane %v6712, 5
        %v6838 = vsel %vm1788, %v6836, %v6837
        %v6839 = vrot.slane %v6837, 4
        %v6840 = vrot.slane %v6713, 5
        %v6841 = vsel %vm1788, %v6839, %v6840
        %v6842 = vrot.slane %v6714, 5
        %v6843 = vrot.slane %v6842, 4
        %v6844 = vrot.slane %v6715, 5
        %v6845 = vsel %vm1788, %v6843, %v6844
        %v6846 = vrot.slane %v6844, 4
        %v6847 = vrot.slane %v6716, 5
        %v6848 = vsel %vm1788, %v6846, %v6847
        %v6849 = vrot.slane %v6717, 5
        %v6850 = vrot.slane %v6849, 4
        %v6851 = vrot.slane %v6718, 5
        %v6852 = vsel %vm1788, %v6850, %v6851
        %v6853 = vrot.slane %v6851, 4
        %v6854 = vrot.slane %v6719, 5
        %v6855 = vsel %vm1788, %v6853, %v6854
        %v6856 = vrot.slane %v6720, 5
        %v6857 = vrot.slane %v6856, 4
        %v6858 = vrot.slane %v6721, 5
        %v6859 = vsel %vm1788, %v6857, %v6858
        %v6860 = vrot.slane %v6858, 4
        %v6861 = vrot.slane %v6722, 5
        %v6862 = vsel %vm1788, %v6860, %v6861
        %v6863 = vrot.slane %v6723, 5
        %v6864 = vrot.slane %v6863, 4
        %v6865 = vrot.slane %v6724, 5
        %v6866 = vsel %vm1788, %v6864, %v6865
        %v6867 = vrot.slane %v6865, 4
        %v6868 = vrot.slane %v6725, 5
        %v6869 = vsel %vm1788, %v6867, %v6868
        %v6870 = vrot.slane %v6726, 5
        %v6871 = vrot.slane %v6870, 4
        %v6872 = vrot.slane %v6727, 5
        %v6873 = vsel %vm1788, %v6871, %v6872
        %v6874 = vrot.slane %v6872, 4
        %v6875 = vrot.slane %v6728, 5
        %v6876 = vsel %vm1788, %v6874, %v6875
        %v6877 = vrot.slane %v6729, 5
        %v6878 = vrot.slane %v6877, 4
        %v6879 = vrot.slane %v6730, 5
        %v6880 = vsel %vm1788, %v6878, %v6879
        %v6881 = vrot.slane %v6879, 4
        %v6882 = vrot.slane %v6731, 5
        %v6883 = vsel %vm1788, %v6881, %v6882
        %v6884 = vrot.slane %v6732, 5
        %v6885 = vrot.slane %v6884, 4
        %v6886 = vrot.slane %v6733, 5
        %v6887 = vsel %vm1788, %v6885, %v6886
        %v6888 = vrot.slane %v6886, 4
        %v6889 = vrot.slane %v6734, 5
        %v6890 = vsel %vm1788, %v6888, %v6889
        %v6891 = vrot.slane %v6735, 5
        %v6892 = vrot.slane %v6891, 4
        %v6893 = vrot.slane %v6736, 5
        %v6894 = vsel %vm1788, %v6892, %v6893
        %v6895 = vrot.slane %v6893, 4
        %v6896 = vrot.slane %v6737, 5
        %v6897 = vsel %vm1788, %v6895, %v6896
        %v6898 = vunpack.c.l.b16 %v6789
        %v6899 = vunpack.c.l.b16 %v6792
        %v6900 = vunpack.c.l.b16 %v6796
        %v6901 = vunpack.c.l.b16 %v6799
        %v6902 = vunpack.c.l.b16 %v6803
        %v6903 = vunpack.c.l.b16 %v6806
        %v6904 = vunpack.c.l.b16 %v6810
        %v6905 = vunpack.c.l.b16 %v6813
        %v6906 = vunpack.c.l.b16 %v6817
        %v6907 = vunpack.c.l.b16 %v6820
        %v6908 = vunpack.c.l.b16 %v6824
        %v6909 = vunpack.c.l.b16 %v6827
        %v6910 = vunpack.c.l.b16 %v6831
        %v6911 = vunpack.c.l.b16 %v6834
        %v6912 = vunpack.c.l.b16 %v6838
        %v6913 = vunpack.c.l.b16 %v6841
        %v6914 = vunpack.c.l.b16 %v6845
        %v6915 = vunpack.c.l.b16 %v6848
        %v6916 = vunpack.c.l.b16 %v6852
        %v6917 = vunpack.c.l.b16 %v6855
        %v6918 = vunpack.c.l.b16 %v6859
        %v6919 = vunpack.c.l.b16 %v6862
        %v6920 = vunpack.c.l.b16 %v6866
        %v6921 = vunpack.c.l.b16 %v6869
        %v6922 = vunpack.c.l.b16 %v6873
        %v6923 = vunpack.c.l.b16 %v6876
        %v6924 = vunpack.c.l.b16 %v6880
        %v6925 = vunpack.c.l.b16 %v6883
        %v6926 = vunpack.c.l.b16 %v6887
        %v6927 = vunpack.c.l.b16 %v6890
        %v6928 = vunpack.c.l.b16 %v6894
        %v6929 = vunpack.c.l.b16 %v6897
        %v6930 = vpack.c.b16 %v6899, %v6898
        %v6931 = vpack.c.b16 %v6901, %v6900
        %v6932 = vpack.c.b16 %v6903, %v6902
        %v6933 = vpack.c.b16 %v6905, %v6904
        %v6934 = vpack.c.b16 %v6907, %v6906
        %v6935 = vpack.c.b16 %v6909, %v6908
        %v6936 = vpack.c.b16 %v6911, %v6910
        %v6937 = vpack.c.b16 %v6913, %v6912
        %v6938 = vpack.c.b16 %v6915, %v6914
        %v6939 = vpack.c.b16 %v6917, %v6916
        %v6940 = vpack.c.b16 %v6919, %v6918
        %v6941 = vpack.c.b16 %v6921, %v6920
        %v6942 = vpack.c.b16 %v6923, %v6922
        %v6943 = vpack.c.b16 %v6925, %v6924
        %v6944 = vpack.c.b16 %v6927, %v6926
        %v6945 = vpack.c.b16 %v6929, %v6928
        %6962 = vst [vmem:[#allocation5 + $0x10] sm:$0xff] %v6930
        %6963 = vst [vmem:[#allocation5 + $0x58] sm:$0xff] %v6931
        %6964 = vst [vmem:[#allocation5 + $0xa0] sm:$0xff] %v6932
        %6965 = vst [vmem:[#allocation5 + $0xe8] sm:$0xff] %v6933
        %6966 = vst [vmem:[#allocation5 + $0x130] sm:$0xff] %v6934
        %6967 = vst [vmem:[#allocation5 + $0x178] sm:$0xff] %v6935
        %6968 = vst [vmem:[#allocation5 + $0x1c0] sm:$0xff] %v6936
        %6969 = vst [vmem:[#allocation5 + $0x208] sm:$0xff] %v6937
        %6970 = vst [vmem:[#allocation5 + $0x250] sm:$0xff] %v6938
        %6971 = vst [vmem:[#allocation5 + $0x298] sm:$0xff] %v6939
        %6972 = vst [vmem:[#allocation5 + $0x2e0] sm:$0xff] %v6940
        %6973 = vst [vmem:[#allocation5 + $0x328] sm:$0xff] %v6941
        %6974 = vst [vmem:[#allocation5 + $0x370] sm:$0xff] %v6942
        %6975 = vst [vmem:[#allocation5 + $0x3b8] sm:$0xff] %v6943
        %6976 = vst [vmem:[#allocation5 + $0x400] sm:$0xff] %v6944
        %6977 = vst [vmem:[#allocation5 + $0x448] sm:$0xff] %v6945
        %v6978 = vld [vmem:[%s5921] sm:$0xf]
        %v6979 = vld [vmem:[%s5921 + $0x4] sm:$0xf]
        %v6980 = vld [vmem:[%s5921 + $0xc] sm:$0xf]
        %v6981 = vld [vmem:[%s5921 + $0x10] sm:$0xf]
        %v6982 = vld [vmem:[%s5921 + $0x18] sm:$0xf]
        %v6983 = vld [vmem:[%s5921 + $0x1c] sm:$0xf]
        %v6984 = vld [vmem:[%s5921 + $0x24] sm:$0xf]
        %v6985 = vld [vmem:[%s5921 + $0x28] sm:$0xf]
        %v6986 = vld [vmem:[%s5921 + $0x30] sm:$0xf]
        %v6987 = vld [vmem:[%s5921 + $0x34] sm:$0xf]
        %v6988 = vld [vmem:[%s5921 + $0x3c] sm:$0xf]
        %v6989 = vld [vmem:[%s5921 + $0x40] sm:$0xf]
        %v6990 = vld [vmem:[%s5921 + $0x48] sm:$0xf]
        %v6991 = vld [vmem:[%s5921 + $0x4c] sm:$0xf]
        %v6992 = vld [vmem:[%s5921 + $0x54] sm:$0xf]
        %v6993 = vld [vmem:[%s5921 + $0x58] sm:$0xf]
        %v6994 = vld [vmem:[%s5921 + $0x60] sm:$0xf]
        %v6995 = vld [vmem:[%s5921 + $0x64] sm:$0xf]
        %v6996 = vld [vmem:[%s5921 + $0x6c] sm:$0xf]
        %v6997 = vld [vmem:[%s5921 + $0x70] sm:$0xf]
        %v6998 = vld [vmem:[%s5921 + $0x78] sm:$0xf]
        %v6999 = vld [vmem:[%s5921 + $0x7c] sm:$0xf]
        %v7000 = vld [vmem:[%s5921 + $0x84] sm:$0xf]
        %v7001 = vld [vmem:[%s5921 + $0x88] sm:$0xf]
        %v7002 = vld [vmem:[%s5921 + $0x90] sm:$0xf]
        %v7003 = vld [vmem:[%s5921 + $0x94] sm:$0xf]
        %v7004 = vld [vmem:[%s5921 + $0x9c] sm:$0xf]
        %v7005 = vld [vmem:[%s5921 + $0xa0] sm:$0xf]
        %v7006 = vld [vmem:[%s5921 + $0xa8] sm:$0xf]
        %v7007 = vld [vmem:[%s5921 + $0xac] sm:$0xf]
        %v7008 = vld [vmem:[%s5921 + $0xb4] sm:$0xf]
        %v7009 = vld [vmem:[%s5921 + $0xb8] sm:$0xf]
        %v7042 = vunpack.c.l.b16 %v6978
        %v7043 = vunpack.c.l.b16 %v6979
        %v7044 = vunpack.c.l.b16 %v6980
        %v7045 = vunpack.c.l.b16 %v6981
        %v7046 = vunpack.c.l.b16 %v6982
        %v7047 = vunpack.c.l.b16 %v6983
        %v7048 = vunpack.c.l.b16 %v6984
        %v7049 = vunpack.c.l.b16 %v6985
        %v7050 = vunpack.c.l.b16 %v6986
        %v7051 = vunpack.c.l.b16 %v6987
        %v7052 = vunpack.c.l.b16 %v6988
        %v7053 = vunpack.c.l.b16 %v6989
        %v7054 = vunpack.c.l.b16 %v6990
        %v7055 = vunpack.c.l.b16 %v6991
        %v7056 = vunpack.c.l.b16 %v6992
        %v7057 = vunpack.c.l.b16 %v6993
        %v7058 = vunpack.c.l.b16 %v6994
        %v7059 = vunpack.c.l.b16 %v6995
        %v7060 = vunpack.c.l.b16 %v6996
        %v7061 = vunpack.c.l.b16 %v6997
        %v7062 = vunpack.c.l.b16 %v6998
        %v7063 = vunpack.c.l.b16 %v6999
        %v7064 = vunpack.c.l.b16 %v7000
        %v7065 = vunpack.c.l.b16 %v7001
        %v7066 = vunpack.c.l.b16 %v7002
        %v7067 = vunpack.c.l.b16 %v7003
        %v7068 = vunpack.c.l.b16 %v7004
        %v7069 = vunpack.c.l.b16 %v7005
        %v7070 = vunpack.c.l.b16 %v7006
        %v7071 = vunpack.c.l.b16 %v7007
        %v7072 = vunpack.c.l.b16 %v7008
        %v7073 = vunpack.c.l.b16 %v7009
        %v7074 = vpack.c.b16 %v7043, %v7042
        %v7075 = vpack.c.b16 %v7045, %v7044
        %v7076 = vpack.c.b16 %v7047, %v7046
        %v7077 = vpack.c.b16 %v7049, %v7048
        %v7078 = vpack.c.b16 %v7051, %v7050
        %v7079 = vpack.c.b16 %v7053, %v7052
        %v7080 = vpack.c.b16 %v7055, %v7054
        %v7081 = vpack.c.b16 %v7057, %v7056
        %v7082 = vpack.c.b16 %v7059, %v7058
        %v7083 = vpack.c.b16 %v7061, %v7060
        %v7084 = vpack.c.b16 %v7063, %v7062
        %v7085 = vpack.c.b16 %v7065, %v7064
        %v7086 = vpack.c.b16 %v7067, %v7066
        %v7087 = vpack.c.b16 %v7069, %v7068
        %v7088 = vpack.c.b16 %v7071, %v7070
        %v7089 = vpack.c.b16 %v7073, %v7072
        %7106 = vst [vmem:[#allocation5 + $0x18] sm:$0xff] %v7074
        %7107 = vst [vmem:[#allocation5 + $0x60] sm:$0xff] %v7075
        %7108 = vst [vmem:[#allocation5 + $0xa8] sm:$0xff] %v7076
        %7109 = vst [vmem:[#allocation5 + $0xf0] sm:$0xff] %v7077
        %7110 = vst [vmem:[#allocation5 + $0x138] sm:$0xff] %v7078
        %7111 = vst [vmem:[#allocation5 + $0x180] sm:$0xff] %v7079
        %7112 = vst [vmem:[#allocation5 + $0x1c8] sm:$0xff] %v7080
        %7113 = vst [vmem:[#allocation5 + $0x210] sm:$0xff] %v7081
        %7114 = vst [vmem:[#allocation5 + $0x258] sm:$0xff] %v7082
        %7115 = vst [vmem:[#allocation5 + $0x2a0] sm:$0xff] %v7083
        %7116 = vst [vmem:[#allocation5 + $0x2e8] sm:$0xff] %v7084
        %7117 = vst [vmem:[#allocation5 + $0x330] sm:$0xff] %v7085
        %7118 = vst [vmem:[#allocation5 + $0x378] sm:$0xff] %v7086
        %7119 = vst [vmem:[#allocation5 + $0x3c0] sm:$0xff] %v7087
        %7120 = vst [vmem:[#allocation5 + $0x408] sm:$0xff] %v7088
        %7121 = vst [vmem:[#allocation5 + $0x450] sm:$0xff] %v7089
        %v7122 = vld [vmem:[%s5921] sm:$0xf]
        %v7123 = vld [vmem:[%s5921 + $0x4] sm:$0xf]
        %v7124 = vld [vmem:[%s5921 + $0x8] sm:$0x1]
        %v7125 = vld [vmem:[%s5921 + $0xc] sm:$0xf]
        %v7126 = vld [vmem:[%s5921 + $0x10] sm:$0xf]
        %v7127 = vld [vmem:[%s5921 + $0x14] sm:$0x1]
        %v7128 = vld [vmem:[%s5921 + $0x18] sm:$0xf]
        %v7129 = vld [vmem:[%s5921 + $0x1c] sm:$0xf]
        %v7130 = vld [vmem:[%s5921 + $0x20] sm:$0x1]
        %v7131 = vld [vmem:[%s5921 + $0x24] sm:$0xf]
        %v7132 = vld [vmem:[%s5921 + $0x28] sm:$0xf]
        %v7133 = vld [vmem:[%s5921 + $0x2c] sm:$0x1]
        %v7134 = vld [vmem:[%s5921 + $0x30] sm:$0xf]
        %v7135 = vld [vmem:[%s5921 + $0x34] sm:$0xf]
        %v7136 = vld [vmem:[%s5921 + $0x38] sm:$0x1]
        %v7137 = vld [vmem:[%s5921 + $0x3c] sm:$0xf]
        %v7138 = vld [vmem:[%s5921 + $0x40] sm:$0xf]
        %v7139 = vld [vmem:[%s5921 + $0x44] sm:$0x1]
        %v7140 = vld [vmem:[%s5921 + $0x48] sm:$0xf]
        %v7141 = vld [vmem:[%s5921 + $0x4c] sm:$0xf]
        %v7142 = vld [vmem:[%s5921 + $0x50] sm:$0x1]
        %v7143 = vld [vmem:[%s5921 + $0x54] sm:$0xf]
        %v7144 = vld [vmem:[%s5921 + $0x58] sm:$0xf]
        %v7145 = vld [vmem:[%s5921 + $0x5c] sm:$0x1]
        %v7146 = vld [vmem:[%s5921 + $0x60] sm:$0xf]
        %v7147 = vld [vmem:[%s5921 + $0x64] sm:$0xf]
        %v7148 = vld [vmem:[%s5921 + $0x68] sm:$0x1]
        %v7149 = vld [vmem:[%s5921 + $0x6c] sm:$0xf]
        %v7150 = vld [vmem:[%s5921 + $0x70] sm:$0xf]
        %v7151 = vld [vmem:[%s5921 + $0x74] sm:$0x1]
        %v7152 = vld [vmem:[%s5921 + $0x78] sm:$0xf]
        %v7153 = vld [vmem:[%s5921 + $0x7c] sm:$0xf]
        %v7154 = vld [vmem:[%s5921 + $0x80] sm:$0x1]
        %v7155 = vld [vmem:[%s5921 + $0x84] sm:$0xf]
        %v7156 = vld [vmem:[%s5921 + $0x88] sm:$0xf]
        %v7157 = vld [vmem:[%s5921 + $0x8c] sm:$0x1]
        %v7158 = vld [vmem:[%s5921 + $0x90] sm:$0xf]
        %v7159 = vld [vmem:[%s5921 + $0x94] sm:$0xf]
        %v7160 = vld [vmem:[%s5921 + $0x98] sm:$0x1]
        %v7161 = vld [vmem:[%s5921 + $0x9c] sm:$0xf]
        %v7162 = vld [vmem:[%s5921 + $0xa0] sm:$0xf]
        %v7163 = vld [vmem:[%s5921 + $0xa4] sm:$0x1]
        %v7164 = vld [vmem:[%s5921 + $0xa8] sm:$0xf]
        %v7165 = vld [vmem:[%s5921 + $0xac] sm:$0xf]
        %v7166 = vld [vmem:[%s5921 + $0xb0] sm:$0x1]
        %v7167 = vld [vmem:[%s5921 + $0xb4] sm:$0xf]
        %v7168 = vld [vmem:[%s5921 + $0xb8] sm:$0xf]
        %v7169 = vld [vmem:[%s5921 + $0xbc] sm:$0x1]
        %v7171 = vshrl.u32 %v7122, 16
        %v7173 = vrot.slane %v7171, 4
        %v7174 = vshll.u32 %v7122, 16
        %v7176 = vrot.slane %v7174, 5
        %v7177 = vor.u32 %v7173, %v7176
        %v7178 = vrot.slane %v7177, 4
        %v7180 = vshll.u32 %v7123, 16
        %v7182 = vrot.slane %v7180, 5
        %v7183 = vsel %vm1225, %v7178, %v7182
        %v7184 = vshrl.u32 %v7123, 16
        %v7186 = vrot.slane %v7184, 4
        %v7187 = vor.u32 %v7186, %v7182
        %v7188 = vrot.slane %v7187, 4
        %v7190 = vshll.u32 %v7124, 16
        %v7192 = vrot.slane %v7190, 5
        %v7193 = vsel %vm1225, %v7188, %v7192
        %v7195 = vshrl.u32 %v7125, 16
        %v7197 = vrot.slane %v7195, 4
        %v7198 = vshll.u32 %v7125, 16
        %v7200 = vrot.slane %v7198, 5
        %v7201 = vor.u32 %v7197, %v7200
        %v7202 = vrot.slane %v7201, 4
        %v7204 = vshll.u32 %v7126, 16
        %v7206 = vrot.slane %v7204, 5
        %v7207 = vsel %vm1225, %v7202, %v7206
        %v7208 = vshrl.u32 %v7126, 16
        %v7210 = vrot.slane %v7208, 4
        %v7211 = vor.u32 %v7210, %v7206
        %v7212 = vrot.slane %v7211, 4
        %v7214 = vshll.u32 %v7127, 16
        %v7216 = vrot.slane %v7214, 5
        %v7217 = vsel %vm1225, %v7212, %v7216
        %v7219 = vshrl.u32 %v7128, 16
        %v7221 = vrot.slane %v7219, 4
        %v7222 = vshll.u32 %v7128, 16
        %v7224 = vrot.slane %v7222, 5
        %v7225 = vor.u32 %v7221, %v7224
        %v7226 = vrot.slane %v7225, 4
        %v7228 = vshll.u32 %v7129, 16
        %v7230 = vrot.slane %v7228, 5
        %v7231 = vsel %vm1225, %v7226, %v7230
        %v7232 = vshrl.u32 %v7129, 16
        %v7234 = vrot.slane %v7232, 4
        %v7235 = vor.u32 %v7234, %v7230
        %v7236 = vrot.slane %v7235, 4
        %v7238 = vshll.u32 %v7130, 16
        %v7240 = vrot.slane %v7238, 5
        %v7241 = vsel %vm1225, %v7236, %v7240
        %v7243 = vshrl.u32 %v7131, 16
        %v7245 = vrot.slane %v7243, 4
        %v7246 = vshll.u32 %v7131, 16
        %v7248 = vrot.slane %v7246, 5
        %v7249 = vor.u32 %v7245, %v7248
        %v7250 = vrot.slane %v7249, 4
        %v7252 = vshll.u32 %v7132, 16
        %v7254 = vrot.slane %v7252, 5
        %v7255 = vsel %vm1225, %v7250, %v7254
        %v7256 = vshrl.u32 %v7132, 16
        %v7258 = vrot.slane %v7256, 4
        %v7259 = vor.u32 %v7258, %v7254
        %v7260 = vrot.slane %v7259, 4
        %v7262 = vshll.u32 %v7133, 16
        %v7264 = vrot.slane %v7262, 5
        %v7265 = vsel %vm1225, %v7260, %v7264
        %v7267 = vshrl.u32 %v7134, 16
        %v7269 = vrot.slane %v7267, 4
        %v7270 = vshll.u32 %v7134, 16
        %v7272 = vrot.slane %v7270, 5
        %v7273 = vor.u32 %v7269, %v7272
        %v7274 = vrot.slane %v7273, 4
        %v7276 = vshll.u32 %v7135, 16
        %v7278 = vrot.slane %v7276, 5
        %v7279 = vsel %vm1225, %v7274, %v7278
        %v7280 = vshrl.u32 %v7135, 16
        %v7282 = vrot.slane %v7280, 4
        %v7283 = vor.u32 %v7282, %v7278
        %v7284 = vrot.slane %v7283, 4
        %v7286 = vshll.u32 %v7136, 16
        %v7288 = vrot.slane %v7286, 5
        %v7289 = vsel %vm1225, %v7284, %v7288
        %v7291 = vshrl.u32 %v7137, 16
        %v7293 = vrot.slane %v7291, 4
        %v7294 = vshll.u32 %v7137, 16
        %v7296 = vrot.slane %v7294, 5
        %v7297 = vor.u32 %v7293, %v7296
        %v7298 = vrot.slane %v7297, 4
        %v7300 = vshll.u32 %v7138, 16
        %v7302 = vrot.slane %v7300, 5
        %v7303 = vsel %vm1225, %v7298, %v7302
        %v7304 = vshrl.u32 %v7138, 16
        %v7306 = vrot.slane %v7304, 4
        %v7307 = vor.u32 %v7306, %v7302
        %v7308 = vrot.slane %v7307, 4
        %v7310 = vshll.u32 %v7139, 16
        %v7312 = vrot.slane %v7310, 5
        %v7313 = vsel %vm1225, %v7308, %v7312
        %v7315 = vshrl.u32 %v7140, 16
        %v7317 = vrot.slane %v7315, 4
        %v7318 = vshll.u32 %v7140, 16
        %v7320 = vrot.slane %v7318, 5
        %v7321 = vor.u32 %v7317, %v7320
        %v7322 = vrot.slane %v7321, 4
        %v7324 = vshll.u32 %v7141, 16
        %v7326 = vrot.slane %v7324, 5
        %v7327 = vsel %vm1225, %v7322, %v7326
        %v7328 = vshrl.u32 %v7141, 16
        %v7330 = vrot.slane %v7328, 4
        %v7331 = vor.u32 %v7330, %v7326
        %v7332 = vrot.slane %v7331, 4
        %v7334 = vshll.u32 %v7142, 16
        %v7336 = vrot.slane %v7334, 5
        %v7337 = vsel %vm1225, %v7332, %v7336
        %v7339 = vshrl.u32 %v7143, 16
        %v7341 = vrot.slane %v7339, 4
        %v7342 = vshll.u32 %v7143, 16
        %v7344 = vrot.slane %v7342, 5
        %v7345 = vor.u32 %v7341, %v7344
        %v7346 = vrot.slane %v7345, 4
        %v7348 = vshll.u32 %v7144, 16
        %v7350 = vrot.slane %v7348, 5
        %v7351 = vsel %vm1225, %v7346, %v7350
        %v7352 = vshrl.u32 %v7144, 16
        %v7354 = vrot.slane %v7352, 4
        %v7355 = vor.u32 %v7354, %v7350
        %v7356 = vrot.slane %v7355, 4
        %v7358 = vshll.u32 %v7145, 16
        %v7360 = vrot.slane %v7358, 5
        %v7361 = vsel %vm1225, %v7356, %v7360
        %v7363 = vshrl.u32 %v7146, 16
        %v7365 = vrot.slane %v7363, 4
        %v7366 = vshll.u32 %v7146, 16
        %v7368 = vrot.slane %v7366, 5
        %v7369 = vor.u32 %v7365, %v7368
        %v7370 = vrot.slane %v7369, 4
        %v7372 = vshll.u32 %v7147, 16
        %v7374 = vrot.slane %v7372, 5
        %v7375 = vsel %vm1225, %v7370, %v7374
        %v7376 = vshrl.u32 %v7147, 16
        %v7378 = vrot.slane %v7376, 4
        %v7379 = vor.u32 %v7378, %v7374
        %v7380 = vrot.slane %v7379, 4
        %v7382 = vshll.u32 %v7148, 16
        %v7384 = vrot.slane %v7382, 5
        %v7385 = vsel %vm1225, %v7380, %v7384
        %v7387 = vshrl.u32 %v7149, 16
        %v7389 = vrot.slane %v7387, 4
        %v7390 = vshll.u32 %v7149, 16
        %v7392 = vrot.slane %v7390, 5
        %v7393 = vor.u32 %v7389, %v7392
        %v7394 = vrot.slane %v7393, 4
        %v7396 = vshll.u32 %v7150, 16
        %v7398 = vrot.slane %v7396, 5
        %v7399 = vsel %vm1225, %v7394, %v7398
        %v7400 = vshrl.u32 %v7150, 16
        %v7402 = vrot.slane %v7400, 4
        %v7403 = vor.u32 %v7402, %v7398
        %v7404 = vrot.slane %v7403, 4
        %v7406 = vshll.u32 %v7151, 16
        %v7408 = vrot.slane %v7406, 5
        %v7409 = vsel %vm1225, %v7404, %v7408
        %v7411 = vshrl.u32 %v7152, 16
        %v7413 = vrot.slane %v7411, 4
        %v7414 = vshll.u32 %v7152, 16
        %v7416 = vrot.slane %v7414, 5
        %v7417 = vor.u32 %v7413, %v7416
        %v7418 = vrot.slane %v7417, 4
        %v7420 = vshll.u32 %v7153, 16
        %v7422 = vrot.slane %v7420, 5
        %v7423 = vsel %vm1225, %v7418, %v7422
        %v7424 = vshrl.u32 %v7153, 16
        %v7426 = vrot.slane %v7424, 4
        %v7427 = vor.u32 %v7426, %v7422
        %v7428 = vrot.slane %v7427, 4
        %v7430 = vshll.u32 %v7154, 16
        %v7432 = vrot.slane %v7430, 5
        %v7433 = vsel %vm1225, %v7428, %v7432
        %v7435 = vshrl.u32 %v7155, 16
        %v7437 = vrot.slane %v7435, 4
        %v7438 = vshll.u32 %v7155, 16
        %v7440 = vrot.slane %v7438, 5
        %v7441 = vor.u32 %v7437, %v7440
        %v7442 = vrot.slane %v7441, 4
        %v7444 = vshll.u32 %v7156, 16
        %v7446 = vrot.slane %v7444, 5
        %v7447 = vsel %vm1225, %v7442, %v7446
        %v7448 = vshrl.u32 %v7156, 16
        %v7450 = vrot.slane %v7448, 4
        %v7451 = vor.u32 %v7450, %v7446
        %v7452 = vrot.slane %v7451, 4
        %v7454 = vshll.u32 %v7157, 16
        %v7456 = vrot.slane %v7454, 5
        %v7457 = vsel %vm1225, %v7452, %v7456
        %v7459 = vshrl.u32 %v7158, 16
        %v7461 = vrot.slane %v7459, 4
        %v7462 = vshll.u32 %v7158, 16
        %v7464 = vrot.slane %v7462, 5
        %v7465 = vor.u32 %v7461, %v7464
        %v7466 = vrot.slane %v7465, 4
        %v7468 = vshll.u32 %v7159, 16
        %v7470 = vrot.slane %v7468, 5
        %v7471 = vsel %vm1225, %v7466, %v7470
        %v7472 = vshrl.u32 %v7159, 16
        %v7474 = vrot.slane %v7472, 4
        %v7475 = vor.u32 %v7474, %v7470
        %v7476 = vrot.slane %v7475, 4
        %v7478 = vshll.u32 %v7160, 16
        %v7480 = vrot.slane %v7478, 5
        %v7481 = vsel %vm1225, %v7476, %v7480
        %v7483 = vshrl.u32 %v7161, 16
        %v7485 = vrot.slane %v7483, 4
        %v7486 = vshll.u32 %v7161, 16
        %v7488 = vrot.slane %v7486, 5
        %v7489 = vor.u32 %v7485, %v7488
        %v7490 = vrot.slane %v7489, 4
        %v7492 = vshll.u32 %v7162, 16
        %v7494 = vrot.slane %v7492, 5
        %v7495 = vsel %vm1225, %v7490, %v7494
        %v7496 = vshrl.u32 %v7162, 16
        %v7498 = vrot.slane %v7496, 4
        %v7499 = vor.u32 %v7498, %v7494
        %v7500 = vrot.slane %v7499, 4
        %v7502 = vshll.u32 %v7163, 16
        %v7504 = vrot.slane %v7502, 5
        %v7505 = vsel %vm1225, %v7500, %v7504
        %v7507 = vshrl.u32 %v7164, 16
        %v7509 = vrot.slane %v7507, 4
        %v7510 = vshll.u32 %v7164, 16
        %v7512 = vrot.slane %v7510, 5
        %v7513 = vor.u32 %v7509, %v7512
        %v7514 = vrot.slane %v7513, 4
        %v7516 = vshll.u32 %v7165, 16
        %v7518 = vrot.slane %v7516, 5
        %v7519 = vsel %vm1225, %v7514, %v7518
        %v7520 = vshrl.u32 %v7165, 16
        %v7522 = vrot.slane %v7520, 4
        %v7523 = vor.u32 %v7522, %v7518
        %v7524 = vrot.slane %v7523, 4
        %v7526 = vshll.u32 %v7166, 16
        %v7528 = vrot.slane %v7526, 5
        %v7529 = vsel %vm1225, %v7524, %v7528
        %v7531 = vshrl.u32 %v7167, 16
        %v7533 = vrot.slane %v7531, 4
        %v7534 = vshll.u32 %v7167, 16
        %v7536 = vrot.slane %v7534, 5
        %v7537 = vor.u32 %v7533, %v7536
        %v7538 = vrot.slane %v7537, 4
        %v7540 = vshll.u32 %v7168, 16
        %v7542 = vrot.slane %v7540, 5
        %v7543 = vsel %vm1225, %v7538, %v7542
        %v7544 = vshrl.u32 %v7168, 16
        %v7546 = vrot.slane %v7544, 4
        %v7547 = vor.u32 %v7546, %v7542
        %v7548 = vrot.slane %v7547, 4
        %v7550 = vshll.u32 %v7169, 16
        %v7552 = vrot.slane %v7550, 5
        %v7553 = vsel %vm1225, %v7548, %v7552
        %v7554 = vunpack.c.l.b16 %v7183
        %v7555 = vunpack.c.l.b16 %v7193
        %v7556 = vunpack.c.l.b16 %v7207
        %v7557 = vunpack.c.l.b16 %v7217
        %v7558 = vunpack.c.l.b16 %v7231
        %v7559 = vunpack.c.l.b16 %v7241
        %v7560 = vunpack.c.l.b16 %v7255
        %v7561 = vunpack.c.l.b16 %v7265
        %v7562 = vunpack.c.l.b16 %v7279
        %v7563 = vunpack.c.l.b16 %v7289
        %v7564 = vunpack.c.l.b16 %v7303
        %v7565 = vunpack.c.l.b16 %v7313
        %v7566 = vunpack.c.l.b16 %v7327
        %v7567 = vunpack.c.l.b16 %v7337
        %v7568 = vunpack.c.l.b16 %v7351
        %v7569 = vunpack.c.l.b16 %v7361
        %v7570 = vunpack.c.l.b16 %v7375
        %v7571 = vunpack.c.l.b16 %v7385
        %v7572 = vunpack.c.l.b16 %v7399
        %v7573 = vunpack.c.l.b16 %v7409
        %v7574 = vunpack.c.l.b16 %v7423
        %v7575 = vunpack.c.l.b16 %v7433
        %v7576 = vunpack.c.l.b16 %v7447
        %v7577 = vunpack.c.l.b16 %v7457
        %v7578 = vunpack.c.l.b16 %v7471
        %v7579 = vunpack.c.l.b16 %v7481
        %v7580 = vunpack.c.l.b16 %v7495
        %v7581 = vunpack.c.l.b16 %v7505
        %v7582 = vunpack.c.l.b16 %v7519
        %v7583 = vunpack.c.l.b16 %v7529
        %v7584 = vunpack.c.l.b16 %v7543
        %v7585 = vunpack.c.l.b16 %v7553
        %v7586 = vpack.c.b16 %v7555, %v7554
        %v7587 = vpack.c.b16 %v7557, %v7556
        %v7588 = vpack.c.b16 %v7559, %v7558
        %v7589 = vpack.c.b16 %v7561, %v7560
        %v7590 = vpack.c.b16 %v7563, %v7562
        %v7591 = vpack.c.b16 %v7565, %v7564
        %v7592 = vpack.c.b16 %v7567, %v7566
        %v7593 = vpack.c.b16 %v7569, %v7568
        %v7594 = vpack.c.b16 %v7571, %v7570
        %v7595 = vpack.c.b16 %v7573, %v7572
        %v7596 = vpack.c.b16 %v7575, %v7574
        %v7597 = vpack.c.b16 %v7577, %v7576
        %v7598 = vpack.c.b16 %v7579, %v7578
        %v7599 = vpack.c.b16 %v7581, %v7580
        %v7600 = vpack.c.b16 %v7583, %v7582
        %v7601 = vpack.c.b16 %v7585, %v7584
        %7618 = vst [vmem:[#allocation5 + $0x20] sm:$0xff] %v7586
        %7619 = vst [vmem:[#allocation5 + $0x68] sm:$0xff] %v7587
        %7620 = vst [vmem:[#allocation5 + $0xb0] sm:$0xff] %v7588
        %7621 = vst [vmem:[#allocation5 + $0xf8] sm:$0xff] %v7589
        %7622 = vst [vmem:[#allocation5 + $0x140] sm:$0xff] %v7590
        %7623 = vst [vmem:[#allocation5 + $0x188] sm:$0xff] %v7591
        %7624 = vst [vmem:[#allocation5 + $0x1d0] sm:$0xff] %v7592
        %7625 = vst [vmem:[#allocation5 + $0x218] sm:$0xff] %v7593
        %7626 = vst [vmem:[#allocation5 + $0x260] sm:$0xff] %v7594
        %7627 = vst [vmem:[#allocation5 + $0x2a8] sm:$0xff] %v7595
        %7628 = vst [vmem:[#allocation5 + $0x2f0] sm:$0xff] %v7596
        %7629 = vst [vmem:[#allocation5 + $0x338] sm:$0xff] %v7597
        %7630 = vst [vmem:[#allocation5 + $0x380] sm:$0xff] %v7598
        %7631 = vst [vmem:[#allocation5 + $0x3c8] sm:$0xff] %v7599
        %7632 = vst [vmem:[#allocation5 + $0x410] sm:$0xff] %v7600
        %7633 = vst [vmem:[#allocation5 + $0x458] sm:$0xff] %v7601
        %v7634 = vld [vmem:[%s5921] sm:$0xe]
        %v7635 = vld [vmem:[%s5921 + $0x4] sm:$0xf]
        %v7636 = vld [vmem:[%s5921 + $0x8] sm:$0x1]
        %v7637 = vld [vmem:[%s5921 + $0xc] sm:$0xe]
        %v7638 = vld [vmem:[%s5921 + $0x10] sm:$0xf]
        %v7639 = vld [vmem:[%s5921 + $0x14] sm:$0x1]
        %v7640 = vld [vmem:[%s5921 + $0x18] sm:$0xe]
        %v7641 = vld [vmem:[%s5921 + $0x1c] sm:$0xf]
        %v7642 = vld [vmem:[%s5921 + $0x20] sm:$0x1]
        %v7643 = vld [vmem:[%s5921 + $0x24] sm:$0xe]
        %v7644 = vld [vmem:[%s5921 + $0x28] sm:$0xf]
        %v7645 = vld [vmem:[%s5921 + $0x2c] sm:$0x1]
        %v7646 = vld [vmem:[%s5921 + $0x30] sm:$0xe]
        %v7647 = vld [vmem:[%s5921 + $0x34] sm:$0xf]
        %v7648 = vld [vmem:[%s5921 + $0x38] sm:$0x1]
        %v7649 = vld [vmem:[%s5921 + $0x3c] sm:$0xe]
        %v7650 = vld [vmem:[%s5921 + $0x40] sm:$0xf]
        %v7651 = vld [vmem:[%s5921 + $0x44] sm:$0x1]
        %v7652 = vld [vmem:[%s5921 + $0x48] sm:$0xe]
        %v7653 = vld [vmem:[%s5921 + $0x4c] sm:$0xf]
        %v7654 = vld [vmem:[%s5921 + $0x50] sm:$0x1]
        %v7655 = vld [vmem:[%s5921 + $0x54] sm:$0xe]
        %v7656 = vld [vmem:[%s5921 + $0x58] sm:$0xf]
        %v7657 = vld [vmem:[%s5921 + $0x5c] sm:$0x1]
        %v7658 = vld [vmem:[%s5921 + $0x60] sm:$0xe]
        %v7659 = vld [vmem:[%s5921 + $0x64] sm:$0xf]
        %v7660 = vld [vmem:[%s5921 + $0x68] sm:$0x1]
        %v7661 = vld [vmem:[%s5921 + $0x6c] sm:$0xe]
        %v7662 = vld [vmem:[%s5921 + $0x70] sm:$0xf]
        %v7663 = vld [vmem:[%s5921 + $0x74] sm:$0x1]
        %v7664 = vld [vmem:[%s5921 + $0x78] sm:$0xe]
        %v7665 = vld [vmem:[%s5921 + $0x7c] sm:$0xf]
        %v7666 = vld [vmem:[%s5921 + $0x80] sm:$0x1]
        %v7667 = vld [vmem:[%s5921 + $0x84] sm:$0xe]
        %v7668 = vld [vmem:[%s5921 + $0x88] sm:$0xf]
        %v7669 = vld [vmem:[%s5921 + $0x8c] sm:$0x1]
        %v7670 = vld [vmem:[%s5921 + $0x90] sm:$0xe]
        %v7671 = vld [vmem:[%s5921 + $0x94] sm:$0xf]
        %v7672 = vld [vmem:[%s5921 + $0x98] sm:$0x1]
        %v7673 = vld [vmem:[%s5921 + $0x9c] sm:$0xe]
        %v7674 = vld [vmem:[%s5921 + $0xa0] sm:$0xf]
        %v7675 = vld [vmem:[%s5921 + $0xa4] sm:$0x1]
        %v7676 = vld [vmem:[%s5921 + $0xa8] sm:$0xe]
        %v7677 = vld [vmem:[%s5921 + $0xac] sm:$0xf]
        %v7678 = vld [vmem:[%s5921 + $0xb0] sm:$0x1]
        %v7679 = vld [vmem:[%s5921 + $0xb4] sm:$0xe]
        %v7680 = vld [vmem:[%s5921 + $0xb8] sm:$0xf]
        %v7681 = vld [vmem:[%s5921 + $0xbc] sm:$0x1]
        %v7730 = vrot.slane %v7634, 5
        %v7731 = vrot.slane %v7730, 4
        %v7732 = vrot.slane %v7635, 5
        %v7733 = vsel %vm1788, %v7731, %v7732
        %v7734 = vrot.slane %v7732, 4
        %v7735 = vrot.slane %v7636, 5
        %v7736 = vsel %vm1788, %v7734, %v7735
        %v7737 = vrot.slane %v7637, 5
        %v7738 = vrot.slane %v7737, 4
        %v7739 = vrot.slane %v7638, 5
        %v7740 = vsel %vm1788, %v7738, %v7739
        %v7741 = vrot.slane %v7739, 4
        %v7742 = vrot.slane %v7639, 5
        %v7743 = vsel %vm1788, %v7741, %v7742
        %v7744 = vrot.slane %v7640, 5
        %v7745 = vrot.slane %v7744, 4
        %v7746 = vrot.slane %v7641, 5
        %v7747 = vsel %vm1788, %v7745, %v7746
        %v7748 = vrot.slane %v7746, 4
        %v7749 = vrot.slane %v7642, 5
        %v7750 = vsel %vm1788, %v7748, %v7749
        %v7751 = vrot.slane %v7643, 5
        %v7752 = vrot.slane %v7751, 4
        %v7753 = vrot.slane %v7644, 5
        %v7754 = vsel %vm1788, %v7752, %v7753
        %v7755 = vrot.slane %v7753, 4
        %v7756 = vrot.slane %v7645, 5
        %v7757 = vsel %vm1788, %v7755, %v7756
        %v7758 = vrot.slane %v7646, 5
        %v7759 = vrot.slane %v7758, 4
        %v7760 = vrot.slane %v7647, 5
        %v7761 = vsel %vm1788, %v7759, %v7760
        %v7762 = vrot.slane %v7760, 4
        %v7763 = vrot.slane %v7648, 5
        %v7764 = vsel %vm1788, %v7762, %v7763
        %v7765 = vrot.slane %v7649, 5
        %v7766 = vrot.slane %v7765, 4
        %v7767 = vrot.slane %v7650, 5
        %v7768 = vsel %vm1788, %v7766, %v7767
        %v7769 = vrot.slane %v7767, 4
        %v7770 = vrot.slane %v7651, 5
        %v7771 = vsel %vm1788, %v7769, %v7770
        %v7772 = vrot.slane %v7652, 5
        %v7773 = vrot.slane %v7772, 4
        %v7774 = vrot.slane %v7653, 5
        %v7775 = vsel %vm1788, %v7773, %v7774
        %v7776 = vrot.slane %v7774, 4
        %v7777 = vrot.slane %v7654, 5
        %v7778 = vsel %vm1788, %v7776, %v7777
        %v7779 = vrot.slane %v7655, 5
        %v7780 = vrot.slane %v7779, 4
        %v7781 = vrot.slane %v7656, 5
        %v7782 = vsel %vm1788, %v7780, %v7781
        %v7783 = vrot.slane %v7781, 4
        %v7784 = vrot.slane %v7657, 5
        %v7785 = vsel %vm1788, %v7783, %v7784
        %v7786 = vrot.slane %v7658, 5
        %v7787 = vrot.slane %v7786, 4
        %v7788 = vrot.slane %v7659, 5
        %v7789 = vsel %vm1788, %v7787, %v7788
        %v7790 = vrot.slane %v7788, 4
        %v7791 = vrot.slane %v7660, 5
        %v7792 = vsel %vm1788, %v7790, %v7791
        %v7793 = vrot.slane %v7661, 5
        %v7794 = vrot.slane %v7793, 4
        %v7795 = vrot.slane %v7662, 5
        %v7796 = vsel %vm1788, %v7794, %v7795
        %v7797 = vrot.slane %v7795, 4
        %v7798 = vrot.slane %v7663, 5
        %v7799 = vsel %vm1788, %v7797, %v7798
        %v7800 = vrot.slane %v7664, 5
        %v7801 = vrot.slane %v7800, 4
        %v7802 = vrot.slane %v7665, 5
        %v7803 = vsel %vm1788, %v7801, %v7802
        %v7804 = vrot.slane %v7802, 4
        %v7805 = vrot.slane %v7666, 5
        %v7806 = vsel %vm1788, %v7804, %v7805
        %v7807 = vrot.slane %v7667, 5
        %v7808 = vrot.slane %v7807, 4
        %v7809 = vrot.slane %v7668, 5
        %v7810 = vsel %vm1788, %v7808, %v7809
        %v7811 = vrot.slane %v7809, 4
        %v7812 = vrot.slane %v7669, 5
        %v7813 = vsel %vm1788, %v7811, %v7812
        %v7814 = vrot.slane %v7670, 5
        %v7815 = vrot.slane %v7814, 4
        %v7816 = vrot.slane %v7671, 5
        %v7817 = vsel %vm1788, %v7815, %v7816
        %v7818 = vrot.slane %v7816, 4
        %v7819 = vrot.slane %v7672, 5
        %v7820 = vsel %vm1788, %v7818, %v7819
        %v7821 = vrot.slane %v7673, 5
        %v7822 = vrot.slane %v7821, 4
        %v7823 = vrot.slane %v7674, 5
        %v7824 = vsel %vm1788, %v7822, %v7823
        %v7825 = vrot.slane %v7823, 4
        %v7826 = vrot.slane %v7675, 5
        %v7827 = vsel %vm1788, %v7825, %v7826
        %v7828 = vrot.slane %v7676, 5
        %v7829 = vrot.slane %v7828, 4
        %v7830 = vrot.slane %v7677, 5
        %v7831 = vsel %vm1788, %v7829, %v7830
        %v7832 = vrot.slane %v7830, 4
        %v7833 = vrot.slane %v7678, 5
        %v7834 = vsel %vm1788, %v7832, %v7833
        %v7835 = vrot.slane %v7679, 5
        %v7836 = vrot.slane %v7835, 4
        %v7837 = vrot.slane %v7680, 5
        %v7838 = vsel %vm1788, %v7836, %v7837
        %v7839 = vrot.slane %v7837, 4
        %v7840 = vrot.slane %v7681, 5
        %v7841 = vsel %vm1788, %v7839, %v7840
        %v7842 = vunpack.c.l.b16 %v7733
        %v7843 = vunpack.c.l.b16 %v7736
        %v7844 = vunpack.c.l.b16 %v7740
        %v7845 = vunpack.c.l.b16 %v7743
        %v7846 = vunpack.c.l.b16 %v7747
        %v7847 = vunpack.c.l.b16 %v7750
        %v7848 = vunpack.c.l.b16 %v7754
        %v7849 = vunpack.c.l.b16 %v7757
        %v7850 = vunpack.c.l.b16 %v7761
        %v7851 = vunpack.c.l.b16 %v7764
        %v7852 = vunpack.c.l.b16 %v7768
        %v7853 = vunpack.c.l.b16 %v7771
        %v7854 = vunpack.c.l.b16 %v7775
        %v7855 = vunpack.c.l.b16 %v7778
        %v7856 = vunpack.c.l.b16 %v7782
        %v7857 = vunpack.c.l.b16 %v7785
        %v7858 = vunpack.c.l.b16 %v7789
        %v7859 = vunpack.c.l.b16 %v7792
        %v7860 = vunpack.c.l.b16 %v7796
        %v7861 = vunpack.c.l.b16 %v7799
        %v7862 = vunpack.c.l.b16 %v7803
        %v7863 = vunpack.c.l.b16 %v7806
        %v7864 = vunpack.c.l.b16 %v7810
        %v7865 = vunpack.c.l.b16 %v7813
        %v7866 = vunpack.c.l.b16 %v7817
        %v7867 = vunpack.c.l.b16 %v7820
        %v7868 = vunpack.c.l.b16 %v7824
        %v7869 = vunpack.c.l.b16 %v7827
        %v7870 = vunpack.c.l.b16 %v7831
        %v7871 = vunpack.c.l.b16 %v7834
        %v7872 = vunpack.c.l.b16 %v7838
        %v7873 = vunpack.c.l.b16 %v7841
        %v7874 = vpack.c.b16 %v7843, %v7842
        %v7875 = vpack.c.b16 %v7845, %v7844
        %v7876 = vpack.c.b16 %v7847, %v7846
        %v7877 = vpack.c.b16 %v7849, %v7848
        %v7878 = vpack.c.b16 %v7851, %v7850
        %v7879 = vpack.c.b16 %v7853, %v7852
        %v7880 = vpack.c.b16 %v7855, %v7854
        %v7881 = vpack.c.b16 %v7857, %v7856
        %v7882 = vpack.c.b16 %v7859, %v7858
        %v7883 = vpack.c.b16 %v7861, %v7860
        %v7884 = vpack.c.b16 %v7863, %v7862
        %v7885 = vpack.c.b16 %v7865, %v7864
        %v7886 = vpack.c.b16 %v7867, %v7866
        %v7887 = vpack.c.b16 %v7869, %v7868
        %v7888 = vpack.c.b16 %v7871, %v7870
        %v7889 = vpack.c.b16 %v7873, %v7872
        %7906 = vst [vmem:[#allocation5 + $0x28] sm:$0xff] %v7874
        %7907 = vst [vmem:[#allocation5 + $0x70] sm:$0xff] %v7875
        %7908 = vst [vmem:[#allocation5 + $0xb8] sm:$0xff] %v7876
        %7909 = vst [vmem:[#allocation5 + $0x100] sm:$0xff] %v7877
        %7910 = vst [vmem:[#allocation5 + $0x148] sm:$0xff] %v7878
        %7911 = vst [vmem:[#allocation5 + $0x190] sm:$0xff] %v7879
        %7912 = vst [vmem:[#allocation5 + $0x1d8] sm:$0xff] %v7880
        %7913 = vst [vmem:[#allocation5 + $0x220] sm:$0xff] %v7881
        %7914 = vst [vmem:[#allocation5 + $0x268] sm:$0xff] %v7882
        %7915 = vst [vmem:[#allocation5 + $0x2b0] sm:$0xff] %v7883
        %7916 = vst [vmem:[#allocation5 + $0x2f8] sm:$0xff] %v7884
        %7917 = vst [vmem:[#allocation5 + $0x340] sm:$0xff] %v7885
        %7918 = vst [vmem:[#allocation5 + $0x388] sm:$0xff] %v7886
        %7919 = vst [vmem:[#allocation5 + $0x3d0] sm:$0xff] %v7887
        %7920 = vst [vmem:[#allocation5 + $0x418] sm:$0xff] %v7888
        %7921 = vst [vmem:[#allocation5 + $0x460] sm:$0xff] %v7889
        %s7922 = scalar_lea.vmem [#allocation4], 24
        %v7923 = vld [vmem:[%s7922] sm:$0xf]
        %v7924 = vld [vmem:[%s7922 + $0x4] sm:$0xf]
        %v7925 = vld [vmem:[%s7922 + $0xc] sm:$0xf]
        %v7926 = vld [vmem:[%s7922 + $0x10] sm:$0xf]
        %v7927 = vld [vmem:[%s7922 + $0x18] sm:$0xf]
        %v7928 = vld [vmem:[%s7922 + $0x1c] sm:$0xf]
        %v7929 = vld [vmem:[%s7922 + $0x24] sm:$0xf]
        %v7930 = vld [vmem:[%s7922 + $0x28] sm:$0xf]
        %v7931 = vld [vmem:[%s7922 + $0x30] sm:$0xf]
        %v7932 = vld [vmem:[%s7922 + $0x34] sm:$0xf]
        %v7933 = vld [vmem:[%s7922 + $0x3c] sm:$0xf]
        %v7934 = vld [vmem:[%s7922 + $0x40] sm:$0xf]
        %v7935 = vld [vmem:[%s7922 + $0x48] sm:$0xf]
        %v7936 = vld [vmem:[%s7922 + $0x4c] sm:$0xf]
        %v7937 = vld [vmem:[%s7922 + $0x54] sm:$0xf]
        %v7938 = vld [vmem:[%s7922 + $0x58] sm:$0xf]
        %v7939 = vld [vmem:[%s7922 + $0x60] sm:$0xf]
        %v7940 = vld [vmem:[%s7922 + $0x64] sm:$0xf]
        %v7941 = vld [vmem:[%s7922 + $0x6c] sm:$0xf]
        %v7942 = vld [vmem:[%s7922 + $0x70] sm:$0xf]
        %v7943 = vld [vmem:[%s7922 + $0x78] sm:$0xf]
        %v7944 = vld [vmem:[%s7922 + $0x7c] sm:$0xf]
        %v7945 = vld [vmem:[%s7922 + $0x84] sm:$0xf]
        %v7946 = vld [vmem:[%s7922 + $0x88] sm:$0xf]
        %v7947 = vld [vmem:[%s7922 + $0x90] sm:$0xf]
        %v7948 = vld [vmem:[%s7922 + $0x94] sm:$0xf]
        %v7949 = vld [vmem:[%s7922 + $0x9c] sm:$0xf]
        %v7950 = vld [vmem:[%s7922 + $0xa0] sm:$0xf]
        %v7951 = vld [vmem:[%s7922 + $0xa8] sm:$0xf]
        %v7952 = vld [vmem:[%s7922 + $0xac] sm:$0xf]
        %v7953 = vld [vmem:[%s7922 + $0xb4] sm:$0xf]
        %v7954 = vld [vmem:[%s7922 + $0xb8] sm:$0xf]
        %v7987 = vunpack.c.l.b16 %v7923
        %v7988 = vunpack.c.l.b16 %v7924
        %v7989 = vunpack.c.l.b16 %v7925
        %v7990 = vunpack.c.l.b16 %v7926
        %v7991 = vunpack.c.l.b16 %v7927
        %v7992 = vunpack.c.l.b16 %v7928
        %v7993 = vunpack.c.l.b16 %v7929
        %v7994 = vunpack.c.l.b16 %v7930
        %v7995 = vunpack.c.l.b16 %v7931
        %v7996 = vunpack.c.l.b16 %v7932
        %v7997 = vunpack.c.l.b16 %v7933
        %v7998 = vunpack.c.l.b16 %v7934
        %v7999 = vunpack.c.l.b16 %v7935
        %v8000 = vunpack.c.l.b16 %v7936
        %v8001 = vunpack.c.l.b16 %v7937
        %v8002 = vunpack.c.l.b16 %v7938
        %v8003 = vunpack.c.l.b16 %v7939
        %v8004 = vunpack.c.l.b16 %v7940
        %v8005 = vunpack.c.l.b16 %v7941
        %v8006 = vunpack.c.l.b16 %v7942
        %v8007 = vunpack.c.l.b16 %v7943
        %v8008 = vunpack.c.l.b16 %v7944
        %v8009 = vunpack.c.l.b16 %v7945
        %v8010 = vunpack.c.l.b16 %v7946
        %v8011 = vunpack.c.l.b16 %v7947
        %v8012 = vunpack.c.l.b16 %v7948
        %v8013 = vunpack.c.l.b16 %v7949
        %v8014 = vunpack.c.l.b16 %v7950
        %v8015 = vunpack.c.l.b16 %v7951
        %v8016 = vunpack.c.l.b16 %v7952
        %v8017 = vunpack.c.l.b16 %v7953
        %v8018 = vunpack.c.l.b16 %v7954
        %v8019 = vpack.c.b16 %v7988, %v7987
        %v8020 = vpack.c.b16 %v7990, %v7989
        %v8021 = vpack.c.b16 %v7992, %v7991
        %v8022 = vpack.c.b16 %v7994, %v7993
        %v8023 = vpack.c.b16 %v7996, %v7995
        %v8024 = vpack.c.b16 %v7998, %v7997
        %v8025 = vpack.c.b16 %v8000, %v7999
        %v8026 = vpack.c.b16 %v8002, %v8001
        %v8027 = vpack.c.b16 %v8004, %v8003
        %v8028 = vpack.c.b16 %v8006, %v8005
        %v8029 = vpack.c.b16 %v8008, %v8007
        %v8030 = vpack.c.b16 %v8010, %v8009
        %v8031 = vpack.c.b16 %v8012, %v8011
        %v8032 = vpack.c.b16 %v8014, %v8013
        %v8033 = vpack.c.b16 %v8016, %v8015
        %v8034 = vpack.c.b16 %v8018, %v8017
        %8051 = vst [vmem:[#allocation5 + $0x30] sm:$0xff] %v8019
        %8052 = vst [vmem:[#allocation5 + $0x78] sm:$0xff] %v8020
        %8053 = vst [vmem:[#allocation5 + $0xc0] sm:$0xff] %v8021
        %8054 = vst [vmem:[#allocation5 + $0x108] sm:$0xff] %v8022
        %8055 = vst [vmem:[#allocation5 + $0x150] sm:$0xff] %v8023
        %8056 = vst [vmem:[#allocation5 + $0x198] sm:$0xff] %v8024
        %8057 = vst [vmem:[#allocation5 + $0x1e0] sm:$0xff] %v8025
        %8058 = vst [vmem:[#allocation5 + $0x228] sm:$0xff] %v8026
        %8059 = vst [vmem:[#allocation5 + $0x270] sm:$0xff] %v8027
        %8060 = vst [vmem:[#allocation5 + $0x2b8] sm:$0xff] %v8028
        %8061 = vst [vmem:[#allocation5 + $0x300] sm:$0xff] %v8029
        %8062 = vst [vmem:[#allocation5 + $0x348] sm:$0xff] %v8030
        %8063 = vst [vmem:[#allocation5 + $0x390] sm:$0xff] %v8031
        %8064 = vst [vmem:[#allocation5 + $0x3d8] sm:$0xff] %v8032
        %8065 = vst [vmem:[#allocation5 + $0x420] sm:$0xff] %v8033
        %8066 = vst [vmem:[#allocation5 + $0x468] sm:$0xff] %v8034
        %v8067 = vld [vmem:[%s7922] sm:$0xf]
        %v8068 = vld [vmem:[%s7922 + $0x4] sm:$0xf]
        %v8069 = vld [vmem:[%s7922 + $0x8] sm:$0x1]
        %v8070 = vld [vmem:[%s7922 + $0xc] sm:$0xf]
        %v8071 = vld [vmem:[%s7922 + $0x10] sm:$0xf]
        %v8072 = vld [vmem:[%s7922 + $0x14] sm:$0x1]
        %v8073 = vld [vmem:[%s7922 + $0x18] sm:$0xf]
        %v8074 = vld [vmem:[%s7922 + $0x1c] sm:$0xf]
        %v8075 = vld [vmem:[%s7922 + $0x20] sm:$0x1]
        %v8076 = vld [vmem:[%s7922 + $0x24] sm:$0xf]
        %v8077 = vld [vmem:[%s7922 + $0x28] sm:$0xf]
        %v8078 = vld [vmem:[%s7922 + $0x2c] sm:$0x1]
        %v8079 = vld [vmem:[%s7922 + $0x30] sm:$0xf]
        %v8080 = vld [vmem:[%s7922 + $0x34] sm:$0xf]
        %v8081 = vld [vmem:[%s7922 + $0x38] sm:$0x1]
        %v8082 = vld [vmem:[%s7922 + $0x3c] sm:$0xf]
        %v8083 = vld [vmem:[%s7922 + $0x40] sm:$0xf]
        %v8084 = vld [vmem:[%s7922 + $0x44] sm:$0x1]
        %v8085 = vld [vmem:[%s7922 + $0x48] sm:$0xf]
        %v8086 = vld [vmem:[%s7922 + $0x4c] sm:$0xf]
        %v8087 = vld [vmem:[%s7922 + $0x50] sm:$0x1]
        %v8088 = vld [vmem:[%s7922 + $0x54] sm:$0xf]
        %v8089 = vld [vmem:[%s7922 + $0x58] sm:$0xf]
        %v8090 = vld [vmem:[%s7922 + $0x5c] sm:$0x1]
        %v8091 = vld [vmem:[%s7922 + $0x60] sm:$0xf]
        %v8092 = vld [vmem:[%s7922 + $0x64] sm:$0xf]
        %v8093 = vld [vmem:[%s7922 + $0x68] sm:$0x1]
        %v8094 = vld [vmem:[%s7922 + $0x6c] sm:$0xf]
        %v8095 = vld [vmem:[%s7922 + $0x70] sm:$0xf]
        %v8096 = vld [vmem:[%s7922 + $0x74] sm:$0x1]
        %v8097 = vld [vmem:[%s7922 + $0x78] sm:$0xf]
        %v8098 = vld [vmem:[%s7922 + $0x7c] sm:$0xf]
        %v8099 = vld [vmem:[%s7922 + $0x80] sm:$0x1]
        %v8100 = vld [vmem:[%s7922 + $0x84] sm:$0xf]
        %v8101 = vld [vmem:[%s7922 + $0x88] sm:$0xf]
        %v8102 = vld [vmem:[%s7922 + $0x8c] sm:$0x1]
        %v8103 = vld [vmem:[%s7922 + $0x90] sm:$0xf]
        %v8104 = vld [vmem:[%s7922 + $0x94] sm:$0xf]
        %v8105 = vld [vmem:[%s7922 + $0x98] sm:$0x1]
        %v8106 = vld [vmem:[%s7922 + $0x9c] sm:$0xf]
        %v8107 = vld [vmem:[%s7922 + $0xa0] sm:$0xf]
        %v8108 = vld [vmem:[%s7922 + $0xa4] sm:$0x1]
        %v8109 = vld [vmem:[%s7922 + $0xa8] sm:$0xf]
        %v8110 = vld [vmem:[%s7922 + $0xac] sm:$0xf]
        %v8111 = vld [vmem:[%s7922 + $0xb0] sm:$0x1]
        %v8112 = vld [vmem:[%s7922 + $0xb4] sm:$0xf]
        %v8113 = vld [vmem:[%s7922 + $0xb8] sm:$0xf]
        %v8114 = vld [vmem:[%s7922 + $0xbc] sm:$0x1]
        %v8116 = vshrl.u32 %v8067, 16
        %v8118 = vrot.slane %v8116, 4
        %v8119 = vshll.u32 %v8067, 16
        %v8121 = vrot.slane %v8119, 5
        %v8122 = vor.u32 %v8118, %v8121
        %v8123 = vrot.slane %v8122, 4
        %v8125 = vshll.u32 %v8068, 16
        %v8127 = vrot.slane %v8125, 5
        %v8128 = vsel %vm1225, %v8123, %v8127
        %v8129 = vshrl.u32 %v8068, 16
        %v8131 = vrot.slane %v8129, 4
        %v8132 = vor.u32 %v8131, %v8127
        %v8133 = vrot.slane %v8132, 4
        %v8135 = vshll.u32 %v8069, 16
        %v8137 = vrot.slane %v8135, 5
        %v8138 = vsel %vm1225, %v8133, %v8137
        %v8140 = vshrl.u32 %v8070, 16
        %v8142 = vrot.slane %v8140, 4
        %v8143 = vshll.u32 %v8070, 16
        %v8145 = vrot.slane %v8143, 5
        %v8146 = vor.u32 %v8142, %v8145
        %v8147 = vrot.slane %v8146, 4
        %v8149 = vshll.u32 %v8071, 16
        %v8151 = vrot.slane %v8149, 5
        %v8152 = vsel %vm1225, %v8147, %v8151
        %v8153 = vshrl.u32 %v8071, 16
        %v8155 = vrot.slane %v8153, 4
        %v8156 = vor.u32 %v8155, %v8151
        %v8157 = vrot.slane %v8156, 4
        %v8159 = vshll.u32 %v8072, 16
        %v8161 = vrot.slane %v8159, 5
        %v8162 = vsel %vm1225, %v8157, %v8161
        %v8164 = vshrl.u32 %v8073, 16
        %v8166 = vrot.slane %v8164, 4
        %v8167 = vshll.u32 %v8073, 16
        %v8169 = vrot.slane %v8167, 5
        %v8170 = vor.u32 %v8166, %v8169
        %v8171 = vrot.slane %v8170, 4
        %v8173 = vshll.u32 %v8074, 16
        %v8175 = vrot.slane %v8173, 5
        %v8176 = vsel %vm1225, %v8171, %v8175
        %v8177 = vshrl.u32 %v8074, 16
        %v8179 = vrot.slane %v8177, 4
        %v8180 = vor.u32 %v8179, %v8175
        %v8181 = vrot.slane %v8180, 4
        %v8183 = vshll.u32 %v8075, 16
        %v8185 = vrot.slane %v8183, 5
        %v8186 = vsel %vm1225, %v8181, %v8185
        %v8188 = vshrl.u32 %v8076, 16
        %v8190 = vrot.slane %v8188, 4
        %v8191 = vshll.u32 %v8076, 16
        %v8193 = vrot.slane %v8191, 5
        %v8194 = vor.u32 %v8190, %v8193
        %v8195 = vrot.slane %v8194, 4
        %v8197 = vshll.u32 %v8077, 16
        %v8199 = vrot.slane %v8197, 5
        %v8200 = vsel %vm1225, %v8195, %v8199
        %v8201 = vshrl.u32 %v8077, 16
        %v8203 = vrot.slane %v8201, 4
        %v8204 = vor.u32 %v8203, %v8199
        %v8205 = vrot.slane %v8204, 4
        %v8207 = vshll.u32 %v8078, 16
        %v8209 = vrot.slane %v8207, 5
        %v8210 = vsel %vm1225, %v8205, %v8209
        %v8212 = vshrl.u32 %v8079, 16
        %v8214 = vrot.slane %v8212, 4
        %v8215 = vshll.u32 %v8079, 16
        %v8217 = vrot.slane %v8215, 5
        %v8218 = vor.u32 %v8214, %v8217
        %v8219 = vrot.slane %v8218, 4
        %v8221 = vshll.u32 %v8080, 16
        %v8223 = vrot.slane %v8221, 5
        %v8224 = vsel %vm1225, %v8219, %v8223
        %v8225 = vshrl.u32 %v8080, 16
        %v8227 = vrot.slane %v8225, 4
        %v8228 = vor.u32 %v8227, %v8223
        %v8229 = vrot.slane %v8228, 4
        %v8231 = vshll.u32 %v8081, 16
        %v8233 = vrot.slane %v8231, 5
        %v8234 = vsel %vm1225, %v8229, %v8233
        %v8236 = vshrl.u32 %v8082, 16
        %v8238 = vrot.slane %v8236, 4
        %v8239 = vshll.u32 %v8082, 16
        %v8241 = vrot.slane %v8239, 5
        %v8242 = vor.u32 %v8238, %v8241
        %v8243 = vrot.slane %v8242, 4
        %v8245 = vshll.u32 %v8083, 16
        %v8247 = vrot.slane %v8245, 5
        %v8248 = vsel %vm1225, %v8243, %v8247
        %v8249 = vshrl.u32 %v8083, 16
        %v8251 = vrot.slane %v8249, 4
        %v8252 = vor.u32 %v8251, %v8247
        %v8253 = vrot.slane %v8252, 4
        %v8255 = vshll.u32 %v8084, 16
        %v8257 = vrot.slane %v8255, 5
        %v8258 = vsel %vm1225, %v8253, %v8257
        %v8260 = vshrl.u32 %v8085, 16
        %v8262 = vrot.slane %v8260, 4
        %v8263 = vshll.u32 %v8085, 16
        %v8265 = vrot.slane %v8263, 5
        %v8266 = vor.u32 %v8262, %v8265
        %v8267 = vrot.slane %v8266, 4
        %v8269 = vshll.u32 %v8086, 16
        %v8271 = vrot.slane %v8269, 5
        %v8272 = vsel %vm1225, %v8267, %v8271
        %v8273 = vshrl.u32 %v8086, 16
        %v8275 = vrot.slane %v8273, 4
        %v8276 = vor.u32 %v8275, %v8271
        %v8277 = vrot.slane %v8276, 4
        %v8279 = vshll.u32 %v8087, 16
        %v8281 = vrot.slane %v8279, 5
        %v8282 = vsel %vm1225, %v8277, %v8281
        %v8284 = vshrl.u32 %v8088, 16
        %v8286 = vrot.slane %v8284, 4
        %v8287 = vshll.u32 %v8088, 16
        %v8289 = vrot.slane %v8287, 5
        %v8290 = vor.u32 %v8286, %v8289
        %v8291 = vrot.slane %v8290, 4
        %v8293 = vshll.u32 %v8089, 16
        %v8295 = vrot.slane %v8293, 5
        %v8296 = vsel %vm1225, %v8291, %v8295
        %v8297 = vshrl.u32 %v8089, 16
        %v8299 = vrot.slane %v8297, 4
        %v8300 = vor.u32 %v8299, %v8295
        %v8301 = vrot.slane %v8300, 4
        %v8303 = vshll.u32 %v8090, 16
        %v8305 = vrot.slane %v8303, 5
        %v8306 = vsel %vm1225, %v8301, %v8305
        %v8308 = vshrl.u32 %v8091, 16
        %v8310 = vrot.slane %v8308, 4
        %v8311 = vshll.u32 %v8091, 16
        %v8313 = vrot.slane %v8311, 5
        %v8314 = vor.u32 %v8310, %v8313
        %v8315 = vrot.slane %v8314, 4
        %v8317 = vshll.u32 %v8092, 16
        %v8319 = vrot.slane %v8317, 5
        %v8320 = vsel %vm1225, %v8315, %v8319
        %v8321 = vshrl.u32 %v8092, 16
        %v8323 = vrot.slane %v8321, 4
        %v8324 = vor.u32 %v8323, %v8319
        %v8325 = vrot.slane %v8324, 4
        %v8327 = vshll.u32 %v8093, 16
        %v8329 = vrot.slane %v8327, 5
        %v8330 = vsel %vm1225, %v8325, %v8329
        %v8332 = vshrl.u32 %v8094, 16
        %v8334 = vrot.slane %v8332, 4
        %v8335 = vshll.u32 %v8094, 16
        %v8337 = vrot.slane %v8335, 5
        %v8338 = vor.u32 %v8334, %v8337
        %v8339 = vrot.slane %v8338, 4
        %v8341 = vshll.u32 %v8095, 16
        %v8343 = vrot.slane %v8341, 5
        %v8344 = vsel %vm1225, %v8339, %v8343
        %v8345 = vshrl.u32 %v8095, 16
        %v8347 = vrot.slane %v8345, 4
        %v8348 = vor.u32 %v8347, %v8343
        %v8349 = vrot.slane %v8348, 4
        %v8351 = vshll.u32 %v8096, 16
        %v8353 = vrot.slane %v8351, 5
        %v8354 = vsel %vm1225, %v8349, %v8353
        %v8356 = vshrl.u32 %v8097, 16
        %v8358 = vrot.slane %v8356, 4
        %v8359 = vshll.u32 %v8097, 16
        %v8361 = vrot.slane %v8359, 5
        %v8362 = vor.u32 %v8358, %v8361
        %v8363 = vrot.slane %v8362, 4
        %v8365 = vshll.u32 %v8098, 16
        %v8367 = vrot.slane %v8365, 5
        %v8368 = vsel %vm1225, %v8363, %v8367
        %v8369 = vshrl.u32 %v8098, 16
        %v8371 = vrot.slane %v8369, 4
        %v8372 = vor.u32 %v8371, %v8367
        %v8373 = vrot.slane %v8372, 4
        %v8375 = vshll.u32 %v8099, 16
        %v8377 = vrot.slane %v8375, 5
        %v8378 = vsel %vm1225, %v8373, %v8377
        %v8380 = vshrl.u32 %v8100, 16
        %v8382 = vrot.slane %v8380, 4
        %v8383 = vshll.u32 %v8100, 16
        %v8385 = vrot.slane %v8383, 5
        %v8386 = vor.u32 %v8382, %v8385
        %v8387 = vrot.slane %v8386, 4
        %v8389 = vshll.u32 %v8101, 16
        %v8391 = vrot.slane %v8389, 5
        %v8392 = vsel %vm1225, %v8387, %v8391
        %v8393 = vshrl.u32 %v8101, 16
        %v8395 = vrot.slane %v8393, 4
        %v8396 = vor.u32 %v8395, %v8391
        %v8397 = vrot.slane %v8396, 4
        %v8399 = vshll.u32 %v8102, 16
        %v8401 = vrot.slane %v8399, 5
        %v8402 = vsel %vm1225, %v8397, %v8401
        %v8404 = vshrl.u32 %v8103, 16
        %v8406 = vrot.slane %v8404, 4
        %v8407 = vshll.u32 %v8103, 16
        %v8409 = vrot.slane %v8407, 5
        %v8410 = vor.u32 %v8406, %v8409
        %v8411 = vrot.slane %v8410, 4
        %v8413 = vshll.u32 %v8104, 16
        %v8415 = vrot.slane %v8413, 5
        %v8416 = vsel %vm1225, %v8411, %v8415
        %v8417 = vshrl.u32 %v8104, 16
        %v8419 = vrot.slane %v8417, 4
        %v8420 = vor.u32 %v8419, %v8415
        %v8421 = vrot.slane %v8420, 4
        %v8423 = vshll.u32 %v8105, 16
        %v8425 = vrot.slane %v8423, 5
        %v8426 = vsel %vm1225, %v8421, %v8425
        %v8428 = vshrl.u32 %v8106, 16
        %v8430 = vrot.slane %v8428, 4
        %v8431 = vshll.u32 %v8106, 16
        %v8433 = vrot.slane %v8431, 5
        %v8434 = vor.u32 %v8430, %v8433
        %v8435 = vrot.slane %v8434, 4
        %v8437 = vshll.u32 %v8107, 16
        %v8439 = vrot.slane %v8437, 5
        %v8440 = vsel %vm1225, %v8435, %v8439
        %v8441 = vshrl.u32 %v8107, 16
        %v8443 = vrot.slane %v8441, 4
        %v8444 = vor.u32 %v8443, %v8439
        %v8445 = vrot.slane %v8444, 4
        %v8447 = vshll.u32 %v8108, 16
        %v8449 = vrot.slane %v8447, 5
        %v8450 = vsel %vm1225, %v8445, %v8449
        %v8452 = vshrl.u32 %v8109, 16
        %v8454 = vrot.slane %v8452, 4
        %v8455 = vshll.u32 %v8109, 16
        %v8457 = vrot.slane %v8455, 5
        %v8458 = vor.u32 %v8454, %v8457
        %v8459 = vrot.slane %v8458, 4
        %v8461 = vshll.u32 %v8110, 16
        %v8463 = vrot.slane %v8461, 5
        %v8464 = vsel %vm1225, %v8459, %v8463
        %v8465 = vshrl.u32 %v8110, 16
        %v8467 = vrot.slane %v8465, 4
        %v8468 = vor.u32 %v8467, %v8463
        %v8469 = vrot.slane %v8468, 4
        %v8471 = vshll.u32 %v8111, 16
        %v8473 = vrot.slane %v8471, 5
        %v8474 = vsel %vm1225, %v8469, %v8473
        %v8476 = vshrl.u32 %v8112, 16
        %v8478 = vrot.slane %v8476, 4
        %v8479 = vshll.u32 %v8112, 16
        %v8481 = vrot.slane %v8479, 5
        %v8482 = vor.u32 %v8478, %v8481
        %v8483 = vrot.slane %v8482, 4
        %v8485 = vshll.u32 %v8113, 16
        %v8487 = vrot.slane %v8485, 5
        %v8488 = vsel %vm1225, %v8483, %v8487
        %v8489 = vshrl.u32 %v8113, 16
        %v8491 = vrot.slane %v8489, 4
        %v8492 = vor.u32 %v8491, %v8487
        %v8493 = vrot.slane %v8492, 4
        %v8495 = vshll.u32 %v8114, 16
        %v8497 = vrot.slane %v8495, 5
        %v8498 = vsel %vm1225, %v8493, %v8497
        %v8499 = vunpack.c.l.b16 %v8128
        %v8500 = vunpack.c.l.b16 %v8138
        %v8501 = vunpack.c.l.b16 %v8152
        %v8502 = vunpack.c.l.b16 %v8162
        %v8503 = vunpack.c.l.b16 %v8176
        %v8504 = vunpack.c.l.b16 %v8186
        %v8505 = vunpack.c.l.b16 %v8200
        %v8506 = vunpack.c.l.b16 %v8210
        %v8507 = vunpack.c.l.b16 %v8224
        %v8508 = vunpack.c.l.b16 %v8234
        %v8509 = vunpack.c.l.b16 %v8248
        %v8510 = vunpack.c.l.b16 %v8258
        %v8511 = vunpack.c.l.b16 %v8272
        %v8512 = vunpack.c.l.b16 %v8282
        %v8513 = vunpack.c.l.b16 %v8296
        %v8514 = vunpack.c.l.b16 %v8306
        %v8515 = vunpack.c.l.b16 %v8320
        %v8516 = vunpack.c.l.b16 %v8330
        %v8517 = vunpack.c.l.b16 %v8344
        %v8518 = vunpack.c.l.b16 %v8354
        %v8519 = vunpack.c.l.b16 %v8368
        %v8520 = vunpack.c.l.b16 %v8378
        %v8521 = vunpack.c.l.b16 %v8392
        %v8522 = vunpack.c.l.b16 %v8402
        %v8523 = vunpack.c.l.b16 %v8416
        %v8524 = vunpack.c.l.b16 %v8426
        %v8525 = vunpack.c.l.b16 %v8440
        %v8526 = vunpack.c.l.b16 %v8450
        %v8527 = vunpack.c.l.b16 %v8464
        %v8528 = vunpack.c.l.b16 %v8474
        %v8529 = vunpack.c.l.b16 %v8488
        %v8530 = vunpack.c.l.b16 %v8498
        %v8531 = vpack.c.b16 %v8500, %v8499
        %v8532 = vpack.c.b16 %v8502, %v8501
        %v8533 = vpack.c.b16 %v8504, %v8503
        %v8534 = vpack.c.b16 %v8506, %v8505
        %v8535 = vpack.c.b16 %v8508, %v8507
        %v8536 = vpack.c.b16 %v8510, %v8509
        %v8537 = vpack.c.b16 %v8512, %v8511
        %v8538 = vpack.c.b16 %v8514, %v8513
        %v8539 = vpack.c.b16 %v8516, %v8515
        %v8540 = vpack.c.b16 %v8518, %v8517
        %v8541 = vpack.c.b16 %v8520, %v8519
        %v8542 = vpack.c.b16 %v8522, %v8521
        %v8543 = vpack.c.b16 %v8524, %v8523
        %v8544 = vpack.c.b16 %v8526, %v8525
        %v8545 = vpack.c.b16 %v8528, %v8527
        %v8546 = vpack.c.b16 %v8530, %v8529
        %8563 = vst [vmem:[#allocation5 + $0x38] sm:$0xff] %v8531
        %8564 = vst [vmem:[#allocation5 + $0x80] sm:$0xff] %v8532
        %8565 = vst [vmem:[#allocation5 + $0xc8] sm:$0xff] %v8533
        %8566 = vst [vmem:[#allocation5 + $0x110] sm:$0xff] %v8534
        %8567 = vst [vmem:[#allocation5 + $0x158] sm:$0xff] %v8535
        %8568 = vst [vmem:[#allocation5 + $0x1a0] sm:$0xff] %v8536
        %8569 = vst [vmem:[#allocation5 + $0x1e8] sm:$0xff] %v8537
        %8570 = vst [vmem:[#allocation5 + $0x230] sm:$0xff] %v8538
        %8571 = vst [vmem:[#allocation5 + $0x278] sm:$0xff] %v8539
        %8572 = vst [vmem:[#allocation5 + $0x2c0] sm:$0xff] %v8540
        %8573 = vst [vmem:[#allocation5 + $0x308] sm:$0xff] %v8541
        %8574 = vst [vmem:[#allocation5 + $0x350] sm:$0xff] %v8542
        %8575 = vst [vmem:[#allocation5 + $0x398] sm:$0xff] %v8543
        %8576 = vst [vmem:[#allocation5 + $0x3e0] sm:$0xff] %v8544
        %8577 = vst [vmem:[#allocation5 + $0x428] sm:$0xff] %v8545
        %8578 = vst [vmem:[#allocation5 + $0x470] sm:$0xff] %v8546
        %v8579 = vld [vmem:[%s7922] sm:$0xe]
        %v8580 = vld [vmem:[%s7922 + $0x4] sm:$0xf]
        %v8581 = vld [vmem:[%s7922 + $0x8] sm:$0x1]
        %v8582 = vld [vmem:[%s7922 + $0xc] sm:$0xe]
        %v8583 = vld [vmem:[%s7922 + $0x10] sm:$0xf]
        %v8584 = vld [vmem:[%s7922 + $0x14] sm:$0x1]
        %v8585 = vld [vmem:[%s7922 + $0x18] sm:$0xe]
        %v8586 = vld [vmem:[%s7922 + $0x1c] sm:$0xf]
        %v8587 = vld [vmem:[%s7922 + $0x20] sm:$0x1]
        %v8588 = vld [vmem:[%s7922 + $0x24] sm:$0xe]
        %v8589 = vld [vmem:[%s7922 + $0x28] sm:$0xf]
        %v8590 = vld [vmem:[%s7922 + $0x2c] sm:$0x1]
        %v8591 = vld [vmem:[%s7922 + $0x30] sm:$0xe]
        %v8592 = vld [vmem:[%s7922 + $0x34] sm:$0xf]
        %v8593 = vld [vmem:[%s7922 + $0x38] sm:$0x1]
        %v8594 = vld [vmem:[%s7922 + $0x3c] sm:$0xe]
        %v8595 = vld [vmem:[%s7922 + $0x40] sm:$0xf]
        %v8596 = vld [vmem:[%s7922 + $0x44] sm:$0x1]
        %v8597 = vld [vmem:[%s7922 + $0x48] sm:$0xe]
        %v8598 = vld [vmem:[%s7922 + $0x4c] sm:$0xf]
        %v8599 = vld [vmem:[%s7922 + $0x50] sm:$0x1]
        %v8600 = vld [vmem:[%s7922 + $0x54] sm:$0xe]
        %v8601 = vld [vmem:[%s7922 + $0x58] sm:$0xf]
        %v8602 = vld [vmem:[%s7922 + $0x5c] sm:$0x1]
        %v8603 = vld [vmem:[%s7922 + $0x60] sm:$0xe]
        %v8604 = vld [vmem:[%s7922 + $0x64] sm:$0xf]
        %v8605 = vld [vmem:[%s7922 + $0x68] sm:$0x1]
        %v8606 = vld [vmem:[%s7922 + $0x6c] sm:$0xe]
        %v8607 = vld [vmem:[%s7922 + $0x70] sm:$0xf]
        %v8608 = vld [vmem:[%s7922 + $0x74] sm:$0x1]
        %v8609 = vld [vmem:[%s7922 + $0x78] sm:$0xe]
        %v8610 = vld [vmem:[%s7922 + $0x7c] sm:$0xf]
        %v8611 = vld [vmem:[%s7922 + $0x80] sm:$0x1]
        %v8612 = vld [vmem:[%s7922 + $0x84] sm:$0xe]
        %v8613 = vld [vmem:[%s7922 + $0x88] sm:$0xf]
        %v8614 = vld [vmem:[%s7922 + $0x8c] sm:$0x1]
        %v8615 = vld [vmem:[%s7922 + $0x90] sm:$0xe]
        %v8616 = vld [vmem:[%s7922 + $0x94] sm:$0xf]
        %v8617 = vld [vmem:[%s7922 + $0x98] sm:$0x1]
        %v8618 = vld [vmem:[%s7922 + $0x9c] sm:$0xe]
        %v8619 = vld [vmem:[%s7922 + $0xa0] sm:$0xf]
        %v8620 = vld [vmem:[%s7922 + $0xa4] sm:$0x1]
        %v8621 = vld [vmem:[%s7922 + $0xa8] sm:$0xe]
        %v8622 = vld [vmem:[%s7922 + $0xac] sm:$0xf]
        %v8623 = vld [vmem:[%s7922 + $0xb0] sm:$0x1]
        %v8624 = vld [vmem:[%s7922 + $0xb4] sm:$0xe]
        %v8625 = vld [vmem:[%s7922 + $0xb8] sm:$0xf]
        %v8626 = vld [vmem:[%s7922 + $0xbc] sm:$0x1]
        %v8675 = vrot.slane %v8579, 5
        %v8676 = vrot.slane %v8675, 4
        %v8677 = vrot.slane %v8580, 5
        %v8678 = vsel %vm1788, %v8676, %v8677
        %v8679 = vrot.slane %v8677, 4
        %v8680 = vrot.slane %v8581, 5
        %v8681 = vsel %vm1788, %v8679, %v8680
        %v8682 = vrot.slane %v8582, 5
        %v8683 = vrot.slane %v8682, 4
        %v8684 = vrot.slane %v8583, 5
        %v8685 = vsel %vm1788, %v8683, %v8684
        %v8686 = vrot.slane %v8684, 4
        %v8687 = vrot.slane %v8584, 5
        %v8688 = vsel %vm1788, %v8686, %v8687
        %v8689 = vrot.slane %v8585, 5
        %v8690 = vrot.slane %v8689, 4
        %v8691 = vrot.slane %v8586, 5
        %v8692 = vsel %vm1788, %v8690, %v8691
        %v8693 = vrot.slane %v8691, 4
        %v8694 = vrot.slane %v8587, 5
        %v8695 = vsel %vm1788, %v8693, %v8694
        %v8696 = vrot.slane %v8588, 5
        %v8697 = vrot.slane %v8696, 4
        %v8698 = vrot.slane %v8589, 5
        %v8699 = vsel %vm1788, %v8697, %v8698
        %v8700 = vrot.slane %v8698, 4
        %v8701 = vrot.slane %v8590, 5
        %v8702 = vsel %vm1788, %v8700, %v8701
        %v8703 = vrot.slane %v8591, 5
        %v8704 = vrot.slane %v8703, 4
        %v8705 = vrot.slane %v8592, 5
        %v8706 = vsel %vm1788, %v8704, %v8705
        %v8707 = vrot.slane %v8705, 4
        %v8708 = vrot.slane %v8593, 5
        %v8709 = vsel %vm1788, %v8707, %v8708
        %v8710 = vrot.slane %v8594, 5
        %v8711 = vrot.slane %v8710, 4
        %v8712 = vrot.slane %v8595, 5
        %v8713 = vsel %vm1788, %v8711, %v8712
        %v8714 = vrot.slane %v8712, 4
        %v8715 = vrot.slane %v8596, 5
        %v8716 = vsel %vm1788, %v8714, %v8715
        %v8717 = vrot.slane %v8597, 5
        %v8718 = vrot.slane %v8717, 4
        %v8719 = vrot.slane %v8598, 5
        %v8720 = vsel %vm1788, %v8718, %v8719
        %v8721 = vrot.slane %v8719, 4
        %v8722 = vrot.slane %v8599, 5
        %v8723 = vsel %vm1788, %v8721, %v8722
        %v8724 = vrot.slane %v8600, 5
        %v8725 = vrot.slane %v8724, 4
        %v8726 = vrot.slane %v8601, 5
        %v8727 = vsel %vm1788, %v8725, %v8726
        %v8728 = vrot.slane %v8726, 4
        %v8729 = vrot.slane %v8602, 5
        %v8730 = vsel %vm1788, %v8728, %v8729
        %v8731 = vrot.slane %v8603, 5
        %v8732 = vrot.slane %v8731, 4
        %v8733 = vrot.slane %v8604, 5
        %v8734 = vsel %vm1788, %v8732, %v8733
        %v8735 = vrot.slane %v8733, 4
        %v8736 = vrot.slane %v8605, 5
        %v8737 = vsel %vm1788, %v8735, %v8736
        %v8738 = vrot.slane %v8606, 5
        %v8739 = vrot.slane %v8738, 4
        %v8740 = vrot.slane %v8607, 5
        %v8741 = vsel %vm1788, %v8739, %v8740
        %v8742 = vrot.slane %v8740, 4
        %v8743 = vrot.slane %v8608, 5
        %v8744 = vsel %vm1788, %v8742, %v8743
        %v8745 = vrot.slane %v8609, 5
        %v8746 = vrot.slane %v8745, 4
        %v8747 = vrot.slane %v8610, 5
        %v8748 = vsel %vm1788, %v8746, %v8747
        %v8749 = vrot.slane %v8747, 4
        %v8750 = vrot.slane %v8611, 5
        %v8751 = vsel %vm1788, %v8749, %v8750
        %v8752 = vrot.slane %v8612, 5
        %v8753 = vrot.slane %v8752, 4
        %v8754 = vrot.slane %v8613, 5
        %v8755 = vsel %vm1788, %v8753, %v8754
        %v8756 = vrot.slane %v8754, 4
        %v8757 = vrot.slane %v8614, 5
        %v8758 = vsel %vm1788, %v8756, %v8757
        %v8759 = vrot.slane %v8615, 5
        %v8760 = vrot.slane %v8759, 4
        %v8761 = vrot.slane %v8616, 5
        %v8762 = vsel %vm1788, %v8760, %v8761
        %v8763 = vrot.slane %v8761, 4
        %v8764 = vrot.slane %v8617, 5
        %v8765 = vsel %vm1788, %v8763, %v8764
        %v8766 = vrot.slane %v8618, 5
        %v8767 = vrot.slane %v8766, 4
        %v8768 = vrot.slane %v8619, 5
        %v8769 = vsel %vm1788, %v8767, %v8768
        %v8770 = vrot.slane %v8768, 4
        %v8771 = vrot.slane %v8620, 5
        %v8772 = vsel %vm1788, %v8770, %v8771
        %v8773 = vrot.slane %v8621, 5
        %v8774 = vrot.slane %v8773, 4
        %v8775 = vrot.slane %v8622, 5
        %v8776 = vsel %vm1788, %v8774, %v8775
        %v8777 = vrot.slane %v8775, 4
        %v8778 = vrot.slane %v8623, 5
        %v8779 = vsel %vm1788, %v8777, %v8778
        %v8780 = vrot.slane %v8624, 5
        %v8781 = vrot.slane %v8780, 4
        %v8782 = vrot.slane %v8625, 5
        %v8783 = vsel %vm1788, %v8781, %v8782
        %v8784 = vrot.slane %v8782, 4
        %v8785 = vrot.slane %v8626, 5
        %v8786 = vsel %vm1788, %v8784, %v8785
        %v8787 = vunpack.c.l.b16 %v8678
        %v8788 = vunpack.c.l.b16 %v8681
        %v8789 = vunpack.c.l.b16 %v8685
        %v8790 = vunpack.c.l.b16 %v8688
        %v8791 = vunpack.c.l.b16 %v8692
        %v8792 = vunpack.c.l.b16 %v8695
        %v8793 = vunpack.c.l.b16 %v8699
        %v8794 = vunpack.c.l.b16 %v8702
        %v8795 = vunpack.c.l.b16 %v8706
        %v8796 = vunpack.c.l.b16 %v8709
        %v8797 = vunpack.c.l.b16 %v8713
        %v8798 = vunpack.c.l.b16 %v8716
        %v8799 = vunpack.c.l.b16 %v8720
        %v8800 = vunpack.c.l.b16 %v8723
        %v8801 = vunpack.c.l.b16 %v8727
        %v8802 = vunpack.c.l.b16 %v8730
        %v8803 = vunpack.c.l.b16 %v8734
        %v8804 = vunpack.c.l.b16 %v8737
        %v8805 = vunpack.c.l.b16 %v8741
        %v8806 = vunpack.c.l.b16 %v8744
        %v8807 = vunpack.c.l.b16 %v8748
        %v8808 = vunpack.c.l.b16 %v8751
        %v8809 = vunpack.c.l.b16 %v8755
        %v8810 = vunpack.c.l.b16 %v8758
        %v8811 = vunpack.c.l.b16 %v8762
        %v8812 = vunpack.c.l.b16 %v8765
        %v8813 = vunpack.c.l.b16 %v8769
        %v8814 = vunpack.c.l.b16 %v8772
        %v8815 = vunpack.c.l.b16 %v8776
        %v8816 = vunpack.c.l.b16 %v8779
        %v8817 = vunpack.c.l.b16 %v8783
        %v8818 = vunpack.c.l.b16 %v8786
        %v8819 = vpack.c.b16 %v8788, %v8787
        %v8820 = vpack.c.b16 %v8790, %v8789
        %v8821 = vpack.c.b16 %v8792, %v8791
        %v8822 = vpack.c.b16 %v8794, %v8793
        %v8823 = vpack.c.b16 %v8796, %v8795
        %v8824 = vpack.c.b16 %v8798, %v8797
        %v8825 = vpack.c.b16 %v8800, %v8799
        %v8826 = vpack.c.b16 %v8802, %v8801
        %v8827 = vpack.c.b16 %v8804, %v8803
        %v8828 = vpack.c.b16 %v8806, %v8805
        %v8829 = vpack.c.b16 %v8808, %v8807
        %v8830 = vpack.c.b16 %v8810, %v8809
        %v8831 = vpack.c.b16 %v8812, %v8811
        %v8832 = vpack.c.b16 %v8814, %v8813
        %v8833 = vpack.c.b16 %v8816, %v8815
        %v8834 = vpack.c.b16 %v8818, %v8817
        %8851 = vst [vmem:[#allocation5 + $0x40] sm:$0xff] %v8819
        %8852 = vst [vmem:[#allocation5 + $0x88] sm:$0xff] %v8820
        %8853 = vst [vmem:[#allocation5 + $0xd0] sm:$0xff] %v8821
        %8854 = vst [vmem:[#allocation5 + $0x118] sm:$0xff] %v8822
        %8855 = vst [vmem:[#allocation5 + $0x160] sm:$0xff] %v8823
        %8856 = vst [vmem:[#allocation5 + $0x1a8] sm:$0xff] %v8824
        %8857 = vst [vmem:[#allocation5 + $0x1f0] sm:$0xff] %v8825
        %8858 = vst [vmem:[#allocation5 + $0x238] sm:$0xff] %v8826
        %8859 = vst [vmem:[#allocation5 + $0x280] sm:$0xff] %v8827
        %8860 = vst [vmem:[#allocation5 + $0x2c8] sm:$0xff] %v8828
        %8861 = vst [vmem:[#allocation5 + $0x310] sm:$0xff] %v8829
        %8862 = vst [vmem:[#allocation5 + $0x358] sm:$0xff] %v8830
        %8863 = vst [vmem:[#allocation5 + $0x3a0] sm:$0xff] %v8831
        %8864 = vst [vmem:[#allocation5 + $0x3e8] sm:$0xff] %v8832
        %8865 = vst [vmem:[#allocation5 + $0x430] sm:$0xff] %v8833
        %8866 = vst [vmem:[#allocation5 + $0x478] sm:$0xff] %v8834
        %v8867 = vld [vmem:[#allocation5] sm:$0xff]
        %v8868 = vld [vmem:[#allocation5 + $0x8] sm:$0xff]
        %v8869 = vld [vmem:[#allocation5 + $0x10] sm:$0xff]
        %v8870 = vld [vmem:[#allocation5 + $0x18] sm:$0xff]
        %v8871 = vld [vmem:[#allocation5 + $0x20] sm:$0xff]
        %v8872 = vld [vmem:[#allocation5 + $0x28] sm:$0xff]
        %v8873 = vld [vmem:[#allocation5 + $0x30] sm:$0xff]
        %v8874 = vld [vmem:[#allocation5 + $0x38] sm:$0xff]
        %v8875 = vld [vmem:[#allocation5 + $0x40] sm:$0xff]
        %v8876 = vld [vmem:[#allocation5 + $0x48] sm:$0xff]
        %v8877 = vld [vmem:[#allocation5 + $0x50] sm:$0xff]
        %v8878 = vld [vmem:[#allocation5 + $0x58] sm:$0xff]
        %v8879 = vld [vmem:[#allocation5 + $0x60] sm:$0xff]
        %v8880 = vld [vmem:[#allocation5 + $0x68] sm:$0xff]
        %v8881 = vld [vmem:[#allocation5 + $0x70] sm:$0xff]
        %v8882 = vld [vmem:[#allocation5 + $0x78] sm:$0xff]
        %v8883 = vld [vmem:[#allocation5 + $0x80] sm:$0xff]
        %v8884 = vld [vmem:[#allocation5 + $0x88] sm:$0xff]
        %v8885 = vld [vmem:[#allocation5 + $0x90] sm:$0xff]
        %v8886 = vld [vmem:[#allocation5 + $0x98] sm:$0xff]
        %v8887 = vld [vmem:[#allocation5 + $0xa0] sm:$0xff]
        %v8888 = vld [vmem:[#allocation5 + $0xa8] sm:$0xff]
        %v8889 = vld [vmem:[#allocation5 + $0xb0] sm:$0xff]
        %v8890 = vld [vmem:[#allocation5 + $0xb8] sm:$0xff]
        %v8891 = vld [vmem:[#allocation5 + $0xc0] sm:$0xff]
        %v8892 = vld [vmem:[#allocation5 + $0xc8] sm:$0xff]
        %v8893 = vld [vmem:[#allocation5 + $0xd0] sm:$0xff]
        %v8894 = vld [vmem:[#allocation5 + $0xd8] sm:$0xff]
        %v8895 = vld [vmem:[#allocation5 + $0xe0] sm:$0xff]
        %v8896 = vld [vmem:[#allocation5 + $0xe8] sm:$0xff]
        %v8897 = vld [vmem:[#allocation5 + $0xf0] sm:$0xff]
        %v8898 = vld [vmem:[#allocation5 + $0xf8] sm:$0xff]
        %v8899 = vld [vmem:[#allocation5 + $0x100] sm:$0xff]
        %v8900 = vld [vmem:[#allocation5 + $0x108] sm:$0xff]
        %v8901 = vld [vmem:[#allocation5 + $0x110] sm:$0xff]
        %v8902 = vld [vmem:[#allocation5 + $0x118] sm:$0xff]
        %v8903 = vld [vmem:[#allocation5 + $0x120] sm:$0xff]
        %v8904 = vld [vmem:[#allocation5 + $0x128] sm:$0xff]
        %v8905 = vld [vmem:[#allocation5 + $0x130] sm:$0xff]
        %v8906 = vld [vmem:[#allocation5 + $0x138] sm:$0xff]
        %v8907 = vld [vmem:[#allocation5 + $0x140] sm:$0xff]
        %v8908 = vld [vmem:[#allocation5 + $0x148] sm:$0xff]
        %v8909 = vld [vmem:[#allocation5 + $0x150] sm:$0xff]
        %v8910 = vld [vmem:[#allocation5 + $0x158] sm:$0xff]
        %v8911 = vld [vmem:[#allocation5 + $0x160] sm:$0xff]
        %v8912 = vld [vmem:[#allocation5 + $0x168] sm:$0xff]
        %v8913 = vld [vmem:[#allocation5 + $0x170] sm:$0xff]
        %v8914 = vld [vmem:[#allocation5 + $0x178] sm:$0xff]
        %v8915 = vld [vmem:[#allocation5 + $0x180] sm:$0xff]
        %v8916 = vld [vmem:[#allocation5 + $0x188] sm:$0xff]
        %v8917 = vld [vmem:[#allocation5 + $0x190] sm:$0xff]
        %v8918 = vld [vmem:[#allocation5 + $0x198] sm:$0xff]
        %v8919 = vld [vmem:[#allocation5 + $0x1a0] sm:$0xff]
        %v8920 = vld [vmem:[#allocation5 + $0x1a8] sm:$0xff]
        %v8921 = vld [vmem:[#allocation5 + $0x1b0] sm:$0xff]
        %v8922 = vld [vmem:[#allocation5 + $0x1b8] sm:$0xff]
        %v8923 = vld [vmem:[#allocation5 + $0x1c0] sm:$0xff]
        %v8924 = vld [vmem:[#allocation5 + $0x1c8] sm:$0xff]
        %v8925 = vld [vmem:[#allocation5 + $0x1d0] sm:$0xff]
        %v8926 = vld [vmem:[#allocation5 + $0x1d8] sm:$0xff]
        %v8927 = vld [vmem:[#allocation5 + $0x1e0] sm:$0xff]
        %v8928 = vld [vmem:[#allocation5 + $0x1e8] sm:$0xff]
        %v8929 = vld [vmem:[#allocation5 + $0x1f0] sm:$0xff]
        %v8930 = vld [vmem:[#allocation5 + $0x1f8] sm:$0xff]
        %v8931 = vld [vmem:[#allocation5 + $0x200] sm:$0xff]
        %v8932 = vld [vmem:[#allocation5 + $0x208] sm:$0xff]
        %v8933 = vld [vmem:[#allocation5 + $0x210] sm:$0xff]
        %v8934 = vld [vmem:[#allocation5 + $0x218] sm:$0xff]
        %v8935 = vld [vmem:[#allocation5 + $0x220] sm:$0xff]
        %v8936 = vld [vmem:[#allocation5 + $0x228] sm:$0xff]
        %v8937 = vld [vmem:[#allocation5 + $0x230] sm:$0xff]
        %v8938 = vld [vmem:[#allocation5 + $0x238] sm:$0xff]
        %v8939 = vld [vmem:[#allocation5 + $0x240] sm:$0xff]
        %v8940 = vld [vmem:[#allocation5 + $0x248] sm:$0xff]
        %v8941 = vld [vmem:[#allocation5 + $0x250] sm:$0xff]
        %v8942 = vld [vmem:[#allocation5 + $0x258] sm:$0xff]
        %v8943 = vld [vmem:[#allocation5 + $0x260] sm:$0xff]
        %v8944 = vld [vmem:[#allocation5 + $0x268] sm:$0xff]
        %v8945 = vld [vmem:[#allocation5 + $0x270] sm:$0xff]
        %v8946 = vld [vmem:[#allocation5 + $0x278] sm:$0xff]
        %v8947 = vld [vmem:[#allocation5 + $0x280] sm:$0xff]
        %v8948 = vld [vmem:[#allocation5 + $0x288] sm:$0xff]
        %v8949 = vld [vmem:[#allocation5 + $0x290] sm:$0xff]
        %v8950 = vld [vmem:[#allocation5 + $0x298] sm:$0xff]
        %v8951 = vld [vmem:[#allocation5 + $0x2a0] sm:$0xff]
        %v8952 = vld [vmem:[#allocation5 + $0x2a8] sm:$0xff]
        %v8953 = vld [vmem:[#allocation5 + $0x2b0] sm:$0xff]
        %v8954 = vld [vmem:[#allocation5 + $0x2b8] sm:$0xff]
        %v8955 = vld [vmem:[#allocation5 + $0x2c0] sm:$0xff]
        %v8956 = vld [vmem:[#allocation5 + $0x2c8] sm:$0xff]
        %v8957 = vld [vmem:[#allocation5 + $0x2d0] sm:$0xff]
        %v8958 = vld [vmem:[#allocation5 + $0x2d8] sm:$0xff]
        %v8959 = vld [vmem:[#allocation5 + $0x2e0] sm:$0xff]
        %v8960 = vld [vmem:[#allocation5 + $0x2e8] sm:$0xff]
        %v8961 = vld [vmem:[#allocation5 + $0x2f0] sm:$0xff]
        %v8962 = vld [vmem:[#allocation5 + $0x2f8] sm:$0xff]
        %v8963 = vld [vmem:[#allocation5 + $0x300] sm:$0xff]
        %v8964 = vld [vmem:[#allocation5 + $0x308] sm:$0xff]
        %v8965 = vld [vmem:[#allocation5 + $0x310] sm:$0xff]
        %v8966 = vld [vmem:[#allocation5 + $0x318] sm:$0xff]
        %v8967 = vld [vmem:[#allocation5 + $0x320] sm:$0xff]
        %v8968 = vld [vmem:[#allocation5 + $0x328] sm:$0xff]
        %v8969 = vld [vmem:[#allocation5 + $0x330] sm:$0xff]
        %v8970 = vld [vmem:[#allocation5 + $0x338] sm:$0xff]
        %v8971 = vld [vmem:[#allocation5 + $0x340] sm:$0xff]
        %v8972 = vld [vmem:[#allocation5 + $0x348] sm:$0xff]
        %v8973 = vld [vmem:[#allocation5 + $0x350] sm:$0xff]
        %v8974 = vld [vmem:[#allocation5 + $0x358] sm:$0xff]
        %v8975 = vld [vmem:[#allocation5 + $0x360] sm:$0xff]
        %v8976 = vld [vmem:[#allocation5 + $0x368] sm:$0xff]
        %v8977 = vld [vmem:[#allocation5 + $0x370] sm:$0xff]
        %v8978 = vld [vmem:[#allocation5 + $0x378] sm:$0xff]
        %v8979 = vld [vmem:[#allocation5 + $0x380] sm:$0xff]
        %v8980 = vld [vmem:[#allocation5 + $0x388] sm:$0xff]
        %v8981 = vld [vmem:[#allocation5 + $0x390] sm:$0xff]
        %v8982 = vld [vmem:[#allocation5 + $0x398] sm:$0xff]
        %v8983 = vld [vmem:[#allocation5 + $0x3a0] sm:$0xff]
        %v8984 = vld [vmem:[#allocation5 + $0x3a8] sm:$0xff]
        %v8985 = vld [vmem:[#allocation5 + $0x3b0] sm:$0xff]
        %v8986 = vld [vmem:[#allocation5 + $0x3b8] sm:$0xff]
        %v8987 = vld [vmem:[#allocation5 + $0x3c0] sm:$0xff]
        %v8988 = vld [vmem:[#allocation5 + $0x3c8] sm:$0xff]
        %v8989 = vld [vmem:[#allocation5 + $0x3d0] sm:$0xff]
        %v8990 = vld [vmem:[#allocation5 + $0x3d8] sm:$0xff]
        %v8991 = vld [vmem:[#allocation5 + $0x3e0] sm:$0xff]
        %v8992 = vld [vmem:[#allocation5 + $0x3e8] sm:$0xff]
        %v8993 = vld [vmem:[#allocation5 + $0x3f0] sm:$0xff]
        %v8994 = vld [vmem:[#allocation5 + $0x3f8] sm:$0xff]
        %v8995 = vld [vmem:[#allocation5 + $0x400] sm:$0xff]
        %v8996 = vld [vmem:[#allocation5 + $0x408] sm:$0xff]
        %v8997 = vld [vmem:[#allocation5 + $0x410] sm:$0xff]
        %v8998 = vld [vmem:[#allocation5 + $0x418] sm:$0xff]
        %v8999 = vld [vmem:[#allocation5 + $0x420] sm:$0xff]
        %v9000 = vld [vmem:[#allocation5 + $0x428] sm:$0xff]
        %v9001 = vld [vmem:[#allocation5 + $0x430] sm:$0xff]
        %v9002 = vld [vmem:[#allocation5 + $0x438] sm:$0xff]
        %v9003 = vld [vmem:[#allocation5 + $0x440] sm:$0xff]
        %v9004 = vld [vmem:[#allocation5 + $0x448] sm:$0xff]
        %v9005 = vld [vmem:[#allocation5 + $0x450] sm:$0xff]
        %v9006 = vld [vmem:[#allocation5 + $0x458] sm:$0xff]
        %v9007 = vld [vmem:[#allocation5 + $0x460] sm:$0xff]
        %v9008 = vld [vmem:[#allocation5 + $0x468] sm:$0xff]
        %v9009 = vld [vmem:[#allocation5 + $0x470] sm:$0xff]
        %v9010 = vld [vmem:[#allocation5 + $0x478] sm:$0xff]
        %v9011 = vld [vmem:[#allocation11] sm:$0xf]
        %v9012 = vld [vmem:[#allocation11 + $0x4] sm:$0xf]
        %v9013 = vld [vmem:[#allocation11 + $0x8] sm:$0xf]
        %v9014 = vld [vmem:[#allocation11 + $0xc] sm:$0xf]
        %v9015 = vld [vmem:[#allocation11 + $0x10] sm:$0xf]
        %v9016 = vld [vmem:[#allocation11 + $0x14] sm:$0xf]
        %v9017 = vld [vmem:[#allocation11 + $0x18] sm:$0xf]
        %v9018 = vld [vmem:[#allocation11 + $0x1c] sm:$0xf]
        %v9019 = vld [vmem:[#allocation11 + $0x20] sm:$0xf]
        %v9020 = vld [vmem:[#allocation11 + $0x24] sm:$0xf]
        %v9021 = vld [vmem:[#allocation11 + $0x28] sm:$0xf]
        %v9022 = vld [vmem:[#allocation11 + $0x2c] sm:$0xf]
        %v9023 = vld [vmem:[#allocation11 + $0x30] sm:$0xf]
        %v9024 = vld [vmem:[#allocation11 + $0x34] sm:$0xf]
        %v9025 = vld [vmem:[#allocation11 + $0x38] sm:$0xf]
        %v9026 = vld [vmem:[#allocation11 + $0x3c] sm:$0xf]
        %v9027 = vld [vmem:[#allocation11 + $0x40] sm:$0xf]
        %v9028 = vld [vmem:[#allocation11 + $0x44] sm:$0xf]
        %v9029 = vld [vmem:[#allocation11 + $0x48] sm:$0xf]
        %v9030 = vld [vmem:[#allocation11 + $0x4c] sm:$0xf]
        %v9031 = vld [vmem:[#allocation11 + $0x50] sm:$0xf]
        %v9032 = vld [vmem:[#allocation11 + $0x54] sm:$0xf]
        %v9033 = vld [vmem:[#allocation11 + $0x58] sm:$0xf]
        %v9034 = vld [vmem:[#allocation11 + $0x5c] sm:$0xf]
        %v9035 = vld [vmem:[#allocation11 + $0x60] sm:$0xf]
        %v9036 = vld [vmem:[#allocation11 + $0x64] sm:$0xf]
        %v9037 = vld [vmem:[#allocation11 + $0x68] sm:$0xf]
        %v9038 = vld [vmem:[#allocation11 + $0x6c] sm:$0xf]
        %v9039 = vld [vmem:[#allocation11 + $0x70] sm:$0xf]
        %v9040 = vld [vmem:[#allocation11 + $0x74] sm:$0xf]
        %v9041 = vld [vmem:[#allocation11 + $0x78] sm:$0xf]
        %v9042 = vld [vmem:[#allocation11 + $0x7c] sm:$0xf]
        %v9043 = vld [vmem:[#allocation11 + $0x80] sm:$0xf]
        %v9044 = vld [vmem:[#allocation11 + $0x84] sm:$0xf]
        %v9045 = vld [vmem:[#allocation11 + $0x88] sm:$0xf]
        %v9046 = vld [vmem:[#allocation11 + $0x8c] sm:$0xf]
        %v9047 = vld [vmem:[#allocation11 + $0x90] sm:$0xf]
        %v9048 = vld [vmem:[#allocation11 + $0x94] sm:$0xf]
        %v9049 = vld [vmem:[#allocation11 + $0x98] sm:$0xf]
        %v9050 = vld [vmem:[#allocation11 + $0x9c] sm:$0xf]
        %v9051 = vld [vmem:[#allocation11 + $0xa0] sm:$0xf]
        %v9052 = vld [vmem:[#allocation11 + $0xa4] sm:$0xf]
        %v9053 = vld [vmem:[#allocation11 + $0xa8] sm:$0xf]
        %v9054 = vld [vmem:[#allocation11 + $0xac] sm:$0xf]
        %v9055 = vld [vmem:[#allocation11 + $0xb0] sm:$0xf]
        %v9056 = vld [vmem:[#allocation11 + $0xb4] sm:$0xf]
        %v9057 = vld [vmem:[#allocation11 + $0xb8] sm:$0xf]
        %v9058 = vld [vmem:[#allocation11 + $0xbc] sm:$0xf]
        %v9059 = vld [vmem:[#allocation11 + $0xc0] sm:$0xf]
        %v9060 = vld [vmem:[#allocation11 + $0xc4] sm:$0xf]
        %v9061 = vld [vmem:[#allocation11 + $0xc8] sm:$0xf]
        %v9062 = vld [vmem:[#allocation11 + $0xcc] sm:$0xf]
        %v9063 = vld [vmem:[#allocation11 + $0xd0] sm:$0xf]
        %v9064 = vld [vmem:[#allocation11 + $0xd4] sm:$0xf]
        %v9065 = vld [vmem:[#allocation11 + $0xd8] sm:$0xf]
        %v9066 = vld [vmem:[#allocation11 + $0xdc] sm:$0xf]
        %v9067 = vld [vmem:[#allocation11 + $0xe0] sm:$0xf]
        %v9068 = vld [vmem:[#allocation11 + $0xe4] sm:$0xf]
        %v9069 = vld [vmem:[#allocation11 + $0xe8] sm:$0xf]
        %v9070 = vld [vmem:[#allocation11 + $0xec] sm:$0xf]
        %v9071 = vld [vmem:[#allocation11 + $0xf0] sm:$0xf]
        %v9072 = vld [vmem:[#allocation11 + $0xf4] sm:$0xf]
        %v9073 = vld [vmem:[#allocation11 + $0xf8] sm:$0xf]
        %v9074 = vld [vmem:[#allocation11 + $0xfc] sm:$0xf]
        %v9075 = vld [vmem:[#allocation11 + $0x100] sm:$0xf]
        %v9076 = vld [vmem:[#allocation11 + $0x104] sm:$0xf]
        %v9077 = vld [vmem:[#allocation11 + $0x108] sm:$0xf]
        %v9078 = vld [vmem:[#allocation11 + $0x10c] sm:$0xf]
        %v9079 = vld [vmem:[#allocation11 + $0x110] sm:$0xf]
        %v9080 = vld [vmem:[#allocation11 + $0x114] sm:$0xf]
        %v9081 = vld [vmem:[#allocation11 + $0x118] sm:$0xf]
        %v9082 = vld [vmem:[#allocation11 + $0x11c] sm:$0xf]
        %v9083 = vld [vmem:[#allocation11 + $0x120] sm:$0xf]
        %v9084 = vld [vmem:[#allocation11 + $0x124] sm:$0xf]
        %v9085 = vld [vmem:[#allocation11 + $0x128] sm:$0xf]
        %v9086 = vld [vmem:[#allocation11 + $0x12c] sm:$0xf]
        %v9087 = vld [vmem:[#allocation11 + $0x130] sm:$0xf]
        %v9088 = vld [vmem:[#allocation11 + $0x134] sm:$0xf]
        %v9089 = vld [vmem:[#allocation11 + $0x138] sm:$0xf]
        %v9090 = vld [vmem:[#allocation11 + $0x13c] sm:$0xf]
        %v9091 = vld [vmem:[#allocation11 + $0x140] sm:$0xf]
        %v9092 = vld [vmem:[#allocation11 + $0x144] sm:$0xf]
        %v9093 = vld [vmem:[#allocation11 + $0x148] sm:$0xf]
        %v9094 = vld [vmem:[#allocation11 + $0x14c] sm:$0xf]
        %v9095 = vld [vmem:[#allocation11 + $0x150] sm:$0xf]
        %v9096 = vld [vmem:[#allocation11 + $0x154] sm:$0xf]
        %v9097 = vld [vmem:[#allocation11 + $0x158] sm:$0xf]
        %v9098 = vld [vmem:[#allocation11 + $0x15c] sm:$0xf]
        %v9099 = vld [vmem:[#allocation11 + $0x160] sm:$0xf]
        %v9100 = vld [vmem:[#allocation11 + $0x164] sm:$0xf]
        %v9101 = vld [vmem:[#allocation11 + $0x168] sm:$0xf]
        %v9102 = vld [vmem:[#allocation11 + $0x16c] sm:$0xf]
        %v9103 = vld [vmem:[#allocation11 + $0x170] sm:$0xf]
        %v9104 = vld [vmem:[#allocation11 + $0x174] sm:$0xf]
        %v9105 = vld [vmem:[#allocation11 + $0x178] sm:$0xf]
        %v9106 = vld [vmem:[#allocation11 + $0x17c] sm:$0xf]
        %v9107 = vld [vmem:[#allocation11 + $0x180] sm:$0xf]
        %v9108 = vld [vmem:[#allocation11 + $0x184] sm:$0xf]
        %v9109 = vld [vmem:[#allocation11 + $0x188] sm:$0xf]
        %v9110 = vld [vmem:[#allocation11 + $0x18c] sm:$0xf]
        %v9111 = vld [vmem:[#allocation11 + $0x190] sm:$0xf]
        %v9112 = vld [vmem:[#allocation11 + $0x194] sm:$0xf]
        %v9113 = vld [vmem:[#allocation11 + $0x198] sm:$0xf]
        %v9114 = vld [vmem:[#allocation11 + $0x19c] sm:$0xf]
        %v9115 = vld [vmem:[#allocation11 + $0x1a0] sm:$0xf]
        %v9116 = vld [vmem:[#allocation11 + $0x1a4] sm:$0xf]
        %v9117 = vld [vmem:[#allocation11 + $0x1a8] sm:$0xf]
        %v9118 = vld [vmem:[#allocation11 + $0x1ac] sm:$0xf]
        %v9119 = vld [vmem:[#allocation11 + $0x1b0] sm:$0xf]
        %v9120 = vld [vmem:[#allocation11 + $0x1b4] sm:$0xf]
        %v9121 = vld [vmem:[#allocation11 + $0x1b8] sm:$0xf]
        %v9122 = vld [vmem:[#allocation11 + $0x1bc] sm:$0xf]
        %v9123 = vld [vmem:[#allocation11 + $0x1c0] sm:$0xf]
        %v9124 = vld [vmem:[#allocation11 + $0x1c4] sm:$0xf]
        %v9125 = vld [vmem:[#allocation11 + $0x1c8] sm:$0xf]
        %v9126 = vld [vmem:[#allocation11 + $0x1cc] sm:$0xf]
        %v9127 = vld [vmem:[#allocation11 + $0x1d0] sm:$0xf]
        %v9128 = vld [vmem:[#allocation11 + $0x1d4] sm:$0xf]
        %v9129 = vld [vmem:[#allocation11 + $0x1d8] sm:$0xf]
        %v9130 = vld [vmem:[#allocation11 + $0x1dc] sm:$0xf]
        %v9131 = vld [vmem:[#allocation11 + $0x1e0] sm:$0xf]
        %v9132 = vld [vmem:[#allocation11 + $0x1e4] sm:$0xf]
        %v9133 = vld [vmem:[#allocation11 + $0x1e8] sm:$0xf]
        %v9134 = vld [vmem:[#allocation11 + $0x1ec] sm:$0xf]
        %v9135 = vld [vmem:[#allocation11 + $0x1f0] sm:$0xf]
        %v9136 = vld [vmem:[#allocation11 + $0x1f4] sm:$0xf]
        %v9137 = vld [vmem:[#allocation11 + $0x1f8] sm:$0xf]
        %v9138 = vld [vmem:[#allocation11 + $0x1fc] sm:$0xf]
        %v9139 = vld [vmem:[#allocation11 + $0x200] sm:$0xf]
        %v9140 = vld [vmem:[#allocation11 + $0x204] sm:$0xf]
        %v9141 = vld [vmem:[#allocation11 + $0x208] sm:$0xf]
        %v9142 = vld [vmem:[#allocation11 + $0x20c] sm:$0xf]
        %v9143 = vld [vmem:[#allocation11 + $0x210] sm:$0xf]
        %v9144 = vld [vmem:[#allocation11 + $0x214] sm:$0xf]
        %v9145 = vld [vmem:[#allocation11 + $0x218] sm:$0xf]
        %v9146 = vld [vmem:[#allocation11 + $0x21c] sm:$0xf]
        %v9147 = vld [vmem:[#allocation11 + $0x220] sm:$0xf]
        %v9148 = vld [vmem:[#allocation11 + $0x224] sm:$0xf]
        %v9149 = vld [vmem:[#allocation11 + $0x228] sm:$0xf]
        %v9150 = vld [vmem:[#allocation11 + $0x22c] sm:$0xf]
        %v9151 = vld [vmem:[#allocation11 + $0x230] sm:$0xf]
        %v9152 = vld [vmem:[#allocation11 + $0x234] sm:$0xf]
        %v9153 = vld [vmem:[#allocation11 + $0x238] sm:$0xf]
        %v9154 = vld [vmem:[#allocation11 + $0x23c] sm:$0xf]
        %v9299 = vunpack.c.l.b16 %v9011
        %v9300 = vunpack.c.l.b16 %v9012
        %v9301 = vunpack.c.l.b16 %v9013
        %v9302 = vunpack.c.l.b16 %v9014
        %v9303 = vunpack.c.l.b16 %v9015
        %v9304 = vunpack.c.l.b16 %v9016
        %v9305 = vunpack.c.l.b16 %v9017
        %v9306 = vunpack.c.l.b16 %v9018
        %v9307 = vunpack.c.l.b16 %v9019
        %v9308 = vunpack.c.l.b16 %v9020
        %v9309 = vunpack.c.l.b16 %v9021
        %v9310 = vunpack.c.l.b16 %v9022
        %v9311 = vunpack.c.l.b16 %v9023
        %v9312 = vunpack.c.l.b16 %v9024
        %v9313 = vunpack.c.l.b16 %v9025
        %v9314 = vunpack.c.l.b16 %v9026
        %v9315 = vunpack.c.l.b16 %v9027
        %v9316 = vunpack.c.l.b16 %v9028
        %v9317 = vunpack.c.l.b16 %v9029
        %v9318 = vunpack.c.l.b16 %v9030
        %v9319 = vunpack.c.l.b16 %v9031
        %v9320 = vunpack.c.l.b16 %v9032
        %v9321 = vunpack.c.l.b16 %v9033
        %v9322 = vunpack.c.l.b16 %v9034
        %v9323 = vunpack.c.l.b16 %v9035
        %v9324 = vunpack.c.l.b16 %v9036
        %v9325 = vunpack.c.l.b16 %v9037
        %v9326 = vunpack.c.l.b16 %v9038
        %v9327 = vunpack.c.l.b16 %v9039
        %v9328 = vunpack.c.l.b16 %v9040
        %v9329 = vunpack.c.l.b16 %v9041
        %v9330 = vunpack.c.l.b16 %v9042
        %v9331 = vunpack.c.l.b16 %v9043
        %v9332 = vunpack.c.l.b16 %v9044
        %v9333 = vunpack.c.l.b16 %v9045
        %v9334 = vunpack.c.l.b16 %v9046
        %v9335 = vunpack.c.l.b16 %v9047
        %v9336 = vunpack.c.l.b16 %v9048
        %v9337 = vunpack.c.l.b16 %v9049
        %v9338 = vunpack.c.l.b16 %v9050
        %v9339 = vunpack.c.l.b16 %v9051
        %v9340 = vunpack.c.l.b16 %v9052
        %v9341 = vunpack.c.l.b16 %v9053
        %v9342 = vunpack.c.l.b16 %v9054
        %v9343 = vunpack.c.l.b16 %v9055
        %v9344 = vunpack.c.l.b16 %v9056
        %v9345 = vunpack.c.l.b16 %v9057
        %v9346 = vunpack.c.l.b16 %v9058
        %v9347 = vunpack.c.l.b16 %v9059
        %v9348 = vunpack.c.l.b16 %v9060
        %v9349 = vunpack.c.l.b16 %v9061
        %v9350 = vunpack.c.l.b16 %v9062
        %v9351 = vunpack.c.l.b16 %v9063
        %v9352 = vunpack.c.l.b16 %v9064
        %v9353 = vunpack.c.l.b16 %v9065
        %v9354 = vunpack.c.l.b16 %v9066
        %v9355 = vunpack.c.l.b16 %v9067
        %v9356 = vunpack.c.l.b16 %v9068
        %v9357 = vunpack.c.l.b16 %v9069
        %v9358 = vunpack.c.l.b16 %v9070
        %v9359 = vunpack.c.l.b16 %v9071
        %v9360 = vunpack.c.l.b16 %v9072
        %v9361 = vunpack.c.l.b16 %v9073
        %v9362 = vunpack.c.l.b16 %v9074
        %v9363 = vunpack.c.l.b16 %v9075
        %v9364 = vunpack.c.l.b16 %v9076
        %v9365 = vunpack.c.l.b16 %v9077
        %v9366 = vunpack.c.l.b16 %v9078
        %v9367 = vunpack.c.l.b16 %v9079
        %v9368 = vunpack.c.l.b16 %v9080
        %v9369 = vunpack.c.l.b16 %v9081
        %v9370 = vunpack.c.l.b16 %v9082
        %v9371 = vunpack.c.l.b16 %v9083
        %v9372 = vunpack.c.l.b16 %v9084
        %v9373 = vunpack.c.l.b16 %v9085
        %v9374 = vunpack.c.l.b16 %v9086
        %v9375 = vunpack.c.l.b16 %v9087
        %v9376 = vunpack.c.l.b16 %v9088
        %v9377 = vunpack.c.l.b16 %v9089
        %v9378 = vunpack.c.l.b16 %v9090
        %v9379 = vunpack.c.l.b16 %v9091
        %v9380 = vunpack.c.l.b16 %v9092
        %v9381 = vunpack.c.l.b16 %v9093
        %v9382 = vunpack.c.l.b16 %v9094
        %v9383 = vunpack.c.l.b16 %v9095
        %v9384 = vunpack.c.l.b16 %v9096
        %v9385 = vunpack.c.l.b16 %v9097
        %v9386 = vunpack.c.l.b16 %v9098
        %v9387 = vunpack.c.l.b16 %v9099
        %v9388 = vunpack.c.l.b16 %v9100
        %v9389 = vunpack.c.l.b16 %v9101
        %v9390 = vunpack.c.l.b16 %v9102
        %v9391 = vunpack.c.l.b16 %v9103
        %v9392 = vunpack.c.l.b16 %v9104
        %v9393 = vunpack.c.l.b16 %v9105
        %v9394 = vunpack.c.l.b16 %v9106
        %v9395 = vunpack.c.l.b16 %v9107
        %v9396 = vunpack.c.l.b16 %v9108
        %v9397 = vunpack.c.l.b16 %v9109
        %v9398 = vunpack.c.l.b16 %v9110
        %v9399 = vunpack.c.l.b16 %v9111
        %v9400 = vunpack.c.l.b16 %v9112
        %v9401 = vunpack.c.l.b16 %v9113
        %v9402 = vunpack.c.l.b16 %v9114
        %v9403 = vunpack.c.l.b16 %v9115
        %v9404 = vunpack.c.l.b16 %v9116
        %v9405 = vunpack.c.l.b16 %v9117
        %v9406 = vunpack.c.l.b16 %v9118
        %v9407 = vunpack.c.l.b16 %v9119
        %v9408 = vunpack.c.l.b16 %v9120
        %v9409 = vunpack.c.l.b16 %v9121
        %v9410 = vunpack.c.l.b16 %v9122
        %v9411 = vunpack.c.l.b16 %v9123
        %v9412 = vunpack.c.l.b16 %v9124
        %v9413 = vunpack.c.l.b16 %v9125
        %v9414 = vunpack.c.l.b16 %v9126
        %v9415 = vunpack.c.l.b16 %v9127
        %v9416 = vunpack.c.l.b16 %v9128
        %v9417 = vunpack.c.l.b16 %v9129
        %v9418 = vunpack.c.l.b16 %v9130
        %v9419 = vunpack.c.l.b16 %v9131
        %v9420 = vunpack.c.l.b16 %v9132
        %v9421 = vunpack.c.l.b16 %v9133
        %v9422 = vunpack.c.l.b16 %v9134
        %v9423 = vunpack.c.l.b16 %v9135
        %v9424 = vunpack.c.l.b16 %v9136
        %v9425 = vunpack.c.l.b16 %v9137
        %v9426 = vunpack.c.l.b16 %v9138
        %v9427 = vunpack.c.l.b16 %v9139
        %v9428 = vunpack.c.l.b16 %v9140
        %v9429 = vunpack.c.l.b16 %v9141
        %v9430 = vunpack.c.l.b16 %v9142
        %v9431 = vunpack.c.l.b16 %v9143
        %v9432 = vunpack.c.l.b16 %v9144
        %v9433 = vunpack.c.l.b16 %v9145
        %v9434 = vunpack.c.l.b16 %v9146
        %v9435 = vunpack.c.l.b16 %v9147
        %v9436 = vunpack.c.l.b16 %v9148
        %v9437 = vunpack.c.l.b16 %v9149
        %v9438 = vunpack.c.l.b16 %v9150
        %v9439 = vunpack.c.l.b16 %v9151
        %v9440 = vunpack.c.l.b16 %v9152
        %v9441 = vunpack.c.l.b16 %v9153
        %v9442 = vunpack.c.l.b16 %v9154
        %v9443 = vpack.c.b16 %v9300, %v9299
        %v9444 = vpack.c.b16 %v9302, %v9301
        %v9445 = vpack.c.b16 %v9304, %v9303
        %v9446 = vpack.c.b16 %v9306, %v9305
        %v9447 = vpack.c.b16 %v9308, %v9307
        %v9448 = vpack.c.b16 %v9310, %v9309
        %v9449 = vpack.c.b16 %v9312, %v9311
        %v9450 = vpack.c.b16 %v9314, %v9313
        %v9451 = vpack.c.b16 %v9316, %v9315
        %v9452 = vpack.c.b16 %v9318, %v9317
        %v9453 = vpack.c.b16 %v9320, %v9319
        %v9454 = vpack.c.b16 %v9322, %v9321
        %v9455 = vpack.c.b16 %v9324, %v9323
        %v9456 = vpack.c.b16 %v9326, %v9325
        %v9457 = vpack.c.b16 %v9328, %v9327
        %v9458 = vpack.c.b16 %v9330, %v9329
        %v9459 = vpack.c.b16 %v9332, %v9331
        %v9460 = vpack.c.b16 %v9334, %v9333
        %v9461 = vpack.c.b16 %v9336, %v9335
        %v9462 = vpack.c.b16 %v9338, %v9337
        %v9463 = vpack.c.b16 %v9340, %v9339
        %v9464 = vpack.c.b16 %v9342, %v9341
        %v9465 = vpack.c.b16 %v9344, %v9343
        %v9466 = vpack.c.b16 %v9346, %v9345
        %v9467 = vpack.c.b16 %v9348, %v9347
        %v9468 = vpack.c.b16 %v9350, %v9349
        %v9469 = vpack.c.b16 %v9352, %v9351
        %v9470 = vpack.c.b16 %v9354, %v9353
        %v9471 = vpack.c.b16 %v9356, %v9355
        %v9472 = vpack.c.b16 %v9358, %v9357
        %v9473 = vpack.c.b16 %v9360, %v9359
        %v9474 = vpack.c.b16 %v9362, %v9361
        %v9475 = vpack.c.b16 %v9364, %v9363
        %v9476 = vpack.c.b16 %v9366, %v9365
        %v9477 = vpack.c.b16 %v9368, %v9367
        %v9478 = vpack.c.b16 %v9370, %v9369
        %v9479 = vpack.c.b16 %v9372, %v9371
        %v9480 = vpack.c.b16 %v9374, %v9373
        %v9481 = vpack.c.b16 %v9376, %v9375
        %v9482 = vpack.c.b16 %v9378, %v9377
        %v9483 = vpack.c.b16 %v9380, %v9379
        %v9484 = vpack.c.b16 %v9382, %v9381
        %v9485 = vpack.c.b16 %v9384, %v9383
        %v9486 = vpack.c.b16 %v9386, %v9385
        %v9487 = vpack.c.b16 %v9388, %v9387
        %v9488 = vpack.c.b16 %v9390, %v9389
        %v9489 = vpack.c.b16 %v9392, %v9391
        %v9490 = vpack.c.b16 %v9394, %v9393
        %v9491 = vpack.c.b16 %v9396, %v9395
        %v9492 = vpack.c.b16 %v9398, %v9397
        %v9493 = vpack.c.b16 %v9400, %v9399
        %v9494 = vpack.c.b16 %v9402, %v9401
        %v9495 = vpack.c.b16 %v9404, %v9403
        %v9496 = vpack.c.b16 %v9406, %v9405
        %v9497 = vpack.c.b16 %v9408, %v9407
        %v9498 = vpack.c.b16 %v9410, %v9409
        %v9499 = vpack.c.b16 %v9412, %v9411
        %v9500 = vpack.c.b16 %v9414, %v9413
        %v9501 = vpack.c.b16 %v9416, %v9415
        %v9502 = vpack.c.b16 %v9418, %v9417
        %v9503 = vpack.c.b16 %v9420, %v9419
        %v9504 = vpack.c.b16 %v9422, %v9421
        %v9505 = vpack.c.b16 %v9424, %v9423
        %v9506 = vpack.c.b16 %v9426, %v9425
        %v9507 = vpack.c.b16 %v9428, %v9427
        %v9508 = vpack.c.b16 %v9430, %v9429
        %v9509 = vpack.c.b16 %v9432, %v9431
        %v9510 = vpack.c.b16 %v9434, %v9433
        %v9511 = vpack.c.b16 %v9436, %v9435
        %v9512 = vpack.c.b16 %v9438, %v9437
        %v9513 = vpack.c.b16 %v9440, %v9439
        %v9514 = vpack.c.b16 %v9442, %v9441
        %9587 = vmatprep.subr.bf16.mxu0 0
        %9588 = vmatpush1.bf16.msra.mxu0 %v9443
        %9589 = vmatprep.subr.bf16.mxu0 0
        %9590 = vmatpush1.bf16.msra.mxu0 %v9444
        %9591 = vmatprep.subr.bf16.mxu0 0
        %9592 = vmatpush1.bf16.msra.mxu0 %v9445
        %9593 = vmatprep.subr.bf16.mxu0 0
        %9594 = vmatpush1.bf16.msra.mxu0 %v9446
        %9595 = vmatprep.subr.bf16.mxu0 0
        %9596 = vmatpush1.bf16.msra.mxu0 %v9447
        %9597 = vmatprep.subr.bf16.mxu0 0
        %9598 = vmatpush1.bf16.msra.mxu0 %v9448
        %9599 = vmatprep.subr.bf16.mxu0 0
        %9600 = vmatpush1.bf16.msra.mxu0 %v9449
        %9601 = vmatprep.subr.bf16.mxu0 0
        %9602 = vmatpush1.bf16.msra.mxu0 %v9450
        %9603 = vmatprep.subr.bf16.mxu0 0
        %9604 = vmatpush1.bf16.msra.mxu0 %v9451
        %9605 = vmatprep.subr.bf16.mxu0 0
        %9606 = vmatpush1.bf16.msra.mxu0 %v9452
        %9607 = vmatprep.subr.bf16.mxu0 0
        %9608 = vmatpush1.bf16.msra.mxu0 %v9453
        %9609 = vmatprep.subr.bf16.mxu0 0
        %9610 = vmatpush1.bf16.msra.mxu0 %v9454
        %9611 = vmatprep.subr.bf16.mxu0 0
        %9612 = vmatpush1.bf16.msra.mxu0 %v9455
        %9613 = vmatprep.subr.bf16.mxu0 0
        %9614 = vmatpush1.bf16.msra.mxu0 %v9456
        %9615 = vmatprep.subr.bf16.mxu0 0
        %9616 = vmatpush1.bf16.msra.mxu0 %v9457
        %9617 = vmatprep.subr.bf16.mxu0 0
        %9618 = vmatpush1.bf16.msra.mxu0 %v9458
        %9619 = vmatprep.mubr.bf16.mxu0 %v8868
        %9620 = vmatmul.mubr.bf16.gmra.mrb[0].mxu0 %v8867
        %v9621 = vpop.f32.mrb[0].mxu0
        %v9622 = vadd.f32 0.0, %v9621
        %v9623 = vpop.f32.mrb[0].mxu0
        %v9624 = vpop.f32.mrb[0].mxu0
        %v9625 = vadd.f32 0.0, %v9624
        %v9626 = vpop.f32.mrb[0].mxu0
        %9627 = vmatprep.mubr.bf16.mxu0 %v8877
        %9628 = vmatmul.mubr.bf16.gmra.mrb[0].mxu0 %v8876
        %v9629 = vpop.f32.mrb[0].mxu0
        %v9630 = vadd.f32 0.0, %v9629
        %v9631 = vpop.f32.mrb[0].mxu0
        %v9632 = vpop.f32.mrb[0].mxu0
        %v9633 = vadd.f32 0.0, %v9632
        %v9634 = vpop.f32.mrb[0].mxu0
        %9635 = vmatprep.mubr.bf16.mxu0 %v8886
        %9636 = vmatmul.mubr.bf16.gmra.mrb[0].mxu0 %v8885
        %v9637 = vpop.f32.mrb[0].mxu0
        %v9638 = vadd.f32 0.0, %v9637
        %v9639 = vpop.f32.mrb[0].mxu0
        %v9640 = vpop.f32.mrb[0].mxu0
        %v9641 = vadd.f32 0.0, %v9640
        %v9642 = vpop.f32.mrb[0].mxu0
        %9643 = vmatprep.mubr.bf16.mxu0 %v8895
        %9644 = vmatmul.mubr.bf16.gmra.mrb[0].mxu0 %v8894
        %v9645 = vpop.f32.mrb[0].mxu0
        %v9646 = vadd.f32 0.0, %v9645
        %v9647 = vpop.f32.mrb[0].mxu0
        %v9648 = vpop.f32.mrb[0].mxu0
        %v9649 = vadd.f32 0.0, %v9648
        %v9650 = vpop.f32.mrb[0].mxu0
        %9651 = vmatprep.mubr.bf16.mxu0 %v8904
        %9652 = vmatmul.mubr.bf16.gmra.mrb[0].mxu0 %v8903
        %v9653 = vpop.f32.mrb[0].mxu0
        %v9654 = vadd.f32 0.0, %v9653
        %v9655 = vpop.f32.mrb[0].mxu0
        %v9656 = vpop.f32.mrb[0].mxu0
        %v9657 = vadd.f32 0.0, %v9656
        %v9658 = vpop.f32.mrb[0].mxu0
        %9659 = vmatprep.mubr.bf16.mxu0 %v8913
        %9660 = vmatmul.mubr.bf16.gmra.mrb[0].mxu0 %v8912
        %v9661 = vpop.f32.mrb[0].mxu0
        %v9662 = vadd.f32 0.0, %v9661
        %v9663 = vpop.f32.mrb[0].mxu0
        %v9664 = vpop.f32.mrb[0].mxu0
        %v9665 = vadd.f32 0.0, %v9664
        %v9666 = vpop.f32.mrb[0].mxu0
        %9667 = vmatprep.mubr.bf16.mxu0 %v8922
        %9668 = vmatmul.mubr.bf16.gmra.mrb[0].mxu0 %v8921
        %v9669 = vpop.f32.mrb[0].mxu0
        %v9670 = vadd.f32 0.0, %v9669
        %v9671 = vpop.f32.mrb[0].mxu0
        %v9672 = vpop.f32.mrb[0].mxu0
        %v9673 = vadd.f32 0.0, %v9672
        %v9674 = vpop.f32.mrb[0].mxu0
        %9675 = vmatprep.mubr.bf16.mxu0 %v8931
        %9676 = vmatmul.mubr.bf16.gmra.mrb[0].mxu0 %v8930
        %v9677 = vpop.f32.mrb[0].mxu0
        %v9678 = vadd.f32 0.0, %v9677
        %v9679 = vpop.f32.mrb[0].mxu0
        %v9680 = vpop.f32.mrb[0].mxu0
        %v9681 = vadd.f32 0.0, %v9680
        %v9682 = vpop.f32.mrb[0].mxu0
        %9683 = vmatprep.mubr.bf16.mxu0 %v8940
        %9684 = vmatmul.mubr.bf16.gmra.mrb[0].mxu0 %v8939
        %v9685 = vpop.f32.mrb[0].mxu0
        %v9686 = vadd.f32 0.0, %v9685
        %v9687 = vpop.f32.mrb[0].mxu0
        %v9688 = vpop.f32.mrb[0].mxu0
        %v9689 = vadd.f32 0.0, %v9688
        %v9690 = vpop.f32.mrb[0].mxu0
        %9691 = vmatprep.mubr.bf16.mxu0 %v8949
        %9692 = vmatmul.mubr.bf16.gmra.mrb[0].mxu0 %v8948
        %v9693 = vpop.f32.mrb[0].mxu0
        %v9694 = vadd.f32 0.0, %v9693
        %v9695 = vpop.f32.mrb[0].mxu0
        %v9696 = vpop.f32.mrb[0].mxu0
        %v9697 = vadd.f32 0.0, %v9696
        %v9698 = vpop.f32.mrb[0].mxu0
        %9699 = vmatprep.mubr.bf16.mxu0 %v8958
        %9700 = vmatmul.mubr.bf16.gmra.mrb[0].mxu0 %v8957
        %v9701 = vpop.f32.mrb[0].mxu0
        %v9702 = vadd.f32 0.0, %v9701
        %v9703 = vpop.f32.mrb[0].mxu0
        %v9704 = vpop.f32.mrb[0].mxu0
        %v9705 = vadd.f32 0.0, %v9704
        %v9706 = vpop.f32.mrb[0].mxu0
        %9707 = vmatprep.mubr.bf16.mxu0 %v8967
        %9708 = vmatmul.mubr.bf16.gmra.mrb[0].mxu0 %v8966
        %v9709 = vpop.f32.mrb[0].mxu0
        %v9710 = vadd.f32 0.0, %v9709
        %v9711 = vpop.f32.mrb[0].mxu0
        %v9712 = vpop.f32.mrb[0].mxu0
        %v9713 = vadd.f32 0.0, %v9712
        %v9714 = vpop.f32.mrb[0].mxu0
        %9715 = vmatprep.mubr.bf16.mxu0 %v8976
        %9716 = vmatmul.mubr.bf16.gmra.mrb[0].mxu0 %v8975
        %v9717 = vpop.f32.mrb[0].mxu0
        %v9718 = vadd.f32 0.0, %v9717
        %v9719 = vpop.f32.mrb[0].mxu0
        %v9720 = vpop.f32.mrb[0].mxu0
        %v9721 = vadd.f32 0.0, %v9720
        %v9722 = vpop.f32.mrb[0].mxu0
        %9723 = vmatprep.mubr.bf16.mxu0 %v8985
        %9724 = vmatmul.mubr.bf16.gmra.mrb[0].mxu0 %v8984
        %v9725 = vpop.f32.mrb[0].mxu0
        %v9726 = vadd.f32 0.0, %v9725
        %v9727 = vpop.f32.mrb[0].mxu0
        %v9728 = vpop.f32.mrb[0].mxu0
        %v9729 = vadd.f32 0.0, %v9728
        %v9730 = vpop.f32.mrb[0].mxu0
        %9731 = vmatprep.mubr.bf16.mxu0 %v8994
        %9732 = vmatmul.mubr.bf16.gmra.mrb[0].mxu0 %v8993
        %v9733 = vpop.f32.mrb[0].mxu0
        %v9734 = vadd.f32 0.0, %v9733
        %v9735 = vpop.f32.mrb[0].mxu0
        %v9736 = vpop.f32.mrb[0].mxu0
        %v9737 = vadd.f32 0.0, %v9736
        %v9738 = vpop.f32.mrb[0].mxu0
        %9739 = vmatprep.mubr.bf16.mxu0 %v9003
        %9740 = vmatmul.mubr.bf16.gmra.mrb[0].mxu0 %v9002
        %v9741 = vpop.f32.mrb[0].mxu0
        %v9742 = vadd.f32 0.0, %v9741
        %v9743 = vpop.f32.mrb[0].mxu0
        %v9744 = vpop.f32.mrb[0].mxu0
        %v9745 = vadd.f32 0.0, %v9744
        %v9746 = vpop.f32.mrb[0].mxu0
        %9747 = vdwg.mxu0
        %9748 = vmatprep.subr.bf16.mxu0 0
        %9749 = vmatpush1.bf16.msra.mxu0 %v9459
        %9750 = vmatprep.subr.bf16.mxu0 0
        %9751 = vmatpush1.bf16.msra.mxu0 %v9460
        %9752 = vmatprep.subr.bf16.mxu0 0
        %9753 = vmatpush1.bf16.msra.mxu0 %v9461
        %9754 = vmatprep.subr.bf16.mxu0 0
        %9755 = vmatpush1.bf16.msra.mxu0 %v9462
        %9756 = vmatprep.subr.bf16.mxu0 0
        %9757 = vmatpush1.bf16.msra.mxu0 %v9463
        %9758 = vmatprep.subr.bf16.mxu0 0
        %9759 = vmatpush1.bf16.msra.mxu0 %v9464
        %9760 = vmatprep.subr.bf16.mxu0 0
        %9761 = vmatpush1.bf16.msra.mxu0 %v9465
        %9762 = vmatprep.subr.bf16.mxu0 0
        %9763 = vmatpush1.bf16.msra.mxu0 %v9466
        %9764 = vmatprep.subr.bf16.mxu0 0
        %9765 = vmatpush1.bf16.msra.mxu0 %v9467
        %9766 = vmatprep.subr.bf16.mxu0 0
        %9767 = vmatpush1.bf16.msra.mxu0 %v9468
        %9768 = vmatprep.subr.bf16.mxu0 0
        %9769 = vmatpush1.bf16.msra.mxu0 %v9469
        %9770 = vmatprep.subr.bf16.mxu0 0
        %9771 = vmatpush1.bf16.msra.mxu0 %v9470
        %9772 = vmatprep.subr.bf16.mxu0 0
        %9773 = vmatpush1.bf16.msra.mxu0 %v9471
        %9774 = vmatprep.subr.bf16.mxu0 0
        %9775 = vmatpush1.bf16.msra.mxu0 %v9472
        %9776 = vmatprep.subr.bf16.mxu0 0
        %9777 = vmatpush1.bf16.msra.mxu0 %v9473
        %9778 = vmatprep.subr.bf16.mxu0 0
        %9779 = vmatpush1.bf16.msra.mxu0 %v9474
        %9780 = vmatprep.mubr.bf16.mxu0 %v8870
        %9781 = vmatmul.mubr.bf16.gmra.mrb[0].mxu0 %v8869
        %v9782 = vpop.f32.mrb[0].mxu0
        %v9783 = vadd.f32 %v9622, %v9782
        %v9784 = vpop.f32.mrb[0].mxu0
        %v9785 = vpop.f32.mrb[0].mxu0
        %v9786 = vadd.f32 %v9625, %v9785
        %v9787 = vpop.f32.mrb[0].mxu0
        %9788 = vmatprep.mubr.bf16.mxu0 %v8879
        %9789 = vmatmul.mubr.bf16.gmra.mrb[0].mxu0 %v8878
        %v9790 = vpop.f32.mrb[0].mxu0
        %v9791 = vadd.f32 %v9630, %v9790
        %v9792 = vpop.f32.mrb[0].mxu0
        %v9793 = vpop.f32.mrb[0].mxu0
        %v9794 = vadd.f32 %v9633, %v9793
        %v9795 = vpop.f32.mrb[0].mxu0
        %9796 = vmatprep.mubr.bf16.mxu0 %v8888
        %9797 = vmatmul.mubr.bf16.gmra.mrb[0].mxu0 %v8887
        %v9798 = vpop.f32.mrb[0].mxu0
        %v9799 = vadd.f32 %v9638, %v9798
        %v9800 = vpop.f32.mrb[0].mxu0
        %v9801 = vpop.f32.mrb[0].mxu0
        %v9802 = vadd.f32 %v9641, %v9801
        %v9803 = vpop.f32.mrb[0].mxu0
        %9804 = vmatprep.mubr.bf16.mxu0 %v8897
        %9805 = vmatmul.mubr.bf16.gmra.mrb[0].mxu0 %v8896
        %v9806 = vpop.f32.mrb[0].mxu0
        %v9807 = vadd.f32 %v9646, %v9806
        %v9808 = vpop.f32.mrb[0].mxu0
        %v9809 = vpop.f32.mrb[0].mxu0
        %v9810 = vadd.f32 %v9649, %v9809
        %v9811 = vpop.f32.mrb[0].mxu0
        %9812 = vmatprep.mubr.bf16.mxu0 %v8906
        %9813 = vmatmul.mubr.bf16.gmra.mrb[0].mxu0 %v8905
        %v9814 = vpop.f32.mrb[0].mxu0
        %v9815 = vadd.f32 %v9654, %v9814
        %v9816 = vpop.f32.mrb[0].mxu0
        %v9817 = vpop.f32.mrb[0].mxu0
        %v9818 = vadd.f32 %v9657, %v9817
        %v9819 = vpop.f32.mrb[0].mxu0
        %9820 = vmatprep.mubr.bf16.mxu0 %v8915
        %9821 = vmatmul.mubr.bf16.gmra.mrb[0].mxu0 %v8914
        %v9822 = vpop.f32.mrb[0].mxu0
        %v9823 = vadd.f32 %v9662, %v9822
        %v9824 = vpop.f32.mrb[0].mxu0
        %v9825 = vpop.f32.mrb[0].mxu0
        %v9826 = vadd.f32 %v9665, %v9825
        %v9827 = vpop.f32.mrb[0].mxu0
        %9828 = vmatprep.mubr.bf16.mxu0 %v8924
        %9829 = vmatmul.mubr.bf16.gmra.mrb[0].mxu0 %v8923
        %v9830 = vpop.f32.mrb[0].mxu0
        %v9831 = vadd.f32 %v9670, %v9830
        %v9832 = vpop.f32.mrb[0].mxu0
        %v9833 = vpop.f32.mrb[0].mxu0
        %v9834 = vadd.f32 %v9673, %v9833
        %v9835 = vpop.f32.mrb[0].mxu0
        %9836 = vmatprep.mubr.bf16.mxu0 %v8933
        %9837 = vmatmul.mubr.bf16.gmra.mrb[0].mxu0 %v8932
        %v9838 = vpop.f32.mrb[0].mxu0
        %v9839 = vadd.f32 %v9678, %v9838
        %v9840 = vpop.f32.mrb[0].mxu0
        %v9841 = vpop.f32.mrb[0].mxu0
        %v9842 = vadd.f32 %v9681, %v9841
        %v9843 = vpop.f32.mrb[0].mxu0
        %9844 = vmatprep.mubr.bf16.mxu0 %v8942
        %9845 = vmatmul.mubr.bf16.gmra.mrb[0].mxu0 %v8941
        %v9846 = vpop.f32.mrb[0].mxu0
        %v9847 = vadd.f32 %v9686, %v9846
        %v9848 = vpop.f32.mrb[0].mxu0
        %v9849 = vpop.f32.mrb[0].mxu0
        %v9850 = vadd.f32 %v9689, %v9849
        %v9851 = vpop.f32.mrb[0].mxu0
        %9852 = vmatprep.mubr.bf16.mxu0 %v8951
        %9853 = vmatmul.mubr.bf16.gmra.mrb[0].mxu0 %v8950
        %v9854 = vpop.f32.mrb[0].mxu0
        %v9855 = vadd.f32 %v9694, %v9854
        %v9856 = vpop.f32.mrb[0].mxu0
        %v9857 = vpop.f32.mrb[0].mxu0
        %v9858 = vadd.f32 %v9697, %v9857
        %v9859 = vpop.f32.mrb[0].mxu0
        %9860 = vmatprep.mubr.bf16.mxu0 %v8960
        %9861 = vmatmul.mubr.bf16.gmra.mrb[0].mxu0 %v8959
        %v9862 = vpop.f32.mrb[0].mxu0
        %v9863 = vadd.f32 %v9702, %v9862
        %v9864 = vpop.f32.mrb[0].mxu0
        %v9865 = vpop.f32.mrb[0].mxu0
        %v9866 = vadd.f32 %v9705, %v9865
        %v9867 = vpop.f32.mrb[0].mxu0
        %9868 = vmatprep.mubr.bf16.mxu0 %v8969
        %9869 = vmatmul.mubr.bf16.gmra.mrb[0].mxu0 %v8968
        %v9870 = vpop.f32.mrb[0].mxu0
        %v9871 = vadd.f32 %v9710, %v9870
        %v9872 = vpop.f32.mrb[0].mxu0
        %v9873 = vpop.f32.mrb[0].mxu0
        %v9874 = vadd.f32 %v9713, %v9873
        %v9875 = vpop.f32.mrb[0].mxu0
        %9876 = vmatprep.mubr.bf16.mxu0 %v8978
        %9877 = vmatmul.mubr.bf16.gmra.mrb[0].mxu0 %v8977
        %v9878 = vpop.f32.mrb[0].mxu0
        %v9879 = vadd.f32 %v9718, %v9878
        %v9880 = vpop.f32.mrb[0].mxu0
        %v9881 = vpop.f32.mrb[0].mxu0
        %v9882 = vadd.f32 %v9721, %v9881
        %v9883 = vpop.f32.mrb[0].mxu0
        %9884 = vmatprep.mubr.bf16.mxu0 %v8987
        %9885 = vmatmul.mubr.bf16.gmra.mrb[0].mxu0 %v8986
        %v9886 = vpop.f32.mrb[0].mxu0
        %v9887 = vadd.f32 %v9726, %v9886
        %v9888 = vpop.f32.mrb[0].mxu0
        %v9889 = vpop.f32.mrb[0].mxu0
        %v9890 = vadd.f32 %v9729, %v9889
        %v9891 = vpop.f32.mrb[0].mxu0
        %9892 = vmatprep.mubr.bf16.mxu0 %v8996
        %9893 = vmatmul.mubr.bf16.gmra.mrb[0].mxu0 %v8995
        %v9894 = vpop.f32.mrb[0].mxu0
        %v9895 = vadd.f32 %v9734, %v9894
        %v9896 = vpop.f32.mrb[0].mxu0
        %v9897 = vpop.f32.mrb[0].mxu0
        %v9898 = vadd.f32 %v9737, %v9897
        %v9899 = vpop.f32.mrb[0].mxu0
        %9900 = vmatprep.mubr.bf16.mxu0 %v9005
        %9901 = vmatmul.mubr.bf16.gmra.mrb[0].mxu0 %v9004
        %v9902 = vpop.f32.mrb[0].mxu0
        %v9903 = vadd.f32 %v9742, %v9902
        %v9904 = vpop.f32.mrb[0].mxu0
        %v9905 = vpop.f32.mrb[0].mxu0
        %v9906 = vadd.f32 %v9745, %v9905
        %v9907 = vpop.f32.mrb[0].mxu0
        %9908 = vdwg.mxu0
        %9909 = vmatprep.subr.bf16.mxu0 0
        %9910 = vmatpush1.bf16.msra.mxu0 %v9475
        %9911 = vmatprep.subr.bf16.mxu0 0
        %9912 = vmatpush1.bf16.msra.mxu0 %v9476
        %9913 = vmatprep.subr.bf16.mxu0 0
        %9914 = vmatpush1.bf16.msra.mxu0 %v9477
        %9915 = vmatprep.subr.bf16.mxu0 0
        %9916 = vmatpush1.bf16.msra.mxu0 %v9478
        %9917 = vmatprep.subr.bf16.mxu0 0
        %9918 = vmatpush1.bf16.msra.mxu0 %v9479
        %9919 = vmatprep.subr.bf16.mxu0 0
        %9920 = vmatpush1.bf16.msra.mxu0 %v9480
        %9921 = vmatprep.subr.bf16.mxu0 0
        %9922 = vmatpush1.bf16.msra.mxu0 %v9481
        %9923 = vmatprep.subr.bf16.mxu0 0
        %9924 = vmatpush1.bf16.msra.mxu0 %v9482
        %9925 = vmatprep.subr.bf16.mxu0 0
        %9926 = vmatpush1.bf16.msra.mxu0 %v9483
        %9927 = vmatprep.subr.bf16.mxu0 0
        %9928 = vmatpush1.bf16.msra.mxu0 %v9484
        %9929 = vmatprep.subr.bf16.mxu0 0
        %9930 = vmatpush1.bf16.msra.mxu0 %v9485
        %9931 = vmatprep.subr.bf16.mxu0 0
        %9932 = vmatpush1.bf16.msra.mxu0 %v9486
        %9933 = vmatprep.subr.bf16.mxu0 0
        %9934 = vmatpush1.bf16.msra.mxu0 %v9487
        %9935 = vmatprep.subr.bf16.mxu0 0
        %9936 = vmatpush1.bf16.msra.mxu0 %v9488
        %9937 = vmatprep.subr.bf16.mxu0 0
        %9938 = vmatpush1.bf16.msra.mxu0 %v9489
        %9939 = vmatprep.subr.bf16.mxu0 0
        %9940 = vmatpush1.bf16.msra.mxu0 %v9490
        %9941 = vmatprep.mubr.bf16.mxu0 %v8872
        %9942 = vmatmul.mubr.bf16.gmra.mrb[0].mxu0 %v8871
        %v9943 = vpop.f32.mrb[0].mxu0
        %v9944 = vadd.f32 %v9783, %v9943
        %v9945 = vpop.f32.mrb[0].mxu0
        %v9946 = vpop.f32.mrb[0].mxu0
        %v9947 = vadd.f32 %v9786, %v9946
        %v9948 = vpop.f32.mrb[0].mxu0
        %9949 = vmatprep.mubr.bf16.mxu0 %v8881
        %9950 = vmatmul.mubr.bf16.gmra.mrb[0].mxu0 %v8880
        %v9951 = vpop.f32.mrb[0].mxu0
        %v9952 = vadd.f32 %v9791, %v9951
        %v9953 = vpop.f32.mrb[0].mxu0
        %v9954 = vpop.f32.mrb[0].mxu0
        %v9955 = vadd.f32 %v9794, %v9954
        %v9956 = vpop.f32.mrb[0].mxu0
        %9957 = vmatprep.mubr.bf16.mxu0 %v8890
        %9958 = vmatmul.mubr.bf16.gmra.mrb[0].mxu0 %v8889
        %v9959 = vpop.f32.mrb[0].mxu0
        %v9960 = vadd.f32 %v9799, %v9959
        %v9961 = vpop.f32.mrb[0].mxu0
        %v9962 = vpop.f32.mrb[0].mxu0
        %v9963 = vadd.f32 %v9802, %v9962
        %v9964 = vpop.f32.mrb[0].mxu0
        %9965 = vmatprep.mubr.bf16.mxu0 %v8899
        %9966 = vmatmul.mubr.bf16.gmra.mrb[0].mxu0 %v8898
        %v9967 = vpop.f32.mrb[0].mxu0
        %v9968 = vadd.f32 %v9807, %v9967
        %v9969 = vpop.f32.mrb[0].mxu0
        %v9970 = vpop.f32.mrb[0].mxu0
        %v9971 = vadd.f32 %v9810, %v9970
        %v9972 = vpop.f32.mrb[0].mxu0
        %9973 = vmatprep.mubr.bf16.mxu0 %v8908
        %9974 = vmatmul.mubr.bf16.gmra.mrb[0].mxu0 %v8907
        %v9975 = vpop.f32.mrb[0].mxu0
        %v9976 = vadd.f32 %v9815, %v9975
        %v9977 = vpop.f32.mrb[0].mxu0
        %v9978 = vpop.f32.mrb[0].mxu0
        %v9979 = vadd.f32 %v9818, %v9978
        %v9980 = vpop.f32.mrb[0].mxu0
        %9981 = vmatprep.mubr.bf16.mxu0 %v8917
        %9982 = vmatmul.mubr.bf16.gmra.mrb[0].mxu0 %v8916
        %v9983 = vpop.f32.mrb[0].mxu0
        %v9984 = vadd.f32 %v9823, %v9983
        %v9985 = vpop.f32.mrb[0].mxu0
        %v9986 = vpop.f32.mrb[0].mxu0
        %v9987 = vadd.f32 %v9826, %v9986
        %v9988 = vpop.f32.mrb[0].mxu0
        %9989 = vmatprep.mubr.bf16.mxu0 %v8926
        %9990 = vmatmul.mubr.bf16.gmra.mrb[0].mxu0 %v8925
        %v9991 = vpop.f32.mrb[0].mxu0
        %v9992 = vadd.f32 %v9831, %v9991
        %v9993 = vpop.f32.mrb[0].mxu0
        %v9994 = vpop.f32.mrb[0].mxu0
        %v9995 = vadd.f32 %v9834, %v9994
        %v9996 = vpop.f32.mrb[0].mxu0
        %9997 = vmatprep.mubr.bf16.mxu0 %v8935
        %9998 = vmatmul.mubr.bf16.gmra.mrb[0].mxu0 %v8934
        %v9999 = vpop.f32.mrb[0].mxu0
        %v10000 = vadd.f32 %v9839, %v9999
        %v10001 = vpop.f32.mrb[0].mxu0
        %v10002 = vpop.f32.mrb[0].mxu0
        %v10003 = vadd.f32 %v9842, %v10002
        %v10004 = vpop.f32.mrb[0].mxu0
        %10005 = vmatprep.mubr.bf16.mxu0 %v8944
        %10006 = vmatmul.mubr.bf16.gmra.mrb[0].mxu0 %v8943
        %v10007 = vpop.f32.mrb[0].mxu0
        %v10008 = vadd.f32 %v9847, %v10007
        %v10009 = vpop.f32.mrb[0].mxu0
        %v10010 = vpop.f32.mrb[0].mxu0
        %v10011 = vadd.f32 %v9850, %v10010
        %v10012 = vpop.f32.mrb[0].mxu0
        %10013 = vmatprep.mubr.bf16.mxu0 %v8953
        %10014 = vmatmul.mubr.bf16.gmra.mrb[0].mxu0 %v8952
        %v10015 = vpop.f32.mrb[0].mxu0
        %v10016 = vadd.f32 %v9855, %v10015
        %v10017 = vpop.f32.mrb[0].mxu0
        %v10018 = vpop.f32.mrb[0].mxu0
        %v10019 = vadd.f32 %v9858, %v10018
        %v10020 = vpop.f32.mrb[0].mxu0
        %10021 = vmatprep.mubr.bf16.mxu0 %v8962
        %10022 = vmatmul.mubr.bf16.gmra.mrb[0].mxu0 %v8961
        %v10023 = vpop.f32.mrb[0].mxu0
        %v10024 = vadd.f32 %v9863, %v10023
        %v10025 = vpop.f32.mrb[0].mxu0
        %v10026 = vpop.f32.mrb[0].mxu0
        %v10027 = vadd.f32 %v9866, %v10026
        %v10028 = vpop.f32.mrb[0].mxu0
        %10029 = vmatprep.mubr.bf16.mxu0 %v8971
        %10030 = vmatmul.mubr.bf16.gmra.mrb[0].mxu0 %v8970
        %v10031 = vpop.f32.mrb[0].mxu0
        %v10032 = vadd.f32 %v9871, %v10031
        %v10033 = vpop.f32.mrb[0].mxu0
        %v10034 = vpop.f32.mrb[0].mxu0
        %v10035 = vadd.f32 %v9874, %v10034
        %v10036 = vpop.f32.mrb[0].mxu0
        %10037 = vmatprep.mubr.bf16.mxu0 %v8980
        %10038 = vmatmul.mubr.bf16.gmra.mrb[0].mxu0 %v8979
        %v10039 = vpop.f32.mrb[0].mxu0
        %v10040 = vadd.f32 %v9879, %v10039
        %v10041 = vpop.f32.mrb[0].mxu0
        %v10042 = vpop.f32.mrb[0].mxu0
        %v10043 = vadd.f32 %v9882, %v10042
        %v10044 = vpop.f32.mrb[0].mxu0
        %10045 = vmatprep.mubr.bf16.mxu0 %v8989
        %10046 = vmatmul.mubr.bf16.gmra.mrb[0].mxu0 %v8988
        %v10047 = vpop.f32.mrb[0].mxu0
        %v10048 = vadd.f32 %v9887, %v10047
        %v10049 = vpop.f32.mrb[0].mxu0
        %v10050 = vpop.f32.mrb[0].mxu0
        %v10051 = vadd.f32 %v9890, %v10050
        %v10052 = vpop.f32.mrb[0].mxu0
        %10053 = vmatprep.mubr.bf16.mxu0 %v8998
        %10054 = vmatmul.mubr.bf16.gmra.mrb[0].mxu0 %v8997
        %v10055 = vpop.f32.mrb[0].mxu0
        %v10056 = vadd.f32 %v9895, %v10055
        %v10057 = vpop.f32.mrb[0].mxu0
        %v10058 = vpop.f32.mrb[0].mxu0
        %v10059 = vadd.f32 %v9898, %v10058
        %v10060 = vpop.f32.mrb[0].mxu0
        %10061 = vmatprep.mubr.bf16.mxu0 %v9007
        %10062 = vmatmul.mubr.bf16.gmra.mrb[0].mxu0 %v9006
        %v10063 = vpop.f32.mrb[0].mxu0
        %v10064 = vadd.f32 %v9903, %v10063
        %v10065 = vpop.f32.mrb[0].mxu0
        %v10066 = vpop.f32.mrb[0].mxu0
        %v10067 = vadd.f32 %v9906, %v10066
        %v10068 = vpop.f32.mrb[0].mxu0
        %10069 = vdwg.mxu0
        %10070 = vmatprep.subr.bf16.mxu0 0
        %10071 = vmatpush1.bf16.msra.mxu0 %v9491
        %10072 = vmatprep.subr.bf16.mxu0 0
        %10073 = vmatpush1.bf16.msra.mxu0 %v9492
        %10074 = vmatprep.subr.bf16.mxu0 0
        %10075 = vmatpush1.bf16.msra.mxu0 %v9493
        %10076 = vmatprep.subr.bf16.mxu0 0
        %10077 = vmatpush1.bf16.msra.mxu0 %v9494
        %10078 = vmatprep.subr.bf16.mxu0 0
        %10079 = vmatpush1.bf16.msra.mxu0 %v9495
        %10080 = vmatprep.subr.bf16.mxu0 0
        %10081 = vmatpush1.bf16.msra.mxu0 %v9496
        %10082 = vmatprep.subr.bf16.mxu0 0
        %10083 = vmatpush1.bf16.msra.mxu0 %v9497
        %10084 = vmatprep.subr.bf16.mxu0 0
        %10085 = vmatpush1.bf16.msra.mxu0 %v9498
        %10086 = vmatprep.subr.bf16.mxu0 0
        %10087 = vmatpush1.bf16.msra.mxu0 %v9499
        %10088 = vmatprep.subr.bf16.mxu0 0
        %10089 = vmatpush1.bf16.msra.mxu0 %v9500
        %10090 = vmatprep.subr.bf16.mxu0 0
        %10091 = vmatpush1.bf16.msra.mxu0 %v9501
        %10092 = vmatprep.subr.bf16.mxu0 0
        %10093 = vmatpush1.bf16.msra.mxu0 %v9502
        %10094 = vmatprep.subr.bf16.mxu0 0
        %10095 = vmatpush1.bf16.msra.mxu0 %v9503
        %10096 = vmatprep.subr.bf16.mxu0 0
        %10097 = vmatpush1.bf16.msra.mxu0 %v9504
        %10098 = vmatprep.subr.bf16.mxu0 0
        %10099 = vmatpush1.bf16.msra.mxu0 %v9505
        %10100 = vmatprep.subr.bf16.mxu0 0
        %10101 = vmatpush1.bf16.msra.mxu0 %v9506
        %10102 = vmatprep.mubr.bf16.mxu0 %v8874
        %10103 = vmatmul.mubr.bf16.gmra.mrb[0].mxu0 %v8873
        %v10104 = vpop.f32.mrb[0].mxu0
        %v10105 = vadd.f32 %v9944, %v10104
        %v10106 = vpop.f32.mrb[0].mxu0
        %v10107 = vpop.f32.mrb[0].mxu0
        %v10108 = vadd.f32 %v9947, %v10107
        %v10109 = vpop.f32.mrb[0].mxu0
        %10110 = vmatprep.mubr.bf16.mxu0 %v8883
        %10111 = vmatmul.mubr.bf16.gmra.mrb[0].mxu0 %v8882
        %v10112 = vpop.f32.mrb[0].mxu0
        %v10113 = vadd.f32 %v9952, %v10112
        %v10114 = vpop.f32.mrb[0].mxu0
        %v10115 = vpop.f32.mrb[0].mxu0
        %v10116 = vadd.f32 %v9955, %v10115
        %v10117 = vpop.f32.mrb[0].mxu0
        %10118 = vmatprep.mubr.bf16.mxu0 %v8892
        %10119 = vmatmul.mubr.bf16.gmra.mrb[0].mxu0 %v8891
        %v10120 = vpop.f32.mrb[0].mxu0
        %v10121 = vadd.f32 %v9960, %v10120
        %v10122 = vpop.f32.mrb[0].mxu0
        %v10123 = vpop.f32.mrb[0].mxu0
        %v10124 = vadd.f32 %v9963, %v10123
        %v10125 = vpop.f32.mrb[0].mxu0
        %10126 = vmatprep.mubr.bf16.mxu0 %v8901
        %10127 = vmatmul.mubr.bf16.gmra.mrb[0].mxu0 %v8900
        %v10128 = vpop.f32.mrb[0].mxu0
        %v10129 = vadd.f32 %v9968, %v10128
        %v10130 = vpop.f32.mrb[0].mxu0
        %v10131 = vpop.f32.mrb[0].mxu0
        %v10132 = vadd.f32 %v9971, %v10131
        %v10133 = vpop.f32.mrb[0].mxu0
        %10134 = vmatprep.mubr.bf16.mxu0 %v8910
        %10135 = vmatmul.mubr.bf16.gmra.mrb[0].mxu0 %v8909
        %v10136 = vpop.f32.mrb[0].mxu0
        %v10137 = vadd.f32 %v9976, %v10136
        %v10138 = vpop.f32.mrb[0].mxu0
        %v10139 = vpop.f32.mrb[0].mxu0
        %v10140 = vadd.f32 %v9979, %v10139
        %v10141 = vpop.f32.mrb[0].mxu0
        %10142 = vmatprep.mubr.bf16.mxu0 %v8919
        %10143 = vmatmul.mubr.bf16.gmra.mrb[0].mxu0 %v8918
        %v10144 = vpop.f32.mrb[0].mxu0
        %v10145 = vadd.f32 %v9984, %v10144
        %v10146 = vpop.f32.mrb[0].mxu0
        %v10147 = vpop.f32.mrb[0].mxu0
        %v10148 = vadd.f32 %v9987, %v10147
        %v10149 = vpop.f32.mrb[0].mxu0
        %10150 = vmatprep.mubr.bf16.mxu0 %v8928
        %10151 = vmatmul.mubr.bf16.gmra.mrb[0].mxu0 %v8927
        %v10152 = vpop.f32.mrb[0].mxu0
        %v10153 = vadd.f32 %v9992, %v10152
        %v10154 = vpop.f32.mrb[0].mxu0
        %v10155 = vpop.f32.mrb[0].mxu0
        %v10156 = vadd.f32 %v9995, %v10155
        %v10157 = vpop.f32.mrb[0].mxu0
        %10158 = vmatprep.mubr.bf16.mxu0 %v8937
        %10159 = vmatmul.mubr.bf16.gmra.mrb[0].mxu0 %v8936
        %v10160 = vpop.f32.mrb[0].mxu0
        %v10161 = vadd.f32 %v10000, %v10160
        %v10162 = vpop.f32.mrb[0].mxu0
        %v10163 = vpop.f32.mrb[0].mxu0
        %v10164 = vadd.f32 %v10003, %v10163
        %v10165 = vpop.f32.mrb[0].mxu0
        %10166 = vmatprep.mubr.bf16.mxu0 %v8946
        %10167 = vmatmul.mubr.bf16.gmra.mrb[0].mxu0 %v8945
        %v10168 = vpop.f32.mrb[0].mxu0
        %v10169 = vadd.f32 %v10008, %v10168
        %v10170 = vpop.f32.mrb[0].mxu0
        %v10171 = vpop.f32.mrb[0].mxu0
        %v10172 = vadd.f32 %v10011, %v10171
        %v10173 = vpop.f32.mrb[0].mxu0
        %10174 = vmatprep.mubr.bf16.mxu0 %v8955
        %10175 = vmatmul.mubr.bf16.gmra.mrb[0].mxu0 %v8954
        %v10176 = vpop.f32.mrb[0].mxu0
        %v10177 = vadd.f32 %v10016, %v10176
        %v10178 = vpop.f32.mrb[0].mxu0
        %v10179 = vpop.f32.mrb[0].mxu0
        %v10180 = vadd.f32 %v10019, %v10179
        %v10181 = vpop.f32.mrb[0].mxu0
        %10182 = vmatprep.mubr.bf16.mxu0 %v8964
        %10183 = vmatmul.mubr.bf16.gmra.mrb[0].mxu0 %v8963
        %v10184 = vpop.f32.mrb[0].mxu0
        %v10185 = vadd.f32 %v10024, %v10184
        %v10186 = vpop.f32.mrb[0].mxu0
        %v10187 = vpop.f32.mrb[0].mxu0
        %v10188 = vadd.f32 %v10027, %v10187
        %v10189 = vpop.f32.mrb[0].mxu0
        %10190 = vmatprep.mubr.bf16.mxu0 %v8973
        %10191 = vmatmul.mubr.bf16.gmra.mrb[0].mxu0 %v8972
        %v10192 = vpop.f32.mrb[0].mxu0
        %v10193 = vadd.f32 %v10032, %v10192
        %v10194 = vpop.f32.mrb[0].mxu0
        %v10195 = vpop.f32.mrb[0].mxu0
        %v10196 = vadd.f32 %v10035, %v10195
        %v10197 = vpop.f32.mrb[0].mxu0
        %10198 = vmatprep.mubr.bf16.mxu0 %v8982
        %10199 = vmatmul.mubr.bf16.gmra.mrb[0].mxu0 %v8981
        %v10200 = vpop.f32.mrb[0].mxu0
        %v10201 = vadd.f32 %v10040, %v10200
        %v10202 = vpop.f32.mrb[0].mxu0
        %v10203 = vpop.f32.mrb[0].mxu0
        %v10204 = vadd.f32 %v10043, %v10203
        %v10205 = vpop.f32.mrb[0].mxu0
        %10206 = vmatprep.mubr.bf16.mxu0 %v8991
        %10207 = vmatmul.mubr.bf16.gmra.mrb[0].mxu0 %v8990
        %v10208 = vpop.f32.mrb[0].mxu0
        %v10209 = vadd.f32 %v10048, %v10208
        %v10210 = vpop.f32.mrb[0].mxu0
        %v10211 = vpop.f32.mrb[0].mxu0
        %v10212 = vadd.f32 %v10051, %v10211
        %v10213 = vpop.f32.mrb[0].mxu0
        %10214 = vmatprep.mubr.bf16.mxu0 %v9000
        %10215 = vmatmul.mubr.bf16.gmra.mrb[0].mxu0 %v8999
        %v10216 = vpop.f32.mrb[0].mxu0
        %v10217 = vadd.f32 %v10056, %v10216
        %v10218 = vpop.f32.mrb[0].mxu0
        %v10219 = vpop.f32.mrb[0].mxu0
        %v10220 = vadd.f32 %v10059, %v10219
        %v10221 = vpop.f32.mrb[0].mxu0
        %10222 = vmatprep.mubr.bf16.mxu0 %v9009
        %10223 = vmatmul.mubr.bf16.gmra.mrb[0].mxu0 %v9008
        %v10224 = vpop.f32.mrb[0].mxu0
        %v10225 = vadd.f32 %v10064, %v10224
        %v10226 = vpop.f32.mrb[0].mxu0
        %v10227 = vpop.f32.mrb[0].mxu0
        %v10228 = vadd.f32 %v10067, %v10227
        %v10229 = vpop.f32.mrb[0].mxu0
        %10230 = vdwg.mxu0
        %10231 = vmatprep.subr.bf16.mxu0 0
        %10232 = vmatpush1.bf16.msra.mxu0 %v9507
        %10233 = vmatprep.subr.bf16.mxu0 0
        %10234 = vmatpush1.bf16.msra.mxu0 %v9508
        %10235 = vmatprep.subr.bf16.mxu0 0
        %10236 = vmatpush1.bf16.msra.mxu0 %v9509
        %10237 = vmatprep.subr.bf16.mxu0 0
        %10238 = vmatpush1.bf16.msra.mxu0 %v9510
        %10239 = vmatprep.subr.bf16.mxu0 0
        %10240 = vmatpush1.bf16.msra.mxu0 %v9511
        %10241 = vmatprep.subr.bf16.mxu0 0
        %10242 = vmatpush1.bf16.msra.mxu0 %v9512
        %10243 = vmatprep.subr.bf16.mxu0 0
        %10244 = vmatpush1.bf16.msra.mxu0 %v9513
        %10245 = vmatprep.subr.bf16.mxu0 0
        %10246 = vmatpush1.bf16.msra.mxu0 %v9514
        %10247 = vmatprep.subr.bf16.mxu0 0
        %10248 = vmatpush1.bf16.msra.mxu0 0
        %10249 = vmatprep.subr.bf16.mxu0 0
        %10250 = vmatpush1.bf16.msra.mxu0 0
        %10251 = vmatprep.subr.bf16.mxu0 0
        %10252 = vmatpush1.bf16.msra.mxu0 0
        %10253 = vmatprep.subr.bf16.mxu0 0
        %10254 = vmatpush1.bf16.msra.mxu0 0
        %10255 = vmatprep.subr.bf16.mxu0 0
        %10256 = vmatpush1.bf16.msra.mxu0 0
        %10257 = vmatprep.subr.bf16.mxu0 0
        %10258 = vmatpush1.bf16.msra.mxu0 0
        %10259 = vmatprep.subr.bf16.mxu0 0
        %10260 = vmatpush1.bf16.msra.mxu0 0
        %10261 = vmatprep.subr.bf16.mxu0 0
        %10262 = vmatpush1.bf16.msra.mxu0 0
        %10263 = vmatprep.mubr.bf16.mxu0 0
        %10264 = vmatmul.mubr.bf16.gmra.mrb[0].mxu0 %v8875
        %v10265 = vpop.f32.mrb[0].mxu0
        %v10266 = vadd.f32 %v10105, %v10265
        %v10267 = vpop.f32.mrb[0].mxu0
        %v10268 = vpop.f32.mrb[0].mxu0
        %v10269 = vadd.f32 %v10108, %v10268
        %v10270 = vpop.f32.mrb[0].mxu0
        %10271 = vmatprep.mubr.bf16.mxu0 0
        %10272 = vmatmul.mubr.bf16.gmra.mrb[0].mxu0 %v8884
        %v10273 = vpop.f32.mrb[0].mxu0
        %v10274 = vadd.f32 %v10113, %v10273
        %v10275 = vpop.f32.mrb[0].mxu0
        %v10276 = vpop.f32.mrb[0].mxu0
        %v10277 = vadd.f32 %v10116, %v10276
        %v10278 = vpop.f32.mrb[0].mxu0
        %10279 = vmatprep.mubr.bf16.mxu0 0
        %10280 = vmatmul.mubr.bf16.gmra.mrb[0].mxu0 %v8893
        %v10281 = vpop.f32.mrb[0].mxu0
        %v10282 = vadd.f32 %v10121, %v10281
        %v10283 = vpop.f32.mrb[0].mxu0
        %v10284 = vpop.f32.mrb[0].mxu0
        %v10285 = vadd.f32 %v10124, %v10284
        %v10286 = vpop.f32.mrb[0].mxu0
        %10287 = vmatprep.mubr.bf16.mxu0 0
        %10288 = vmatmul.mubr.bf16.gmra.mrb[0].mxu0 %v8902
        %v10289 = vpop.f32.mrb[0].mxu0
        %v10290 = vadd.f32 %v10129, %v10289
        %v10291 = vpop.f32.mrb[0].mxu0
        %v10292 = vpop.f32.mrb[0].mxu0
        %v10293 = vadd.f32 %v10132, %v10292
        %v10294 = vpop.f32.mrb[0].mxu0
        %10295 = vmatprep.mubr.bf16.mxu0 0
        %10296 = vmatmul.mubr.bf16.gmra.mrb[0].mxu0 %v8911
        %v10297 = vpop.f32.mrb[0].mxu0
        %v10298 = vadd.f32 %v10137, %v10297
        %v10299 = vpop.f32.mrb[0].mxu0
        %v10300 = vpop.f32.mrb[0].mxu0
        %v10301 = vadd.f32 %v10140, %v10300
        %v10302 = vpop.f32.mrb[0].mxu0
        %10303 = vmatprep.mubr.bf16.mxu0 0
        %10304 = vmatmul.mubr.bf16.gmra.mrb[0].mxu0 %v8920
        %v10305 = vpop.f32.mrb[0].mxu0
        %v10306 = vadd.f32 %v10145, %v10305
        %v10307 = vpop.f32.mrb[0].mxu0
        %v10308 = vpop.f32.mrb[0].mxu0
        %v10309 = vadd.f32 %v10148, %v10308
        %v10310 = vpop.f32.mrb[0].mxu0
        %10311 = vmatprep.mubr.bf16.mxu0 0
        %10312 = vmatmul.mubr.bf16.gmra.mrb[0].mxu0 %v8929
        %v10313 = vpop.f32.mrb[0].mxu0
        %v10314 = vadd.f32 %v10153, %v10313
        %v10315 = vpop.f32.mrb[0].mxu0
        %v10316 = vpop.f32.mrb[0].mxu0
        %v10317 = vadd.f32 %v10156, %v10316
        %v10318 = vpop.f32.mrb[0].mxu0
        %10319 = vmatprep.mubr.bf16.mxu0 0
        %10320 = vmatmul.mubr.bf16.gmra.mrb[0].mxu0 %v8938
        %v10321 = vpop.f32.mrb[0].mxu0
        %v10322 = vadd.f32 %v10161, %v10321
        %v10323 = vpop.f32.mrb[0].mxu0
        %v10324 = vpop.f32.mrb[0].mxu0
        %v10325 = vadd.f32 %v10164, %v10324
        %v10326 = vpop.f32.mrb[0].mxu0
        %10327 = vmatprep.mubr.bf16.mxu0 0
        %10328 = vmatmul.mubr.bf16.gmra.mrb[0].mxu0 %v8947
        %v10329 = vpop.f32.mrb[0].mxu0
        %v10330 = vadd.f32 %v10169, %v10329
        %v10331 = vpop.f32.mrb[0].mxu0
        %v10332 = vpop.f32.mrb[0].mxu0
        %v10333 = vadd.f32 %v10172, %v10332
        %v10334 = vpop.f32.mrb[0].mxu0
        %10335 = vmatprep.mubr.bf16.mxu0 0
        %10336 = vmatmul.mubr.bf16.gmra.mrb[0].mxu0 %v8956
        %v10337 = vpop.f32.mrb[0].mxu0
        %v10338 = vadd.f32 %v10177, %v10337
        %v10339 = vpop.f32.mrb[0].mxu0
        %v10340 = vpop.f32.mrb[0].mxu0
        %v10341 = vadd.f32 %v10180, %v10340
        %v10342 = vpop.f32.mrb[0].mxu0
        %10343 = vmatprep.mubr.bf16.mxu0 0
        %10344 = vmatmul.mubr.bf16.gmra.mrb[0].mxu0 %v8965
        %v10345 = vpop.f32.mrb[0].mxu0
        %v10346 = vadd.f32 %v10185, %v10345
        %v10347 = vpop.f32.mrb[0].mxu0
        %v10348 = vpop.f32.mrb[0].mxu0
        %v10349 = vadd.f32 %v10188, %v10348
        %v10350 = vpop.f32.mrb[0].mxu0
        %10351 = vmatprep.mubr.bf16.mxu0 0
        %10352 = vmatmul.mubr.bf16.gmra.mrb[0].mxu0 %v8974
        %v10353 = vpop.f32.mrb[0].mxu0
        %v10354 = vadd.f32 %v10193, %v10353
        %v10355 = vpop.f32.mrb[0].mxu0
        %v10356 = vpop.f32.mrb[0].mxu0
        %v10357 = vadd.f32 %v10196, %v10356
        %v10358 = vpop.f32.mrb[0].mxu0
        %10359 = vmatprep.mubr.bf16.mxu0 0
        %10360 = vmatmul.mubr.bf16.gmra.mrb[0].mxu0 %v8983
        %v10361 = vpop.f32.mrb[0].mxu0
        %v10362 = vadd.f32 %v10201, %v10361
        %v10363 = vpop.f32.mrb[0].mxu0
        %v10364 = vpop.f32.mrb[0].mxu0
        %v10365 = vadd.f32 %v10204, %v10364
        %v10366 = vpop.f32.mrb[0].mxu0
        %10367 = vmatprep.mubr.bf16.mxu0 0
        %10368 = vmatmul.mubr.bf16.gmra.mrb[0].mxu0 %v8992
        %v10369 = vpop.f32.mrb[0].mxu0
        %v10370 = vadd.f32 %v10209, %v10369
        %v10371 = vpop.f32.mrb[0].mxu0
        %v10372 = vpop.f32.mrb[0].mxu0
        %v10373 = vadd.f32 %v10212, %v10372
        %v10374 = vpop.f32.mrb[0].mxu0
        %10375 = vmatprep.mubr.bf16.mxu0 0
        %10376 = vmatmul.mubr.bf16.gmra.mrb[0].mxu0 %v9001
        %v10377 = vpop.f32.mrb[0].mxu0
        %v10378 = vadd.f32 %v10217, %v10377
        %v10379 = vpop.f32.mrb[0].mxu0
        %v10380 = vpop.f32.mrb[0].mxu0
        %v10381 = vadd.f32 %v10220, %v10380
        %v10382 = vpop.f32.mrb[0].mxu0
        %10383 = vmatprep.mubr.bf16.mxu0 0
        %10384 = vmatmul.mubr.bf16.gmra.mrb[0].mxu0 %v9010
        %v10385 = vpop.f32.mrb[0].mxu0
        %v10386 = vadd.f32 %v10225, %v10385
        %v10387 = vpop.f32.mrb[0].mxu0
        %v10388 = vpop.f32.mrb[0].mxu0
        %v10389 = vadd.f32 %v10228, %v10388
        %v10390 = vpop.f32.mrb[0].mxu0
        %10391 = vdwg.mxu0
        %v10392 = vld [vmem:[%s5] sm:$0x1]
        %v10394 = vlaneseq
        %v10395 = vshrl.u32 %v10394, 7
        %v10396 = vsub.s32 0, %v10395
        %v10397 = vrot.slane %v10392, %v10396
        %v10399 = vmul.f32 %v10266, %v10397
        %v10400 = vmul.f32 %v10269, %v10397
        %v10401 = vmul.f32 %v10274, %v10397
        %v10402 = vmul.f32 %v10277, %v10397
        %v10403 = vmul.f32 %v10282, %v10397
        %v10404 = vmul.f32 %v10285, %v10397
        %v10405 = vmul.f32 %v10290, %v10397
        %v10406 = vmul.f32 %v10293, %v10397
        %v10407 = vmul.f32 %v10298, %v10397
        %v10408 = vmul.f32 %v10301, %v10397
        %v10409 = vmul.f32 %v10306, %v10397
        %v10410 = vmul.f32 %v10309, %v10397
        %v10411 = vmul.f32 %v10314, %v10397
        %v10412 = vmul.f32 %v10317, %v10397
        %v10413 = vmul.f32 %v10322, %v10397
        %v10414 = vmul.f32 %v10325, %v10397
        %v10415 = vmul.f32 %v10330, %v10397
        %v10416 = vmul.f32 %v10333, %v10397
        %v10417 = vmul.f32 %v10338, %v10397
        %v10418 = vmul.f32 %v10341, %v10397
        %v10419 = vmul.f32 %v10346, %v10397
        %v10420 = vmul.f32 %v10349, %v10397
        %v10421 = vmul.f32 %v10354, %v10397
        %v10422 = vmul.f32 %v10357, %v10397
        %v10423 = vmul.f32 %v10362, %v10397
        %v10424 = vmul.f32 %v10365, %v10397
        %v10425 = vmul.f32 %v10370, %v10397
        %v10426 = vmul.f32 %v10373, %v10397
        %v10427 = vmul.f32 %v10378, %v10397
        %v10428 = vmul.f32 %v10381, %v10397
        %v10429 = vmul.f32 %v10386, %v10397
        %v10430 = vmul.f32 %v10389, %v10397
        %v10431 = vld [vmem:[%s6] sm:$0x1]
        %v10433 = vlaneseq
        %v10434 = vshrl.u32 %v10433, 7
        %v10435 = vsub.s32 0, %v10434
        %v10436 = vrot.slane %v10431, %v10435
        %v10438 = vadd.f32 %v10399, %v10436
        %v10439 = vadd.f32 %v10400, %v10436
        %v10440 = vadd.f32 %v10401, %v10436
        %v10441 = vadd.f32 %v10402, %v10436
        %v10442 = vadd.f32 %v10403, %v10436
        %v10443 = vadd.f32 %v10404, %v10436
        %v10444 = vadd.f32 %v10405, %v10436
        %v10445 = vadd.f32 %v10406, %v10436
        %v10446 = vadd.f32 %v10407, %v10436
        %v10447 = vadd.f32 %v10408, %v10436
        %v10448 = vadd.f32 %v10409, %v10436
        %v10449 = vadd.f32 %v10410, %v10436
        %v10450 = vadd.f32 %v10411, %v10436
        %v10451 = vadd.f32 %v10412, %v10436
        %v10452 = vadd.f32 %v10413, %v10436
        %v10453 = vadd.f32 %v10414, %v10436
        %v10454 = vadd.f32 %v10415, %v10436
        %v10455 = vadd.f32 %v10416, %v10436
        %v10456 = vadd.f32 %v10417, %v10436
        %v10457 = vadd.f32 %v10418, %v10436
        %v10458 = vadd.f32 %v10419, %v10436
        %v10459 = vadd.f32 %v10420, %v10436
        %v10460 = vadd.f32 %v10421, %v10436
        %v10461 = vadd.f32 %v10422, %v10436
        %v10462 = vadd.f32 %v10423, %v10436
        %v10463 = vadd.f32 %v10424, %v10436
        %v10464 = vadd.f32 %v10425, %v10436
        %v10465 = vadd.f32 %v10426, %v10436
        %v10466 = vadd.f32 %v10427, %v10436
        %v10467 = vadd.f32 %v10428, %v10436
        %v10468 = vadd.f32 %v10429, %v10436
        %v10469 = vadd.f32 %v10430, %v10436
        %10470 = vst [vmem:[%s325] sm:$0xff] %v10438
        %10471 = vst [vmem:[%s325 + $0x8] sm:$0xff] %v10439
        %10472 = vst [vmem:[%s325 + $0x10] sm:$0xff] %v10440
        %10473 = vst [vmem:[%s325 + $0x18] sm:$0xff] %v10441
        %10474 = vst [vmem:[%s325 + $0x20] sm:$0xff] %v10442
        %10475 = vst [vmem:[%s325 + $0x28] sm:$0xff] %v10443
        %10476 = vst [vmem:[%s325 + $0x30] sm:$0xff] %v10444
        %10477 = vst [vmem:[%s325 + $0x38] sm:$0xff] %v10445
        %10478 = vst [vmem:[%s325 + $0x40] sm:$0xff] %v10446
        %10479 = vst [vmem:[%s325 + $0x48] sm:$0xff] %v10447
        %10480 = vst [vmem:[%s325 + $0x50] sm:$0xff] %v10448
        %10481 = vst [vmem:[%s325 + $0x58] sm:$0xff] %v10449
        %10482 = vst [vmem:[%s325 + $0x60] sm:$0xff] %v10450
        %10483 = vst [vmem:[%s325 + $0x68] sm:$0xff] %v10451
        %10484 = vst [vmem:[%s325 + $0x70] sm:$0xff] %v10452
        %10485 = vst [vmem:[%s325 + $0x78] sm:$0xff] %v10453
        %10486 = vst [vmem:[%s325 + $0x80] sm:$0xff] %v10454
        %10487 = vst [vmem:[%s325 + $0x88] sm:$0xff] %v10455
        %10488 = vst [vmem:[%s325 + $0x90] sm:$0xff] %v10456
        %10489 = vst [vmem:[%s325 + $0x98] sm:$0xff] %v10457
        %10490 = vst [vmem:[%s325 + $0xa0] sm:$0xff] %v10458
        %10491 = vst [vmem:[%s325 + $0xa8] sm:$0xff] %v10459
        %10492 = vst [vmem:[%s325 + $0xb0] sm:$0xff] %v10460
        %10493 = vst [vmem:[%s325 + $0xb8] sm:$0xff] %v10461
        %10494 = vst [vmem:[%s325 + $0xc0] sm:$0xff] %v10462
        %10495 = vst [vmem:[%s325 + $0xc8] sm:$0xff] %v10463
        %10496 = vst [vmem:[%s325 + $0xd0] sm:$0xff] %v10464
        %10497 = vst [vmem:[%s325 + $0xd8] sm:$0xff] %v10465
        %10498 = vst [vmem:[%s325 + $0xe0] sm:$0xff] %v10466
        %10499 = vst [vmem:[%s325 + $0xe8] sm:$0xff] %v10467
        %10500 = vst [vmem:[%s325 + $0xf0] sm:$0xff] %v10468
        %10501 = vst [vmem:[%s325 + $0xf8] sm:$0xff] %v10469
        %s10502 = sand.u32 %s185, 1
        %s10503 = scalar_lea.sflag [#allocation8], %s10502
        %s10504 = sand.u32 %s185, 1
        %s10505 = smul.addr %s10504, 256
        %s10506 = scalar_lea.vmem [#allocation12], %s10505
        // Predicated region
        $region61: #{tpu_custom_call.1} parent=47 // pred_check
          %p10507 = pneg %p195
        $region62: #{tpu_custom_call.1} parent=47 // pred_check_branch
          %10509 = sbr.rel (%p10507) target = $region64
        $region63: #{tpu_custom_call.1} parent=47 // pred_region
          %s10511 = ssub.s32 4096, 4096
          %10512 = vsyncadd %s10503, %s10511
          %s10513 = smul.addr %s25, 32
          %s10514 = smul.addr %s10513, 128
          %s10515 = scalar_lea.hbm %s7, %s10514
          %s10516 = sshll.u32 %s10506, 4
          %s10517 = int_to_ptr.vmem [resolvable:$true] %s10516
          %10522 = dma.vmem_to_hbm [thread:$0]  %s10517, 4096, %s10515, %s10503, 128, 128, 8
        $region64: #{tpu_custom_call.1} parent=47 // pred_fallthru
          _
      $region48: #{tpu_custom_call.1} parent=5 // pred_fallthru
        _
      %p10523 = scmp.le.s32.totalorder 2, %s20
      // Predicated region
      $region65: #{tpu_custom_call.1} parent=5 // pred_check
        %p10524 = pneg %p10523
      $region66: #{tpu_custom_call.1} parent=5 // pred_check_branch
        %10526 = sbr.rel (%p10524) target = $region68
      $region67: #{tpu_custom_call.1} parent=5 // pred_region
        %s10527 = ssub.s32 %s20, 2
        // Predicated region
        $region69: #{tpu_custom_call.1} parent=67 // pred_check
          %p10528 = pneg %p201
        $region70: #{tpu_custom_call.1} parent=67 // pred_check_branch
          %10530 = sbr.rel (%p10528) target = $region72
        $region71: #{tpu_custom_call.1} parent=67 // pred_region
          %s10531 = sand.u32 %s186, 1
          %s10532 = scalar_lea.sflag [#allocation8], %s10531
          %s10533 = sand.u32 %s186, 1
          %s10534 = smul.addr %s10533, 256
          %s10535 = scalar_lea.vmem [#allocation12], %s10534
          %10536 = dma.done %s10532, 4096
        $region72: #{tpu_custom_call.1} parent=67 // pred_fallthru
          _
      $region68: #{tpu_custom_call.1} parent=5 // pred_fallthru
        _
    $region6: #{tpu_custom_call.1} parent=1 // loop_footer
      %s24 = sadd.s32 1, %s20
    $region7: #{tpu_custom_call.1} parent=1 // loop_footer_branch
      %19 = sbr.rel target = $region3
    $region8: #{tpu_custom_call.1} parent=1 // loop_exit
      _
    %10537 = vsyncpa [#allocation7], 1
    %s10538 = scalar_lea.sflag [#allocation7], 1
    %10539 = vsyncpa %s10538, 1
    %10540 = vsyncpa [#allocation10], 1
    %10541 = vsyncpa [#allocation8], 1
    %s10542 = scalar_lea.sflag [#allocation8], 1
    %10543 = vsyncpa %s10542, 1

</llo_original>
